<compile_context>
chip_gen: v5e
topology: v5e:2x2
jax: 0.10.0
libtpu: 0.0.40
codegen_flags: <defaults>
</compile_context>

<pallas_src>
import jax
import jax.numpy as jnp
import numpy as np
from jax import lax
from jax.experimental import pallas as pl
from jax.experimental.pallas import tpu as pltpu


def _sigmoid(z):
    return 1.0 / (1.0 + jnp.exp(-z))


# ----------------------------- fused ClassNet kernel -------------------------
def _make_classnet_kernel(depth, H, W, cin, width, cout):
    HW = H * W
    PAD = W + 1  # zero rows above/below the flattened image inside the scratch

    def kernel(*refs):
        x_ref, ml_ref, mr_ref = refs[0], refs[1], refs[2]
        layer_refs = refs[3:3 + 3 * depth]
        head_w_ref = refs[3 + 3 * depth]      # (9, width, cout) bf16
        head_b_ref = refs[4 + 3 * depth]      # (1, cout) f32
        o_ref = refs[5 + 3 * depth]           # (1, HW, cout) f32
        pad_ref = refs[6 + 3 * depth]         # (HW + 2*(W+1), cmax) f32 scratch

        # Zero once: only interior rows are ever overwritten, so the top/bottom
        # zero-padding rows stay valid for every layer of this invocation.
        pad_ref[...] = jnp.zeros_like(pad_ref)

        ml = ml_ref[...]                      # (HW, 1) mask: column x != 0
        mr = mr_ref[...]                      # (HW, 1) mask: column x != W-1

        def taps(c):
            """9 shifted (HW, c) slices of the padded image (wrap masked)."""
            out = []
            for k in range(9):
                ky, kx = divmod(k, 3)
                start = PAD + (ky - 1) * W + (kx - 1)
                s = pad_ref[start:start + HW, :c]
                if kx == 0:
                    s = s * ml
                elif kx == 2:
                    s = s * mr
                out.append(s)
            return out

        h = x_ref[0].astype(jnp.float32)      # (HW, cin)
        c = cin
        for i in range(depth):
            dw_w_ref = layer_refs[3 * i]      # (9, 1, c)   f32 depthwise taps
            pw_w_ref = layer_refs[3 * i + 1]  # (c, width)  bf16 (BN folded)
            pw_b_ref = layer_refs[3 * i + 2]  # (1, width)  f32 (all biases + BN folded)

            # depthwise 3x3, padding=1 (VPU multiply-adds)
            pad_ref[PAD:PAD + HW, :c] = h
            acc = jnp.zeros((HW, c), jnp.float32)
            for k, s in enumerate(taps(c)):
                acc = acc + s * dw_w_ref[k]

            # pointwise 1x1 (+ folded BN/bias) on the MXU, bf16 in / f32 acc
            y = jnp.dot(acc.astype(jnp.bfloat16), pw_w_ref[...],
                        preferred_element_type=jnp.float32)
            y = y + pw_b_ref[...]
            h = y * _sigmoid(y)               # SiLU
            c = width

        # head: full 3x3 conv width -> cout as 9 MXU matmuls over shifted rows
        pad_ref[PAD:PAD + HW, :width] = h
        acc = jnp.zeros((HW, cout), jnp.float32)
        for k, s in enumerate(taps(width)):
            acc = acc + jnp.dot(s.astype(jnp.bfloat16), head_w_ref[k],
                                preferred_element_type=jnp.float32)
        z = acc + head_b_ref[...]
        o_ref[0] = _sigmoid(z).astype(o_ref.dtype)

    return kernel


# ----------------------------- host-side param folding -----------------------
def fold_params(params, eps=1e-4):
    """Fold depthwise bias, pointwise bias and inference-mode BatchNorm into the
    pointwise weight/bias; repack all weights into kernel-friendly layouts."""
    folded_layers = []
    for p in params["layers"]:
        c = p["dw_w"].shape[0]
        width = p["pw_w"].shape[0]
        # (c,1,3,3) -> (9,1,c), tap index k = 3*ky + kx
        dw_k = jnp.transpose(p["dw_w"].reshape(c, 9), (1, 0)).reshape(9, 1, c)
        scale = p["gamma"] / jnp.sqrt(p["var"] + eps)
        shift = p["beta"] - p["mean"] * scale
        w_pw = jnp.transpose(p["pw_w"].reshape(width, c), (1, 0))      # (c, width)
        w_eff = (w_pw * scale[None, :]).astype(jnp.bfloat16)
        b_eff = ((p["dw_b"] @ w_pw + p["pw_b"]) * scale + shift).reshape(1, width)
        folded_layers.append((dw_k.astype(jnp.float32), w_eff,
                              b_eff.astype(jnp.float32)))
    cout, width = params["head_w"].shape[0], params["head_w"].shape[1]
    head_k = jnp.transpose(params["head_w"], (2, 3, 1, 0)).reshape(9, width, cout)
    head_k = head_k.astype(jnp.bfloat16)
    head_b = params["head_b"].reshape(1, cout).astype(jnp.float32)
    return folded_layers, head_k, head_b


def class_net_forward(x_nchw, params, num_classes, num_anchors, eps=1e-4):
    N, cin, H, W = x_nchw.shape
    HW = H * W
    folded_layers, head_k, head_b = fold_params(params, eps)
    depth = len(folded_layers)
    width = head_k.shape[1]
    cout = head_k.shape[2]
    cmax = max(cin, width)

    # Single small input relayout NCHW -> (N, H*W, C); output needs none.
    x_rows = jnp.transpose(x_nchw, (0, 2, 3, 1)).reshape(N, HW, cin)

    col = np.arange(HW) % W
    mask_l = jnp.asarray((col != 0).astype(np.float32).reshape(HW, 1))
    mask_r = jnp.asarray((col != W - 1).astype(np.float32).reshape(HW, 1))

    inputs = [x_rows, mask_l, mask_r]
    in_specs = [
        pl.BlockSpec((1, HW, cin), lambda n: (n, 0, 0)),
        pl.BlockSpec((HW, 1), lambda n: (0, 0)),
        pl.BlockSpec((HW, 1), lambda n: (0, 0)),
    ]
    for dw_k, w_eff, b_eff in folded_layers:
        c = dw_k.shape[2]
        inputs += [dw_k, w_eff, b_eff]
        in_specs += [
            pl.BlockSpec((9, 1, c), lambda n: (0, 0, 0)),
            pl.BlockSpec((c, width), lambda n: (0, 0)),
            pl.BlockSpec((1, width), lambda n: (0, 0)),
        ]
    inputs += [head_k, head_b]
    in_specs += [
        pl.BlockSpec((9, width, cout), lambda n: (0, 0, 0)),
        pl.BlockSpec((1, cout), lambda n: (0, 0)),
    ]

    out = pl.pallas_call(
        _make_classnet_kernel(depth, H, W, cin, width, cout),
        out_shape=jax.ShapeDtypeStruct((N, HW, cout), jnp.float32),
        grid_spec=pltpu.PrefetchScalarGridSpec(
            num_scalar_prefetch=0,
            grid=(N,),
            in_specs=in_specs,
            out_specs=pl.BlockSpec((1, HW, cout), lambda n: (n, 0, 0)),
            scratch_shapes=[pltpu.VMEM((HW + 2 * (W + 1), cmax), jnp.float32)],
        ),
        compiler_params=pltpu.CompilerParams(
            dimension_semantics=("parallel",),
            vmem_limit_bytes=32 * 1024 * 1024,
        ),
    )(*inputs)

    # (N, H*W, A*nc) -> (N, H*W*A, nc): pure metadata reshape, matches
    # PyTorch's permute(0,2,3,1).view(N, -1, num_classes).
    return out.reshape(N, HW * num_anchors, num_classes)


# ----------------------------- parameter init & reference --------------------
def init_classnet_params(key, in_channels, num_classes, num_anchors, depth, width):
    cout = num_anchors * num_classes
    keys = list(jax.random.split(key, 8 * depth + 2))
    params = {"layers": []}
    for i in range(depth):
        c = in_channels if i == 0 else width
        k = [keys.pop(0) for _ in range(8)]
        params["layers"].append({
            "dw_w": jax.random.normal(k[0], (c, 1, 3, 3), jnp.float32) / 3.0,
            "dw_b": 0.1 * jax.random.normal(k[1], (c,), jnp.float32),
            "pw_w": jax.random.normal(k[2], (width, c, 1, 1), jnp.float32) / np.sqrt(c),
            "pw_b": 0.1 * jax.random.normal(k[3], (width,), jnp.float32),
            "gamma": 1.0 + 0.1 * jax.random.normal(k[4], (width,), jnp.float32),
            "beta": 0.1 * jax.random.normal(k[5], (width,), jnp.float32),
            "mean": 0.1 * jax.random.normal(k[6], (width,), jnp.float32),
            "var": jax.random.uniform(k[7], (width,), jnp.float32, 0.5, 1.5),
        })
    params["head_w"] = jax.random.normal(keys.pop(0), (cout, width, 3, 3),
                                         jnp.float32) / np.sqrt(9 * width)
    params["head_b"] = 0.1 * jax.random.normal(keys.pop(0), (cout,), jnp.float32)
    return params


def classnet_reference(x_nchw, params, num_classes, eps=1e-4):
    # TODO(synk): BatchNorm is evaluated in inference mode (running statistics);
    # training-mode batch-statistic computation/update is not modeled.
    dn = ("NCHW", "OIHW", "NCHW")
    y = x_nchw
    for p in params["layers"]:
        c = y.shape[1]
        y = lax.conv_general_dilated(y, p["dw_w"], window_strides=(1, 1),
                                     padding=((1, 1), (1, 1)),
                                     dimension_numbers=dn, feature_group_count=c)
        y = y + p["dw_b"][None, :, None, None]
        y = lax.conv_general_dilated(y, p["pw_w"], window_strides=(1, 1),
                                     padding=((0, 0), (0, 0)),
                                     dimension_numbers=dn)
        y = y + p["pw_b"][None, :, None, None]
        scale = p["gamma"] / jnp.sqrt(p["var"] + eps)
        shift = p["beta"] - p["mean"] * scale
        y = y * scale[None, :, None, None] + shift[None, :, None, None]
        y = y * jax.nn.sigmoid(y)                            # SiLU
    y = lax.conv_general_dilated(y, params["head_w"], window_strides=(1, 1),
                                 padding=((1, 1), (1, 1)), dimension_numbers=dn)
    y = y + params["head_b"][None, :, None, None]
    N = y.shape[0]
    y = jnp.transpose(y, (0, 2, 3, 1)).reshape(N, -1, num_classes)
    return jax.nn.sigmoid(y)


# ----------------------------- demo / self-test -------------------------------
if __name__ == "__main__":
    key = jax.random.PRNGKey(0)
    k_x, k_p = jax.random.split(key)

    batch, in_channels, H, W = 2, 64, 16, 16
    num_classes, num_anchors, depth, width = 16, 8, 2, 64   # head out = 128 lanes

    x = jax.random.normal(k_x, (batch, in_channels, H, W), jnp.float32)
    params = init_classnet_params(k_p, in_channels, num_classes, num_anchors,
                                  depth, width)

    out = class_net_forward(x, params, num_classes, num_anchors)
    out = jax.block_until_ready(out)

    ref = classnet_reference(x, params, num_classes)
    assert out.shape == ref.shape == (batch, H * W * num_anchors, num_classes), \
        (out.shape, ref.shape)
    np.testing.assert_allclose(np.asarray(out), np.asarray(ref),
                               rtol=2e-2, atol=2e-2)

    print("KERNEL_OK")
</pallas_src>

<mosaic_0001>
module attributes {stable_mosaic.version = 11 : i64} {
  func.func @kernel(%arg0: i32, %arg1: memref<1x256x64xf32, #tpu.memory_space<vmem>>, %arg2: memref<256x1xf32, #tpu.memory_space<vmem>>, %arg3: memref<256x1xf32, #tpu.memory_space<vmem>>, %arg4: memref<9x1x64xf32, #tpu.memory_space<vmem>>, %arg5: memref<64x64xbf16, #tpu.memory_space<vmem>>, %arg6: memref<1x64xf32, #tpu.memory_space<vmem>>, %arg7: memref<9x1x64xf32, #tpu.memory_space<vmem>>, %arg8: memref<64x64xbf16, #tpu.memory_space<vmem>>, %arg9: memref<1x64xf32, #tpu.memory_space<vmem>>, %arg10: memref<9x64x128xbf16, #tpu.memory_space<vmem>>, %arg11: memref<1x128xf32, #tpu.memory_space<vmem>>, %arg12: memref<1x256x128xf32, #tpu.memory_space<vmem>>, %arg13: memref<290x64xf32, #tpu.memory_space<vmem>>) attributes {dimension_semantics = [#tpu.dimension_semantics<parallel>], iteration_bounds = array<i64: 2>, scalar_prefetch = 0 : i64, scratch_operands = 1 : i64, tpu.core_type = #tpu.core_type<tc>, window_params = [{transform_indices = @transform_0, window_bounds = array<i64: 1, 256, 64>}, {pipeline_mode = #tpu.pipeline_mode<synchronous>, transform_indices = @transform_1, window_bounds = array<i64: 256, 1>}, {pipeline_mode = #tpu.pipeline_mode<synchronous>, transform_indices = @transform_2, window_bounds = array<i64: 256, 1>}, {pipeline_mode = #tpu.pipeline_mode<synchronous>, transform_indices = @transform_3, window_bounds = array<i64: 9, 1, 64>}, {pipeline_mode = #tpu.pipeline_mode<synchronous>, transform_indices = @transform_4, window_bounds = array<i64: 64, 64>}, {pipeline_mode = #tpu.pipeline_mode<synchronous>, transform_indices = @transform_5, window_bounds = array<i64: 1, 64>}, {pipeline_mode = #tpu.pipeline_mode<synchronous>, transform_indices = @transform_6, window_bounds = array<i64: 9, 1, 64>}, {pipeline_mode = #tpu.pipeline_mode<synchronous>, transform_indices = @transform_7, window_bounds = array<i64: 64, 64>}, {pipeline_mode = #tpu.pipeline_mode<synchronous>, transform_indices = @transform_8, window_bounds = array<i64: 1, 64>}, {pipeline_mode = #tpu.pipeline_mode<synchronous>, transform_indices = @transform_9, window_bounds = array<i64: 9, 64, 128>}, {pipeline_mode = #tpu.pipeline_mode<synchronous>, transform_indices = @transform_10, window_bounds = array<i64: 1, 128>}, {transform_indices = @transform_11, window_bounds = array<i64: 1, 256, 128>}]} {
    %cst = arith.constant 0.000000e+00 : f32
    %0 = vector.broadcast %cst : f32 to vector<290x64xf32>
    %c0 = arith.constant 0 : index
    %c0_0 = arith.constant 0 : index
    %1 = vector.load %arg13[%c0, %c0_0] : memref<290x64xf32, #tpu.memory_space<vmem>>, vector<290x64xf32>
    tpu.vector_store %arg13[%c0, %c0_0], %0 {strides = array<i32>} : memref<290x64xf32, #tpu.memory_space<vmem>>, vector<290x64xf32>,
    %c0_1 = arith.constant 0 : index
    %c0_2 = arith.constant 0 : index
    %2 = vector.load %arg2[%c0_1, %c0_2] : memref<256x1xf32, #tpu.memory_space<vmem>>, vector<256x1xf32>
    %c0_3 = arith.constant 0 : index
    %c0_4 = arith.constant 0 : index
    %3 = vector.load %arg3[%c0_3, %c0_4] : memref<256x1xf32, #tpu.memory_space<vmem>>, vector<256x1xf32>
    %c0_5 = arith.constant 0 : index
    %c0_6 = arith.constant 0 : index
    %c0_7 = arith.constant 0 : index
    %4 = vector.load %arg1[%c0_5, %c0_6, %c0_7] : memref<1x256x64xf32, #tpu.memory_space<vmem>>, vector<1x256x64xf32>
    %5 = vector.shape_cast %4 : vector<1x256x64xf32> to vector<256x64xf32>
    %c17 = arith.constant 17 : index
    %c0_8 = arith.constant 0 : index
    %6 = vector.load %arg13[%c17, %c0_8] : memref<290x64xf32, #tpu.memory_space<vmem>>, vector<256x64xf32>
    tpu.vector_store %arg13[%c17, %c0_8], %5 {strides = array<i32>} : memref<290x64xf32, #tpu.memory_space<vmem>>, vector<256x64xf32>,
    %cst_9 = arith.constant 0.000000e+00 : f32
    %7 = vector.broadcast %cst_9 : f32 to vector<256x64xf32>
    %c0_10 = arith.constant 0 : index
    %c0_11 = arith.constant 0 : index
    %8 = vector.load %arg13[%c0_10, %c0_11] : memref<290x64xf32, #tpu.memory_space<vmem>>, vector<256x64xf32>
    %9 = vector.broadcast %2 : vector<256x1xf32> to vector<256x64xf32>
    %10 = arith.mulf %8, %9 : vector<256x64xf32>
    %c1 = arith.constant 1 : index
    %c0_12 = arith.constant 0 : index
    %11 = vector.load %arg13[%c1, %c0_12] : memref<290x64xf32, #tpu.memory_space<vmem>>, vector<256x64xf32>
    %c2 = arith.constant 2 : index
    %c0_13 = arith.constant 0 : index
    %12 = vector.load %arg13[%c2, %c0_13] : memref<290x64xf32, #tpu.memory_space<vmem>>, vector<256x64xf32>
    %13 = vector.broadcast %3 : vector<256x1xf32> to vector<256x64xf32>
    %14 = arith.mulf %12, %13 : vector<256x64xf32>
    %c16 = arith.constant 16 : index
    %c0_14 = arith.constant 0 : index
    %15 = vector.load %arg13[%c16, %c0_14] : memref<290x64xf32, #tpu.memory_space<vmem>>, vector<256x64xf32>
    %16 = vector.broadcast %2 : vector<256x1xf32> to vector<256x64xf32>
    %17 = arith.mulf %15, %16 : vector<256x64xf32>
    %c17_15 = arith.constant 17 : index
    %c0_16 = arith.constant 0 : index
    %18 = vector.load %arg13[%c17_15, %c0_16] : memref<290x64xf32, #tpu.memory_space<vmem>>, vector<256x64xf32>
    %c18 = arith.constant 18 : index
    %c0_17 = arith.constant 0 : index
    %19 = vector.load %arg13[%c18, %c0_17] : memref<290x64xf32, #tpu.memory_space<vmem>>, vector<256x64xf32>
    %20 = vector.broadcast %3 : vector<256x1xf32> to vector<256x64xf32>
    %21 = arith.mulf %19, %20 : vector<256x64xf32>
    %c32 = arith.constant 32 : index
    %c0_18 = arith.constant 0 : index
    %22 = vector.load %arg13[%c32, %c0_18] : memref<290x64xf32, #tpu.memory_space<vmem>>, vector<256x64xf32>
    %23 = vector.broadcast %2 : vector<256x1xf32> to vector<256x64xf32>
    %24 = arith.mulf %22, %23 : vector<256x64xf32>
    %c33 = arith.constant 33 : index
    %c0_19 = arith.constant 0 : index
    %25 = vector.load %arg13[%c33, %c0_19] : memref<290x64xf32, #tpu.memory_space<vmem>>, vector<256x64xf32>
    %c34 = arith.constant 34 : index
    %c0_20 = arith.constant 0 : index
    %26 = vector.load %arg13[%c34, %c0_20] : memref<290x64xf32, #tpu.memory_space<vmem>>, vector<256x64xf32>
    %27 = vector.broadcast %3 : vector<256x1xf32> to vector<256x64xf32>
    %28 = arith.mulf %26, %27 : vector<256x64xf32>
    %c0_21 = arith.constant 0 : index
    %c0_22 = arith.constant 0 : index
    %c0_23 = arith.constant 0 : index
    %29 = vector.load %arg4[%c0_21, %c0_22, %c0_23] : memref<9x1x64xf32, #tpu.memory_space<vmem>>, vector<1x1x64xf32>
    %30 = vector.shape_cast %29 : vector<1x1x64xf32> to vector<1x64xf32>
    %31 = vector.broadcast %30 : vector<1x64xf32> to vector<256x64xf32>
    %32 = arith.mulf %10, %31 : vector<256x64xf32>
    %33 = arith.addf %7, %32 : vector<256x64xf32>
    %c1_24 = arith.constant 1 : index
    %c0_25 = arith.constant 0 : index
    %c0_26 = arith.constant 0 : index
    %34 = vector.load %arg4[%c1_24, %c0_25, %c0_26] : memref<9x1x64xf32, #tpu.memory_space<vmem>>, vector<1x1x64xf32>
    %35 = vector.shape_cast %34 : vector<1x1x64xf32> to vector<1x64xf32>
    %36 = vector.broadcast %35 : vector<1x64xf32> to vector<256x64xf32>
    %37 = arith.mulf %11, %36 : vector<256x64xf32>
    %38 = arith.addf %33, %37 : vector<256x64xf32>
    %c2_27 = arith.constant 2 : index
    %c0_28 = arith.constant 0 : index
    %c0_29 = arith.constant 0 : index
    %39 = vector.load %arg4[%c2_27, %c0_28, %c0_29] : memref<9x1x64xf32, #tpu.memory_space<vmem>>, vector<1x1x64xf32>
    %40 = vector.shape_cast %39 : vector<1x1x64xf32> to vector<1x64xf32>
    %41 = vector.broadcast %40 : vector<1x64xf32> to vector<256x64xf32>
    %42 = arith.mulf %14, %41 : vector<256x64xf32>
    %43 = arith.addf %38, %42 : vector<256x64xf32>
    %c3 = arith.constant 3 : index
    %c0_30 = arith.constant 0 : index
    %c0_31 = arith.constant 0 : index
    %44 = vector.load %arg4[%c3, %c0_30, %c0_31] : memref<9x1x64xf32, #tpu.memory_space<vmem>>, vector<1x1x64xf32>
    %45 = vector.shape_cast %44 : vector<1x1x64xf32> to vector<1x64xf32>
    %46 = vector.broadcast %45 : vector<1x64xf32> to vector<256x64xf32>
    %47 = arith.mulf %17, %46 : vector<256x64xf32>
    %48 = arith.addf %43, %47 : vector<256x64xf32>
    %c4 = arith.constant 4 : index
    %c0_32 = arith.constant 0 : index
    %c0_33 = arith.constant 0 : index
    %49 = vector.load %arg4[%c4, %c0_32, %c0_33] : memref<9x1x64xf32, #tpu.memory_space<vmem>>, vector<1x1x64xf32>
    %50 = vector.shape_cast %49 : vector<1x1x64xf32> to vector<1x64xf32>
    %51 = vector.broadcast %50 : vector<1x64xf32> to vector<256x64xf32>
    %52 = arith.mulf %18, %51 : vector<256x64xf32>
    %53 = arith.addf %48, %52 : vector<256x64xf32>
    %c5 = arith.constant 5 : index
    %c0_34 = arith.constant 0 : index
    %c0_35 = arith.constant 0 : index
    %54 = vector.load %arg4[%c5, %c0_34, %c0_35] : memref<9x1x64xf32, #tpu.memory_space<vmem>>, vector<1x1x64xf32>
    %55 = vector.shape_cast %54 : vector<1x1x64xf32> to vector<1x64xf32>
    %56 = vector.broadcast %55 : vector<1x64xf32> to vector<256x64xf32>
    %57 = arith.mulf %21, %56 : vector<256x64xf32>
    %58 = arith.addf %53, %57 : vector<256x64xf32>
    %c6 = arith.constant 6 : index
    %c0_36 = arith.constant 0 : index
    %c0_37 = arith.constant 0 : index
    %59 = vector.load %arg4[%c6, %c0_36, %c0_37] : memref<9x1x64xf32, #tpu.memory_space<vmem>>, vector<1x1x64xf32>
    %60 = vector.shape_cast %59 : vector<1x1x64xf32> to vector<1x64xf32>
    %61 = vector.broadcast %60 : vector<1x64xf32> to vector<256x64xf32>
    %62 = arith.mulf %24, %61 : vector<256x64xf32>
    %63 = arith.addf %58, %62 : vector<256x64xf32>
    %c7 = arith.constant 7 : index
    %c0_38 = arith.constant 0 : index
    %c0_39 = arith.constant 0 : index
    %64 = vector.load %arg4[%c7, %c0_38, %c0_39] : memref<9x1x64xf32, #tpu.memory_space<vmem>>, vector<1x1x64xf32>
    %65 = vector.shape_cast %64 : vector<1x1x64xf32> to vector<1x64xf32>
    %66 = vector.broadcast %65 : vector<1x64xf32> to vector<256x64xf32>
    %67 = arith.mulf %25, %66 : vector<256x64xf32>
    %68 = arith.addf %63, %67 : vector<256x64xf32>
    %c8 = arith.constant 8 : index
    %c0_40 = arith.constant 0 : index
    %c0_41 = arith.constant 0 : index
    %69 = vector.load %arg4[%c8, %c0_40, %c0_41] : memref<9x1x64xf32, #tpu.memory_space<vmem>>, vector<1x1x64xf32>
    %70 = vector.shape_cast %69 : vector<1x1x64xf32> to vector<1x64xf32>
    %71 = vector.broadcast %70 : vector<1x64xf32> to vector<256x64xf32>
    %72 = arith.mulf %28, %71 : vector<256x64xf32>
    %73 = arith.addf %68, %72 : vector<256x64xf32>
    %74 = arith.truncf %73 : vector<256x64xf32> to vector<256x64xbf16>
    %c0_42 = arith.constant 0 : index
    %c0_43 = arith.constant 0 : index
    %75 = vector.load %arg5[%c0_42, %c0_43] : memref<64x64xbf16, #tpu.memory_space<vmem>>, vector<64x64xbf16>
    %cst_44 = arith.constant dense<0.000000e+00> : vector<256x64xf32>
    %76 = tpu.matmul %74, %75, %cst_44 {dimension_numbers = #tpu.dot_dimension_numbers<[1], [0], [0], [1], [0, 0, 1, 1], [], []>} : vector<256x64xbf16>, vector<64x64xbf16>, vector<256x64xf32> -> vector<256x64xf32>
    %c0_45 = arith.constant 0 : index
    %c0_46 = arith.constant 0 : index
    %77 = vector.load %arg6[%c0_45, %c0_46] : memref<1x64xf32, #tpu.memory_space<vmem>>, vector<1x64xf32>
    %78 = vector.broadcast %77 : vector<1x64xf32> to vector<256x64xf32>
    %79 = arith.addf %76, %78 : vector<256x64xf32>
    %cst_47 = arith.constant 0.000000e+00 : f32
    %80 = vector.broadcast %cst_47 : f32 to vector<256x64xf32>
    %81 = arith.subf %80, %79 : vector<256x64xf32>
    %82 = math.exp %81 : vector<256x64xf32>
    %cst_48 = arith.constant 1.000000e+00 : f32
    %83 = vector.broadcast %cst_48 : f32 to vector<256x64xf32>
    %84 = arith.addf %83, %82 : vector<256x64xf32>
    %cst_49 = arith.constant 1.000000e+00 : f32
    %85 = vector.broadcast %cst_49 : f32 to vector<256x64xf32>
    %86 = arith.divf %85, %84 : vector<256x64xf32>
    %87 = arith.mulf %79, %86 : vector<256x64xf32>
    %c17_50 = arith.constant 17 : index
    %c0_51 = arith.constant 0 : index
    %88 = vector.load %arg13[%c17_50, %c0_51] : memref<290x64xf32, #tpu.memory_space<vmem>>, vector<256x64xf32>
    tpu.vector_store %arg13[%c17_50, %c0_51], %87 {strides = array<i32>} : memref<290x64xf32, #tpu.memory_space<vmem>>, vector<256x64xf32>,
    %cst_52 = arith.constant 0.000000e+00 : f32
    %89 = vector.broadcast %cst_52 : f32 to vector<256x64xf32>
    %c0_53 = arith.constant 0 : index
    %c0_54 = arith.constant 0 : index
    %90 = vector.load %arg13[%c0_53, %c0_54] : memref<290x64xf32, #tpu.memory_space<vmem>>, vector<256x64xf32>
    %91 = vector.broadcast %2 : vector<256x1xf32> to vector<256x64xf32>
    %92 = arith.mulf %90, %91 : vector<256x64xf32>
    %c1_55 = arith.constant 1 : index
    %c0_56 = arith.constant 0 : index
    %93 = vector.load %arg13[%c1_55, %c0_56] : memref<290x64xf32, #tpu.memory_space<vmem>>, vector<256x64xf32>
    %c2_57 = arith.constant 2 : index
    %c0_58 = arith.constant 0 : index
    %94 = vector.load %arg13[%c2_57, %c0_58] : memref<290x64xf32, #tpu.memory_space<vmem>>, vector<256x64xf32>
    %95 = vector.broadcast %3 : vector<256x1xf32> to vector<256x64xf32>
    %96 = arith.mulf %94, %95 : vector<256x64xf32>
    %c16_59 = arith.constant 16 : index
    %c0_60 = arith.constant 0 : index
    %97 = vector.load %arg13[%c16_59, %c0_60] : memref<290x64xf32, #tpu.memory_space<vmem>>, vector<256x64xf32>
    %98 = vector.broadcast %2 : vector<256x1xf32> to vector<256x64xf32>
    %99 = arith.mulf %97, %98 : vector<256x64xf32>
    %c17_61 = arith.constant 17 : index
    %c0_62 = arith.constant 0 : index
    %100 = vector.load %arg13[%c17_61, %c0_62] : memref<290x64xf32, #tpu.memory_space<vmem>>, vector<256x64xf32>
    %c18_63 = arith.constant 18 : index
    %c0_64 = arith.constant 0 : index
    %101 = vector.load %arg13[%c18_63, %c0_64] : memref<290x64xf32, #tpu.memory_space<vmem>>, vector<256x64xf32>
    %102 = vector.broadcast %3 : vector<256x1xf32> to vector<256x64xf32>
    %103 = arith.mulf %101, %102 : vector<256x64xf32>
    %c32_65 = arith.constant 32 : index
    %c0_66 = arith.constant 0 : index
    %104 = vector.load %arg13[%c32_65, %c0_66] : memref<290x64xf32, #tpu.memory_space<vmem>>, vector<256x64xf32>
    %105 = vector.broadcast %2 : vector<256x1xf32> to vector<256x64xf32>
    %106 = arith.mulf %104, %105 : vector<256x64xf32>
    %c33_67 = arith.constant 33 : index
    %c0_68 = arith.constant 0 : index
    %107 = vector.load %arg13[%c33_67, %c0_68] : memref<290x64xf32, #tpu.memory_space<vmem>>, vector<256x64xf32>
    %c34_69 = arith.constant 34 : index
    %c0_70 = arith.constant 0 : index
    %108 = vector.load %arg13[%c34_69, %c0_70] : memref<290x64xf32, #tpu.memory_space<vmem>>, vector<256x64xf32>
    %109 = vector.broadcast %3 : vector<256x1xf32> to vector<256x64xf32>
    %110 = arith.mulf %108, %109 : vector<256x64xf32>
    %c0_71 = arith.constant 0 : index
    %c0_72 = arith.constant 0 : index
    %c0_73 = arith.constant 0 : index
    %111 = vector.load %arg7[%c0_71, %c0_72, %c0_73] : memref<9x1x64xf32, #tpu.memory_space<vmem>>, vector<1x1x64xf32>
    %112 = vector.shape_cast %111 : vector<1x1x64xf32> to vector<1x64xf32>
    %113 = vector.broadcast %112 : vector<1x64xf32> to vector<256x64xf32>
    %114 = arith.mulf %92, %113 : vector<256x64xf32>
    %115 = arith.addf %89, %114 : vector<256x64xf32>
    %c1_74 = arith.constant 1 : index
    %c0_75 = arith.constant 0 : index
    %c0_76 = arith.constant 0 : index
    %116 = vector.load %arg7[%c1_74, %c0_75, %c0_76] : memref<9x1x64xf32, #tpu.memory_space<vmem>>, vector<1x1x64xf32>
    %117 = vector.shape_cast %116 : vector<1x1x64xf32> to vector<1x64xf32>
    %118 = vector.broadcast %117 : vector<1x64xf32> to vector<256x64xf32>
    %119 = arith.mulf %93, %118 : vector<256x64xf32>
    %120 = arith.addf %115, %119 : vector<256x64xf32>
    %c2_77 = arith.constant 2 : index
    %c0_78 = arith.constant 0 : index
    %c0_79 = arith.constant 0 : index
    %121 = vector.load %arg7[%c2_77, %c0_78, %c0_79] : memref<9x1x64xf32, #tpu.memory_space<vmem>>, vector<1x1x64xf32>
    %122 = vector.shape_cast %121 : vector<1x1x64xf32> to vector<1x64xf32>
    %123 = vector.broadcast %122 : vector<1x64xf32> to vector<256x64xf32>
    %124 = arith.mulf %96, %123 : vector<256x64xf32>
    %125 = arith.addf %120, %124 : vector<256x64xf32>
    %c3_80 = arith.constant 3 : index
    %c0_81 = arith.constant 0 : index
    %c0_82 = arith.constant 0 : index
    %126 = vector.load %arg7[%c3_80, %c0_81, %c0_82] : memref<9x1x64xf32, #tpu.memory_space<vmem>>, vector<1x1x64xf32>
    %127 = vector.shape_cast %126 : vector<1x1x64xf32> to vector<1x64xf32>
    %128 = vector.broadcast %127 : vector<1x64xf32> to vector<256x64xf32>
    %129 = arith.mulf %99, %128 : vector<256x64xf32>
    %130 = arith.addf %125, %129 : vector<256x64xf32>
    %c4_83 = arith.constant 4 : index
    %c0_84 = arith.constant 0 : index
    %c0_85 = arith.constant 0 : index
    %131 = vector.load %arg7[%c4_83, %c0_84, %c0_85] : memref<9x1x64xf32, #tpu.memory_space<vmem>>, vector<1x1x64xf32>
    %132 = vector.shape_cast %131 : vector<1x1x64xf32> to vector<1x64xf32>
    %133 = vector.broadcast %132 : vector<1x64xf32> to vector<256x64xf32>
    %134 = arith.mulf %100, %133 : vector<256x64xf32>
    %135 = arith.addf %130, %134 : vector<256x64xf32>
    %c5_86 = arith.constant 5 : index
    %c0_87 = arith.constant 0 : index
    %c0_88 = arith.constant 0 : index
    %136 = vector.load %arg7[%c5_86, %c0_87, %c0_88] : memref<9x1x64xf32, #tpu.memory_space<vmem>>, vector<1x1x64xf32>
    %137 = vector.shape_cast %136 : vector<1x1x64xf32> to vector<1x64xf32>
    %138 = vector.broadcast %137 : vector<1x64xf32> to vector<256x64xf32>
    %139 = arith.mulf %103, %138 : vector<256x64xf32>
    %140 = arith.addf %135, %139 : vector<256x64xf32>
    %c6_89 = arith.constant 6 : index
    %c0_90 = arith.constant 0 : index
    %c0_91 = arith.constant 0 : index
    %141 = vector.load %arg7[%c6_89, %c0_90, %c0_91] : memref<9x1x64xf32, #tpu.memory_space<vmem>>, vector<1x1x64xf32>
    %142 = vector.shape_cast %141 : vector<1x1x64xf32> to vector<1x64xf32>
    %143 = vector.broadcast %142 : vector<1x64xf32> to vector<256x64xf32>
    %144 = arith.mulf %106, %143 : vector<256x64xf32>
    %145 = arith.addf %140, %144 : vector<256x64xf32>
    %c7_92 = arith.constant 7 : index
    %c0_93 = arith.constant 0 : index
    %c0_94 = arith.constant 0 : index
    %146 = vector.load %arg7[%c7_92, %c0_93, %c0_94] : memref<9x1x64xf32, #tpu.memory_space<vmem>>, vector<1x1x64xf32>
    %147 = vector.shape_cast %146 : vector<1x1x64xf32> to vector<1x64xf32>
    %148 = vector.broadcast %147 : vector<1x64xf32> to vector<256x64xf32>
    %149 = arith.mulf %107, %148 : vector<256x64xf32>
    %150 = arith.addf %145, %149 : vector<256x64xf32>
    %c8_95 = arith.constant 8 : index
    %c0_96 = arith.constant 0 : index
    %c0_97 = arith.constant 0 : index
    %151 = vector.load %arg7[%c8_95, %c0_96, %c0_97] : memref<9x1x64xf32, #tpu.memory_space<vmem>>, vector<1x1x64xf32>
    %152 = vector.shape_cast %151 : vector<1x1x64xf32> to vector<1x64xf32>
    %153 = vector.broadcast %152 : vector<1x64xf32> to vector<256x64xf32>
    %154 = arith.mulf %110, %153 : vector<256x64xf32>
    %155 = arith.addf %150, %154 : vector<256x64xf32>
    %156 = arith.truncf %155 : vector<256x64xf32> to vector<256x64xbf16>
    %c0_98 = arith.constant 0 : index
    %c0_99 = arith.constant 0 : index
    %157 = vector.load %arg8[%c0_98, %c0_99] : memref<64x64xbf16, #tpu.memory_space<vmem>>, vector<64x64xbf16>
    %cst_100 = arith.constant dense<0.000000e+00> : vector<256x64xf32>
    %158 = tpu.matmul %156, %157, %cst_100 {dimension_numbers = #tpu.dot_dimension_numbers<[1], [0], [0], [1], [0, 0, 1, 1], [], []>} : vector<256x64xbf16>, vector<64x64xbf16>, vector<256x64xf32> -> vector<256x64xf32>
    %c0_101 = arith.constant 0 : index
    %c0_102 = arith.constant 0 : index
    %159 = vector.load %arg9[%c0_101, %c0_102] : memref<1x64xf32, #tpu.memory_space<vmem>>, vector<1x64xf32>
    %160 = vector.broadcast %159 : vector<1x64xf32> to vector<256x64xf32>
    %161 = arith.addf %158, %160 : vector<256x64xf32>
    %cst_103 = arith.constant 0.000000e+00 : f32
    %162 = vector.broadcast %cst_103 : f32 to vector<256x64xf32>
    %163 = arith.subf %162, %161 : vector<256x64xf32>
    %164 = math.exp %163 : vector<256x64xf32>
    %cst_104 = arith.constant 1.000000e+00 : f32
    %165 = vector.broadcast %cst_104 : f32 to vector<256x64xf32>
    %166 = arith.addf %165, %164 : vector<256x64xf32>
    %cst_105 = arith.constant 1.000000e+00 : f32
    %167 = vector.broadcast %cst_105 : f32 to vector<256x64xf32>
    %168 = arith.divf %167, %166 : vector<256x64xf32>
    %169 = arith.mulf %161, %168 : vector<256x64xf32>
    %c17_106 = arith.constant 17 : index
    %c0_107 = arith.constant 0 : index
    %170 = vector.load %arg13[%c17_106, %c0_107] : memref<290x64xf32, #tpu.memory_space<vmem>>, vector<256x64xf32>
    tpu.vector_store %arg13[%c17_106, %c0_107], %169 {strides = array<i32>} : memref<290x64xf32, #tpu.memory_space<vmem>>, vector<256x64xf32>,
    %cst_108 = arith.constant 0.000000e+00 : f32
    %171 = vector.broadcast %cst_108 : f32 to vector<256x128xf32>
    %c0_109 = arith.constant 0 : index
    %c0_110 = arith.constant 0 : index
    %172 = vector.load %arg13[%c0_109, %c0_110] : memref<290x64xf32, #tpu.memory_space<vmem>>, vector<256x64xf32>
    %173 = vector.broadcast %2 : vector<256x1xf32> to vector<256x64xf32>
    %174 = arith.mulf %172, %173 : vector<256x64xf32>
    %c1_111 = arith.constant 1 : index
    %c0_112 = arith.constant 0 : index
    %175 = vector.load %arg13[%c1_111, %c0_112] : memref<290x64xf32, #tpu.memory_space<vmem>>, vector<256x64xf32>
    %c2_113 = arith.constant 2 : index
    %c0_114 = arith.constant 0 : index
    %176 = vector.load %arg13[%c2_113, %c0_114] : memref<290x64xf32, #tpu.memory_space<vmem>>, vector<256x64xf32>
    %177 = vector.broadcast %3 : vector<256x1xf32> to vector<256x64xf32>
    %178 = arith.mulf %176, %177 : vector<256x64xf32>
    %c16_115 = arith.constant 16 : index
    %c0_116 = arith.constant 0 : index
    %179 = vector.load %arg13[%c16_115, %c0_116] : memref<290x64xf32, #tpu.memory_space<vmem>>, vector<256x64xf32>
    %180 = vector.broadcast %2 : vector<256x1xf32> to vector<256x64xf32>
    %181 = arith.mulf %179, %180 : vector<256x64xf32>
    %c17_117 = arith.constant 17 : index
    %c0_118 = arith.constant 0 : index
    %182 = vector.load %arg13[%c17_117, %c0_118] : memref<290x64xf32, #tpu.memory_space<vmem>>, vector<256x64xf32>
    %c18_119 = arith.constant 18 : index
    %c0_120 = arith.constant 0 : index
    %183 = vector.load %arg13[%c18_119, %c0_120] : memref<290x64xf32, #tpu.memory_space<vmem>>, vector<256x64xf32>
    %184 = vector.broadcast %3 : vector<256x1xf32> to vector<256x64xf32>
    %185 = arith.mulf %183, %184 : vector<256x64xf32>
    %c32_121 = arith.constant 32 : index
    %c0_122 = arith.constant 0 : index
    %186 = vector.load %arg13[%c32_121, %c0_122] : memref<290x64xf32, #tpu.memory_space<vmem>>, vector<256x64xf32>
    %187 = vector.broadcast %2 : vector<256x1xf32> to vector<256x64xf32>
    %188 = arith.mulf %186, %187 : vector<256x64xf32>
    %c33_123 = arith.constant 33 : index
    %c0_124 = arith.constant 0 : index
    %189 = vector.load %arg13[%c33_123, %c0_124] : memref<290x64xf32, #tpu.memory_space<vmem>>, vector<256x64xf32>
    %c34_125 = arith.constant 34 : index
    %c0_126 = arith.constant 0 : index
    %190 = vector.load %arg13[%c34_125, %c0_126] : memref<290x64xf32, #tpu.memory_space<vmem>>, vector<256x64xf32>
    %191 = vector.broadcast %3 : vector<256x1xf32> to vector<256x64xf32>
    %192 = arith.mulf %190, %191 : vector<256x64xf32>
    %193 = arith.truncf %174 : vector<256x64xf32> to vector<256x64xbf16>
    %c0_127 = arith.constant 0 : index
    %c0_128 = arith.constant 0 : index
    %c0_129 = arith.constant 0 : index
    %194 = vector.load %arg10[%c0_127, %c0_128, %c0_129] : memref<9x64x128xbf16, #tpu.memory_space<vmem>>, vector<1x64x128xbf16>
    %195 = vector.shape_cast %194 : vector<1x64x128xbf16> to vector<64x128xbf16>
    %cst_130 = arith.constant dense<0.000000e+00> : vector<256x128xf32>
    %196 = tpu.matmul %193, %195, %cst_130 {dimension_numbers = #tpu.dot_dimension_numbers<[1], [0], [0], [1], [0, 0, 1, 1], [], []>} : vector<256x64xbf16>, vector<64x128xbf16>, vector<256x128xf32> -> vector<256x128xf32>
    %197 = arith.addf %171, %196 : vector<256x128xf32>
    %198 = arith.truncf %175 : vector<256x64xf32> to vector<256x64xbf16>
    %c1_131 = arith.constant 1 : index
    %c0_132 = arith.constant 0 : index
    %c0_133 = arith.constant 0 : index
    %199 = vector.load %arg10[%c1_131, %c0_132, %c0_133] : memref<9x64x128xbf16, #tpu.memory_space<vmem>>, vector<1x64x128xbf16>
    %200 = vector.shape_cast %199 : vector<1x64x128xbf16> to vector<64x128xbf16>
    %cst_134 = arith.constant dense<0.000000e+00> : vector<256x128xf32>
    %201 = tpu.matmul %198, %200, %cst_134 {dimension_numbers = #tpu.dot_dimension_numbers<[1], [0], [0], [1], [0, 0, 1, 1], [], []>} : vector<256x64xbf16>, vector<64x128xbf16>, vector<256x128xf32> -> vector<256x128xf32>
    %202 = arith.addf %197, %201 : vector<256x128xf32>
    %203 = arith.truncf %178 : vector<256x64xf32> to vector<256x64xbf16>
    %c2_135 = arith.constant 2 : index
    %c0_136 = arith.constant 0 : index
    %c0_137 = arith.constant 0 : index
    %204 = vector.load %arg10[%c2_135, %c0_136, %c0_137] : memref<9x64x128xbf16, #tpu.memory_space<vmem>>, vector<1x64x128xbf16>
    %205 = vector.shape_cast %204 : vector<1x64x128xbf16> to vector<64x128xbf16>
    %cst_138 = arith.constant dense<0.000000e+00> : vector<256x128xf32>
    %206 = tpu.matmul %203, %205, %cst_138 {dimension_numbers = #tpu.dot_dimension_numbers<[1], [0], [0], [1], [0, 0, 1, 1], [], []>} : vector<256x64xbf16>, vector<64x128xbf16>, vector<256x128xf32> -> vector<256x128xf32>
    %207 = arith.addf %202, %206 : vector<256x128xf32>
    %208 = arith.truncf %181 : vector<256x64xf32> to vector<256x64xbf16>
    %c3_139 = arith.constant 3 : index
    %c0_140 = arith.constant 0 : index
    %c0_141 = arith.constant 0 : index
    %209 = vector.load %arg10[%c3_139, %c0_140, %c0_141] : memref<9x64x128xbf16, #tpu.memory_space<vmem>>, vector<1x64x128xbf16>
    %210 = vector.shape_cast %209 : vector<1x64x128xbf16> to vector<64x128xbf16>
    %cst_142 = arith.constant dense<0.000000e+00> : vector<256x128xf32>
    %211 = tpu.matmul %208, %210, %cst_142 {dimension_numbers = #tpu.dot_dimension_numbers<[1], [0], [0], [1], [0, 0, 1, 1], [], []>} : vector<256x64xbf16>, vector<64x128xbf16>, vector<256x128xf32> -> vector<256x128xf32>
    %212 = arith.addf %207, %211 : vector<256x128xf32>
    %213 = arith.truncf %182 : vector<256x64xf32> to vector<256x64xbf16>
    %c4_143 = arith.constant 4 : index
    %c0_144 = arith.constant 0 : index
    %c0_145 = arith.constant 0 : index
    %214 = vector.load %arg10[%c4_143, %c0_144, %c0_145] : memref<9x64x128xbf16, #tpu.memory_space<vmem>>, vector<1x64x128xbf16>
    %215 = vector.shape_cast %214 : vector<1x64x128xbf16> to vector<64x128xbf16>
    %cst_146 = arith.constant dense<0.000000e+00> : vector<256x128xf32>
    %216 = tpu.matmul %213, %215, %cst_146 {dimension_numbers = #tpu.dot_dimension_numbers<[1], [0], [0], [1], [0, 0, 1, 1], [], []>} : vector<256x64xbf16>, vector<64x128xbf16>, vector<256x128xf32> -> vector<256x128xf32>
    %217 = arith.addf %212, %216 : vector<256x128xf32>
    %218 = arith.truncf %185 : vector<256x64xf32> to vector<256x64xbf16>
    %c5_147 = arith.constant 5 : index
    %c0_148 = arith.constant 0 : index
    %c0_149 = arith.constant 0 : index
    %219 = vector.load %arg10[%c5_147, %c0_148, %c0_149] : memref<9x64x128xbf16, #tpu.memory_space<vmem>>, vector<1x64x128xbf16>
    %220 = vector.shape_cast %219 : vector<1x64x128xbf16> to vector<64x128xbf16>
    %cst_150 = arith.constant dense<0.000000e+00> : vector<256x128xf32>
    %221 = tpu.matmul %218, %220, %cst_150 {dimension_numbers = #tpu.dot_dimension_numbers<[1], [0], [0], [1], [0, 0, 1, 1], [], []>} : vector<256x64xbf16>, vector<64x128xbf16>, vector<256x128xf32> -> vector<256x128xf32>
    %222 = arith.addf %217, %221 : vector<256x128xf32>
    %223 = arith.truncf %188 : vector<256x64xf32> to vector<256x64xbf16>
    %c6_151 = arith.constant 6 : index
    %c0_152 = arith.constant 0 : index
    %c0_153 = arith.constant 0 : index
    %224 = vector.load %arg10[%c6_151, %c0_152, %c0_153] : memref<9x64x128xbf16, #tpu.memory_space<vmem>>, vector<1x64x128xbf16>
    %225 = vector.shape_cast %224 : vector<1x64x128xbf16> to vector<64x128xbf16>
    %cst_154 = arith.constant dense<0.000000e+00> : vector<256x128xf32>
    %226 = tpu.matmul %223, %225, %cst_154 {dimension_numbers = #tpu.dot_dimension_numbers<[1], [0], [0], [1], [0, 0, 1, 1], [], []>} : vector<256x64xbf16>, vector<64x128xbf16>, vector<256x128xf32> -> vector<256x128xf32>
    %227 = arith.addf %222, %226 : vector<256x128xf32>
    %228 = arith.truncf %189 : vector<256x64xf32> to vector<256x64xbf16>
    %c7_155 = arith.constant 7 : index
    %c0_156 = arith.constant 0 : index
    %c0_157 = arith.constant 0 : index
    %229 = vector.load %arg10[%c7_155, %c0_156, %c0_157] : memref<9x64x128xbf16, #tpu.memory_space<vmem>>, vector<1x64x128xbf16>
    %230 = vector.shape_cast %229 : vector<1x64x128xbf16> to vector<64x128xbf16>
    %cst_158 = arith.constant dense<0.000000e+00> : vector<256x128xf32>
    %231 = tpu.matmul %228, %230, %cst_158 {dimension_numbers = #tpu.dot_dimension_numbers<[1], [0], [0], [1], [0, 0, 1, 1], [], []>} : vector<256x64xbf16>, vector<64x128xbf16>, vector<256x128xf32> -> vector<256x128xf32>
    %232 = arith.addf %227, %231 : vector<256x128xf32>
    %233 = arith.truncf %192 : vector<256x64xf32> to vector<256x64xbf16>
    %c8_159 = arith.constant 8 : index
    %c0_160 = arith.constant 0 : index
    %c0_161 = arith.constant 0 : index
    %234 = vector.load %arg10[%c8_159, %c0_160, %c0_161] : memref<9x64x128xbf16, #tpu.memory_space<vmem>>, vector<1x64x128xbf16>
    %235 = vector.shape_cast %234 : vector<1x64x128xbf16> to vector<64x128xbf16>
    %cst_162 = arith.constant dense<0.000000e+00> : vector<256x128xf32>
    %236 = tpu.matmul %233, %235, %cst_162 {dimension_numbers = #tpu.dot_dimension_numbers<[1], [0], [0], [1], [0, 0, 1, 1], [], []>} : vector<256x64xbf16>, vector<64x128xbf16>, vector<256x128xf32> -> vector<256x128xf32>
    %237 = arith.addf %232, %236 : vector<256x128xf32>
    %c0_163 = arith.constant 0 : index
    %c0_164 = arith.constant 0 : index
    %238 = vector.load %arg11[%c0_163, %c0_164] : memref<1x128xf32, #tpu.memory_space<vmem>>, vector<1x128xf32>
    %239 = vector.broadcast %238 : vector<1x128xf32> to vector<256x128xf32>
    %240 = arith.addf %237, %239 : vector<256x128xf32>
    %cst_165 = arith.constant 0.000000e+00 : f32
    %241 = vector.broadcast %cst_165 : f32 to vector<256x128xf32>
    %242 = arith.subf %241, %240 : vector<256x128xf32>
    %243 = math.exp %242 : vector<256x128xf32>
    %cst_166 = arith.constant 1.000000e+00 : f32
    %244 = vector.broadcast %cst_166 : f32 to vector<256x128xf32>
    %245 = arith.addf %244, %243 : vector<256x128xf32>
    %cst_167 = arith.constant 1.000000e+00 : f32
    %246 = vector.broadcast %cst_167 : f32 to vector<256x128xf32>
    %247 = arith.divf %246, %245 : vector<256x128xf32>
    %c0_168 = arith.constant 0 : index
    %c0_169 = arith.constant 0 : index
    %c0_170 = arith.constant 0 : index
    %248 = vector.load %arg12[%c0_168, %c0_169, %c0_170] : memref<1x256x128xf32, #tpu.memory_space<vmem>>, vector<1x256x128xf32>
    %249 = vector.shape_cast %248 : vector<1x256x128xf32> to vector<256x128xf32>
    %250 = vector.shape_cast %247 : vector<256x128xf32> to vector<1x256x128xf32>
    tpu.vector_store %arg12[%c0_168, %c0_169, %c0_170], %250 {strides = array<i32>} : memref<1x256x128xf32, #tpu.memory_space<vmem>>, vector<1x256x128xf32>,
    return
  }
  func.func @transform_0(%arg0: i32) -> (i32, i32, i32) {
    %c0_i32 = arith.constant 0 : i32
    %c0_i32_0 = arith.constant 0 : i32
    %c0_i32_1 = arith.constant 0 : i32
    return %arg0, %c0_i32, %c0_i32_0 : i32, i32, i32
  }
  func.func @transform_1(%arg0: i32) -> (i32, i32) {
    %c0_i32 = arith.constant 0 : i32
    %c0_i32_0 = arith.constant 0 : i32
    %c0_i32_1 = arith.constant 0 : i32
    return %c0_i32, %c0_i32_0 : i32, i32
  }
  func.func @transform_2(%arg0: i32) -> (i32, i32) {
    %c0_i32 = arith.constant 0 : i32
    %c0_i32_0 = arith.constant 0 : i32
    %c0_i32_1 = arith.constant 0 : i32
    return %c0_i32, %c0_i32_0 : i32, i32
  }
  func.func @transform_3(%arg0: i32) -> (i32, i32, i32) {
    %c0_i32 = arith.constant 0 : i32
    %c0_i32_0 = arith.constant 0 : i32
    %c0_i32_1 = arith.constant 0 : i32
    %c0_i32_2 = arith.constant 0 : i32
    return %c0_i32, %c0_i32_0, %c0_i32_1 : i32, i32, i32
  }
  func.func @transform_4(%arg0: i32) -> (i32, i32) {
    %c0_i32 = arith.constant 0 : i32
    %c0_i32_0 = arith.constant 0 : i32
    %c0_i32_1 = arith.constant 0 : i32
    return %c0_i32, %c0_i32_0 : i32, i32
  }
  func.func @transform_5(%arg0: i32) -> (i32, i32) {
    %c0_i32 = arith.constant 0 : i32
    %c0_i32_0 = arith.constant 0 : i32
    %c0_i32_1 = arith.constant 0 : i32
    return %c0_i32, %c0_i32_0 : i32, i32
  }
  func.func @transform_6(%arg0: i32) -> (i32, i32, i32) {
    %c0_i32 = arith.constant 0 : i32
    %c0_i32_0 = arith.constant 0 : i32
    %c0_i32_1 = arith.constant 0 : i32
    %c0_i32_2 = arith.constant 0 : i32
    return %c0_i32, %c0_i32_0, %c0_i32_1 : i32, i32, i32
  }
  func.func @transform_7(%arg0: i32) -> (i32, i32) {
    %c0_i32 = arith.constant 0 : i32
    %c0_i32_0 = arith.constant 0 : i32
    %c0_i32_1 = arith.constant 0 : i32
    return %c0_i32, %c0_i32_0 : i32, i32
  }
  func.func @transform_8(%arg0: i32) -> (i32, i32) {
    %c0_i32 = arith.constant 0 : i32
    %c0_i32_0 = arith.constant 0 : i32
    %c0_i32_1 = arith.constant 0 : i32
    return %c0_i32, %c0_i32_0 : i32, i32
  }
  func.func @transform_9(%arg0: i32) -> (i32, i32, i32) {
    %c0_i32 = arith.constant 0 : i32
    %c0_i32_0 = arith.constant 0 : i32
    %c0_i32_1 = arith.constant 0 : i32
    %c0_i32_2 = arith.constant 0 : i32
    return %c0_i32, %c0_i32_0, %c0_i32_1 : i32, i32, i32
  }
  func.func @transform_10(%arg0: i32) -> (i32, i32) {
    %c0_i32 = arith.constant 0 : i32
    %c0_i32_0 = arith.constant 0 : i32
    %c0_i32_1 = arith.constant 0 : i32
    return %c0_i32, %c0_i32_0 : i32, i32
  }
  func.func @transform_11(%arg0: i32) -> (i32, i32, i32) {
    %c0_i32 = arith.constant 0 : i32
    %c0_i32_0 = arith.constant 0 : i32
    %c0_i32_1 = arith.constant 0 : i32
    return %arg0, %c0_i32, %c0_i32_0 : i32, i32, i32
  }
}

</mosaic_0001>

<llo_original>
// kernel: tpu_custom_call.1
$region0: #{tpu_custom_call.1}
  #allocation0 [shape = 'u32[]', space=smem, size = 0x4, offset = 0x4, fixed_abs, tag = 'smem constant byte address 0x4 - core index']
  #allocation1 [shape = 'u32[72,128]{1,0:T(1,128)}', space=vmem, size = 0x9000, scoped, tag = 'internal scratch']
  #allocation2 [shape = 'f32[290,64]{1,0:T(8,128)}', space=vmem, size = 0x25000, scoped, tag = 'scratch operand']
  %s0 = inlined_call_operand.vmem [shape: f32[2,256,64], index: 0, kind: input, shape index: {}]
  %s1 = inlined_call_operand.vmem [shape: f32[256,1], index: 1, kind: input, shape index: {}]
  %s2 = inlined_call_operand.vmem [shape: f32[256,1], index: 2, kind: input, shape index: {}]
  %s3 = inlined_call_operand.vmem [shape: f32[9,1,64], index: 3, kind: input, shape index: {}]
  %s4 = inlined_call_operand.vmem [shape: bf16[64,64], index: 4, kind: input, shape index: {}]
  %s5 = inlined_call_operand.vmem [shape: f32[1,64], index: 5, kind: input, shape index: {}]
  %s6 = inlined_call_operand.vmem [shape: f32[9,1,64], index: 6, kind: input, shape index: {}]
  %s7 = inlined_call_operand.vmem [shape: bf16[64,64], index: 7, kind: input, shape index: {}]
  %s8 = inlined_call_operand.vmem [shape: f32[1,64], index: 8, kind: input, shape index: {}]
  %s9 = inlined_call_operand.vmem [shape: bf16[9,64,128], index: 9, kind: input, shape index: {}]
  %s10 = inlined_call_operand.vmem [shape: f32[1,128], index: 10, kind: input, shape index: {}]
  %s11 = inlined_call_operand.hbm [shape: f32[2,256,128], index: 11, kind: output, shape index: {}]
  %s12 = sld [smem:[#allocation0]]
  $region77: #{tpu_custom_call.1} parent=0
    _
  %s14 = ssub.s32 1, %s12
  %s15 = scalar_select 0, %s14, %s12
  $region1: #{tpu_custom_call.1} parent=0
    #allocation3 [shape = 'u8[262144]{0}', space=vmem, size = 0x40000, scoped, tag = 'output window, operand 0']
    #allocation4 [shape = 's32[2]{0}', space=sflag, size = 0x8, scoped, tag = 'scoped memory for tpu_custom_call.1']
    %16 = vsyncpa [#allocation4], 0
    %s17 = scalar_lea.sflag [#allocation4], 1
    %18 = vsyncpa %s17, 0
    loop: start=0, step=1, limit=4
    $region2: #{tpu_custom_call.1} parent=1 // loop_pre_header
      _
    $region3: #{tpu_custom_call.1} parent=1 // loop_header
      %s20 = sphi 0, %s24
      %p21 = scmp.ge.s32.totalorder %s20, 4
      %s30 = sphi 0, %s32
      %s33 = sphi 0, %s30
      %s34 = sphi 0, %s33
      %s50 = sphi 0, %s34
      %s54 = sphi 0, %s54
      %s56 = sphi 0, %s54
      %s57 = sphi 0, %s56
      %s71 = sphi 0, %s57
      %s75 = sphi 0, %s75
      %s77 = sphi 0, %s75
      %s78 = sphi 0, %s77
      %s92 = sphi 0, %s78
      %s96 = sphi 0, %s96
      %s98 = sphi 0, %s96
      %s99 = sphi 0, %s98
      %s113 = sphi 0, %s99
      %s117 = sphi 0, %s117
      %s119 = sphi 0, %s117
      %s120 = sphi 0, %s119
      %s134 = sphi 0, %s120
      %s138 = sphi 0, %s138
      %s140 = sphi 0, %s138
      %s141 = sphi 0, %s140
      %s155 = sphi 0, %s141
      %s159 = sphi 0, %s159
      %s161 = sphi 0, %s159
      %s162 = sphi 0, %s161
      %s176 = sphi 0, %s162
      %s180 = sphi 0, %s180
      %s182 = sphi 0, %s180
      %s183 = sphi 0, %s182
      %s197 = sphi 0, %s183
      %s201 = sphi 0, %s201
      %s203 = sphi 0, %s201
      %s204 = sphi 0, %s203
      %s218 = sphi 0, %s204
      %s222 = sphi 0, %s222
      %s224 = sphi 0, %s222
      %s225 = sphi 0, %s224
      %s239 = sphi 0, %s225
      %s243 = sphi 0, %s243
      %s245 = sphi 0, %s243
      %s246 = sphi 0, %s245
      %s260 = sphi 0, %s246
      %s266 = sphi 0, %s268
      %s269 = sphi 0, %s266
      %s270 = sphi 0, %s269
      %s286 = sphi 0, %s270
    $region4: #{tpu_custom_call.1} parent=1 // loop_header_branch
      %23 = sbr.rel (%p21) target = $region8
    $region5: #{tpu_custom_call.1} parent=1 // loop_body
      %s25 = ssub.s32 %s20, 1
      %s26 = ssub.s32 %s20, 2
      %s27 = sadd.s32 %s20, 1
      %s28 = ssub.s32 %s20, %s27
      %p29 = scmp.eq.s32.totalorder %s28, 0
      %s31 = sadd.s32 %s30, 1
      %s32 = scalar_select %p29, %s30, %s31
      %p35 = pneg %p29
      %p36 = scmp.eq.s32.totalorder %s20, 1
      %p37 = por %p35, %p36
      %p38 = scmp.ne.s32.totalorder %s30, %s33
      %p39 = scmp.eq.s32.totalorder %s20, 0
      %p40 = por %p38, %p39
      %p41 = scmp.ne.s32.totalorder %s30, %s33
      %p42 = scmp.eq.s32.totalorder %s25, 1
      %p43 = por %p41, %p42
      %p44 = scmp.ne.s32.totalorder %s33, %s34
      %p45 = scmp.eq.s32.totalorder %s25, 0
      %p46 = por %p44, %p45
      %p47 = scmp.ne.s32.totalorder %s33, %s34
      %p48 = scmp.eq.s32.totalorder %s26, 1
      %p49 = por %p47, %p48
      %p51 = scmp.ne.s32.totalorder %s34, %s50
      %p52 = scmp.eq.s32.totalorder %s26, 0
      %p53 = por %p51, %p52
      %s55 = sadd.s32 %s54, 1
      %p58 = scmp.eq.s32.totalorder %s20, 1
      %p59 = scmp.ne.s32.totalorder %s54, %s56
      %p60 = scmp.eq.s32.totalorder %s20, 0
      %p61 = por %p59, %p60
      %p62 = scmp.ne.s32.totalorder %s54, %s56
      %p63 = scmp.eq.s32.totalorder %s25, 1
      %p64 = por %p62, %p63
      %p65 = scmp.ne.s32.totalorder %s56, %s57
      %p66 = scmp.eq.s32.totalorder %s25, 0
      %p67 = por %p65, %p66
      %p68 = scmp.ne.s32.totalorder %s56, %s57
      %p69 = scmp.eq.s32.totalorder %s26, 1
      %p70 = por %p68, %p69
      %p72 = scmp.ne.s32.totalorder %s57, %s71
      %p73 = scmp.eq.s32.totalorder %s26, 0
      %p74 = por %p72, %p73
      %s76 = sadd.s32 %s75, 1
      %p79 = scmp.eq.s32.totalorder %s20, 1
      %p80 = scmp.ne.s32.totalorder %s75, %s77
      %p81 = scmp.eq.s32.totalorder %s20, 0
      %p82 = por %p80, %p81
      %p83 = scmp.ne.s32.totalorder %s75, %s77
      %p84 = scmp.eq.s32.totalorder %s25, 1
      %p85 = por %p83, %p84
      %p86 = scmp.ne.s32.totalorder %s77, %s78
      %p87 = scmp.eq.s32.totalorder %s25, 0
      %p88 = por %p86, %p87
      %p89 = scmp.ne.s32.totalorder %s77, %s78
      %p90 = scmp.eq.s32.totalorder %s26, 1
      %p91 = por %p89, %p90
      %p93 = scmp.ne.s32.totalorder %s78, %s92
      %p94 = scmp.eq.s32.totalorder %s26, 0
      %p95 = por %p93, %p94
      %s97 = sadd.s32 %s96, 1
      %p100 = scmp.eq.s32.totalorder %s20, 1
      %p101 = scmp.ne.s32.totalorder %s96, %s98
      %p102 = scmp.eq.s32.totalorder %s20, 0
      %p103 = por %p101, %p102
      %p104 = scmp.ne.s32.totalorder %s96, %s98
      %p105 = scmp.eq.s32.totalorder %s25, 1
      %p106 = por %p104, %p105
      %p107 = scmp.ne.s32.totalorder %s98, %s99
      %p108 = scmp.eq.s32.totalorder %s25, 0
      %p109 = por %p107, %p108
      %p110 = scmp.ne.s32.totalorder %s98, %s99
      %p111 = scmp.eq.s32.totalorder %s26, 1
      %p112 = por %p110, %p111
      %p114 = scmp.ne.s32.totalorder %s99, %s113
      %p115 = scmp.eq.s32.totalorder %s26, 0
      %p116 = por %p114, %p115
      %s118 = sadd.s32 %s117, 1
      %p121 = scmp.eq.s32.totalorder %s20, 1
      %p122 = scmp.ne.s32.totalorder %s117, %s119
      %p123 = scmp.eq.s32.totalorder %s20, 0
      %p124 = por %p122, %p123
      %p125 = scmp.ne.s32.totalorder %s117, %s119
      %p126 = scmp.eq.s32.totalorder %s25, 1
      %p127 = por %p125, %p126
      %p128 = scmp.ne.s32.totalorder %s119, %s120
      %p129 = scmp.eq.s32.totalorder %s25, 0
      %p130 = por %p128, %p129
      %p131 = scmp.ne.s32.totalorder %s119, %s120
      %p132 = scmp.eq.s32.totalorder %s26, 1
      %p133 = por %p131, %p132
      %p135 = scmp.ne.s32.totalorder %s120, %s134
      %p136 = scmp.eq.s32.totalorder %s26, 0
      %p137 = por %p135, %p136
      %s139 = sadd.s32 %s138, 1
      %p142 = scmp.eq.s32.totalorder %s20, 1
      %p143 = scmp.ne.s32.totalorder %s138, %s140
      %p144 = scmp.eq.s32.totalorder %s20, 0
      %p145 = por %p143, %p144
      %p146 = scmp.ne.s32.totalorder %s138, %s140
      %p147 = scmp.eq.s32.totalorder %s25, 1
      %p148 = por %p146, %p147
      %p149 = scmp.ne.s32.totalorder %s140, %s141
      %p150 = scmp.eq.s32.totalorder %s25, 0
      %p151 = por %p149, %p150
      %p152 = scmp.ne.s32.totalorder %s140, %s141
      %p153 = scmp.eq.s32.totalorder %s26, 1
      %p154 = por %p152, %p153
      %p156 = scmp.ne.s32.totalorder %s141, %s155
      %p157 = scmp.eq.s32.totalorder %s26, 0
      %p158 = por %p156, %p157
      %s160 = sadd.s32 %s159, 1
      %p163 = scmp.eq.s32.totalorder %s20, 1
      %p164 = scmp.ne.s32.totalorder %s159, %s161
      %p165 = scmp.eq.s32.totalorder %s20, 0
      %p166 = por %p164, %p165
      %p167 = scmp.ne.s32.totalorder %s159, %s161
      %p168 = scmp.eq.s32.totalorder %s25, 1
      %p169 = por %p167, %p168
      %p170 = scmp.ne.s32.totalorder %s161, %s162
      %p171 = scmp.eq.s32.totalorder %s25, 0
      %p172 = por %p170, %p171
      %p173 = scmp.ne.s32.totalorder %s161, %s162
      %p174 = scmp.eq.s32.totalorder %s26, 1
      %p175 = por %p173, %p174
      %p177 = scmp.ne.s32.totalorder %s162, %s176
      %p178 = scmp.eq.s32.totalorder %s26, 0
      %p179 = por %p177, %p178
      %s181 = sadd.s32 %s180, 1
      %p184 = scmp.eq.s32.totalorder %s20, 1
      %p185 = scmp.ne.s32.totalorder %s180, %s182
      %p186 = scmp.eq.s32.totalorder %s20, 0
      %p187 = por %p185, %p186
      %p188 = scmp.ne.s32.totalorder %s180, %s182
      %p189 = scmp.eq.s32.totalorder %s25, 1
      %p190 = por %p188, %p189
      %p191 = scmp.ne.s32.totalorder %s182, %s183
      %p192 = scmp.eq.s32.totalorder %s25, 0
      %p193 = por %p191, %p192
      %p194 = scmp.ne.s32.totalorder %s182, %s183
      %p195 = scmp.eq.s32.totalorder %s26, 1
      %p196 = por %p194, %p195
      %p198 = scmp.ne.s32.totalorder %s183, %s197
      %p199 = scmp.eq.s32.totalorder %s26, 0
      %p200 = por %p198, %p199
      %s202 = sadd.s32 %s201, 1
      %p205 = scmp.eq.s32.totalorder %s20, 1
      %p206 = scmp.ne.s32.totalorder %s201, %s203
      %p207 = scmp.eq.s32.totalorder %s20, 0
      %p208 = por %p206, %p207
      %p209 = scmp.ne.s32.totalorder %s201, %s203
      %p210 = scmp.eq.s32.totalorder %s25, 1
      %p211 = por %p209, %p210
      %p212 = scmp.ne.s32.totalorder %s203, %s204
      %p213 = scmp.eq.s32.totalorder %s25, 0
      %p214 = por %p212, %p213
      %p215 = scmp.ne.s32.totalorder %s203, %s204
      %p216 = scmp.eq.s32.totalorder %s26, 1
      %p217 = por %p215, %p216
      %p219 = scmp.ne.s32.totalorder %s204, %s218
      %p220 = scmp.eq.s32.totalorder %s26, 0
      %p221 = por %p219, %p220
      %s223 = sadd.s32 %s222, 1
      %p226 = scmp.eq.s32.totalorder %s20, 1
      %p227 = scmp.ne.s32.totalorder %s222, %s224
      %p228 = scmp.eq.s32.totalorder %s20, 0
      %p229 = por %p227, %p228
      %p230 = scmp.ne.s32.totalorder %s222, %s224
      %p231 = scmp.eq.s32.totalorder %s25, 1
      %p232 = por %p230, %p231
      %p233 = scmp.ne.s32.totalorder %s224, %s225
      %p234 = scmp.eq.s32.totalorder %s25, 0
      %p235 = por %p233, %p234
      %p236 = scmp.ne.s32.totalorder %s224, %s225
      %p237 = scmp.eq.s32.totalorder %s26, 1
      %p238 = por %p236, %p237
      %p240 = scmp.ne.s32.totalorder %s225, %s239
      %p241 = scmp.eq.s32.totalorder %s26, 0
      %p242 = por %p240, %p241
      %s244 = sadd.s32 %s243, 1
      %p247 = scmp.eq.s32.totalorder %s20, 1
      %p248 = scmp.ne.s32.totalorder %s243, %s245
      %p249 = scmp.eq.s32.totalorder %s20, 0
      %p250 = por %p248, %p249
      %p251 = scmp.ne.s32.totalorder %s243, %s245
      %p252 = scmp.eq.s32.totalorder %s25, 1
      %p253 = por %p251, %p252
      %p254 = scmp.ne.s32.totalorder %s245, %s246
      %p255 = scmp.eq.s32.totalorder %s25, 0
      %p256 = por %p254, %p255
      %p257 = scmp.ne.s32.totalorder %s245, %s246
      %p258 = scmp.eq.s32.totalorder %s26, 1
      %p259 = por %p257, %p258
      %p261 = scmp.ne.s32.totalorder %s246, %s260
      %p262 = scmp.eq.s32.totalorder %s26, 0
      %p263 = por %p261, %p262
      %s264 = ssub.s32 %s20, %s27
      %p265 = scmp.eq.s32.totalorder %s264, 0
      %s267 = sadd.s32 %s266, 1
      %s268 = scalar_select %p265, %s266, %s267
      %p271 = pneg %p265
      %p272 = scmp.eq.s32.totalorder %s20, 1
      %p273 = por %p271, %p272
      %p274 = scmp.ne.s32.totalorder %s266, %s269
      %p275 = scmp.eq.s32.totalorder %s20, 0
      %p276 = por %p274, %p275
      %p277 = scmp.ne.s32.totalorder %s266, %s269
      %p278 = scmp.eq.s32.totalorder %s25, 1
      %p279 = por %p277, %p278
      %p280 = scmp.ne.s32.totalorder %s269, %s270
      %p281 = scmp.eq.s32.totalorder %s25, 0
      %p282 = por %p280, %p281
      %p283 = scmp.ne.s32.totalorder %s269, %s270
      %p284 = scmp.eq.s32.totalorder %s26, 1
      %p285 = por %p283, %p284
      %p287 = scmp.ne.s32.totalorder %s270, %s286
      %p288 = scmp.eq.s32.totalorder %s26, 0
      %p289 = por %p287, %p288
      %p290 = scmp.le.s32.totalorder 1, %s20
      %p291 = scmp.lt.s32.totalorder %s20, 3
      %p292 = pnand %p290, %p291
      %p293 = pneg %p292
      // Predicated region
      $region9: #{tpu_custom_call.1} parent=5 // pred_check
        _
      $region10: #{tpu_custom_call.1} parent=5 // pred_check_branch
        %295 = sbr.rel (%p292) target = $region12
      $region11: #{tpu_custom_call.1} parent=5 // pred_region
        %s296 = ssub.s32 %s20, 1
        // Predicated region
        $region13: #{tpu_custom_call.1} parent=11 // pred_check
          %p297 = pneg %p67
        $region14: #{tpu_custom_call.1} parent=11 // pred_check_branch
          %299 = sbr.rel (%p297) target = $region16
        $region15: #{tpu_custom_call.1} parent=11 // pred_region
          _
        $region16: #{tpu_custom_call.1} parent=11 // pred_fallthru
          _
        // Predicated region
        $region17: #{tpu_custom_call.1} parent=11 // pred_check
          %p300 = pneg %p88
        $region18: #{tpu_custom_call.1} parent=11 // pred_check_branch
          %302 = sbr.rel (%p300) target = $region20
        $region19: #{tpu_custom_call.1} parent=11 // pred_region
          _
        $region20: #{tpu_custom_call.1} parent=11 // pred_fallthru
          _
        // Predicated region
        $region21: #{tpu_custom_call.1} parent=11 // pred_check
          %p303 = pneg %p109
        $region22: #{tpu_custom_call.1} parent=11 // pred_check_branch
          %305 = sbr.rel (%p303) target = $region24
        $region23: #{tpu_custom_call.1} parent=11 // pred_region
          _
        $region24: #{tpu_custom_call.1} parent=11 // pred_fallthru
          _
        // Predicated region
        $region25: #{tpu_custom_call.1} parent=11 // pred_check
          %p306 = pneg %p130
        $region26: #{tpu_custom_call.1} parent=11 // pred_check_branch
          %308 = sbr.rel (%p306) target = $region28
        $region27: #{tpu_custom_call.1} parent=11 // pred_region
          _
        $region28: #{tpu_custom_call.1} parent=11 // pred_fallthru
          _
        // Predicated region
        $region29: #{tpu_custom_call.1} parent=11 // pred_check
          %p309 = pneg %p151
        $region30: #{tpu_custom_call.1} parent=11 // pred_check_branch
          %311 = sbr.rel (%p309) target = $region32
        $region31: #{tpu_custom_call.1} parent=11 // pred_region
          _
        $region32: #{tpu_custom_call.1} parent=11 // pred_fallthru
          _
        // Predicated region
        $region33: #{tpu_custom_call.1} parent=11 // pred_check
          %p312 = pneg %p172
        $region34: #{tpu_custom_call.1} parent=11 // pred_check_branch
          %314 = sbr.rel (%p312) target = $region36
        $region35: #{tpu_custom_call.1} parent=11 // pred_region
          _
        $region36: #{tpu_custom_call.1} parent=11 // pred_fallthru
          _
        // Predicated region
        $region37: #{tpu_custom_call.1} parent=11 // pred_check
          %p315 = pneg %p193
        $region38: #{tpu_custom_call.1} parent=11 // pred_check_branch
          %317 = sbr.rel (%p315) target = $region40
        $region39: #{tpu_custom_call.1} parent=11 // pred_region
          _
        $region40: #{tpu_custom_call.1} parent=11 // pred_fallthru
          _
        // Predicated region
        $region41: #{tpu_custom_call.1} parent=11 // pred_check
          %p318 = pneg %p214
        $region42: #{tpu_custom_call.1} parent=11 // pred_check_branch
          %320 = sbr.rel (%p318) target = $region44
        $region43: #{tpu_custom_call.1} parent=11 // pred_region
          _
        $region44: #{tpu_custom_call.1} parent=11 // pred_fallthru
          _
        // Predicated region
        $region45: #{tpu_custom_call.1} parent=11 // pred_check
          %p321 = pneg %p235
        $region46: #{tpu_custom_call.1} parent=11 // pred_check_branch
          %323 = sbr.rel (%p321) target = $region48
        $region47: #{tpu_custom_call.1} parent=11 // pred_region
          _
        $region48: #{tpu_custom_call.1} parent=11 // pred_fallthru
          _
        // Predicated region
        $region49: #{tpu_custom_call.1} parent=11 // pred_check
          %p324 = pneg %p256
        $region50: #{tpu_custom_call.1} parent=11 // pred_check_branch
          %326 = sbr.rel (%p324) target = $region52
        $region51: #{tpu_custom_call.1} parent=11 // pred_region
          _
        $region52: #{tpu_custom_call.1} parent=11 // pred_fallthru
          _
      $region12: #{tpu_custom_call.1} parent=5 // pred_fallthru
        _
      %p327 = scmp.lt.s32.totalorder %s20, 2
      // Predicated region
      $region53: #{tpu_custom_call.1} parent=5 // pred_check
        %p328 = pneg %p327
      $region54: #{tpu_custom_call.1} parent=5 // pred_check_branch
        %330 = sbr.rel (%p328) target = $region56
      $region55: #{tpu_custom_call.1} parent=5 // pred_region
        // Predicated region
        $region57: #{tpu_custom_call.1} parent=55 // pred_check
          %p331 = pneg %p40
        $region58: #{tpu_custom_call.1} parent=55 // pred_check_branch
          %333 = sbr.rel (%p331) target = $region60
        $region59: #{tpu_custom_call.1} parent=55 // pred_region
          %p334 = scmp.lt.s32.totalorder %s20, 1
          %s335 = scalar_select %p334, %s20, 1
          %s336 = smul.addr %s335, 32
          %s337 = smul.addr %s336, 8
          %s338 = scalar_lea.vmem %s0, %s337
        $region60: #{tpu_custom_call.1} parent=55 // pred_fallthru
          _
      $region56: #{tpu_custom_call.1} parent=5 // pred_fallthru
        _
      %p339 = scmp.le.s32.totalorder 1, %s20
      %p340 = scmp.lt.s32.totalorder %s20, 3
      %p341 = pnand %p339, %p340
      %p342 = pneg %p341
      // Predicated region
      $region61: #{tpu_custom_call.1} parent=5 // pred_check
        _
      $region62: #{tpu_custom_call.1} parent=5 // pred_check_branch
        %344 = sbr.rel (%p341) target = $region64
      $region63: #{tpu_custom_call.1} parent=5 // pred_region
        %s345 = ssub.s32 %s20, 1
        %p346 = scmp.lt.s32.totalorder %s25, 1
        %s347 = scalar_select %p346, %s25, 1
        %s348 = smul.addr %s347, 32
        %s349 = smul.addr %s348, 8
        %s350 = scalar_lea.vmem %s0, %s349
        %p351 = pneg %p46
        %p352 = pneg %p43
        %p353 = pneg %p67
        %p354 = pneg %p64
        %p355 = pneg %p88
        %p356 = pneg %p85
        %p357 = pneg %p109
        %p358 = pneg %p106
        %p359 = pneg %p130
        %p360 = pneg %p127
        %p361 = pneg %p151
        %p362 = pneg %p148
        %p363 = pneg %p172
        %p364 = pneg %p169
        %p365 = pneg %p193
        %p366 = pneg %p190
        %p367 = pneg %p214
        %p368 = pneg %p211
        %p369 = pneg %p235
        %p370 = pneg %p232
        %p371 = pneg %p256
        %p372 = pneg %p253
        %p373 = pneg %p282
        %p374 = pneg %p279
        %s375 = sand.u32 %s269, 1
        %s376 = scalar_lea.sflag [#allocation4], %s375
        %s377 = sand.u32 %s269, 1
        %s378 = smul.addr %s377, 256
        %s379 = scalar_lea.vmem [#allocation3], %s378
        %p380 = scmp.lt.s32.totalorder %s25, 1
        %s381 = scalar_select %p380, %s25, 1
        %s382 = smul.addr %s381, 32
        %s383 = smul.addr %s382, 8
        %s384 = scalar_lea.vmem %s0, %s383
        %vm386 = vcmask 523264
        %387 = vst.msk [vmem:[#allocation2] sm:$0xff] %vm386, 0.0
        %388 = vst.msk [vmem:[#allocation2 + $0x8] sm:$0xff] %vm386, 0.0
        %389 = vst.msk [vmem:[#allocation2 + $0x10] sm:$0xff] %vm386, 0.0
        %390 = vst.msk [vmem:[#allocation2 + $0x18] sm:$0xff] %vm386, 0.0
        %391 = vst.msk [vmem:[#allocation2 + $0x20] sm:$0xff] %vm386, 0.0
        %392 = vst.msk [vmem:[#allocation2 + $0x28] sm:$0xff] %vm386, 0.0
        %393 = vst.msk [vmem:[#allocation2 + $0x30] sm:$0xff] %vm386, 0.0
        %394 = vst.msk [vmem:[#allocation2 + $0x38] sm:$0xff] %vm386, 0.0
        %395 = vst.msk [vmem:[#allocation2 + $0x40] sm:$0xff] %vm386, 0.0
        %396 = vst.msk [vmem:[#allocation2 + $0x48] sm:$0xff] %vm386, 0.0
        %397 = vst.msk [vmem:[#allocation2 + $0x50] sm:$0xff] %vm386, 0.0
        %398 = vst.msk [vmem:[#allocation2 + $0x58] sm:$0xff] %vm386, 0.0
        %399 = vst.msk [vmem:[#allocation2 + $0x60] sm:$0xff] %vm386, 0.0
        %400 = vst.msk [vmem:[#allocation2 + $0x68] sm:$0xff] %vm386, 0.0
        %401 = vst.msk [vmem:[#allocation2 + $0x70] sm:$0xff] %vm386, 0.0
        %402 = vst.msk [vmem:[#allocation2 + $0x78] sm:$0xff] %vm386, 0.0
        %403 = vst.msk [vmem:[#allocation2 + $0x80] sm:$0xff] %vm386, 0.0
        %404 = vst.msk [vmem:[#allocation2 + $0x88] sm:$0xff] %vm386, 0.0
        %405 = vst.msk [vmem:[#allocation2 + $0x90] sm:$0xff] %vm386, 0.0
        %406 = vst.msk [vmem:[#allocation2 + $0x98] sm:$0xff] %vm386, 0.0
        %407 = vst.msk [vmem:[#allocation2 + $0xa0] sm:$0xff] %vm386, 0.0
        %408 = vst.msk [vmem:[#allocation2 + $0xa8] sm:$0xff] %vm386, 0.0
        %409 = vst.msk [vmem:[#allocation2 + $0xb0] sm:$0xff] %vm386, 0.0
        %410 = vst.msk [vmem:[#allocation2 + $0xb8] sm:$0xff] %vm386, 0.0
        %411 = vst.msk [vmem:[#allocation2 + $0xc0] sm:$0xff] %vm386, 0.0
        %412 = vst.msk [vmem:[#allocation2 + $0xc8] sm:$0xff] %vm386, 0.0
        %413 = vst.msk [vmem:[#allocation2 + $0xd0] sm:$0xff] %vm386, 0.0
        %414 = vst.msk [vmem:[#allocation2 + $0xd8] sm:$0xff] %vm386, 0.0
        %415 = vst.msk [vmem:[#allocation2 + $0xe0] sm:$0xff] %vm386, 0.0
        %416 = vst.msk [vmem:[#allocation2 + $0xe8] sm:$0xff] %vm386, 0.0
        %417 = vst.msk [vmem:[#allocation2 + $0xf0] sm:$0xff] %vm386, 0.0
        %418 = vst.msk [vmem:[#allocation2 + $0xf8] sm:$0xff] %vm386, 0.0
        %419 = vst.msk [vmem:[#allocation2 + $0x100] sm:$0xff] %vm386, 0.0
        %420 = vst.msk [vmem:[#allocation2 + $0x108] sm:$0xff] %vm386, 0.0
        %421 = vst.msk [vmem:[#allocation2 + $0x110] sm:$0xff] %vm386, 0.0
        %422 = vst.msk [vmem:[#allocation2 + $0x118] sm:$0xff] %vm386, 0.0
        %vm423 = vcmask 517120
        %424 = vst.msk [vmem:[#allocation2 + $0x120] sm:$0x3] %vm423, 0.0
        %v425 = vld [vmem:[%s1] sm:$0xff]
        %v426 = vld [vmem:[%s1 + $0x8] sm:$0xff]
        %v427 = vld [vmem:[%s1 + $0x10] sm:$0xff]
        %v428 = vld [vmem:[%s1 + $0x18] sm:$0xff]
        %v429 = vld [vmem:[%s1 + $0x20] sm:$0xff]
        %v430 = vld [vmem:[%s1 + $0x28] sm:$0xff]
        %v431 = vld [vmem:[%s1 + $0x30] sm:$0xff]
        %v432 = vld [vmem:[%s1 + $0x38] sm:$0xff]
        %v433 = vld [vmem:[%s1 + $0x40] sm:$0xff]
        %v434 = vld [vmem:[%s1 + $0x48] sm:$0xff]
        %v435 = vld [vmem:[%s1 + $0x50] sm:$0xff]
        %v436 = vld [vmem:[%s1 + $0x58] sm:$0xff]
        %v437 = vld [vmem:[%s1 + $0x60] sm:$0xff]
        %v438 = vld [vmem:[%s1 + $0x68] sm:$0xff]
        %v439 = vld [vmem:[%s1 + $0x70] sm:$0xff]
        %v440 = vld [vmem:[%s1 + $0x78] sm:$0xff]
        %v441 = vld [vmem:[%s1 + $0x80] sm:$0xff]
        %v442 = vld [vmem:[%s1 + $0x88] sm:$0xff]
        %v443 = vld [vmem:[%s1 + $0x90] sm:$0xff]
        %v444 = vld [vmem:[%s1 + $0x98] sm:$0xff]
        %v445 = vld [vmem:[%s1 + $0xa0] sm:$0xff]
        %v446 = vld [vmem:[%s1 + $0xa8] sm:$0xff]
        %v447 = vld [vmem:[%s1 + $0xb0] sm:$0xff]
        %v448 = vld [vmem:[%s1 + $0xb8] sm:$0xff]
        %v449 = vld [vmem:[%s1 + $0xc0] sm:$0xff]
        %v450 = vld [vmem:[%s1 + $0xc8] sm:$0xff]
        %v451 = vld [vmem:[%s1 + $0xd0] sm:$0xff]
        %v452 = vld [vmem:[%s1 + $0xd8] sm:$0xff]
        %v453 = vld [vmem:[%s1 + $0xe0] sm:$0xff]
        %v454 = vld [vmem:[%s1 + $0xe8] sm:$0xff]
        %v455 = vld [vmem:[%s1 + $0xf0] sm:$0xff]
        %v456 = vld [vmem:[%s1 + $0xf8] sm:$0xff]
        %v457 = vld [vmem:[%s2] sm:$0xff]
        %v458 = vld [vmem:[%s2 + $0x8] sm:$0xff]
        %v459 = vld [vmem:[%s2 + $0x10] sm:$0xff]
        %v460 = vld [vmem:[%s2 + $0x18] sm:$0xff]
        %v461 = vld [vmem:[%s2 + $0x20] sm:$0xff]
        %v462 = vld [vmem:[%s2 + $0x28] sm:$0xff]
        %v463 = vld [vmem:[%s2 + $0x30] sm:$0xff]
        %v464 = vld [vmem:[%s2 + $0x38] sm:$0xff]
        %v465 = vld [vmem:[%s2 + $0x40] sm:$0xff]
        %v466 = vld [vmem:[%s2 + $0x48] sm:$0xff]
        %v467 = vld [vmem:[%s2 + $0x50] sm:$0xff]
        %v468 = vld [vmem:[%s2 + $0x58] sm:$0xff]
        %v469 = vld [vmem:[%s2 + $0x60] sm:$0xff]
        %v470 = vld [vmem:[%s2 + $0x68] sm:$0xff]
        %v471 = vld [vmem:[%s2 + $0x70] sm:$0xff]
        %v472 = vld [vmem:[%s2 + $0x78] sm:$0xff]
        %v473 = vld [vmem:[%s2 + $0x80] sm:$0xff]
        %v474 = vld [vmem:[%s2 + $0x88] sm:$0xff]
        %v475 = vld [vmem:[%s2 + $0x90] sm:$0xff]
        %v476 = vld [vmem:[%s2 + $0x98] sm:$0xff]
        %v477 = vld [vmem:[%s2 + $0xa0] sm:$0xff]
        %v478 = vld [vmem:[%s2 + $0xa8] sm:$0xff]
        %v479 = vld [vmem:[%s2 + $0xb0] sm:$0xff]
        %v480 = vld [vmem:[%s2 + $0xb8] sm:$0xff]
        %v481 = vld [vmem:[%s2 + $0xc0] sm:$0xff]
        %v482 = vld [vmem:[%s2 + $0xc8] sm:$0xff]
        %v483 = vld [vmem:[%s2 + $0xd0] sm:$0xff]
        %v484 = vld [vmem:[%s2 + $0xd8] sm:$0xff]
        %v485 = vld [vmem:[%s2 + $0xe0] sm:$0xff]
        %v486 = vld [vmem:[%s2 + $0xe8] sm:$0xff]
        %v487 = vld [vmem:[%s2 + $0xf0] sm:$0xff]
        %v488 = vld [vmem:[%s2 + $0xf8] sm:$0xff]
        %v489 = vld [vmem:[%s384] sm:$0xff]
        %v490 = vld [vmem:[%s384 + $0x8] sm:$0xff]
        %v491 = vld [vmem:[%s384 + $0x10] sm:$0xff]
        %v492 = vld [vmem:[%s384 + $0x18] sm:$0xff]
        %v493 = vld [vmem:[%s384 + $0x20] sm:$0xff]
        %v494 = vld [vmem:[%s384 + $0x28] sm:$0xff]
        %v495 = vld [vmem:[%s384 + $0x30] sm:$0xff]
        %v496 = vld [vmem:[%s384 + $0x38] sm:$0xff]
        %v497 = vld [vmem:[%s384 + $0x40] sm:$0xff]
        %v498 = vld [vmem:[%s384 + $0x48] sm:$0xff]
        %v499 = vld [vmem:[%s384 + $0x50] sm:$0xff]
        %v500 = vld [vmem:[%s384 + $0x58] sm:$0xff]
        %v501 = vld [vmem:[%s384 + $0x60] sm:$0xff]
        %v502 = vld [vmem:[%s384 + $0x68] sm:$0xff]
        %v503 = vld [vmem:[%s384 + $0x70] sm:$0xff]
        %v504 = vld [vmem:[%s384 + $0x78] sm:$0xff]
        %v505 = vld [vmem:[%s384 + $0x80] sm:$0xff]
        %v506 = vld [vmem:[%s384 + $0x88] sm:$0xff]
        %v507 = vld [vmem:[%s384 + $0x90] sm:$0xff]
        %v508 = vld [vmem:[%s384 + $0x98] sm:$0xff]
        %v509 = vld [vmem:[%s384 + $0xa0] sm:$0xff]
        %v510 = vld [vmem:[%s384 + $0xa8] sm:$0xff]
        %v511 = vld [vmem:[%s384 + $0xb0] sm:$0xff]
        %v512 = vld [vmem:[%s384 + $0xb8] sm:$0xff]
        %v513 = vld [vmem:[%s384 + $0xc0] sm:$0xff]
        %v514 = vld [vmem:[%s384 + $0xc8] sm:$0xff]
        %v515 = vld [vmem:[%s384 + $0xd0] sm:$0xff]
        %v516 = vld [vmem:[%s384 + $0xd8] sm:$0xff]
        %v517 = vld [vmem:[%s384 + $0xe0] sm:$0xff]
        %v518 = vld [vmem:[%s384 + $0xe8] sm:$0xff]
        %v519 = vld [vmem:[%s384 + $0xf0] sm:$0xff]
        %v520 = vld [vmem:[%s384 + $0xf8] sm:$0xff]
        %521 = vst.msk [vmem:[#allocation2 + $0x11] sm:$0xff] %vm386, %v489
        %522 = vst.msk [vmem:[#allocation2 + $0x19] sm:$0xff] %vm386, %v490
        %523 = vst.msk [vmem:[#allocation2 + $0x21] sm:$0xff] %vm386, %v491
        %524 = vst.msk [vmem:[#allocation2 + $0x29] sm:$0xff] %vm386, %v492
        %525 = vst.msk [vmem:[#allocation2 + $0x31] sm:$0xff] %vm386, %v493
        %526 = vst.msk [vmem:[#allocation2 + $0x39] sm:$0xff] %vm386, %v494
        %527 = vst.msk [vmem:[#allocation2 + $0x41] sm:$0xff] %vm386, %v495
        %528 = vst.msk [vmem:[#allocation2 + $0x49] sm:$0xff] %vm386, %v496
        %529 = vst.msk [vmem:[#allocation2 + $0x51] sm:$0xff] %vm386, %v497
        %530 = vst.msk [vmem:[#allocation2 + $0x59] sm:$0xff] %vm386, %v498
        %531 = vst.msk [vmem:[#allocation2 + $0x61] sm:$0xff] %vm386, %v499
        %532 = vst.msk [vmem:[#allocation2 + $0x69] sm:$0xff] %vm386, %v500
        %533 = vst.msk [vmem:[#allocation2 + $0x71] sm:$0xff] %vm386, %v501
        %534 = vst.msk [vmem:[#allocation2 + $0x79] sm:$0xff] %vm386, %v502
        %535 = vst.msk [vmem:[#allocation2 + $0x81] sm:$0xff] %vm386, %v503
        %536 = vst.msk [vmem:[#allocation2 + $0x89] sm:$0xff] %vm386, %v504
        %537 = vst.msk [vmem:[#allocation2 + $0x91] sm:$0xff] %vm386, %v505
        %538 = vst.msk [vmem:[#allocation2 + $0x99] sm:$0xff] %vm386, %v506
        %539 = vst.msk [vmem:[#allocation2 + $0xa1] sm:$0xff] %vm386, %v507
        %540 = vst.msk [vmem:[#allocation2 + $0xa9] sm:$0xff] %vm386, %v508
        %541 = vst.msk [vmem:[#allocation2 + $0xb1] sm:$0xff] %vm386, %v509
        %542 = vst.msk [vmem:[#allocation2 + $0xb9] sm:$0xff] %vm386, %v510
        %543 = vst.msk [vmem:[#allocation2 + $0xc1] sm:$0xff] %vm386, %v511
        %544 = vst.msk [vmem:[#allocation2 + $0xc9] sm:$0xff] %vm386, %v512
        %545 = vst.msk [vmem:[#allocation2 + $0xd1] sm:$0xff] %vm386, %v513
        %546 = vst.msk [vmem:[#allocation2 + $0xd9] sm:$0xff] %vm386, %v514
        %547 = vst.msk [vmem:[#allocation2 + $0xe1] sm:$0xff] %vm386, %v515
        %548 = vst.msk [vmem:[#allocation2 + $0xe9] sm:$0xff] %vm386, %v516
        %549 = vst.msk [vmem:[#allocation2 + $0xf1] sm:$0xff] %vm386, %v517
        %550 = vst.msk [vmem:[#allocation2 + $0xf9] sm:$0xff] %vm386, %v518
        %551 = vst.msk [vmem:[#allocation2 + $0x101] sm:$0xff] %vm386, %v519
        %552 = vst.msk [vmem:[#allocation2 + $0x109] sm:$0xff] %vm386, %v520
        %v553 = vld [vmem:[#allocation2] sm:$0xff]
        %v554 = vld [vmem:[#allocation2 + $0x8] sm:$0xff]
        %v555 = vld [vmem:[#allocation2 + $0x10] sm:$0xff]
        %v556 = vld [vmem:[#allocation2 + $0x18] sm:$0xff]
        %v557 = vld [vmem:[#allocation2 + $0x20] sm:$0xff]
        %v558 = vld [vmem:[#allocation2 + $0x28] sm:$0xff]
        %v559 = vld [vmem:[#allocation2 + $0x30] sm:$0xff]
        %v560 = vld [vmem:[#allocation2 + $0x38] sm:$0xff]
        %v561 = vld [vmem:[#allocation2 + $0x40] sm:$0xff]
        %v562 = vld [vmem:[#allocation2 + $0x48] sm:$0xff]
        %v563 = vld [vmem:[#allocation2 + $0x50] sm:$0xff]
        %v564 = vld [vmem:[#allocation2 + $0x58] sm:$0xff]
        %v565 = vld [vmem:[#allocation2 + $0x60] sm:$0xff]
        %v566 = vld [vmem:[#allocation2 + $0x68] sm:$0xff]
        %v567 = vld [vmem:[#allocation2 + $0x70] sm:$0xff]
        %v568 = vld [vmem:[#allocation2 + $0x78] sm:$0xff]
        %v569 = vld [vmem:[#allocation2 + $0x80] sm:$0xff]
        %v570 = vld [vmem:[#allocation2 + $0x88] sm:$0xff]
        %v571 = vld [vmem:[#allocation2 + $0x90] sm:$0xff]
        %v572 = vld [vmem:[#allocation2 + $0x98] sm:$0xff]
        %v573 = vld [vmem:[#allocation2 + $0xa0] sm:$0xff]
        %v574 = vld [vmem:[#allocation2 + $0xa8] sm:$0xff]
        %v575 = vld [vmem:[#allocation2 + $0xb0] sm:$0xff]
        %v576 = vld [vmem:[#allocation2 + $0xb8] sm:$0xff]
        %v577 = vld [vmem:[#allocation2 + $0xc0] sm:$0xff]
        %v578 = vld [vmem:[#allocation2 + $0xc8] sm:$0xff]
        %v579 = vld [vmem:[#allocation2 + $0xd0] sm:$0xff]
        %v580 = vld [vmem:[#allocation2 + $0xd8] sm:$0xff]
        %v581 = vld [vmem:[#allocation2 + $0xe0] sm:$0xff]
        %v582 = vld [vmem:[#allocation2 + $0xe8] sm:$0xff]
        %v583 = vld [vmem:[#allocation2 + $0xf0] sm:$0xff]
        %v584 = vld [vmem:[#allocation2 + $0xf8] sm:$0xff]
        %586 = vset.pattern.permute.xlu0 0
        %587 = vperm.xlu0 %586, %v425
        %v588 = vpop.permute.xlu0 %587
        %591 = vset.pattern.permute.xlu0 0
        %592 = vperm.xlu0 %591, %v426
        %v593 = vpop.permute.xlu0 %592
        %596 = vset.pattern.permute.xlu0 0
        %597 = vperm.xlu0 %596, %v427
        %v598 = vpop.permute.xlu0 %597
        %601 = vset.pattern.permute.xlu0 0
        %602 = vperm.xlu0 %601, %v428
        %v603 = vpop.permute.xlu0 %602
        %606 = vset.pattern.permute.xlu0 0
        %607 = vperm.xlu0 %606, %v429
        %v608 = vpop.permute.xlu0 %607
        %611 = vset.pattern.permute.xlu0 0
        %612 = vperm.xlu0 %611, %v430
        %v613 = vpop.permute.xlu0 %612
        %616 = vset.pattern.permute.xlu0 0
        %617 = vperm.xlu0 %616, %v431
        %v618 = vpop.permute.xlu0 %617
        %621 = vset.pattern.permute.xlu0 0
        %622 = vperm.xlu0 %621, %v432
        %v623 = vpop.permute.xlu0 %622
        %626 = vset.pattern.permute.xlu0 0
        %627 = vperm.xlu0 %626, %v433
        %v628 = vpop.permute.xlu0 %627
        %631 = vset.pattern.permute.xlu0 0
        %632 = vperm.xlu0 %631, %v434
        %v633 = vpop.permute.xlu0 %632
        %636 = vset.pattern.permute.xlu0 0
        %637 = vperm.xlu0 %636, %v435
        %v638 = vpop.permute.xlu0 %637
        %641 = vset.pattern.permute.xlu0 0
        %642 = vperm.xlu0 %641, %v436
        %v643 = vpop.permute.xlu0 %642
        %646 = vset.pattern.permute.xlu0 0
        %647 = vperm.xlu0 %646, %v437
        %v648 = vpop.permute.xlu0 %647
        %651 = vset.pattern.permute.xlu0 0
        %652 = vperm.xlu0 %651, %v438
        %v653 = vpop.permute.xlu0 %652
        %656 = vset.pattern.permute.xlu0 0
        %657 = vperm.xlu0 %656, %v439
        %v658 = vpop.permute.xlu0 %657
        %661 = vset.pattern.permute.xlu0 0
        %662 = vperm.xlu0 %661, %v440
        %v663 = vpop.permute.xlu0 %662
        %666 = vset.pattern.permute.xlu0 0
        %667 = vperm.xlu0 %666, %v441
        %v668 = vpop.permute.xlu0 %667
        %671 = vset.pattern.permute.xlu0 0
        %672 = vperm.xlu0 %671, %v442
        %v673 = vpop.permute.xlu0 %672
        %676 = vset.pattern.permute.xlu0 0
        %677 = vperm.xlu0 %676, %v443
        %v678 = vpop.permute.xlu0 %677
        %681 = vset.pattern.permute.xlu0 0
        %682 = vperm.xlu0 %681, %v444
        %v683 = vpop.permute.xlu0 %682
        %686 = vset.pattern.permute.xlu0 0
        %687 = vperm.xlu0 %686, %v445
        %v688 = vpop.permute.xlu0 %687
        %691 = vset.pattern.permute.xlu0 0
        %692 = vperm.xlu0 %691, %v446
        %v693 = vpop.permute.xlu0 %692
        %696 = vset.pattern.permute.xlu0 0
        %697 = vperm.xlu0 %696, %v447
        %v698 = vpop.permute.xlu0 %697
        %701 = vset.pattern.permute.xlu0 0
        %702 = vperm.xlu0 %701, %v448
        %v703 = vpop.permute.xlu0 %702
        %706 = vset.pattern.permute.xlu0 0
        %707 = vperm.xlu0 %706, %v449
        %v708 = vpop.permute.xlu0 %707
        %711 = vset.pattern.permute.xlu0 0
        %712 = vperm.xlu0 %711, %v450
        %v713 = vpop.permute.xlu0 %712
        %716 = vset.pattern.permute.xlu0 0
        %717 = vperm.xlu0 %716, %v451
        %v718 = vpop.permute.xlu0 %717
        %721 = vset.pattern.permute.xlu0 0
        %722 = vperm.xlu0 %721, %v452
        %v723 = vpop.permute.xlu0 %722
        %726 = vset.pattern.permute.xlu0 0
        %727 = vperm.xlu0 %726, %v453
        %v728 = vpop.permute.xlu0 %727
        %731 = vset.pattern.permute.xlu0 0
        %732 = vperm.xlu0 %731, %v454
        %v733 = vpop.permute.xlu0 %732
        %736 = vset.pattern.permute.xlu0 0
        %737 = vperm.xlu0 %736, %v455
        %v738 = vpop.permute.xlu0 %737
        %741 = vset.pattern.permute.xlu0 0
        %742 = vperm.xlu0 %741, %v456
        %v743 = vpop.permute.xlu0 %742
        %v745 = vmul.f32 %v553, %v588
        %v746 = vmul.f32 %v554, %v593
        %v747 = vmul.f32 %v555, %v598
        %v748 = vmul.f32 %v556, %v603
        %v749 = vmul.f32 %v557, %v608
        %v750 = vmul.f32 %v558, %v613
        %v751 = vmul.f32 %v559, %v618
        %v752 = vmul.f32 %v560, %v623
        %v753 = vmul.f32 %v561, %v628
        %v754 = vmul.f32 %v562, %v633
        %v755 = vmul.f32 %v563, %v638
        %v756 = vmul.f32 %v564, %v643
        %v757 = vmul.f32 %v565, %v648
        %v758 = vmul.f32 %v566, %v653
        %v759 = vmul.f32 %v567, %v658
        %v760 = vmul.f32 %v568, %v663
        %v761 = vmul.f32 %v569, %v668
        %v762 = vmul.f32 %v570, %v673
        %v763 = vmul.f32 %v571, %v678
        %v764 = vmul.f32 %v572, %v683
        %v765 = vmul.f32 %v573, %v688
        %v766 = vmul.f32 %v574, %v693
        %v767 = vmul.f32 %v575, %v698
        %v768 = vmul.f32 %v576, %v703
        %v769 = vmul.f32 %v577, %v708
        %v770 = vmul.f32 %v578, %v713
        %v771 = vmul.f32 %v579, %v718
        %v772 = vmul.f32 %v580, %v723
        %v773 = vmul.f32 %v581, %v728
        %v774 = vmul.f32 %v582, %v733
        %v775 = vmul.f32 %v583, %v738
        %v776 = vmul.f32 %v584, %v743
        %v777 = vld [vmem:[#allocation2 + $0x1] sm:$0xff]
        %v778 = vld [vmem:[#allocation2 + $0x9] sm:$0xff]
        %v779 = vld [vmem:[#allocation2 + $0x11] sm:$0xff]
        %v780 = vld [vmem:[#allocation2 + $0x19] sm:$0xff]
        %v781 = vld [vmem:[#allocation2 + $0x21] sm:$0xff]
        %v782 = vld [vmem:[#allocation2 + $0x29] sm:$0xff]
        %v783 = vld [vmem:[#allocation2 + $0x31] sm:$0xff]
        %v784 = vld [vmem:[#allocation2 + $0x39] sm:$0xff]
        %v785 = vld [vmem:[#allocation2 + $0x41] sm:$0xff]
        %v786 = vld [vmem:[#allocation2 + $0x49] sm:$0xff]
        %v787 = vld [vmem:[#allocation2 + $0x51] sm:$0xff]
        %v788 = vld [vmem:[#allocation2 + $0x59] sm:$0xff]
        %v789 = vld [vmem:[#allocation2 + $0x61] sm:$0xff]
        %v790 = vld [vmem:[#allocation2 + $0x69] sm:$0xff]
        %v791 = vld [vmem:[#allocation2 + $0x71] sm:$0xff]
        %v792 = vld [vmem:[#allocation2 + $0x79] sm:$0xff]
        %v793 = vld [vmem:[#allocation2 + $0x81] sm:$0xff]
        %v794 = vld [vmem:[#allocation2 + $0x89] sm:$0xff]
        %v795 = vld [vmem:[#allocation2 + $0x91] sm:$0xff]
        %v796 = vld [vmem:[#allocation2 + $0x99] sm:$0xff]
        %v797 = vld [vmem:[#allocation2 + $0xa1] sm:$0xff]
        %v798 = vld [vmem:[#allocation2 + $0xa9] sm:$0xff]
        %v799 = vld [vmem:[#allocation2 + $0xb1] sm:$0xff]
        %v800 = vld [vmem:[#allocation2 + $0xb9] sm:$0xff]
        %v801 = vld [vmem:[#allocation2 + $0xc1] sm:$0xff]
        %v802 = vld [vmem:[#allocation2 + $0xc9] sm:$0xff]
        %v803 = vld [vmem:[#allocation2 + $0xd1] sm:$0xff]
        %v804 = vld [vmem:[#allocation2 + $0xd9] sm:$0xff]
        %v805 = vld [vmem:[#allocation2 + $0xe1] sm:$0xff]
        %v806 = vld [vmem:[#allocation2 + $0xe9] sm:$0xff]
        %v807 = vld [vmem:[#allocation2 + $0xf1] sm:$0xff]
        %v808 = vld [vmem:[#allocation2 + $0xf9] sm:$0xff]
        %v809 = vld [vmem:[#allocation2 + $0x2] sm:$0xff]
        %v810 = vld [vmem:[#allocation2 + $0xa] sm:$0xff]
        %v811 = vld [vmem:[#allocation2 + $0x12] sm:$0xff]
        %v812 = vld [vmem:[#allocation2 + $0x1a] sm:$0xff]
        %v813 = vld [vmem:[#allocation2 + $0x22] sm:$0xff]
        %v814 = vld [vmem:[#allocation2 + $0x2a] sm:$0xff]
        %v815 = vld [vmem:[#allocation2 + $0x32] sm:$0xff]
        %v816 = vld [vmem:[#allocation2 + $0x3a] sm:$0xff]
        %v817 = vld [vmem:[#allocation2 + $0x42] sm:$0xff]
        %v818 = vld [vmem:[#allocation2 + $0x4a] sm:$0xff]
        %v819 = vld [vmem:[#allocation2 + $0x52] sm:$0xff]
        %v820 = vld [vmem:[#allocation2 + $0x5a] sm:$0xff]
        %v821 = vld [vmem:[#allocation2 + $0x62] sm:$0xff]
        %v822 = vld [vmem:[#allocation2 + $0x6a] sm:$0xff]
        %v823 = vld [vmem:[#allocation2 + $0x72] sm:$0xff]
        %v824 = vld [vmem:[#allocation2 + $0x7a] sm:$0xff]
        %v825 = vld [vmem:[#allocation2 + $0x82] sm:$0xff]
        %v826 = vld [vmem:[#allocation2 + $0x8a] sm:$0xff]
        %v827 = vld [vmem:[#allocation2 + $0x92] sm:$0xff]
        %v828 = vld [vmem:[#allocation2 + $0x9a] sm:$0xff]
        %v829 = vld [vmem:[#allocation2 + $0xa2] sm:$0xff]
        %v830 = vld [vmem:[#allocation2 + $0xaa] sm:$0xff]
        %v831 = vld [vmem:[#allocation2 + $0xb2] sm:$0xff]
        %v832 = vld [vmem:[#allocation2 + $0xba] sm:$0xff]
        %v833 = vld [vmem:[#allocation2 + $0xc2] sm:$0xff]
        %v834 = vld [vmem:[#allocation2 + $0xca] sm:$0xff]
        %v835 = vld [vmem:[#allocation2 + $0xd2] sm:$0xff]
        %v836 = vld [vmem:[#allocation2 + $0xda] sm:$0xff]
        %v837 = vld [vmem:[#allocation2 + $0xe2] sm:$0xff]
        %v838 = vld [vmem:[#allocation2 + $0xea] sm:$0xff]
        %v839 = vld [vmem:[#allocation2 + $0xf2] sm:$0xff]
        %v840 = vld [vmem:[#allocation2 + $0xfa] sm:$0xff]
        %842 = vset.pattern.permute.xlu0 0
        %843 = vperm.xlu0 %842, %v457
        %v844 = vpop.permute.xlu0 %843
        %847 = vset.pattern.permute.xlu0 0
        %848 = vperm.xlu0 %847, %v458
        %v849 = vpop.permute.xlu0 %848
        %852 = vset.pattern.permute.xlu0 0
        %853 = vperm.xlu0 %852, %v459
        %v854 = vpop.permute.xlu0 %853
        %857 = vset.pattern.permute.xlu0 0
        %858 = vperm.xlu0 %857, %v460
        %v859 = vpop.permute.xlu0 %858
        %862 = vset.pattern.permute.xlu0 0
        %863 = vperm.xlu0 %862, %v461
        %v864 = vpop.permute.xlu0 %863
        %867 = vset.pattern.permute.xlu0 0
        %868 = vperm.xlu0 %867, %v462
        %v869 = vpop.permute.xlu0 %868
        %872 = vset.pattern.permute.xlu0 0
        %873 = vperm.xlu0 %872, %v463
        %v874 = vpop.permute.xlu0 %873
        %877 = vset.pattern.permute.xlu0 0
        %878 = vperm.xlu0 %877, %v464
        %v879 = vpop.permute.xlu0 %878
        %882 = vset.pattern.permute.xlu0 0
        %883 = vperm.xlu0 %882, %v465
        %v884 = vpop.permute.xlu0 %883
        %887 = vset.pattern.permute.xlu0 0
        %888 = vperm.xlu0 %887, %v466
        %v889 = vpop.permute.xlu0 %888
        %892 = vset.pattern.permute.xlu0 0
        %893 = vperm.xlu0 %892, %v467
        %v894 = vpop.permute.xlu0 %893
        %897 = vset.pattern.permute.xlu0 0
        %898 = vperm.xlu0 %897, %v468
        %v899 = vpop.permute.xlu0 %898
        %902 = vset.pattern.permute.xlu0 0
        %903 = vperm.xlu0 %902, %v469
        %v904 = vpop.permute.xlu0 %903
        %907 = vset.pattern.permute.xlu0 0
        %908 = vperm.xlu0 %907, %v470
        %v909 = vpop.permute.xlu0 %908
        %912 = vset.pattern.permute.xlu0 0
        %913 = vperm.xlu0 %912, %v471
        %v914 = vpop.permute.xlu0 %913
        %917 = vset.pattern.permute.xlu0 0
        %918 = vperm.xlu0 %917, %v472
        %v919 = vpop.permute.xlu0 %918
        %922 = vset.pattern.permute.xlu0 0
        %923 = vperm.xlu0 %922, %v473
        %v924 = vpop.permute.xlu0 %923
        %927 = vset.pattern.permute.xlu0 0
        %928 = vperm.xlu0 %927, %v474
        %v929 = vpop.permute.xlu0 %928
        %932 = vset.pattern.permute.xlu0 0
        %933 = vperm.xlu0 %932, %v475
        %v934 = vpop.permute.xlu0 %933
        %937 = vset.pattern.permute.xlu0 0
        %938 = vperm.xlu0 %937, %v476
        %v939 = vpop.permute.xlu0 %938
        %942 = vset.pattern.permute.xlu0 0
        %943 = vperm.xlu0 %942, %v477
        %v944 = vpop.permute.xlu0 %943
        %947 = vset.pattern.permute.xlu0 0
        %948 = vperm.xlu0 %947, %v478
        %v949 = vpop.permute.xlu0 %948
        %952 = vset.pattern.permute.xlu0 0
        %953 = vperm.xlu0 %952, %v479
        %v954 = vpop.permute.xlu0 %953
        %957 = vset.pattern.permute.xlu0 0
        %958 = vperm.xlu0 %957, %v480
        %v959 = vpop.permute.xlu0 %958
        %962 = vset.pattern.permute.xlu0 0
        %963 = vperm.xlu0 %962, %v481
        %v964 = vpop.permute.xlu0 %963
        %967 = vset.pattern.permute.xlu0 0
        %968 = vperm.xlu0 %967, %v482
        %v969 = vpop.permute.xlu0 %968
        %972 = vset.pattern.permute.xlu0 0
        %973 = vperm.xlu0 %972, %v483
        %v974 = vpop.permute.xlu0 %973
        %977 = vset.pattern.permute.xlu0 0
        %978 = vperm.xlu0 %977, %v484
        %v979 = vpop.permute.xlu0 %978
        %982 = vset.pattern.permute.xlu0 0
        %983 = vperm.xlu0 %982, %v485
        %v984 = vpop.permute.xlu0 %983
        %987 = vset.pattern.permute.xlu0 0
        %988 = vperm.xlu0 %987, %v486
        %v989 = vpop.permute.xlu0 %988
        %992 = vset.pattern.permute.xlu0 0
        %993 = vperm.xlu0 %992, %v487
        %v994 = vpop.permute.xlu0 %993
        %997 = vset.pattern.permute.xlu0 0
        %998 = vperm.xlu0 %997, %v488
        %v999 = vpop.permute.xlu0 %998
        %v1001 = vmul.f32 %v809, %v844
        %v1002 = vmul.f32 %v810, %v849
        %v1003 = vmul.f32 %v811, %v854
        %v1004 = vmul.f32 %v812, %v859
        %v1005 = vmul.f32 %v813, %v864
        %v1006 = vmul.f32 %v814, %v869
        %v1007 = vmul.f32 %v815, %v874
        %v1008 = vmul.f32 %v816, %v879
        %v1009 = vmul.f32 %v817, %v884
        %v1010 = vmul.f32 %v818, %v889
        %v1011 = vmul.f32 %v819, %v894
        %v1012 = vmul.f32 %v820, %v899
        %v1013 = vmul.f32 %v821, %v904
        %v1014 = vmul.f32 %v822, %v909
        %v1015 = vmul.f32 %v823, %v914
        %v1016 = vmul.f32 %v824, %v919
        %v1017 = vmul.f32 %v825, %v924
        %v1018 = vmul.f32 %v826, %v929
        %v1019 = vmul.f32 %v827, %v934
        %v1020 = vmul.f32 %v828, %v939
        %v1021 = vmul.f32 %v829, %v944
        %v1022 = vmul.f32 %v830, %v949
        %v1023 = vmul.f32 %v831, %v954
        %v1024 = vmul.f32 %v832, %v959
        %v1025 = vmul.f32 %v833, %v964
        %v1026 = vmul.f32 %v834, %v969
        %v1027 = vmul.f32 %v835, %v974
        %v1028 = vmul.f32 %v836, %v979
        %v1029 = vmul.f32 %v837, %v984
        %v1030 = vmul.f32 %v838, %v989
        %v1031 = vmul.f32 %v839, %v994
        %v1032 = vmul.f32 %v840, %v999
        %v1033 = vld [vmem:[#allocation2 + $0x10] sm:$0xff]
        %v1034 = vld [vmem:[#allocation2 + $0x18] sm:$0xff]
        %v1035 = vld [vmem:[#allocation2 + $0x20] sm:$0xff]
        %v1036 = vld [vmem:[#allocation2 + $0x28] sm:$0xff]
        %v1037 = vld [vmem:[#allocation2 + $0x30] sm:$0xff]
        %v1038 = vld [vmem:[#allocation2 + $0x38] sm:$0xff]
        %v1039 = vld [vmem:[#allocation2 + $0x40] sm:$0xff]
        %v1040 = vld [vmem:[#allocation2 + $0x48] sm:$0xff]
        %v1041 = vld [vmem:[#allocation2 + $0x50] sm:$0xff]
        %v1042 = vld [vmem:[#allocation2 + $0x58] sm:$0xff]
        %v1043 = vld [vmem:[#allocation2 + $0x60] sm:$0xff]
        %v1044 = vld [vmem:[#allocation2 + $0x68] sm:$0xff]
        %v1045 = vld [vmem:[#allocation2 + $0x70] sm:$0xff]
        %v1046 = vld [vmem:[#allocation2 + $0x78] sm:$0xff]
        %v1047 = vld [vmem:[#allocation2 + $0x80] sm:$0xff]
        %v1048 = vld [vmem:[#allocation2 + $0x88] sm:$0xff]
        %v1049 = vld [vmem:[#allocation2 + $0x90] sm:$0xff]
        %v1050 = vld [vmem:[#allocation2 + $0x98] sm:$0xff]
        %v1051 = vld [vmem:[#allocation2 + $0xa0] sm:$0xff]
        %v1052 = vld [vmem:[#allocation2 + $0xa8] sm:$0xff]
        %v1053 = vld [vmem:[#allocation2 + $0xb0] sm:$0xff]
        %v1054 = vld [vmem:[#allocation2 + $0xb8] sm:$0xff]
        %v1055 = vld [vmem:[#allocation2 + $0xc0] sm:$0xff]
        %v1056 = vld [vmem:[#allocation2 + $0xc8] sm:$0xff]
        %v1057 = vld [vmem:[#allocation2 + $0xd0] sm:$0xff]
        %v1058 = vld [vmem:[#allocation2 + $0xd8] sm:$0xff]
        %v1059 = vld [vmem:[#allocation2 + $0xe0] sm:$0xff]
        %v1060 = vld [vmem:[#allocation2 + $0xe8] sm:$0xff]
        %v1061 = vld [vmem:[#allocation2 + $0xf0] sm:$0xff]
        %v1062 = vld [vmem:[#allocation2 + $0xf8] sm:$0xff]
        %v1063 = vld [vmem:[#allocation2 + $0x100] sm:$0xff]
        %v1064 = vld [vmem:[#allocation2 + $0x108] sm:$0xff]
        %v1065 = vmul.f32 %v1033, %v588
        %v1066 = vmul.f32 %v1034, %v593
        %v1067 = vmul.f32 %v1035, %v598
        %v1068 = vmul.f32 %v1036, %v603
        %v1069 = vmul.f32 %v1037, %v608
        %v1070 = vmul.f32 %v1038, %v613
        %v1071 = vmul.f32 %v1039, %v618
        %v1072 = vmul.f32 %v1040, %v623
        %v1073 = vmul.f32 %v1041, %v628
        %v1074 = vmul.f32 %v1042, %v633
        %v1075 = vmul.f32 %v1043, %v638
        %v1076 = vmul.f32 %v1044, %v643
        %v1077 = vmul.f32 %v1045, %v648
        %v1078 = vmul.f32 %v1046, %v653
        %v1079 = vmul.f32 %v1047, %v658
        %v1080 = vmul.f32 %v1048, %v663
        %v1081 = vmul.f32 %v1049, %v668
        %v1082 = vmul.f32 %v1050, %v673
        %v1083 = vmul.f32 %v1051, %v678
        %v1084 = vmul.f32 %v1052, %v683
        %v1085 = vmul.f32 %v1053, %v688
        %v1086 = vmul.f32 %v1054, %v693
        %v1087 = vmul.f32 %v1055, %v698
        %v1088 = vmul.f32 %v1056, %v703
        %v1089 = vmul.f32 %v1057, %v708
        %v1090 = vmul.f32 %v1058, %v713
        %v1091 = vmul.f32 %v1059, %v718
        %v1092 = vmul.f32 %v1060, %v723
        %v1093 = vmul.f32 %v1061, %v728
        %v1094 = vmul.f32 %v1062, %v733
        %v1095 = vmul.f32 %v1063, %v738
        %v1096 = vmul.f32 %v1064, %v743
        %v1097 = vld [vmem:[#allocation2 + $0x11] sm:$0xff]
        %v1098 = vld [vmem:[#allocation2 + $0x19] sm:$0xff]
        %v1099 = vld [vmem:[#allocation2 + $0x21] sm:$0xff]
        %v1100 = vld [vmem:[#allocation2 + $0x29] sm:$0xff]
        %v1101 = vld [vmem:[#allocation2 + $0x31] sm:$0xff]
        %v1102 = vld [vmem:[#allocation2 + $0x39] sm:$0xff]
        %v1103 = vld [vmem:[#allocation2 + $0x41] sm:$0xff]
        %v1104 = vld [vmem:[#allocation2 + $0x49] sm:$0xff]
        %v1105 = vld [vmem:[#allocation2 + $0x51] sm:$0xff]
        %v1106 = vld [vmem:[#allocation2 + $0x59] sm:$0xff]
        %v1107 = vld [vmem:[#allocation2 + $0x61] sm:$0xff]
        %v1108 = vld [vmem:[#allocation2 + $0x69] sm:$0xff]
        %v1109 = vld [vmem:[#allocation2 + $0x71] sm:$0xff]
        %v1110 = vld [vmem:[#allocation2 + $0x79] sm:$0xff]
        %v1111 = vld [vmem:[#allocation2 + $0x81] sm:$0xff]
        %v1112 = vld [vmem:[#allocation2 + $0x89] sm:$0xff]
        %v1113 = vld [vmem:[#allocation2 + $0x91] sm:$0xff]
        %v1114 = vld [vmem:[#allocation2 + $0x99] sm:$0xff]
        %v1115 = vld [vmem:[#allocation2 + $0xa1] sm:$0xff]
        %v1116 = vld [vmem:[#allocation2 + $0xa9] sm:$0xff]
        %v1117 = vld [vmem:[#allocation2 + $0xb1] sm:$0xff]
        %v1118 = vld [vmem:[#allocation2 + $0xb9] sm:$0xff]
        %v1119 = vld [vmem:[#allocation2 + $0xc1] sm:$0xff]
        %v1120 = vld [vmem:[#allocation2 + $0xc9] sm:$0xff]
        %v1121 = vld [vmem:[#allocation2 + $0xd1] sm:$0xff]
        %v1122 = vld [vmem:[#allocation2 + $0xd9] sm:$0xff]
        %v1123 = vld [vmem:[#allocation2 + $0xe1] sm:$0xff]
        %v1124 = vld [vmem:[#allocation2 + $0xe9] sm:$0xff]
        %v1125 = vld [vmem:[#allocation2 + $0xf1] sm:$0xff]
        %v1126 = vld [vmem:[#allocation2 + $0xf9] sm:$0xff]
        %v1127 = vld [vmem:[#allocation2 + $0x101] sm:$0xff]
        %v1128 = vld [vmem:[#allocation2 + $0x109] sm:$0xff]
        %v1129 = vld [vmem:[#allocation2 + $0x12] sm:$0xff]
        %v1130 = vld [vmem:[#allocation2 + $0x1a] sm:$0xff]
        %v1131 = vld [vmem:[#allocation2 + $0x22] sm:$0xff]
        %v1132 = vld [vmem:[#allocation2 + $0x2a] sm:$0xff]
        %v1133 = vld [vmem:[#allocation2 + $0x32] sm:$0xff]
        %v1134 = vld [vmem:[#allocation2 + $0x3a] sm:$0xff]
        %v1135 = vld [vmem:[#allocation2 + $0x42] sm:$0xff]
        %v1136 = vld [vmem:[#allocation2 + $0x4a] sm:$0xff]
        %v1137 = vld [vmem:[#allocation2 + $0x52] sm:$0xff]
        %v1138 = vld [vmem:[#allocation2 + $0x5a] sm:$0xff]
        %v1139 = vld [vmem:[#allocation2 + $0x62] sm:$0xff]
        %v1140 = vld [vmem:[#allocation2 + $0x6a] sm:$0xff]
        %v1141 = vld [vmem:[#allocation2 + $0x72] sm:$0xff]
        %v1142 = vld [vmem:[#allocation2 + $0x7a] sm:$0xff]
        %v1143 = vld [vmem:[#allocation2 + $0x82] sm:$0xff]
        %v1144 = vld [vmem:[#allocation2 + $0x8a] sm:$0xff]
        %v1145 = vld [vmem:[#allocation2 + $0x92] sm:$0xff]
        %v1146 = vld [vmem:[#allocation2 + $0x9a] sm:$0xff]
        %v1147 = vld [vmem:[#allocation2 + $0xa2] sm:$0xff]
        %v1148 = vld [vmem:[#allocation2 + $0xaa] sm:$0xff]
        %v1149 = vld [vmem:[#allocation2 + $0xb2] sm:$0xff]
        %v1150 = vld [vmem:[#allocation2 + $0xba] sm:$0xff]
        %v1151 = vld [vmem:[#allocation2 + $0xc2] sm:$0xff]
        %v1152 = vld [vmem:[#allocation2 + $0xca] sm:$0xff]
        %v1153 = vld [vmem:[#allocation2 + $0xd2] sm:$0xff]
        %v1154 = vld [vmem:[#allocation2 + $0xda] sm:$0xff]
        %v1155 = vld [vmem:[#allocation2 + $0xe2] sm:$0xff]
        %v1156 = vld [vmem:[#allocation2 + $0xea] sm:$0xff]
        %v1157 = vld [vmem:[#allocation2 + $0xf2] sm:$0xff]
        %v1158 = vld [vmem:[#allocation2 + $0xfa] sm:$0xff]
        %v1159 = vld [vmem:[#allocation2 + $0x102] sm:$0xff]
        %v1160 = vld [vmem:[#allocation2 + $0x10a] sm:$0xff]
        %v1161 = vmul.f32 %v1129, %v844
        %v1162 = vmul.f32 %v1130, %v849
        %v1163 = vmul.f32 %v1131, %v854
        %v1164 = vmul.f32 %v1132, %v859
        %v1165 = vmul.f32 %v1133, %v864
        %v1166 = vmul.f32 %v1134, %v869
        %v1167 = vmul.f32 %v1135, %v874
        %v1168 = vmul.f32 %v1136, %v879
        %v1169 = vmul.f32 %v1137, %v884
        %v1170 = vmul.f32 %v1138, %v889
        %v1171 = vmul.f32 %v1139, %v894
        %v1172 = vmul.f32 %v1140, %v899
        %v1173 = vmul.f32 %v1141, %v904
        %v1174 = vmul.f32 %v1142, %v909
        %v1175 = vmul.f32 %v1143, %v914
        %v1176 = vmul.f32 %v1144, %v919
        %v1177 = vmul.f32 %v1145, %v924
        %v1178 = vmul.f32 %v1146, %v929
        %v1179 = vmul.f32 %v1147, %v934
        %v1180 = vmul.f32 %v1148, %v939
        %v1181 = vmul.f32 %v1149, %v944
        %v1182 = vmul.f32 %v1150, %v949
        %v1183 = vmul.f32 %v1151, %v954
        %v1184 = vmul.f32 %v1152, %v959
        %v1185 = vmul.f32 %v1153, %v964
        %v1186 = vmul.f32 %v1154, %v969
        %v1187 = vmul.f32 %v1155, %v974
        %v1188 = vmul.f32 %v1156, %v979
        %v1189 = vmul.f32 %v1157, %v984
        %v1190 = vmul.f32 %v1158, %v989
        %v1191 = vmul.f32 %v1159, %v994
        %v1192 = vmul.f32 %v1160, %v999
        %v1193 = vld [vmem:[#allocation2 + $0x110] sm:$0xff]
        %v1194 = vld [vmem:[#allocation2 + $0x118] sm:$0xff]
        %v1195 = vmul.f32 %v1035, %v588
        %v1196 = vmul.f32 %v1036, %v593
        %v1197 = vmul.f32 %v1037, %v598
        %v1198 = vmul.f32 %v1038, %v603
        %v1199 = vmul.f32 %v1039, %v608
        %v1200 = vmul.f32 %v1040, %v613
        %v1201 = vmul.f32 %v1041, %v618
        %v1202 = vmul.f32 %v1042, %v623
        %v1203 = vmul.f32 %v1043, %v628
        %v1204 = vmul.f32 %v1044, %v633
        %v1205 = vmul.f32 %v1045, %v638
        %v1206 = vmul.f32 %v1046, %v643
        %v1207 = vmul.f32 %v1047, %v648
        %v1208 = vmul.f32 %v1048, %v653
        %v1209 = vmul.f32 %v1049, %v658
        %v1210 = vmul.f32 %v1050, %v663
        %v1211 = vmul.f32 %v1051, %v668
        %v1212 = vmul.f32 %v1052, %v673
        %v1213 = vmul.f32 %v1053, %v678
        %v1214 = vmul.f32 %v1054, %v683
        %v1215 = vmul.f32 %v1055, %v688
        %v1216 = vmul.f32 %v1056, %v693
        %v1217 = vmul.f32 %v1057, %v698
        %v1218 = vmul.f32 %v1058, %v703
        %v1219 = vmul.f32 %v1059, %v708
        %v1220 = vmul.f32 %v1060, %v713
        %v1221 = vmul.f32 %v1061, %v718
        %v1222 = vmul.f32 %v1062, %v723
        %v1223 = vmul.f32 %v1063, %v728
        %v1224 = vmul.f32 %v1064, %v733
        %v1225 = vmul.f32 %v1193, %v738
        %v1226 = vmul.f32 %v1194, %v743
        %v1227 = vld [vmem:[#allocation2 + $0x111] sm:$0xff]
        %v1228 = vld [vmem:[#allocation2 + $0x119] sm:$0xff]
        %v1229 = vld [vmem:[#allocation2 + $0x112] sm:$0xff]
        %v1230 = vld [vmem:[#allocation2 + $0x11a] sm:$0xff]
        %v1231 = vmul.f32 %v1131, %v844
        %v1232 = vmul.f32 %v1132, %v849
        %v1233 = vmul.f32 %v1133, %v854
        %v1234 = vmul.f32 %v1134, %v859
        %v1235 = vmul.f32 %v1135, %v864
        %v1236 = vmul.f32 %v1136, %v869
        %v1237 = vmul.f32 %v1137, %v874
        %v1238 = vmul.f32 %v1138, %v879
        %v1239 = vmul.f32 %v1139, %v884
        %v1240 = vmul.f32 %v1140, %v889
        %v1241 = vmul.f32 %v1141, %v894
        %v1242 = vmul.f32 %v1142, %v899
        %v1243 = vmul.f32 %v1143, %v904
        %v1244 = vmul.f32 %v1144, %v909
        %v1245 = vmul.f32 %v1145, %v914
        %v1246 = vmul.f32 %v1146, %v919
        %v1247 = vmul.f32 %v1147, %v924
        %v1248 = vmul.f32 %v1148, %v929
        %v1249 = vmul.f32 %v1149, %v934
        %v1250 = vmul.f32 %v1150, %v939
        %v1251 = vmul.f32 %v1151, %v944
        %v1252 = vmul.f32 %v1152, %v949
        %v1253 = vmul.f32 %v1153, %v954
        %v1254 = vmul.f32 %v1154, %v959
        %v1255 = vmul.f32 %v1155, %v964
        %v1256 = vmul.f32 %v1156, %v969
        %v1257 = vmul.f32 %v1157, %v974
        %v1258 = vmul.f32 %v1158, %v979
        %v1259 = vmul.f32 %v1159, %v984
        %v1260 = vmul.f32 %v1160, %v989
        %v1261 = vmul.f32 %v1229, %v994
        %v1262 = vmul.f32 %v1230, %v999
        %v1263 = vld [vmem:[%s3] sm:$0x1]
        %v1265 = vperm.slane %v1263, 0
        %v1267 = vmul.f32 %v745, %v1265
        %v1268 = vmul.f32 %v746, %v1265
        %v1269 = vmul.f32 %v747, %v1265
        %v1270 = vmul.f32 %v748, %v1265
        %v1271 = vmul.f32 %v749, %v1265
        %v1272 = vmul.f32 %v750, %v1265
        %v1273 = vmul.f32 %v751, %v1265
        %v1274 = vmul.f32 %v752, %v1265
        %v1275 = vmul.f32 %v753, %v1265
        %v1276 = vmul.f32 %v754, %v1265
        %v1277 = vmul.f32 %v755, %v1265
        %v1278 = vmul.f32 %v756, %v1265
        %v1279 = vmul.f32 %v757, %v1265
        %v1280 = vmul.f32 %v758, %v1265
        %v1281 = vmul.f32 %v759, %v1265
        %v1282 = vmul.f32 %v760, %v1265
        %v1283 = vmul.f32 %v761, %v1265
        %v1284 = vmul.f32 %v762, %v1265
        %v1285 = vmul.f32 %v763, %v1265
        %v1286 = vmul.f32 %v764, %v1265
        %v1287 = vmul.f32 %v765, %v1265
        %v1288 = vmul.f32 %v766, %v1265
        %v1289 = vmul.f32 %v767, %v1265
        %v1290 = vmul.f32 %v768, %v1265
        %v1291 = vmul.f32 %v769, %v1265
        %v1292 = vmul.f32 %v770, %v1265
        %v1293 = vmul.f32 %v771, %v1265
        %v1294 = vmul.f32 %v772, %v1265
        %v1295 = vmul.f32 %v773, %v1265
        %v1296 = vmul.f32 %v774, %v1265
        %v1297 = vmul.f32 %v775, %v1265
        %v1298 = vmul.f32 %v776, %v1265
        %v1299 = vadd.f32 %v1267, 0.0
        %v1300 = vadd.f32 %v1268, 0.0
        %v1301 = vadd.f32 %v1269, 0.0
        %v1302 = vadd.f32 %v1270, 0.0
        %v1303 = vadd.f32 %v1271, 0.0
        %v1304 = vadd.f32 %v1272, 0.0
        %v1305 = vadd.f32 %v1273, 0.0
        %v1306 = vadd.f32 %v1274, 0.0
        %v1307 = vadd.f32 %v1275, 0.0
        %v1308 = vadd.f32 %v1276, 0.0
        %v1309 = vadd.f32 %v1277, 0.0
        %v1310 = vadd.f32 %v1278, 0.0
        %v1311 = vadd.f32 %v1279, 0.0
        %v1312 = vadd.f32 %v1280, 0.0
        %v1313 = vadd.f32 %v1281, 0.0
        %v1314 = vadd.f32 %v1282, 0.0
        %v1315 = vadd.f32 %v1283, 0.0
        %v1316 = vadd.f32 %v1284, 0.0
        %v1317 = vadd.f32 %v1285, 0.0
        %v1318 = vadd.f32 %v1286, 0.0
        %v1319 = vadd.f32 %v1287, 0.0
        %v1320 = vadd.f32 %v1288, 0.0
        %v1321 = vadd.f32 %v1289, 0.0
        %v1322 = vadd.f32 %v1290, 0.0
        %v1323 = vadd.f32 %v1291, 0.0
        %v1324 = vadd.f32 %v1292, 0.0
        %v1325 = vadd.f32 %v1293, 0.0
        %v1326 = vadd.f32 %v1294, 0.0
        %v1327 = vadd.f32 %v1295, 0.0
        %v1328 = vadd.f32 %v1296, 0.0
        %v1329 = vadd.f32 %v1297, 0.0
        %v1330 = vadd.f32 %v1298, 0.0
        %s1331 = scalar_lea.vmem %s3, 1
        %v1332 = vld [vmem:[%s1331] sm:$0x1]
        %v1334 = vperm.slane %v1332, 0
        %v1336 = vmul.f32 %v777, %v1334
        %v1337 = vmul.f32 %v778, %v1334
        %v1338 = vmul.f32 %v779, %v1334
        %v1339 = vmul.f32 %v780, %v1334
        %v1340 = vmul.f32 %v781, %v1334
        %v1341 = vmul.f32 %v782, %v1334
        %v1342 = vmul.f32 %v783, %v1334
        %v1343 = vmul.f32 %v784, %v1334
        %v1344 = vmul.f32 %v785, %v1334
        %v1345 = vmul.f32 %v786, %v1334
        %v1346 = vmul.f32 %v787, %v1334
        %v1347 = vmul.f32 %v788, %v1334
        %v1348 = vmul.f32 %v789, %v1334
        %v1349 = vmul.f32 %v790, %v1334
        %v1350 = vmul.f32 %v791, %v1334
        %v1351 = vmul.f32 %v792, %v1334
        %v1352 = vmul.f32 %v793, %v1334
        %v1353 = vmul.f32 %v794, %v1334
        %v1354 = vmul.f32 %v795, %v1334
        %v1355 = vmul.f32 %v796, %v1334
        %v1356 = vmul.f32 %v797, %v1334
        %v1357 = vmul.f32 %v798, %v1334
        %v1358 = vmul.f32 %v799, %v1334
        %v1359 = vmul.f32 %v800, %v1334
        %v1360 = vmul.f32 %v801, %v1334
        %v1361 = vmul.f32 %v802, %v1334
        %v1362 = vmul.f32 %v803, %v1334
        %v1363 = vmul.f32 %v804, %v1334
        %v1364 = vmul.f32 %v805, %v1334
        %v1365 = vmul.f32 %v806, %v1334
        %v1366 = vmul.f32 %v807, %v1334
        %v1367 = vmul.f32 %v808, %v1334
        %v1368 = vadd.f32 %v1299, %v1336
        %v1369 = vadd.f32 %v1300, %v1337
        %v1370 = vadd.f32 %v1301, %v1338
        %v1371 = vadd.f32 %v1302, %v1339
        %v1372 = vadd.f32 %v1303, %v1340
        %v1373 = vadd.f32 %v1304, %v1341
        %v1374 = vadd.f32 %v1305, %v1342
        %v1375 = vadd.f32 %v1306, %v1343
        %v1376 = vadd.f32 %v1307, %v1344
        %v1377 = vadd.f32 %v1308, %v1345
        %v1378 = vadd.f32 %v1309, %v1346
        %v1379 = vadd.f32 %v1310, %v1347
        %v1380 = vadd.f32 %v1311, %v1348
        %v1381 = vadd.f32 %v1312, %v1349
        %v1382 = vadd.f32 %v1313, %v1350
        %v1383 = vadd.f32 %v1314, %v1351
        %v1384 = vadd.f32 %v1315, %v1352
        %v1385 = vadd.f32 %v1316, %v1353
        %v1386 = vadd.f32 %v1317, %v1354
        %v1387 = vadd.f32 %v1318, %v1355
        %v1388 = vadd.f32 %v1319, %v1356
        %v1389 = vadd.f32 %v1320, %v1357
        %v1390 = vadd.f32 %v1321, %v1358
        %v1391 = vadd.f32 %v1322, %v1359
        %v1392 = vadd.f32 %v1323, %v1360
        %v1393 = vadd.f32 %v1324, %v1361
        %v1394 = vadd.f32 %v1325, %v1362
        %v1395 = vadd.f32 %v1326, %v1363
        %v1396 = vadd.f32 %v1327, %v1364
        %v1397 = vadd.f32 %v1328, %v1365
        %v1398 = vadd.f32 %v1329, %v1366
        %v1399 = vadd.f32 %v1330, %v1367
        %s1400 = scalar_lea.vmem %s3, 2
        %v1401 = vld [vmem:[%s1400] sm:$0x1]
        %v1403 = vperm.slane %v1401, 0
        %v1405 = vmul.f32 %v1001, %v1403
        %v1406 = vmul.f32 %v1002, %v1403
        %v1407 = vmul.f32 %v1003, %v1403
        %v1408 = vmul.f32 %v1004, %v1403
        %v1409 = vmul.f32 %v1005, %v1403
        %v1410 = vmul.f32 %v1006, %v1403
        %v1411 = vmul.f32 %v1007, %v1403
        %v1412 = vmul.f32 %v1008, %v1403
        %v1413 = vmul.f32 %v1009, %v1403
        %v1414 = vmul.f32 %v1010, %v1403
        %v1415 = vmul.f32 %v1011, %v1403
        %v1416 = vmul.f32 %v1012, %v1403
        %v1417 = vmul.f32 %v1013, %v1403
        %v1418 = vmul.f32 %v1014, %v1403
        %v1419 = vmul.f32 %v1015, %v1403
        %v1420 = vmul.f32 %v1016, %v1403
        %v1421 = vmul.f32 %v1017, %v1403
        %v1422 = vmul.f32 %v1018, %v1403
        %v1423 = vmul.f32 %v1019, %v1403
        %v1424 = vmul.f32 %v1020, %v1403
        %v1425 = vmul.f32 %v1021, %v1403
        %v1426 = vmul.f32 %v1022, %v1403
        %v1427 = vmul.f32 %v1023, %v1403
        %v1428 = vmul.f32 %v1024, %v1403
        %v1429 = vmul.f32 %v1025, %v1403
        %v1430 = vmul.f32 %v1026, %v1403
        %v1431 = vmul.f32 %v1027, %v1403
        %v1432 = vmul.f32 %v1028, %v1403
        %v1433 = vmul.f32 %v1029, %v1403
        %v1434 = vmul.f32 %v1030, %v1403
        %v1435 = vmul.f32 %v1031, %v1403
        %v1436 = vmul.f32 %v1032, %v1403
        %v1437 = vadd.f32 %v1368, %v1405
        %v1438 = vadd.f32 %v1369, %v1406
        %v1439 = vadd.f32 %v1370, %v1407
        %v1440 = vadd.f32 %v1371, %v1408
        %v1441 = vadd.f32 %v1372, %v1409
        %v1442 = vadd.f32 %v1373, %v1410
        %v1443 = vadd.f32 %v1374, %v1411
        %v1444 = vadd.f32 %v1375, %v1412
        %v1445 = vadd.f32 %v1376, %v1413
        %v1446 = vadd.f32 %v1377, %v1414
        %v1447 = vadd.f32 %v1378, %v1415
        %v1448 = vadd.f32 %v1379, %v1416
        %v1449 = vadd.f32 %v1380, %v1417
        %v1450 = vadd.f32 %v1381, %v1418
        %v1451 = vadd.f32 %v1382, %v1419
        %v1452 = vadd.f32 %v1383, %v1420
        %v1453 = vadd.f32 %v1384, %v1421
        %v1454 = vadd.f32 %v1385, %v1422
        %v1455 = vadd.f32 %v1386, %v1423
        %v1456 = vadd.f32 %v1387, %v1424
        %v1457 = vadd.f32 %v1388, %v1425
        %v1458 = vadd.f32 %v1389, %v1426
        %v1459 = vadd.f32 %v1390, %v1427
        %v1460 = vadd.f32 %v1391, %v1428
        %v1461 = vadd.f32 %v1392, %v1429
        %v1462 = vadd.f32 %v1393, %v1430
        %v1463 = vadd.f32 %v1394, %v1431
        %v1464 = vadd.f32 %v1395, %v1432
        %v1465 = vadd.f32 %v1396, %v1433
        %v1466 = vadd.f32 %v1397, %v1434
        %v1467 = vadd.f32 %v1398, %v1435
        %v1468 = vadd.f32 %v1399, %v1436
        %s1469 = scalar_lea.vmem %s3, 3
        %v1470 = vld [vmem:[%s1469] sm:$0x1]
        %v1472 = vperm.slane %v1470, 0
        %v1474 = vmul.f32 %v1065, %v1472
        %v1475 = vmul.f32 %v1066, %v1472
        %v1476 = vmul.f32 %v1067, %v1472
        %v1477 = vmul.f32 %v1068, %v1472
        %v1478 = vmul.f32 %v1069, %v1472
        %v1479 = vmul.f32 %v1070, %v1472
        %v1480 = vmul.f32 %v1071, %v1472
        %v1481 = vmul.f32 %v1072, %v1472
        %v1482 = vmul.f32 %v1073, %v1472
        %v1483 = vmul.f32 %v1074, %v1472
        %v1484 = vmul.f32 %v1075, %v1472
        %v1485 = vmul.f32 %v1076, %v1472
        %v1486 = vmul.f32 %v1077, %v1472
        %v1487 = vmul.f32 %v1078, %v1472
        %v1488 = vmul.f32 %v1079, %v1472
        %v1489 = vmul.f32 %v1080, %v1472
        %v1490 = vmul.f32 %v1081, %v1472
        %v1491 = vmul.f32 %v1082, %v1472
        %v1492 = vmul.f32 %v1083, %v1472
        %v1493 = vmul.f32 %v1084, %v1472
        %v1494 = vmul.f32 %v1085, %v1472
        %v1495 = vmul.f32 %v1086, %v1472
        %v1496 = vmul.f32 %v1087, %v1472
        %v1497 = vmul.f32 %v1088, %v1472
        %v1498 = vmul.f32 %v1089, %v1472
        %v1499 = vmul.f32 %v1090, %v1472
        %v1500 = vmul.f32 %v1091, %v1472
        %v1501 = vmul.f32 %v1092, %v1472
        %v1502 = vmul.f32 %v1093, %v1472
        %v1503 = vmul.f32 %v1094, %v1472
        %v1504 = vmul.f32 %v1095, %v1472
        %v1505 = vmul.f32 %v1096, %v1472
        %v1506 = vadd.f32 %v1437, %v1474
        %v1507 = vadd.f32 %v1438, %v1475
        %v1508 = vadd.f32 %v1439, %v1476
        %v1509 = vadd.f32 %v1440, %v1477
        %v1510 = vadd.f32 %v1441, %v1478
        %v1511 = vadd.f32 %v1442, %v1479
        %v1512 = vadd.f32 %v1443, %v1480
        %v1513 = vadd.f32 %v1444, %v1481
        %v1514 = vadd.f32 %v1445, %v1482
        %v1515 = vadd.f32 %v1446, %v1483
        %v1516 = vadd.f32 %v1447, %v1484
        %v1517 = vadd.f32 %v1448, %v1485
        %v1518 = vadd.f32 %v1449, %v1486
        %v1519 = vadd.f32 %v1450, %v1487
        %v1520 = vadd.f32 %v1451, %v1488
        %v1521 = vadd.f32 %v1452, %v1489
        %v1522 = vadd.f32 %v1453, %v1490
        %v1523 = vadd.f32 %v1454, %v1491
        %v1524 = vadd.f32 %v1455, %v1492
        %v1525 = vadd.f32 %v1456, %v1493
        %v1526 = vadd.f32 %v1457, %v1494
        %v1527 = vadd.f32 %v1458, %v1495
        %v1528 = vadd.f32 %v1459, %v1496
        %v1529 = vadd.f32 %v1460, %v1497
        %v1530 = vadd.f32 %v1461, %v1498
        %v1531 = vadd.f32 %v1462, %v1499
        %v1532 = vadd.f32 %v1463, %v1500
        %v1533 = vadd.f32 %v1464, %v1501
        %v1534 = vadd.f32 %v1465, %v1502
        %v1535 = vadd.f32 %v1466, %v1503
        %v1536 = vadd.f32 %v1467, %v1504
        %v1537 = vadd.f32 %v1468, %v1505
        %s1538 = scalar_lea.vmem %s3, 4
        %v1539 = vld [vmem:[%s1538] sm:$0x1]
        %v1541 = vperm.slane %v1539, 0
        %v1543 = vmul.f32 %v1097, %v1541
        %v1544 = vmul.f32 %v1098, %v1541
        %v1545 = vmul.f32 %v1099, %v1541
        %v1546 = vmul.f32 %v1100, %v1541
        %v1547 = vmul.f32 %v1101, %v1541
        %v1548 = vmul.f32 %v1102, %v1541
        %v1549 = vmul.f32 %v1103, %v1541
        %v1550 = vmul.f32 %v1104, %v1541
        %v1551 = vmul.f32 %v1105, %v1541
        %v1552 = vmul.f32 %v1106, %v1541
        %v1553 = vmul.f32 %v1107, %v1541
        %v1554 = vmul.f32 %v1108, %v1541
        %v1555 = vmul.f32 %v1109, %v1541
        %v1556 = vmul.f32 %v1110, %v1541
        %v1557 = vmul.f32 %v1111, %v1541
        %v1558 = vmul.f32 %v1112, %v1541
        %v1559 = vmul.f32 %v1113, %v1541
        %v1560 = vmul.f32 %v1114, %v1541
        %v1561 = vmul.f32 %v1115, %v1541
        %v1562 = vmul.f32 %v1116, %v1541
        %v1563 = vmul.f32 %v1117, %v1541
        %v1564 = vmul.f32 %v1118, %v1541
        %v1565 = vmul.f32 %v1119, %v1541
        %v1566 = vmul.f32 %v1120, %v1541
        %v1567 = vmul.f32 %v1121, %v1541
        %v1568 = vmul.f32 %v1122, %v1541
        %v1569 = vmul.f32 %v1123, %v1541
        %v1570 = vmul.f32 %v1124, %v1541
        %v1571 = vmul.f32 %v1125, %v1541
        %v1572 = vmul.f32 %v1126, %v1541
        %v1573 = vmul.f32 %v1127, %v1541
        %v1574 = vmul.f32 %v1128, %v1541
        %v1575 = vadd.f32 %v1506, %v1543
        %v1576 = vadd.f32 %v1507, %v1544
        %v1577 = vadd.f32 %v1508, %v1545
        %v1578 = vadd.f32 %v1509, %v1546
        %v1579 = vadd.f32 %v1510, %v1547
        %v1580 = vadd.f32 %v1511, %v1548
        %v1581 = vadd.f32 %v1512, %v1549
        %v1582 = vadd.f32 %v1513, %v1550
        %v1583 = vadd.f32 %v1514, %v1551
        %v1584 = vadd.f32 %v1515, %v1552
        %v1585 = vadd.f32 %v1516, %v1553
        %v1586 = vadd.f32 %v1517, %v1554
        %v1587 = vadd.f32 %v1518, %v1555
        %v1588 = vadd.f32 %v1519, %v1556
        %v1589 = vadd.f32 %v1520, %v1557
        %v1590 = vadd.f32 %v1521, %v1558
        %v1591 = vadd.f32 %v1522, %v1559
        %v1592 = vadd.f32 %v1523, %v1560
        %v1593 = vadd.f32 %v1524, %v1561
        %v1594 = vadd.f32 %v1525, %v1562
        %v1595 = vadd.f32 %v1526, %v1563
        %v1596 = vadd.f32 %v1527, %v1564
        %v1597 = vadd.f32 %v1528, %v1565
        %v1598 = vadd.f32 %v1529, %v1566
        %v1599 = vadd.f32 %v1530, %v1567
        %v1600 = vadd.f32 %v1531, %v1568
        %v1601 = vadd.f32 %v1532, %v1569
        %v1602 = vadd.f32 %v1533, %v1570
        %v1603 = vadd.f32 %v1534, %v1571
        %v1604 = vadd.f32 %v1535, %v1572
        %v1605 = vadd.f32 %v1536, %v1573
        %v1606 = vadd.f32 %v1537, %v1574
        %s1607 = scalar_lea.vmem %s3, 5
        %v1608 = vld [vmem:[%s1607] sm:$0x1]
        %v1610 = vperm.slane %v1608, 0
        %v1612 = vmul.f32 %v1161, %v1610
        %v1613 = vmul.f32 %v1162, %v1610
        %v1614 = vmul.f32 %v1163, %v1610
        %v1615 = vmul.f32 %v1164, %v1610
        %v1616 = vmul.f32 %v1165, %v1610
        %v1617 = vmul.f32 %v1166, %v1610
        %v1618 = vmul.f32 %v1167, %v1610
        %v1619 = vmul.f32 %v1168, %v1610
        %v1620 = vmul.f32 %v1169, %v1610
        %v1621 = vmul.f32 %v1170, %v1610
        %v1622 = vmul.f32 %v1171, %v1610
        %v1623 = vmul.f32 %v1172, %v1610
        %v1624 = vmul.f32 %v1173, %v1610
        %v1625 = vmul.f32 %v1174, %v1610
        %v1626 = vmul.f32 %v1175, %v1610
        %v1627 = vmul.f32 %v1176, %v1610
        %v1628 = vmul.f32 %v1177, %v1610
        %v1629 = vmul.f32 %v1178, %v1610
        %v1630 = vmul.f32 %v1179, %v1610
        %v1631 = vmul.f32 %v1180, %v1610
        %v1632 = vmul.f32 %v1181, %v1610
        %v1633 = vmul.f32 %v1182, %v1610
        %v1634 = vmul.f32 %v1183, %v1610
        %v1635 = vmul.f32 %v1184, %v1610
        %v1636 = vmul.f32 %v1185, %v1610
        %v1637 = vmul.f32 %v1186, %v1610
        %v1638 = vmul.f32 %v1187, %v1610
        %v1639 = vmul.f32 %v1188, %v1610
        %v1640 = vmul.f32 %v1189, %v1610
        %v1641 = vmul.f32 %v1190, %v1610
        %v1642 = vmul.f32 %v1191, %v1610
        %v1643 = vmul.f32 %v1192, %v1610
        %v1644 = vadd.f32 %v1575, %v1612
        %v1645 = vadd.f32 %v1576, %v1613
        %v1646 = vadd.f32 %v1577, %v1614
        %v1647 = vadd.f32 %v1578, %v1615
        %v1648 = vadd.f32 %v1579, %v1616
        %v1649 = vadd.f32 %v1580, %v1617
        %v1650 = vadd.f32 %v1581, %v1618
        %v1651 = vadd.f32 %v1582, %v1619
        %v1652 = vadd.f32 %v1583, %v1620
        %v1653 = vadd.f32 %v1584, %v1621
        %v1654 = vadd.f32 %v1585, %v1622
        %v1655 = vadd.f32 %v1586, %v1623
        %v1656 = vadd.f32 %v1587, %v1624
        %v1657 = vadd.f32 %v1588, %v1625
        %v1658 = vadd.f32 %v1589, %v1626
        %v1659 = vadd.f32 %v1590, %v1627
        %v1660 = vadd.f32 %v1591, %v1628
        %v1661 = vadd.f32 %v1592, %v1629
        %v1662 = vadd.f32 %v1593, %v1630
        %v1663 = vadd.f32 %v1594, %v1631
        %v1664 = vadd.f32 %v1595, %v1632
        %v1665 = vadd.f32 %v1596, %v1633
        %v1666 = vadd.f32 %v1597, %v1634
        %v1667 = vadd.f32 %v1598, %v1635
        %v1668 = vadd.f32 %v1599, %v1636
        %v1669 = vadd.f32 %v1600, %v1637
        %v1670 = vadd.f32 %v1601, %v1638
        %v1671 = vadd.f32 %v1602, %v1639
        %v1672 = vadd.f32 %v1603, %v1640
        %v1673 = vadd.f32 %v1604, %v1641
        %v1674 = vadd.f32 %v1605, %v1642
        %v1675 = vadd.f32 %v1606, %v1643
        %s1676 = scalar_lea.vmem %s3, 6
        %v1677 = vld [vmem:[%s1676] sm:$0x1]
        %v1679 = vperm.slane %v1677, 0
        %v1681 = vmul.f32 %v1195, %v1679
        %v1682 = vmul.f32 %v1196, %v1679
        %v1683 = vmul.f32 %v1197, %v1679
        %v1684 = vmul.f32 %v1198, %v1679
        %v1685 = vmul.f32 %v1199, %v1679
        %v1686 = vmul.f32 %v1200, %v1679
        %v1687 = vmul.f32 %v1201, %v1679
        %v1688 = vmul.f32 %v1202, %v1679
        %v1689 = vmul.f32 %v1203, %v1679
        %v1690 = vmul.f32 %v1204, %v1679
        %v1691 = vmul.f32 %v1205, %v1679
        %v1692 = vmul.f32 %v1206, %v1679
        %v1693 = vmul.f32 %v1207, %v1679
        %v1694 = vmul.f32 %v1208, %v1679
        %v1695 = vmul.f32 %v1209, %v1679
        %v1696 = vmul.f32 %v1210, %v1679
        %v1697 = vmul.f32 %v1211, %v1679
        %v1698 = vmul.f32 %v1212, %v1679
        %v1699 = vmul.f32 %v1213, %v1679
        %v1700 = vmul.f32 %v1214, %v1679
        %v1701 = vmul.f32 %v1215, %v1679
        %v1702 = vmul.f32 %v1216, %v1679
        %v1703 = vmul.f32 %v1217, %v1679
        %v1704 = vmul.f32 %v1218, %v1679
        %v1705 = vmul.f32 %v1219, %v1679
        %v1706 = vmul.f32 %v1220, %v1679
        %v1707 = vmul.f32 %v1221, %v1679
        %v1708 = vmul.f32 %v1222, %v1679
        %v1709 = vmul.f32 %v1223, %v1679
        %v1710 = vmul.f32 %v1224, %v1679
        %v1711 = vmul.f32 %v1225, %v1679
        %v1712 = vmul.f32 %v1226, %v1679
        %v1713 = vadd.f32 %v1644, %v1681
        %v1714 = vadd.f32 %v1645, %v1682
        %v1715 = vadd.f32 %v1646, %v1683
        %v1716 = vadd.f32 %v1647, %v1684
        %v1717 = vadd.f32 %v1648, %v1685
        %v1718 = vadd.f32 %v1649, %v1686
        %v1719 = vadd.f32 %v1650, %v1687
        %v1720 = vadd.f32 %v1651, %v1688
        %v1721 = vadd.f32 %v1652, %v1689
        %v1722 = vadd.f32 %v1653, %v1690
        %v1723 = vadd.f32 %v1654, %v1691
        %v1724 = vadd.f32 %v1655, %v1692
        %v1725 = vadd.f32 %v1656, %v1693
        %v1726 = vadd.f32 %v1657, %v1694
        %v1727 = vadd.f32 %v1658, %v1695
        %v1728 = vadd.f32 %v1659, %v1696
        %v1729 = vadd.f32 %v1660, %v1697
        %v1730 = vadd.f32 %v1661, %v1698
        %v1731 = vadd.f32 %v1662, %v1699
        %v1732 = vadd.f32 %v1663, %v1700
        %v1733 = vadd.f32 %v1664, %v1701
        %v1734 = vadd.f32 %v1665, %v1702
        %v1735 = vadd.f32 %v1666, %v1703
        %v1736 = vadd.f32 %v1667, %v1704
        %v1737 = vadd.f32 %v1668, %v1705
        %v1738 = vadd.f32 %v1669, %v1706
        %v1739 = vadd.f32 %v1670, %v1707
        %v1740 = vadd.f32 %v1671, %v1708
        %v1741 = vadd.f32 %v1672, %v1709
        %v1742 = vadd.f32 %v1673, %v1710
        %v1743 = vadd.f32 %v1674, %v1711
        %v1744 = vadd.f32 %v1675, %v1712
        %s1745 = scalar_lea.vmem %s3, 7
        %v1746 = vld [vmem:[%s1745] sm:$0x1]
        %v1748 = vperm.slane %v1746, 0
        %v1750 = vmul.f32 %v1099, %v1748
        %v1751 = vmul.f32 %v1100, %v1748
        %v1752 = vmul.f32 %v1101, %v1748
        %v1753 = vmul.f32 %v1102, %v1748
        %v1754 = vmul.f32 %v1103, %v1748
        %v1755 = vmul.f32 %v1104, %v1748
        %v1756 = vmul.f32 %v1105, %v1748
        %v1757 = vmul.f32 %v1106, %v1748
        %v1758 = vmul.f32 %v1107, %v1748
        %v1759 = vmul.f32 %v1108, %v1748
        %v1760 = vmul.f32 %v1109, %v1748
        %v1761 = vmul.f32 %v1110, %v1748
        %v1762 = vmul.f32 %v1111, %v1748
        %v1763 = vmul.f32 %v1112, %v1748
        %v1764 = vmul.f32 %v1113, %v1748
        %v1765 = vmul.f32 %v1114, %v1748
        %v1766 = vmul.f32 %v1115, %v1748
        %v1767 = vmul.f32 %v1116, %v1748
        %v1768 = vmul.f32 %v1117, %v1748
        %v1769 = vmul.f32 %v1118, %v1748
        %v1770 = vmul.f32 %v1119, %v1748
        %v1771 = vmul.f32 %v1120, %v1748
        %v1772 = vmul.f32 %v1121, %v1748
        %v1773 = vmul.f32 %v1122, %v1748
        %v1774 = vmul.f32 %v1123, %v1748
        %v1775 = vmul.f32 %v1124, %v1748
        %v1776 = vmul.f32 %v1125, %v1748
        %v1777 = vmul.f32 %v1126, %v1748
        %v1778 = vmul.f32 %v1127, %v1748
        %v1779 = vmul.f32 %v1128, %v1748
        %v1780 = vmul.f32 %v1227, %v1748
        %v1781 = vmul.f32 %v1228, %v1748
        %v1782 = vadd.f32 %v1713, %v1750
        %v1783 = vadd.f32 %v1714, %v1751
        %v1784 = vadd.f32 %v1715, %v1752
        %v1785 = vadd.f32 %v1716, %v1753
        %v1786 = vadd.f32 %v1717, %v1754
        %v1787 = vadd.f32 %v1718, %v1755
        %v1788 = vadd.f32 %v1719, %v1756
        %v1789 = vadd.f32 %v1720, %v1757
        %v1790 = vadd.f32 %v1721, %v1758
        %v1791 = vadd.f32 %v1722, %v1759
        %v1792 = vadd.f32 %v1723, %v1760
        %v1793 = vadd.f32 %v1724, %v1761
        %v1794 = vadd.f32 %v1725, %v1762
        %v1795 = vadd.f32 %v1726, %v1763
        %v1796 = vadd.f32 %v1727, %v1764
        %v1797 = vadd.f32 %v1728, %v1765
        %v1798 = vadd.f32 %v1729, %v1766
        %v1799 = vadd.f32 %v1730, %v1767
        %v1800 = vadd.f32 %v1731, %v1768
        %v1801 = vadd.f32 %v1732, %v1769
        %v1802 = vadd.f32 %v1733, %v1770
        %v1803 = vadd.f32 %v1734, %v1771
        %v1804 = vadd.f32 %v1735, %v1772
        %v1805 = vadd.f32 %v1736, %v1773
        %v1806 = vadd.f32 %v1737, %v1774
        %v1807 = vadd.f32 %v1738, %v1775
        %v1808 = vadd.f32 %v1739, %v1776
        %v1809 = vadd.f32 %v1740, %v1777
        %v1810 = vadd.f32 %v1741, %v1778
        %v1811 = vadd.f32 %v1742, %v1779
        %v1812 = vadd.f32 %v1743, %v1780
        %v1813 = vadd.f32 %v1744, %v1781
        %s1814 = scalar_lea.vmem %s3, 8
        %v1815 = vld [vmem:[%s1814] sm:$0x1]
        %v1817 = vperm.slane %v1815, 0
        %v1819 = vmul.f32 %v1231, %v1817
        %v1820 = vmul.f32 %v1232, %v1817
        %v1821 = vmul.f32 %v1233, %v1817
        %v1822 = vmul.f32 %v1234, %v1817
        %v1823 = vmul.f32 %v1235, %v1817
        %v1824 = vmul.f32 %v1236, %v1817
        %v1825 = vmul.f32 %v1237, %v1817
        %v1826 = vmul.f32 %v1238, %v1817
        %v1827 = vmul.f32 %v1239, %v1817
        %v1828 = vmul.f32 %v1240, %v1817
        %v1829 = vmul.f32 %v1241, %v1817
        %v1830 = vmul.f32 %v1242, %v1817
        %v1831 = vmul.f32 %v1243, %v1817
        %v1832 = vmul.f32 %v1244, %v1817
        %v1833 = vmul.f32 %v1245, %v1817
        %v1834 = vmul.f32 %v1246, %v1817
        %v1835 = vmul.f32 %v1247, %v1817
        %v1836 = vmul.f32 %v1248, %v1817
        %v1837 = vmul.f32 %v1249, %v1817
        %v1838 = vmul.f32 %v1250, %v1817
        %v1839 = vmul.f32 %v1251, %v1817
        %v1840 = vmul.f32 %v1252, %v1817
        %v1841 = vmul.f32 %v1253, %v1817
        %v1842 = vmul.f32 %v1254, %v1817
        %v1843 = vmul.f32 %v1255, %v1817
        %v1844 = vmul.f32 %v1256, %v1817
        %v1845 = vmul.f32 %v1257, %v1817
        %v1846 = vmul.f32 %v1258, %v1817
        %v1847 = vmul.f32 %v1259, %v1817
        %v1848 = vmul.f32 %v1260, %v1817
        %v1849 = vmul.f32 %v1261, %v1817
        %v1850 = vmul.f32 %v1262, %v1817
        %v1851 = vadd.f32 %v1782, %v1819
        %v1852 = vadd.f32 %v1783, %v1820
        %v1853 = vadd.f32 %v1784, %v1821
        %v1854 = vadd.f32 %v1785, %v1822
        %v1855 = vadd.f32 %v1786, %v1823
        %v1856 = vadd.f32 %v1787, %v1824
        %v1857 = vadd.f32 %v1788, %v1825
        %v1858 = vadd.f32 %v1789, %v1826
        %v1859 = vadd.f32 %v1790, %v1827
        %v1860 = vadd.f32 %v1791, %v1828
        %v1861 = vadd.f32 %v1792, %v1829
        %v1862 = vadd.f32 %v1793, %v1830
        %v1863 = vadd.f32 %v1794, %v1831
        %v1864 = vadd.f32 %v1795, %v1832
        %v1865 = vadd.f32 %v1796, %v1833
        %v1866 = vadd.f32 %v1797, %v1834
        %v1867 = vadd.f32 %v1798, %v1835
        %v1868 = vadd.f32 %v1799, %v1836
        %v1869 = vadd.f32 %v1800, %v1837
        %v1870 = vadd.f32 %v1801, %v1838
        %v1871 = vadd.f32 %v1802, %v1839
        %v1872 = vadd.f32 %v1803, %v1840
        %v1873 = vadd.f32 %v1804, %v1841
        %v1874 = vadd.f32 %v1805, %v1842
        %v1875 = vadd.f32 %v1806, %v1843
        %v1876 = vadd.f32 %v1807, %v1844
        %v1877 = vadd.f32 %v1808, %v1845
        %v1878 = vadd.f32 %v1809, %v1846
        %v1879 = vadd.f32 %v1810, %v1847
        %v1880 = vadd.f32 %v1811, %v1848
        %v1881 = vadd.f32 %v1812, %v1849
        %v1882 = vadd.f32 %v1813, %v1850
        %v1883 = vpack.c.bf16 %v1852, %v1851
        %v1884 = vpack.c.bf16 %v1854, %v1853
        %v1885 = vpack.c.bf16 %v1856, %v1855
        %v1886 = vpack.c.bf16 %v1858, %v1857
        %v1887 = vpack.c.bf16 %v1860, %v1859
        %v1888 = vpack.c.bf16 %v1862, %v1861
        %v1889 = vpack.c.bf16 %v1864, %v1863
        %v1890 = vpack.c.bf16 %v1866, %v1865
        %v1891 = vpack.c.bf16 %v1868, %v1867
        %v1892 = vpack.c.bf16 %v1870, %v1869
        %v1893 = vpack.c.bf16 %v1872, %v1871
        %v1894 = vpack.c.bf16 %v1874, %v1873
        %v1895 = vpack.c.bf16 %v1876, %v1875
        %v1896 = vpack.c.bf16 %v1878, %v1877
        %v1897 = vpack.c.bf16 %v1880, %v1879
        %v1898 = vpack.c.bf16 %v1882, %v1881
        %v1899 = vld [vmem:[%s4] sm:$0xf]
        %v1900 = vld [vmem:[%s4 + $0x4] sm:$0xf]
        %v1901 = vld [vmem:[%s4 + $0x8] sm:$0xf]
        %v1902 = vld [vmem:[%s4 + $0xc] sm:$0xf]
        %v1903 = vld [vmem:[%s4 + $0x10] sm:$0xf]
        %v1904 = vld [vmem:[%s4 + $0x14] sm:$0xf]
        %v1905 = vld [vmem:[%s4 + $0x18] sm:$0xf]
        %v1906 = vld [vmem:[%s4 + $0x1c] sm:$0xf]
        %v1907 = vld [vmem:[%s5] sm:$0x1]
        %v1909 = vperm.slane %v1907, 0
        %v1919 = vunpack.c.l.b16 %v1899
        %v1920 = vunpack.c.l.b16 %v1900
        %v1921 = vunpack.c.l.b16 %v1901
        %v1922 = vunpack.c.l.b16 %v1902
        %v1923 = vunpack.c.l.b16 %v1903
        %v1924 = vunpack.c.l.b16 %v1904
        %v1925 = vunpack.c.l.b16 %v1905
        %v1926 = vunpack.c.l.b16 %v1906
        %v1927 = vpack.c.b16 %v1920, %v1919
        %v1928 = vpack.c.b16 %v1922, %v1921
        %v1929 = vpack.c.b16 %v1924, %v1923
        %v1930 = vpack.c.b16 %v1926, %v1925
        %v1936 = vsel %vm386, %v1883, 0
        %v1939 = vsel %vm386, %v1884, 0
        %v1942 = vsel %vm386, %v1885, 0
        %v1945 = vsel %vm386, %v1886, 0
        %v1948 = vsel %vm386, %v1887, 0
        %v1951 = vsel %vm386, %v1888, 0
        %v1954 = vsel %vm386, %v1889, 0
        %v1957 = vsel %vm386, %v1890, 0
        %v1960 = vsel %vm386, %v1891, 0
        %v1963 = vsel %vm386, %v1892, 0
        %v1966 = vsel %vm386, %v1893, 0
        %v1969 = vsel %vm386, %v1894, 0
        %v1972 = vsel %vm386, %v1895, 0
        %v1975 = vsel %vm386, %v1896, 0
        %v1978 = vsel %vm386, %v1897, 0
        %v1981 = vsel %vm386, %v1898, 0
        %1983 = vmatpush.bf16.msra.mxu0 0
        %1984 = vmatpush.bf16.msra.mxu0 0
        %1985 = vmatpush.bf16.msra.mxu0 0
        %1986 = vmatpush.bf16.msra.mxu0 0
        %1987 = vmatpush.bf16.msra.mxu0 %v1930
        %1988 = vmatpush.bf16.msra.mxu0 %v1929
        %1989 = vmatpush.bf16.msra.mxu0 %v1928
        %1990 = vmatpush.bf16.msra.mxu0 %v1927
        %1991 = vmatmul.bf16.gmra.mxu0 %v1936
        %v1992 = vpop.f32.mrf.mxu0
        %v1993 = vadd.f32 %v1909, %v1992
        %v1994 = vpop.f32.mrf.mxu0
        %v1995 = vadd.f32 %v1909, %v1994
        %1996 = vmatmul.bf16.gmra.mxu0 %v1939
        %v1997 = vpop.f32.mrf.mxu0
        %v1998 = vadd.f32 %v1909, %v1997
        %v1999 = vpop.f32.mrf.mxu0
        %v2000 = vadd.f32 %v1909, %v1999
        %2001 = vmatmul.bf16.gmra.mxu0 %v1942
        %v2002 = vpop.f32.mrf.mxu0
        %v2003 = vadd.f32 %v1909, %v2002
        %v2004 = vpop.f32.mrf.mxu0
        %v2005 = vadd.f32 %v1909, %v2004
        %2006 = vmatmul.bf16.gmra.mxu0 %v1945
        %v2007 = vpop.f32.mrf.mxu0
        %v2008 = vadd.f32 %v1909, %v2007
        %v2009 = vpop.f32.mrf.mxu0
        %v2010 = vadd.f32 %v1909, %v2009
        %2011 = vmatmul.bf16.gmra.mxu0 %v1948
        %v2012 = vpop.f32.mrf.mxu0
        %v2013 = vadd.f32 %v1909, %v2012
        %v2014 = vpop.f32.mrf.mxu0
        %v2015 = vadd.f32 %v1909, %v2014
        %2016 = vmatmul.bf16.gmra.mxu0 %v1951
        %v2017 = vpop.f32.mrf.mxu0
        %v2018 = vadd.f32 %v1909, %v2017
        %v2019 = vpop.f32.mrf.mxu0
        %v2020 = vadd.f32 %v1909, %v2019
        %2021 = vmatmul.bf16.gmra.mxu0 %v1954
        %v2022 = vpop.f32.mrf.mxu0
        %v2023 = vadd.f32 %v1909, %v2022
        %v2024 = vpop.f32.mrf.mxu0
        %v2025 = vadd.f32 %v1909, %v2024
        %2026 = vmatmul.bf16.gmra.mxu0 %v1957
        %v2027 = vpop.f32.mrf.mxu0
        %v2028 = vadd.f32 %v1909, %v2027
        %v2029 = vpop.f32.mrf.mxu0
        %v2030 = vadd.f32 %v1909, %v2029
        %2031 = vmatmul.bf16.gmra.mxu0 %v1960
        %v2032 = vpop.f32.mrf.mxu0
        %v2033 = vadd.f32 %v1909, %v2032
        %v2034 = vpop.f32.mrf.mxu0
        %v2035 = vadd.f32 %v1909, %v2034
        %2036 = vmatmul.bf16.gmra.mxu0 %v1963
        %v2037 = vpop.f32.mrf.mxu0
        %v2038 = vadd.f32 %v1909, %v2037
        %v2039 = vpop.f32.mrf.mxu0
        %v2040 = vadd.f32 %v1909, %v2039
        %2041 = vmatmul.bf16.gmra.mxu0 %v1966
        %v2042 = vpop.f32.mrf.mxu0
        %v2043 = vadd.f32 %v1909, %v2042
        %v2044 = vpop.f32.mrf.mxu0
        %v2045 = vadd.f32 %v1909, %v2044
        %2046 = vmatmul.bf16.gmra.mxu0 %v1969
        %v2047 = vpop.f32.mrf.mxu0
        %v2048 = vadd.f32 %v1909, %v2047
        %v2049 = vpop.f32.mrf.mxu0
        %v2050 = vadd.f32 %v1909, %v2049
        %2051 = vmatmul.bf16.gmra.mxu0 %v1972
        %v2052 = vpop.f32.mrf.mxu0
        %v2053 = vadd.f32 %v1909, %v2052
        %v2054 = vpop.f32.mrf.mxu0
        %v2055 = vadd.f32 %v1909, %v2054
        %2056 = vmatmul.bf16.gmra.mxu0 %v1975
        %v2057 = vpop.f32.mrf.mxu0
        %v2058 = vadd.f32 %v1909, %v2057
        %v2059 = vpop.f32.mrf.mxu0
        %v2060 = vadd.f32 %v1909, %v2059
        %2061 = vmatmul.bf16.gmra.mxu0 %v1978
        %v2062 = vpop.f32.mrf.mxu0
        %v2063 = vadd.f32 %v1909, %v2062
        %v2064 = vpop.f32.mrf.mxu0
        %v2065 = vadd.f32 %v1909, %v2064
        %2066 = vmatmul.bf16.gmra.mxu0 %v1981
        %v2067 = vpop.f32.mrf.mxu0
        %v2068 = vadd.f32 %v1909, %v2067
        %v2069 = vpop.f32.mrf.mxu0
        %v2070 = vadd.f32 %v1909, %v2069
        %2071 = vdwg.mxu0
        %v2072 = vsub.f32 0.0, %v1993
        %v2073 = vsub.f32 0.0, %v1995
        %v2074 = vsub.f32 0.0, %v1998
        %v2075 = vsub.f32 0.0, %v2000
        %v2076 = vsub.f32 0.0, %v2003
        %v2077 = vsub.f32 0.0, %v2005
        %v2078 = vsub.f32 0.0, %v2008
        %v2079 = vsub.f32 0.0, %v2010
        %v2080 = vsub.f32 0.0, %v2013
        %v2081 = vsub.f32 0.0, %v2015
        %v2082 = vsub.f32 0.0, %v2018
        %v2083 = vsub.f32 0.0, %v2020
        %v2084 = vsub.f32 0.0, %v2023
        %v2085 = vsub.f32 0.0, %v2025
        %v2086 = vsub.f32 0.0, %v2028
        %v2087 = vsub.f32 0.0, %v2030
        %v2088 = vsub.f32 0.0, %v2033
        %v2089 = vsub.f32 0.0, %v2035
        %v2090 = vsub.f32 0.0, %v2038
        %v2091 = vsub.f32 0.0, %v2040
        %v2092 = vsub.f32 0.0, %v2043
        %v2093 = vsub.f32 0.0, %v2045
        %v2094 = vsub.f32 0.0, %v2048
        %v2095 = vsub.f32 0.0, %v2050
        %v2096 = vsub.f32 0.0, %v2053
        %v2097 = vsub.f32 0.0, %v2055
        %v2098 = vsub.f32 0.0, %v2058
        %v2099 = vsub.f32 0.0, %v2060
        %v2100 = vsub.f32 0.0, %v2063
        %v2101 = vsub.f32 0.0, %v2065
        %v2102 = vsub.f32 0.0, %v2068
        %v2103 = vsub.f32 0.0, %v2070
        %v2104 = vmul.f32 %v2072, 1.442695
        %v2105 = vpow.pop %v2104
        %v2106 = vmul.f32 %v2073, 1.442695
        %v2107 = vpow.pop %v2106
        %v2108 = vmul.f32 %v2074, 1.442695
        %v2109 = vpow.pop %v2108
        %v2110 = vmul.f32 %v2075, 1.442695
        %v2111 = vpow.pop %v2110
        %v2112 = vmul.f32 %v2076, 1.442695
        %v2113 = vpow.pop %v2112
        %v2114 = vmul.f32 %v2077, 1.442695
        %v2115 = vpow.pop %v2114
        %v2116 = vmul.f32 %v2078, 1.442695
        %v2117 = vpow.pop %v2116
        %v2118 = vmul.f32 %v2079, 1.442695
        %v2119 = vpow.pop %v2118
        %v2120 = vmul.f32 %v2080, 1.442695
        %v2121 = vpow.pop %v2120
        %v2122 = vmul.f32 %v2081, 1.442695
        %v2123 = vpow.pop %v2122
        %v2124 = vmul.f32 %v2082, 1.442695
        %v2125 = vpow.pop %v2124
        %v2126 = vmul.f32 %v2083, 1.442695
        %v2127 = vpow.pop %v2126
        %v2128 = vmul.f32 %v2084, 1.442695
        %v2129 = vpow.pop %v2128
        %v2130 = vmul.f32 %v2085, 1.442695
        %v2131 = vpow.pop %v2130
        %v2132 = vmul.f32 %v2086, 1.442695
        %v2133 = vpow.pop %v2132
        %v2134 = vmul.f32 %v2087, 1.442695
        %v2135 = vpow.pop %v2134
        %v2136 = vmul.f32 %v2088, 1.442695
        %v2137 = vpow.pop %v2136
        %v2138 = vmul.f32 %v2089, 1.442695
        %v2139 = vpow.pop %v2138
        %v2140 = vmul.f32 %v2090, 1.442695
        %v2141 = vpow.pop %v2140
        %v2142 = vmul.f32 %v2091, 1.442695
        %v2143 = vpow.pop %v2142
        %v2144 = vmul.f32 %v2092, 1.442695
        %v2145 = vpow.pop %v2144
        %v2146 = vmul.f32 %v2093, 1.442695
        %v2147 = vpow.pop %v2146
        %v2148 = vmul.f32 %v2094, 1.442695
        %v2149 = vpow.pop %v2148
        %v2150 = vmul.f32 %v2095, 1.442695
        %v2151 = vpow.pop %v2150
        %v2152 = vmul.f32 %v2096, 1.442695
        %v2153 = vpow.pop %v2152
        %v2154 = vmul.f32 %v2097, 1.442695
        %v2155 = vpow.pop %v2154
        %v2156 = vmul.f32 %v2098, 1.442695
        %v2157 = vpow.pop %v2156
        %v2158 = vmul.f32 %v2099, 1.442695
        %v2159 = vpow.pop %v2158
        %v2160 = vmul.f32 %v2100, 1.442695
        %v2161 = vpow.pop %v2160
        %v2162 = vmul.f32 %v2101, 1.442695
        %v2163 = vpow.pop %v2162
        %v2164 = vmul.f32 %v2102, 1.442695
        %v2165 = vpow.pop %v2164
        %v2166 = vmul.f32 %v2103, 1.442695
        %v2167 = vpow.pop %v2166
        %v2168 = vadd.f32 %v2105, 1.0
        %v2169 = vadd.f32 %v2107, 1.0
        %v2170 = vadd.f32 %v2109, 1.0
        %v2171 = vadd.f32 %v2111, 1.0
        %v2172 = vadd.f32 %v2113, 1.0
        %v2173 = vadd.f32 %v2115, 1.0
        %v2174 = vadd.f32 %v2117, 1.0
        %v2175 = vadd.f32 %v2119, 1.0
        %v2176 = vadd.f32 %v2121, 1.0
        %v2177 = vadd.f32 %v2123, 1.0
        %v2178 = vadd.f32 %v2125, 1.0
        %v2179 = vadd.f32 %v2127, 1.0
        %v2180 = vadd.f32 %v2129, 1.0
        %v2181 = vadd.f32 %v2131, 1.0
        %v2182 = vadd.f32 %v2133, 1.0
        %v2183 = vadd.f32 %v2135, 1.0
        %v2184 = vadd.f32 %v2137, 1.0
        %v2185 = vadd.f32 %v2139, 1.0
        %v2186 = vadd.f32 %v2141, 1.0
        %v2187 = vadd.f32 %v2143, 1.0
        %v2188 = vadd.f32 %v2145, 1.0
        %v2189 = vadd.f32 %v2147, 1.0
        %v2190 = vadd.f32 %v2149, 1.0
        %v2191 = vadd.f32 %v2151, 1.0
        %v2192 = vadd.f32 %v2153, 1.0
        %v2193 = vadd.f32 %v2155, 1.0
        %v2194 = vadd.f32 %v2157, 1.0
        %v2195 = vadd.f32 %v2159, 1.0
        %v2196 = vadd.f32 %v2161, 1.0
        %v2197 = vadd.f32 %v2163, 1.0
        %v2198 = vadd.f32 %v2165, 1.0
        %v2199 = vadd.f32 %v2167, 1.0
        %v2200 = vrcp.pop %v2168
        %v2201 = vmul.f32 %v2168, %v2200
        %v2202 = vsub.f32 1.0, %v2201
        %v2203 = vmul.f32 %v2200, %v2202
        %v2204 = vadd.f32 %v2200, %v2203
        %vm2205 = vweird.f32 %v2168
        %vm2206 = vweird.f32 %v2200
        %vm2207 = vmor %vm2205, %vm2206
        %v2208 = vsel %vm2207, %v2200, %v2204
        %v2209 = vand.u32 2147483647, %v2168
        %vm2210 = vcmp.eq.f32.partialorder %v2209, 8.507059e+37
        %v2211 = vand.u32 %v2168, 2147483648
        %v2212 = vor.u32 1.1754944e-38, %v2211
        %v2213 = vsel %vm2210, %v2212, %v2208
        %v2214 = vmul.f32 1.0, %v2213
        %v2215 = vrcp.pop %v2169
        %v2216 = vmul.f32 %v2169, %v2215
        %v2217 = vsub.f32 1.0, %v2216
        %v2218 = vmul.f32 %v2215, %v2217
        %v2219 = vadd.f32 %v2215, %v2218
        %vm2220 = vweird.f32 %v2169
        %vm2221 = vweird.f32 %v2215
        %vm2222 = vmor %vm2220, %vm2221
        %v2223 = vsel %vm2222, %v2215, %v2219
        %v2224 = vand.u32 2147483647, %v2169
        %vm2225 = vcmp.eq.f32.partialorder %v2224, 8.507059e+37
        %v2226 = vand.u32 %v2169, 2147483648
        %v2227 = vor.u32 1.1754944e-38, %v2226
        %v2228 = vsel %vm2225, %v2227, %v2223
        %v2229 = vmul.f32 1.0, %v2228
        %v2230 = vrcp.pop %v2170
        %v2231 = vmul.f32 %v2170, %v2230
        %v2232 = vsub.f32 1.0, %v2231
        %v2233 = vmul.f32 %v2230, %v2232
        %v2234 = vadd.f32 %v2230, %v2233
        %vm2235 = vweird.f32 %v2170
        %vm2236 = vweird.f32 %v2230
        %vm2237 = vmor %vm2235, %vm2236
        %v2238 = vsel %vm2237, %v2230, %v2234
        %v2239 = vand.u32 2147483647, %v2170
        %vm2240 = vcmp.eq.f32.partialorder %v2239, 8.507059e+37
        %v2241 = vand.u32 %v2170, 2147483648
        %v2242 = vor.u32 1.1754944e-38, %v2241
        %v2243 = vsel %vm2240, %v2242, %v2238
        %v2244 = vmul.f32 1.0, %v2243
        %v2245 = vrcp.pop %v2171
        %v2246 = vmul.f32 %v2171, %v2245
        %v2247 = vsub.f32 1.0, %v2246
        %v2248 = vmul.f32 %v2245, %v2247
        %v2249 = vadd.f32 %v2245, %v2248
        %vm2250 = vweird.f32 %v2171
        %vm2251 = vweird.f32 %v2245
        %vm2252 = vmor %vm2250, %vm2251
        %v2253 = vsel %vm2252, %v2245, %v2249
        %v2254 = vand.u32 2147483647, %v2171
        %vm2255 = vcmp.eq.f32.partialorder %v2254, 8.507059e+37
        %v2256 = vand.u32 %v2171, 2147483648
        %v2257 = vor.u32 1.1754944e-38, %v2256
        %v2258 = vsel %vm2255, %v2257, %v2253
        %v2259 = vmul.f32 1.0, %v2258
        %v2260 = vrcp.pop %v2172
        %v2261 = vmul.f32 %v2172, %v2260
        %v2262 = vsub.f32 1.0, %v2261
        %v2263 = vmul.f32 %v2260, %v2262
        %v2264 = vadd.f32 %v2260, %v2263
        %vm2265 = vweird.f32 %v2172
        %vm2266 = vweird.f32 %v2260
        %vm2267 = vmor %vm2265, %vm2266
        %v2268 = vsel %vm2267, %v2260, %v2264
        %v2269 = vand.u32 2147483647, %v2172
        %vm2270 = vcmp.eq.f32.partialorder %v2269, 8.507059e+37
        %v2271 = vand.u32 %v2172, 2147483648
        %v2272 = vor.u32 1.1754944e-38, %v2271
        %v2273 = vsel %vm2270, %v2272, %v2268
        %v2274 = vmul.f32 1.0, %v2273
        %v2275 = vrcp.pop %v2173
        %v2276 = vmul.f32 %v2173, %v2275
        %v2277 = vsub.f32 1.0, %v2276
        %v2278 = vmul.f32 %v2275, %v2277
        %v2279 = vadd.f32 %v2275, %v2278
        %vm2280 = vweird.f32 %v2173
        %vm2281 = vweird.f32 %v2275
        %vm2282 = vmor %vm2280, %vm2281
        %v2283 = vsel %vm2282, %v2275, %v2279
        %v2284 = vand.u32 2147483647, %v2173
        %vm2285 = vcmp.eq.f32.partialorder %v2284, 8.507059e+37
        %v2286 = vand.u32 %v2173, 2147483648
        %v2287 = vor.u32 1.1754944e-38, %v2286
        %v2288 = vsel %vm2285, %v2287, %v2283
        %v2289 = vmul.f32 1.0, %v2288
        %v2290 = vrcp.pop %v2174
        %v2291 = vmul.f32 %v2174, %v2290
        %v2292 = vsub.f32 1.0, %v2291
        %v2293 = vmul.f32 %v2290, %v2292
        %v2294 = vadd.f32 %v2290, %v2293
        %vm2295 = vweird.f32 %v2174
        %vm2296 = vweird.f32 %v2290
        %vm2297 = vmor %vm2295, %vm2296
        %v2298 = vsel %vm2297, %v2290, %v2294
        %v2299 = vand.u32 2147483647, %v2174
        %vm2300 = vcmp.eq.f32.partialorder %v2299, 8.507059e+37
        %v2301 = vand.u32 %v2174, 2147483648
        %v2302 = vor.u32 1.1754944e-38, %v2301
        %v2303 = vsel %vm2300, %v2302, %v2298
        %v2304 = vmul.f32 1.0, %v2303
        %v2305 = vrcp.pop %v2175
        %v2306 = vmul.f32 %v2175, %v2305
        %v2307 = vsub.f32 1.0, %v2306
        %v2308 = vmul.f32 %v2305, %v2307
        %v2309 = vadd.f32 %v2305, %v2308
        %vm2310 = vweird.f32 %v2175
        %vm2311 = vweird.f32 %v2305
        %vm2312 = vmor %vm2310, %vm2311
        %v2313 = vsel %vm2312, %v2305, %v2309
        %v2314 = vand.u32 2147483647, %v2175
        %vm2315 = vcmp.eq.f32.partialorder %v2314, 8.507059e+37
        %v2316 = vand.u32 %v2175, 2147483648
        %v2317 = vor.u32 1.1754944e-38, %v2316
        %v2318 = vsel %vm2315, %v2317, %v2313
        %v2319 = vmul.f32 1.0, %v2318
        %v2320 = vrcp.pop %v2176
        %v2321 = vmul.f32 %v2176, %v2320
        %v2322 = vsub.f32 1.0, %v2321
        %v2323 = vmul.f32 %v2320, %v2322
        %v2324 = vadd.f32 %v2320, %v2323
        %vm2325 = vweird.f32 %v2176
        %vm2326 = vweird.f32 %v2320
        %vm2327 = vmor %vm2325, %vm2326
        %v2328 = vsel %vm2327, %v2320, %v2324
        %v2329 = vand.u32 2147483647, %v2176
        %vm2330 = vcmp.eq.f32.partialorder %v2329, 8.507059e+37
        %v2331 = vand.u32 %v2176, 2147483648
        %v2332 = vor.u32 1.1754944e-38, %v2331
        %v2333 = vsel %vm2330, %v2332, %v2328
        %v2334 = vmul.f32 1.0, %v2333
        %v2335 = vrcp.pop %v2177
        %v2336 = vmul.f32 %v2177, %v2335
        %v2337 = vsub.f32 1.0, %v2336
        %v2338 = vmul.f32 %v2335, %v2337
        %v2339 = vadd.f32 %v2335, %v2338
        %vm2340 = vweird.f32 %v2177
        %vm2341 = vweird.f32 %v2335
        %vm2342 = vmor %vm2340, %vm2341
        %v2343 = vsel %vm2342, %v2335, %v2339
        %v2344 = vand.u32 2147483647, %v2177
        %vm2345 = vcmp.eq.f32.partialorder %v2344, 8.507059e+37
        %v2346 = vand.u32 %v2177, 2147483648
        %v2347 = vor.u32 1.1754944e-38, %v2346
        %v2348 = vsel %vm2345, %v2347, %v2343
        %v2349 = vmul.f32 1.0, %v2348
        %v2350 = vrcp.pop %v2178
        %v2351 = vmul.f32 %v2178, %v2350
        %v2352 = vsub.f32 1.0, %v2351
        %v2353 = vmul.f32 %v2350, %v2352
        %v2354 = vadd.f32 %v2350, %v2353
        %vm2355 = vweird.f32 %v2178
        %vm2356 = vweird.f32 %v2350
        %vm2357 = vmor %vm2355, %vm2356
        %v2358 = vsel %vm2357, %v2350, %v2354
        %v2359 = vand.u32 2147483647, %v2178
        %vm2360 = vcmp.eq.f32.partialorder %v2359, 8.507059e+37
        %v2361 = vand.u32 %v2178, 2147483648
        %v2362 = vor.u32 1.1754944e-38, %v2361
        %v2363 = vsel %vm2360, %v2362, %v2358
        %v2364 = vmul.f32 1.0, %v2363
        %v2365 = vrcp.pop %v2179
        %v2366 = vmul.f32 %v2179, %v2365
        %v2367 = vsub.f32 1.0, %v2366
        %v2368 = vmul.f32 %v2365, %v2367
        %v2369 = vadd.f32 %v2365, %v2368
        %vm2370 = vweird.f32 %v2179
        %vm2371 = vweird.f32 %v2365
        %vm2372 = vmor %vm2370, %vm2371
        %v2373 = vsel %vm2372, %v2365, %v2369
        %v2374 = vand.u32 2147483647, %v2179
        %vm2375 = vcmp.eq.f32.partialorder %v2374, 8.507059e+37
        %v2376 = vand.u32 %v2179, 2147483648
        %v2377 = vor.u32 1.1754944e-38, %v2376
        %v2378 = vsel %vm2375, %v2377, %v2373
        %v2379 = vmul.f32 1.0, %v2378
        %v2380 = vrcp.pop %v2180
        %v2381 = vmul.f32 %v2180, %v2380
        %v2382 = vsub.f32 1.0, %v2381
        %v2383 = vmul.f32 %v2380, %v2382
        %v2384 = vadd.f32 %v2380, %v2383
        %vm2385 = vweird.f32 %v2180
        %vm2386 = vweird.f32 %v2380
        %vm2387 = vmor %vm2385, %vm2386
        %v2388 = vsel %vm2387, %v2380, %v2384
        %v2389 = vand.u32 2147483647, %v2180
        %vm2390 = vcmp.eq.f32.partialorder %v2389, 8.507059e+37
        %v2391 = vand.u32 %v2180, 2147483648
        %v2392 = vor.u32 1.1754944e-38, %v2391
        %v2393 = vsel %vm2390, %v2392, %v2388
        %v2394 = vmul.f32 1.0, %v2393
        %v2395 = vrcp.pop %v2181
        %v2396 = vmul.f32 %v2181, %v2395
        %v2397 = vsub.f32 1.0, %v2396
        %v2398 = vmul.f32 %v2395, %v2397
        %v2399 = vadd.f32 %v2395, %v2398
        %vm2400 = vweird.f32 %v2181
        %vm2401 = vweird.f32 %v2395
        %vm2402 = vmor %vm2400, %vm2401
        %v2403 = vsel %vm2402, %v2395, %v2399
        %v2404 = vand.u32 2147483647, %v2181
        %vm2405 = vcmp.eq.f32.partialorder %v2404, 8.507059e+37
        %v2406 = vand.u32 %v2181, 2147483648
        %v2407 = vor.u32 1.1754944e-38, %v2406
        %v2408 = vsel %vm2405, %v2407, %v2403
        %v2409 = vmul.f32 1.0, %v2408
        %v2410 = vrcp.pop %v2182
        %v2411 = vmul.f32 %v2182, %v2410
        %v2412 = vsub.f32 1.0, %v2411
        %v2413 = vmul.f32 %v2410, %v2412
        %v2414 = vadd.f32 %v2410, %v2413
        %vm2415 = vweird.f32 %v2182
        %vm2416 = vweird.f32 %v2410
        %vm2417 = vmor %vm2415, %vm2416
        %v2418 = vsel %vm2417, %v2410, %v2414
        %v2419 = vand.u32 2147483647, %v2182
        %vm2420 = vcmp.eq.f32.partialorder %v2419, 8.507059e+37
        %v2421 = vand.u32 %v2182, 2147483648
        %v2422 = vor.u32 1.1754944e-38, %v2421
        %v2423 = vsel %vm2420, %v2422, %v2418
        %v2424 = vmul.f32 1.0, %v2423
        %v2425 = vrcp.pop %v2183
        %v2426 = vmul.f32 %v2183, %v2425
        %v2427 = vsub.f32 1.0, %v2426
        %v2428 = vmul.f32 %v2425, %v2427
        %v2429 = vadd.f32 %v2425, %v2428
        %vm2430 = vweird.f32 %v2183
        %vm2431 = vweird.f32 %v2425
        %vm2432 = vmor %vm2430, %vm2431
        %v2433 = vsel %vm2432, %v2425, %v2429
        %v2434 = vand.u32 2147483647, %v2183
        %vm2435 = vcmp.eq.f32.partialorder %v2434, 8.507059e+37
        %v2436 = vand.u32 %v2183, 2147483648
        %v2437 = vor.u32 1.1754944e-38, %v2436
        %v2438 = vsel %vm2435, %v2437, %v2433
        %v2439 = vmul.f32 1.0, %v2438
        %v2440 = vrcp.pop %v2184
        %v2441 = vmul.f32 %v2184, %v2440
        %v2442 = vsub.f32 1.0, %v2441
        %v2443 = vmul.f32 %v2440, %v2442
        %v2444 = vadd.f32 %v2440, %v2443
        %vm2445 = vweird.f32 %v2184
        %vm2446 = vweird.f32 %v2440
        %vm2447 = vmor %vm2445, %vm2446
        %v2448 = vsel %vm2447, %v2440, %v2444
        %v2449 = vand.u32 2147483647, %v2184
        %vm2450 = vcmp.eq.f32.partialorder %v2449, 8.507059e+37
        %v2451 = vand.u32 %v2184, 2147483648
        %v2452 = vor.u32 1.1754944e-38, %v2451
        %v2453 = vsel %vm2450, %v2452, %v2448
        %v2454 = vmul.f32 1.0, %v2453
        %v2455 = vrcp.pop %v2185
        %v2456 = vmul.f32 %v2185, %v2455
        %v2457 = vsub.f32 1.0, %v2456
        %v2458 = vmul.f32 %v2455, %v2457
        %v2459 = vadd.f32 %v2455, %v2458
        %vm2460 = vweird.f32 %v2185
        %vm2461 = vweird.f32 %v2455
        %vm2462 = vmor %vm2460, %vm2461
        %v2463 = vsel %vm2462, %v2455, %v2459
        %v2464 = vand.u32 2147483647, %v2185
        %vm2465 = vcmp.eq.f32.partialorder %v2464, 8.507059e+37
        %v2466 = vand.u32 %v2185, 2147483648
        %v2467 = vor.u32 1.1754944e-38, %v2466
        %v2468 = vsel %vm2465, %v2467, %v2463
        %v2469 = vmul.f32 1.0, %v2468
        %v2470 = vrcp.pop %v2186
        %v2471 = vmul.f32 %v2186, %v2470
        %v2472 = vsub.f32 1.0, %v2471
        %v2473 = vmul.f32 %v2470, %v2472
        %v2474 = vadd.f32 %v2470, %v2473
        %vm2475 = vweird.f32 %v2186
        %vm2476 = vweird.f32 %v2470
        %vm2477 = vmor %vm2475, %vm2476
        %v2478 = vsel %vm2477, %v2470, %v2474
        %v2479 = vand.u32 2147483647, %v2186
        %vm2480 = vcmp.eq.f32.partialorder %v2479, 8.507059e+37
        %v2481 = vand.u32 %v2186, 2147483648
        %v2482 = vor.u32 1.1754944e-38, %v2481
        %v2483 = vsel %vm2480, %v2482, %v2478
        %v2484 = vmul.f32 1.0, %v2483
        %v2485 = vrcp.pop %v2187
        %v2486 = vmul.f32 %v2187, %v2485
        %v2487 = vsub.f32 1.0, %v2486
        %v2488 = vmul.f32 %v2485, %v2487
        %v2489 = vadd.f32 %v2485, %v2488
        %vm2490 = vweird.f32 %v2187
        %vm2491 = vweird.f32 %v2485
        %vm2492 = vmor %vm2490, %vm2491
        %v2493 = vsel %vm2492, %v2485, %v2489
        %v2494 = vand.u32 2147483647, %v2187
        %vm2495 = vcmp.eq.f32.partialorder %v2494, 8.507059e+37
        %v2496 = vand.u32 %v2187, 2147483648
        %v2497 = vor.u32 1.1754944e-38, %v2496
        %v2498 = vsel %vm2495, %v2497, %v2493
        %v2499 = vmul.f32 1.0, %v2498
        %v2500 = vrcp.pop %v2188
        %v2501 = vmul.f32 %v2188, %v2500
        %v2502 = vsub.f32 1.0, %v2501
        %v2503 = vmul.f32 %v2500, %v2502
        %v2504 = vadd.f32 %v2500, %v2503
        %vm2505 = vweird.f32 %v2188
        %vm2506 = vweird.f32 %v2500
        %vm2507 = vmor %vm2505, %vm2506
        %v2508 = vsel %vm2507, %v2500, %v2504
        %v2509 = vand.u32 2147483647, %v2188
        %vm2510 = vcmp.eq.f32.partialorder %v2509, 8.507059e+37
        %v2511 = vand.u32 %v2188, 2147483648
        %v2512 = vor.u32 1.1754944e-38, %v2511
        %v2513 = vsel %vm2510, %v2512, %v2508
        %v2514 = vmul.f32 1.0, %v2513
        %v2515 = vrcp.pop %v2189
        %v2516 = vmul.f32 %v2189, %v2515
        %v2517 = vsub.f32 1.0, %v2516
        %v2518 = vmul.f32 %v2515, %v2517
        %v2519 = vadd.f32 %v2515, %v2518
        %vm2520 = vweird.f32 %v2189
        %vm2521 = vweird.f32 %v2515
        %vm2522 = vmor %vm2520, %vm2521
        %v2523 = vsel %vm2522, %v2515, %v2519
        %v2524 = vand.u32 2147483647, %v2189
        %vm2525 = vcmp.eq.f32.partialorder %v2524, 8.507059e+37
        %v2526 = vand.u32 %v2189, 2147483648
        %v2527 = vor.u32 1.1754944e-38, %v2526
        %v2528 = vsel %vm2525, %v2527, %v2523
        %v2529 = vmul.f32 1.0, %v2528
        %v2530 = vrcp.pop %v2190
        %v2531 = vmul.f32 %v2190, %v2530
        %v2532 = vsub.f32 1.0, %v2531
        %v2533 = vmul.f32 %v2530, %v2532
        %v2534 = vadd.f32 %v2530, %v2533
        %vm2535 = vweird.f32 %v2190
        %vm2536 = vweird.f32 %v2530
        %vm2537 = vmor %vm2535, %vm2536
        %v2538 = vsel %vm2537, %v2530, %v2534
        %v2539 = vand.u32 2147483647, %v2190
        %vm2540 = vcmp.eq.f32.partialorder %v2539, 8.507059e+37
        %v2541 = vand.u32 %v2190, 2147483648
        %v2542 = vor.u32 1.1754944e-38, %v2541
        %v2543 = vsel %vm2540, %v2542, %v2538
        %v2544 = vmul.f32 1.0, %v2543
        %v2545 = vrcp.pop %v2191
        %v2546 = vmul.f32 %v2191, %v2545
        %v2547 = vsub.f32 1.0, %v2546
        %v2548 = vmul.f32 %v2545, %v2547
        %v2549 = vadd.f32 %v2545, %v2548
        %vm2550 = vweird.f32 %v2191
        %vm2551 = vweird.f32 %v2545
        %vm2552 = vmor %vm2550, %vm2551
        %v2553 = vsel %vm2552, %v2545, %v2549
        %v2554 = vand.u32 2147483647, %v2191
        %vm2555 = vcmp.eq.f32.partialorder %v2554, 8.507059e+37
        %v2556 = vand.u32 %v2191, 2147483648
        %v2557 = vor.u32 1.1754944e-38, %v2556
        %v2558 = vsel %vm2555, %v2557, %v2553
        %v2559 = vmul.f32 1.0, %v2558
        %v2560 = vrcp.pop %v2192
        %v2561 = vmul.f32 %v2192, %v2560
        %v2562 = vsub.f32 1.0, %v2561
        %v2563 = vmul.f32 %v2560, %v2562
        %v2564 = vadd.f32 %v2560, %v2563
        %vm2565 = vweird.f32 %v2192
        %vm2566 = vweird.f32 %v2560
        %vm2567 = vmor %vm2565, %vm2566
        %v2568 = vsel %vm2567, %v2560, %v2564
        %v2569 = vand.u32 2147483647, %v2192
        %vm2570 = vcmp.eq.f32.partialorder %v2569, 8.507059e+37
        %v2571 = vand.u32 %v2192, 2147483648
        %v2572 = vor.u32 1.1754944e-38, %v2571
        %v2573 = vsel %vm2570, %v2572, %v2568
        %v2574 = vmul.f32 1.0, %v2573
        %v2575 = vrcp.pop %v2193
        %v2576 = vmul.f32 %v2193, %v2575
        %v2577 = vsub.f32 1.0, %v2576
        %v2578 = vmul.f32 %v2575, %v2577
        %v2579 = vadd.f32 %v2575, %v2578
        %vm2580 = vweird.f32 %v2193
        %vm2581 = vweird.f32 %v2575
        %vm2582 = vmor %vm2580, %vm2581
        %v2583 = vsel %vm2582, %v2575, %v2579
        %v2584 = vand.u32 2147483647, %v2193
        %vm2585 = vcmp.eq.f32.partialorder %v2584, 8.507059e+37
        %v2586 = vand.u32 %v2193, 2147483648
        %v2587 = vor.u32 1.1754944e-38, %v2586
        %v2588 = vsel %vm2585, %v2587, %v2583
        %v2589 = vmul.f32 1.0, %v2588
        %v2590 = vrcp.pop %v2194
        %v2591 = vmul.f32 %v2194, %v2590
        %v2592 = vsub.f32 1.0, %v2591
        %v2593 = vmul.f32 %v2590, %v2592
        %v2594 = vadd.f32 %v2590, %v2593
        %vm2595 = vweird.f32 %v2194
        %vm2596 = vweird.f32 %v2590
        %vm2597 = vmor %vm2595, %vm2596
        %v2598 = vsel %vm2597, %v2590, %v2594
        %v2599 = vand.u32 2147483647, %v2194
        %vm2600 = vcmp.eq.f32.partialorder %v2599, 8.507059e+37
        %v2601 = vand.u32 %v2194, 2147483648
        %v2602 = vor.u32 1.1754944e-38, %v2601
        %v2603 = vsel %vm2600, %v2602, %v2598
        %v2604 = vmul.f32 1.0, %v2603
        %v2605 = vrcp.pop %v2195
        %v2606 = vmul.f32 %v2195, %v2605
        %v2607 = vsub.f32 1.0, %v2606
        %v2608 = vmul.f32 %v2605, %v2607
        %v2609 = vadd.f32 %v2605, %v2608
        %vm2610 = vweird.f32 %v2195
        %vm2611 = vweird.f32 %v2605
        %vm2612 = vmor %vm2610, %vm2611
        %v2613 = vsel %vm2612, %v2605, %v2609
        %v2614 = vand.u32 2147483647, %v2195
        %vm2615 = vcmp.eq.f32.partialorder %v2614, 8.507059e+37
        %v2616 = vand.u32 %v2195, 2147483648
        %v2617 = vor.u32 1.1754944e-38, %v2616
        %v2618 = vsel %vm2615, %v2617, %v2613
        %v2619 = vmul.f32 1.0, %v2618
        %v2620 = vrcp.pop %v2196
        %v2621 = vmul.f32 %v2196, %v2620
        %v2622 = vsub.f32 1.0, %v2621
        %v2623 = vmul.f32 %v2620, %v2622
        %v2624 = vadd.f32 %v2620, %v2623
        %vm2625 = vweird.f32 %v2196
        %vm2626 = vweird.f32 %v2620
        %vm2627 = vmor %vm2625, %vm2626
        %v2628 = vsel %vm2627, %v2620, %v2624
        %v2629 = vand.u32 2147483647, %v2196
        %vm2630 = vcmp.eq.f32.partialorder %v2629, 8.507059e+37
        %v2631 = vand.u32 %v2196, 2147483648
        %v2632 = vor.u32 1.1754944e-38, %v2631
        %v2633 = vsel %vm2630, %v2632, %v2628
        %v2634 = vmul.f32 1.0, %v2633
        %v2635 = vrcp.pop %v2197
        %v2636 = vmul.f32 %v2197, %v2635
        %v2637 = vsub.f32 1.0, %v2636
        %v2638 = vmul.f32 %v2635, %v2637
        %v2639 = vadd.f32 %v2635, %v2638
        %vm2640 = vweird.f32 %v2197
        %vm2641 = vweird.f32 %v2635
        %vm2642 = vmor %vm2640, %vm2641
        %v2643 = vsel %vm2642, %v2635, %v2639
        %v2644 = vand.u32 2147483647, %v2197
        %vm2645 = vcmp.eq.f32.partialorder %v2644, 8.507059e+37
        %v2646 = vand.u32 %v2197, 2147483648
        %v2647 = vor.u32 1.1754944e-38, %v2646
        %v2648 = vsel %vm2645, %v2647, %v2643
        %v2649 = vmul.f32 1.0, %v2648
        %v2650 = vrcp.pop %v2198
        %v2651 = vmul.f32 %v2198, %v2650
        %v2652 = vsub.f32 1.0, %v2651
        %v2653 = vmul.f32 %v2650, %v2652
        %v2654 = vadd.f32 %v2650, %v2653
        %vm2655 = vweird.f32 %v2198
        %vm2656 = vweird.f32 %v2650
        %vm2657 = vmor %vm2655, %vm2656
        %v2658 = vsel %vm2657, %v2650, %v2654
        %v2659 = vand.u32 2147483647, %v2198
        %vm2660 = vcmp.eq.f32.partialorder %v2659, 8.507059e+37
        %v2661 = vand.u32 %v2198, 2147483648
        %v2662 = vor.u32 1.1754944e-38, %v2661
        %v2663 = vsel %vm2660, %v2662, %v2658
        %v2664 = vmul.f32 1.0, %v2663
        %v2665 = vrcp.pop %v2199
        %v2666 = vmul.f32 %v2199, %v2665
        %v2667 = vsub.f32 1.0, %v2666
        %v2668 = vmul.f32 %v2665, %v2667
        %v2669 = vadd.f32 %v2665, %v2668
        %vm2670 = vweird.f32 %v2199
        %vm2671 = vweird.f32 %v2665
        %vm2672 = vmor %vm2670, %vm2671
        %v2673 = vsel %vm2672, %v2665, %v2669
        %v2674 = vand.u32 2147483647, %v2199
        %vm2675 = vcmp.eq.f32.partialorder %v2674, 8.507059e+37
        %v2676 = vand.u32 %v2199, 2147483648
        %v2677 = vor.u32 1.1754944e-38, %v2676
        %v2678 = vsel %vm2675, %v2677, %v2673
        %v2679 = vmul.f32 1.0, %v2678
        %v2680 = vmul.f32 %v1993, %v2214
        %v2681 = vmul.f32 %v1995, %v2229
        %v2682 = vmul.f32 %v1998, %v2244
        %v2683 = vmul.f32 %v2000, %v2259
        %v2684 = vmul.f32 %v2003, %v2274
        %v2685 = vmul.f32 %v2005, %v2289
        %v2686 = vmul.f32 %v2008, %v2304
        %v2687 = vmul.f32 %v2010, %v2319
        %v2688 = vmul.f32 %v2013, %v2334
        %v2689 = vmul.f32 %v2015, %v2349
        %v2690 = vmul.f32 %v2018, %v2364
        %v2691 = vmul.f32 %v2020, %v2379
        %v2692 = vmul.f32 %v2023, %v2394
        %v2693 = vmul.f32 %v2025, %v2409
        %v2694 = vmul.f32 %v2028, %v2424
        %v2695 = vmul.f32 %v2030, %v2439
        %v2696 = vmul.f32 %v2033, %v2454
        %v2697 = vmul.f32 %v2035, %v2469
        %v2698 = vmul.f32 %v2038, %v2484
        %v2699 = vmul.f32 %v2040, %v2499
        %v2700 = vmul.f32 %v2043, %v2514
        %v2701 = vmul.f32 %v2045, %v2529
        %v2702 = vmul.f32 %v2048, %v2544
        %v2703 = vmul.f32 %v2050, %v2559
        %v2704 = vmul.f32 %v2053, %v2574
        %v2705 = vmul.f32 %v2055, %v2589
        %v2706 = vmul.f32 %v2058, %v2604
        %v2707 = vmul.f32 %v2060, %v2619
        %v2708 = vmul.f32 %v2063, %v2634
        %v2709 = vmul.f32 %v2065, %v2649
        %v2710 = vmul.f32 %v2068, %v2664
        %v2711 = vmul.f32 %v2070, %v2679
        %2712 = vst.msk [vmem:[#allocation2 + $0x11] sm:$0xff] %vm386, %v2680
        %2713 = vst.msk [vmem:[#allocation2 + $0x19] sm:$0xff] %vm386, %v2681
        %2714 = vst.msk [vmem:[#allocation2 + $0x21] sm:$0xff] %vm386, %v2682
        %2715 = vst.msk [vmem:[#allocation2 + $0x29] sm:$0xff] %vm386, %v2683
        %2716 = vst.msk [vmem:[#allocation2 + $0x31] sm:$0xff] %vm386, %v2684
        %2717 = vst.msk [vmem:[#allocation2 + $0x39] sm:$0xff] %vm386, %v2685
        %2718 = vst.msk [vmem:[#allocation2 + $0x41] sm:$0xff] %vm386, %v2686
        %2719 = vst.msk [vmem:[#allocation2 + $0x49] sm:$0xff] %vm386, %v2687
        %2720 = vst.msk [vmem:[#allocation2 + $0x51] sm:$0xff] %vm386, %v2688
        %2721 = vst.msk [vmem:[#allocation2 + $0x59] sm:$0xff] %vm386, %v2689
        %2722 = vst.msk [vmem:[#allocation2 + $0x61] sm:$0xff] %vm386, %v2690
        %2723 = vst.msk [vmem:[#allocation2 + $0x69] sm:$0xff] %vm386, %v2691
        %2724 = vst.msk [vmem:[#allocation2 + $0x71] sm:$0xff] %vm386, %v2692
        %2725 = vst.msk [vmem:[#allocation2 + $0x79] sm:$0xff] %vm386, %v2693
        %2726 = vst.msk [vmem:[#allocation2 + $0x81] sm:$0xff] %vm386, %v2694
        %2727 = vst.msk [vmem:[#allocation2 + $0x89] sm:$0xff] %vm386, %v2695
        %2728 = vst.msk [vmem:[#allocation2 + $0x91] sm:$0xff] %vm386, %v2696
        %2729 = vst.msk [vmem:[#allocation2 + $0x99] sm:$0xff] %vm386, %v2697
        %2730 = vst.msk [vmem:[#allocation2 + $0xa1] sm:$0xff] %vm386, %v2698
        %2731 = vst.msk [vmem:[#allocation2 + $0xa9] sm:$0xff] %vm386, %v2699
        %2732 = vst.msk [vmem:[#allocation2 + $0xb1] sm:$0xff] %vm386, %v2700
        %2733 = vst.msk [vmem:[#allocation2 + $0xb9] sm:$0xff] %vm386, %v2701
        %2734 = vst.msk [vmem:[#allocation2 + $0xc1] sm:$0xff] %vm386, %v2702
        %2735 = vst.msk [vmem:[#allocation2 + $0xc9] sm:$0xff] %vm386, %v2703
        %2736 = vst.msk [vmem:[#allocation2 + $0xd1] sm:$0xff] %vm386, %v2704
        %2737 = vst.msk [vmem:[#allocation2 + $0xd9] sm:$0xff] %vm386, %v2705
        %2738 = vst.msk [vmem:[#allocation2 + $0xe1] sm:$0xff] %vm386, %v2706
        %2739 = vst.msk [vmem:[#allocation2 + $0xe9] sm:$0xff] %vm386, %v2707
        %2740 = vst.msk [vmem:[#allocation2 + $0xf1] sm:$0xff] %vm386, %v2708
        %2741 = vst.msk [vmem:[#allocation2 + $0xf9] sm:$0xff] %vm386, %v2709
        %2742 = vst.msk [vmem:[#allocation2 + $0x101] sm:$0xff] %vm386, %v2710
        %2743 = vst.msk [vmem:[#allocation2 + $0x109] sm:$0xff] %vm386, %v2711
        %v2744 = vld [vmem:[#allocation2] sm:$0xff]
        %v2745 = vld [vmem:[#allocation2 + $0x8] sm:$0xff]
        %v2746 = vld [vmem:[#allocation2 + $0x10] sm:$0xff]
        %v2747 = vld [vmem:[#allocation2 + $0x18] sm:$0xff]
        %v2748 = vld [vmem:[#allocation2 + $0x20] sm:$0xff]
        %v2749 = vld [vmem:[#allocation2 + $0x28] sm:$0xff]
        %v2750 = vld [vmem:[#allocation2 + $0x30] sm:$0xff]
        %v2751 = vld [vmem:[#allocation2 + $0x38] sm:$0xff]
        %v2752 = vld [vmem:[#allocation2 + $0x40] sm:$0xff]
        %v2753 = vld [vmem:[#allocation2 + $0x48] sm:$0xff]
        %v2754 = vld [vmem:[#allocation2 + $0x50] sm:$0xff]
        %v2755 = vld [vmem:[#allocation2 + $0x58] sm:$0xff]
        %v2756 = vld [vmem:[#allocation2 + $0x60] sm:$0xff]
        %v2757 = vld [vmem:[#allocation2 + $0x68] sm:$0xff]
        %v2758 = vld [vmem:[#allocation2 + $0x70] sm:$0xff]
        %v2759 = vld [vmem:[#allocation2 + $0x78] sm:$0xff]
        %v2760 = vld [vmem:[#allocation2 + $0x80] sm:$0xff]
        %v2761 = vld [vmem:[#allocation2 + $0x88] sm:$0xff]
        %v2762 = vld [vmem:[#allocation2 + $0x90] sm:$0xff]
        %v2763 = vld [vmem:[#allocation2 + $0x98] sm:$0xff]
        %v2764 = vld [vmem:[#allocation2 + $0xa0] sm:$0xff]
        %v2765 = vld [vmem:[#allocation2 + $0xa8] sm:$0xff]
        %v2766 = vld [vmem:[#allocation2 + $0xb0] sm:$0xff]
        %v2767 = vld [vmem:[#allocation2 + $0xb8] sm:$0xff]
        %v2768 = vld [vmem:[#allocation2 + $0xc0] sm:$0xff]
        %v2769 = vld [vmem:[#allocation2 + $0xc8] sm:$0xff]
        %v2770 = vld [vmem:[#allocation2 + $0xd0] sm:$0xff]
        %v2771 = vld [vmem:[#allocation2 + $0xd8] sm:$0xff]
        %v2772 = vld [vmem:[#allocation2 + $0xe0] sm:$0xff]
        %v2773 = vld [vmem:[#allocation2 + $0xe8] sm:$0xff]
        %v2774 = vld [vmem:[#allocation2 + $0xf0] sm:$0xff]
        %v2775 = vld [vmem:[#allocation2 + $0xf8] sm:$0xff]
        %v2776 = vmul.f32 %v2744, %v588
        %v2777 = vmul.f32 %v2745, %v593
        %v2778 = vmul.f32 %v2746, %v598
        %v2779 = vmul.f32 %v2747, %v603
        %v2780 = vmul.f32 %v2748, %v608
        %v2781 = vmul.f32 %v2749, %v613
        %v2782 = vmul.f32 %v2750, %v618
        %v2783 = vmul.f32 %v2751, %v623
        %v2784 = vmul.f32 %v2752, %v628
        %v2785 = vmul.f32 %v2753, %v633
        %v2786 = vmul.f32 %v2754, %v638
        %v2787 = vmul.f32 %v2755, %v643
        %v2788 = vmul.f32 %v2756, %v648
        %v2789 = vmul.f32 %v2757, %v653
        %v2790 = vmul.f32 %v2758, %v658
        %v2791 = vmul.f32 %v2759, %v663
        %v2792 = vmul.f32 %v2760, %v668
        %v2793 = vmul.f32 %v2761, %v673
        %v2794 = vmul.f32 %v2762, %v678
        %v2795 = vmul.f32 %v2763, %v683
        %v2796 = vmul.f32 %v2764, %v688
        %v2797 = vmul.f32 %v2765, %v693
        %v2798 = vmul.f32 %v2766, %v698
        %v2799 = vmul.f32 %v2767, %v703
        %v2800 = vmul.f32 %v2768, %v708
        %v2801 = vmul.f32 %v2769, %v713
        %v2802 = vmul.f32 %v2770, %v718
        %v2803 = vmul.f32 %v2771, %v723
        %v2804 = vmul.f32 %v2772, %v728
        %v2805 = vmul.f32 %v2773, %v733
        %v2806 = vmul.f32 %v2774, %v738
        %v2807 = vmul.f32 %v2775, %v743
        %v2808 = vld [vmem:[#allocation2 + $0x1] sm:$0xff]
        %v2809 = vld [vmem:[#allocation2 + $0x9] sm:$0xff]
        %v2810 = vld [vmem:[#allocation2 + $0x11] sm:$0xff]
        %v2811 = vld [vmem:[#allocation2 + $0x19] sm:$0xff]
        %v2812 = vld [vmem:[#allocation2 + $0x21] sm:$0xff]
        %v2813 = vld [vmem:[#allocation2 + $0x29] sm:$0xff]
        %v2814 = vld [vmem:[#allocation2 + $0x31] sm:$0xff]
        %v2815 = vld [vmem:[#allocation2 + $0x39] sm:$0xff]
        %v2816 = vld [vmem:[#allocation2 + $0x41] sm:$0xff]
        %v2817 = vld [vmem:[#allocation2 + $0x49] sm:$0xff]
        %v2818 = vld [vmem:[#allocation2 + $0x51] sm:$0xff]
        %v2819 = vld [vmem:[#allocation2 + $0x59] sm:$0xff]
        %v2820 = vld [vmem:[#allocation2 + $0x61] sm:$0xff]
        %v2821 = vld [vmem:[#allocation2 + $0x69] sm:$0xff]
        %v2822 = vld [vmem:[#allocation2 + $0x71] sm:$0xff]
        %v2823 = vld [vmem:[#allocation2 + $0x79] sm:$0xff]
        %v2824 = vld [vmem:[#allocation2 + $0x81] sm:$0xff]
        %v2825 = vld [vmem:[#allocation2 + $0x89] sm:$0xff]
        %v2826 = vld [vmem:[#allocation2 + $0x91] sm:$0xff]
        %v2827 = vld [vmem:[#allocation2 + $0x99] sm:$0xff]
        %v2828 = vld [vmem:[#allocation2 + $0xa1] sm:$0xff]
        %v2829 = vld [vmem:[#allocation2 + $0xa9] sm:$0xff]
        %v2830 = vld [vmem:[#allocation2 + $0xb1] sm:$0xff]
        %v2831 = vld [vmem:[#allocation2 + $0xb9] sm:$0xff]
        %v2832 = vld [vmem:[#allocation2 + $0xc1] sm:$0xff]
        %v2833 = vld [vmem:[#allocation2 + $0xc9] sm:$0xff]
        %v2834 = vld [vmem:[#allocation2 + $0xd1] sm:$0xff]
        %v2835 = vld [vmem:[#allocation2 + $0xd9] sm:$0xff]
        %v2836 = vld [vmem:[#allocation2 + $0xe1] sm:$0xff]
        %v2837 = vld [vmem:[#allocation2 + $0xe9] sm:$0xff]
        %v2838 = vld [vmem:[#allocation2 + $0xf1] sm:$0xff]
        %v2839 = vld [vmem:[#allocation2 + $0xf9] sm:$0xff]
        %v2840 = vld [vmem:[#allocation2 + $0x2] sm:$0xff]
        %v2841 = vld [vmem:[#allocation2 + $0xa] sm:$0xff]
        %v2842 = vld [vmem:[#allocation2 + $0x12] sm:$0xff]
        %v2843 = vld [vmem:[#allocation2 + $0x1a] sm:$0xff]
        %v2844 = vld [vmem:[#allocation2 + $0x22] sm:$0xff]
        %v2845 = vld [vmem:[#allocation2 + $0x2a] sm:$0xff]
        %v2846 = vld [vmem:[#allocation2 + $0x32] sm:$0xff]
        %v2847 = vld [vmem:[#allocation2 + $0x3a] sm:$0xff]
        %v2848 = vld [vmem:[#allocation2 + $0x42] sm:$0xff]
        %v2849 = vld [vmem:[#allocation2 + $0x4a] sm:$0xff]
        %v2850 = vld [vmem:[#allocation2 + $0x52] sm:$0xff]
        %v2851 = vld [vmem:[#allocation2 + $0x5a] sm:$0xff]
        %v2852 = vld [vmem:[#allocation2 + $0x62] sm:$0xff]
        %v2853 = vld [vmem:[#allocation2 + $0x6a] sm:$0xff]
        %v2854 = vld [vmem:[#allocation2 + $0x72] sm:$0xff]
        %v2855 = vld [vmem:[#allocation2 + $0x7a] sm:$0xff]
        %v2856 = vld [vmem:[#allocation2 + $0x82] sm:$0xff]
        %v2857 = vld [vmem:[#allocation2 + $0x8a] sm:$0xff]
        %v2858 = vld [vmem:[#allocation2 + $0x92] sm:$0xff]
        %v2859 = vld [vmem:[#allocation2 + $0x9a] sm:$0xff]
        %v2860 = vld [vmem:[#allocation2 + $0xa2] sm:$0xff]
        %v2861 = vld [vmem:[#allocation2 + $0xaa] sm:$0xff]
        %v2862 = vld [vmem:[#allocation2 + $0xb2] sm:$0xff]
        %v2863 = vld [vmem:[#allocation2 + $0xba] sm:$0xff]
        %v2864 = vld [vmem:[#allocation2 + $0xc2] sm:$0xff]
        %v2865 = vld [vmem:[#allocation2 + $0xca] sm:$0xff]
        %v2866 = vld [vmem:[#allocation2 + $0xd2] sm:$0xff]
        %v2867 = vld [vmem:[#allocation2 + $0xda] sm:$0xff]
        %v2868 = vld [vmem:[#allocation2 + $0xe2] sm:$0xff]
        %v2869 = vld [vmem:[#allocation2 + $0xea] sm:$0xff]
        %v2870 = vld [vmem:[#allocation2 + $0xf2] sm:$0xff]
        %v2871 = vld [vmem:[#allocation2 + $0xfa] sm:$0xff]
        %v2872 = vmul.f32 %v2840, %v844
        %v2873 = vmul.f32 %v2841, %v849
        %v2874 = vmul.f32 %v2842, %v854
        %v2875 = vmul.f32 %v2843, %v859
        %v2876 = vmul.f32 %v2844, %v864
        %v2877 = vmul.f32 %v2845, %v869
        %v2878 = vmul.f32 %v2846, %v874
        %v2879 = vmul.f32 %v2847, %v879
        %v2880 = vmul.f32 %v2848, %v884
        %v2881 = vmul.f32 %v2849, %v889
        %v2882 = vmul.f32 %v2850, %v894
        %v2883 = vmul.f32 %v2851, %v899
        %v2884 = vmul.f32 %v2852, %v904
        %v2885 = vmul.f32 %v2853, %v909
        %v2886 = vmul.f32 %v2854, %v914
        %v2887 = vmul.f32 %v2855, %v919
        %v2888 = vmul.f32 %v2856, %v924
        %v2889 = vmul.f32 %v2857, %v929
        %v2890 = vmul.f32 %v2858, %v934
        %v2891 = vmul.f32 %v2859, %v939
        %v2892 = vmul.f32 %v2860, %v944
        %v2893 = vmul.f32 %v2861, %v949
        %v2894 = vmul.f32 %v2862, %v954
        %v2895 = vmul.f32 %v2863, %v959
        %v2896 = vmul.f32 %v2864, %v964
        %v2897 = vmul.f32 %v2865, %v969
        %v2898 = vmul.f32 %v2866, %v974
        %v2899 = vmul.f32 %v2867, %v979
        %v2900 = vmul.f32 %v2868, %v984
        %v2901 = vmul.f32 %v2869, %v989
        %v2902 = vmul.f32 %v2870, %v994
        %v2903 = vmul.f32 %v2871, %v999
        %v2904 = vld [vmem:[#allocation2 + $0x100] sm:$0xff]
        %v2905 = vld [vmem:[#allocation2 + $0x108] sm:$0xff]
        %v2906 = vmul.f32 %v2746, %v588
        %v2907 = vmul.f32 %v2747, %v593
        %v2908 = vmul.f32 %v2748, %v598
        %v2909 = vmul.f32 %v2749, %v603
        %v2910 = vmul.f32 %v2750, %v608
        %v2911 = vmul.f32 %v2751, %v613
        %v2912 = vmul.f32 %v2752, %v618
        %v2913 = vmul.f32 %v2753, %v623
        %v2914 = vmul.f32 %v2754, %v628
        %v2915 = vmul.f32 %v2755, %v633
        %v2916 = vmul.f32 %v2756, %v638
        %v2917 = vmul.f32 %v2757, %v643
        %v2918 = vmul.f32 %v2758, %v648
        %v2919 = vmul.f32 %v2759, %v653
        %v2920 = vmul.f32 %v2760, %v658
        %v2921 = vmul.f32 %v2761, %v663
        %v2922 = vmul.f32 %v2762, %v668
        %v2923 = vmul.f32 %v2763, %v673
        %v2924 = vmul.f32 %v2764, %v678
        %v2925 = vmul.f32 %v2765, %v683
        %v2926 = vmul.f32 %v2766, %v688
        %v2927 = vmul.f32 %v2767, %v693
        %v2928 = vmul.f32 %v2768, %v698
        %v2929 = vmul.f32 %v2769, %v703
        %v2930 = vmul.f32 %v2770, %v708
        %v2931 = vmul.f32 %v2771, %v713
        %v2932 = vmul.f32 %v2772, %v718
        %v2933 = vmul.f32 %v2773, %v723
        %v2934 = vmul.f32 %v2774, %v728
        %v2935 = vmul.f32 %v2775, %v733
        %v2936 = vmul.f32 %v2904, %v738
        %v2937 = vmul.f32 %v2905, %v743
        %v2938 = vld [vmem:[#allocation2 + $0x101] sm:$0xff]
        %v2939 = vld [vmem:[#allocation2 + $0x109] sm:$0xff]
        %v2940 = vld [vmem:[#allocation2 + $0x102] sm:$0xff]
        %v2941 = vld [vmem:[#allocation2 + $0x10a] sm:$0xff]
        %v2942 = vmul.f32 %v2842, %v844
        %v2943 = vmul.f32 %v2843, %v849
        %v2944 = vmul.f32 %v2844, %v854
        %v2945 = vmul.f32 %v2845, %v859
        %v2946 = vmul.f32 %v2846, %v864
        %v2947 = vmul.f32 %v2847, %v869
        %v2948 = vmul.f32 %v2848, %v874
        %v2949 = vmul.f32 %v2849, %v879
        %v2950 = vmul.f32 %v2850, %v884
        %v2951 = vmul.f32 %v2851, %v889
        %v2952 = vmul.f32 %v2852, %v894
        %v2953 = vmul.f32 %v2853, %v899
        %v2954 = vmul.f32 %v2854, %v904
        %v2955 = vmul.f32 %v2855, %v909
        %v2956 = vmul.f32 %v2856, %v914
        %v2957 = vmul.f32 %v2857, %v919
        %v2958 = vmul.f32 %v2858, %v924
        %v2959 = vmul.f32 %v2859, %v929
        %v2960 = vmul.f32 %v2860, %v934
        %v2961 = vmul.f32 %v2861, %v939
        %v2962 = vmul.f32 %v2862, %v944
        %v2963 = vmul.f32 %v2863, %v949
        %v2964 = vmul.f32 %v2864, %v954
        %v2965 = vmul.f32 %v2865, %v959
        %v2966 = vmul.f32 %v2866, %v964
        %v2967 = vmul.f32 %v2867, %v969
        %v2968 = vmul.f32 %v2868, %v974
        %v2969 = vmul.f32 %v2869, %v979
        %v2970 = vmul.f32 %v2870, %v984
        %v2971 = vmul.f32 %v2871, %v989
        %v2972 = vmul.f32 %v2940, %v994
        %v2973 = vmul.f32 %v2941, %v999
        %v2974 = vld [vmem:[#allocation2 + $0x110] sm:$0xff]
        %v2975 = vld [vmem:[#allocation2 + $0x118] sm:$0xff]
        %v2976 = vmul.f32 %v2748, %v588
        %v2977 = vmul.f32 %v2749, %v593
        %v2978 = vmul.f32 %v2750, %v598
        %v2979 = vmul.f32 %v2751, %v603
        %v2980 = vmul.f32 %v2752, %v608
        %v2981 = vmul.f32 %v2753, %v613
        %v2982 = vmul.f32 %v2754, %v618
        %v2983 = vmul.f32 %v2755, %v623
        %v2984 = vmul.f32 %v2756, %v628
        %v2985 = vmul.f32 %v2757, %v633
        %v2986 = vmul.f32 %v2758, %v638
        %v2987 = vmul.f32 %v2759, %v643
        %v2988 = vmul.f32 %v2760, %v648
        %v2989 = vmul.f32 %v2761, %v653
        %v2990 = vmul.f32 %v2762, %v658
        %v2991 = vmul.f32 %v2763, %v663
        %v2992 = vmul.f32 %v2764, %v668
        %v2993 = vmul.f32 %v2765, %v673
        %v2994 = vmul.f32 %v2766, %v678
        %v2995 = vmul.f32 %v2767, %v683
        %v2996 = vmul.f32 %v2768, %v688
        %v2997 = vmul.f32 %v2769, %v693
        %v2998 = vmul.f32 %v2770, %v698
        %v2999 = vmul.f32 %v2771, %v703
        %v3000 = vmul.f32 %v2772, %v708
        %v3001 = vmul.f32 %v2773, %v713
        %v3002 = vmul.f32 %v2774, %v718
        %v3003 = vmul.f32 %v2775, %v723
        %v3004 = vmul.f32 %v2904, %v728
        %v3005 = vmul.f32 %v2905, %v733
        %v3006 = vmul.f32 %v2974, %v738
        %v3007 = vmul.f32 %v2975, %v743
        %v3008 = vld [vmem:[#allocation2 + $0x111] sm:$0xff]
        %v3009 = vld [vmem:[#allocation2 + $0x119] sm:$0xff]
        %v3010 = vld [vmem:[#allocation2 + $0x112] sm:$0xff]
        %v3011 = vld [vmem:[#allocation2 + $0x11a] sm:$0xff]
        %v3012 = vmul.f32 %v2844, %v844
        %v3013 = vmul.f32 %v2845, %v849
        %v3014 = vmul.f32 %v2846, %v854
        %v3015 = vmul.f32 %v2847, %v859
        %v3016 = vmul.f32 %v2848, %v864
        %v3017 = vmul.f32 %v2849, %v869
        %v3018 = vmul.f32 %v2850, %v874
        %v3019 = vmul.f32 %v2851, %v879
        %v3020 = vmul.f32 %v2852, %v884
        %v3021 = vmul.f32 %v2853, %v889
        %v3022 = vmul.f32 %v2854, %v894
        %v3023 = vmul.f32 %v2855, %v899
        %v3024 = vmul.f32 %v2856, %v904
        %v3025 = vmul.f32 %v2857, %v909
        %v3026 = vmul.f32 %v2858, %v914
        %v3027 = vmul.f32 %v2859, %v919
        %v3028 = vmul.f32 %v2860, %v924
        %v3029 = vmul.f32 %v2861, %v929
        %v3030 = vmul.f32 %v2862, %v934
        %v3031 = vmul.f32 %v2863, %v939
        %v3032 = vmul.f32 %v2864, %v944
        %v3033 = vmul.f32 %v2865, %v949
        %v3034 = vmul.f32 %v2866, %v954
        %v3035 = vmul.f32 %v2867, %v959
        %v3036 = vmul.f32 %v2868, %v964
        %v3037 = vmul.f32 %v2869, %v969
        %v3038 = vmul.f32 %v2870, %v974
        %v3039 = vmul.f32 %v2871, %v979
        %v3040 = vmul.f32 %v2940, %v984
        %v3041 = vmul.f32 %v2941, %v989
        %v3042 = vmul.f32 %v3010, %v994
        %v3043 = vmul.f32 %v3011, %v999
        %v3044 = vld [vmem:[%s6] sm:$0x1]
        %v3046 = vperm.slane %v3044, 0
        %v3048 = vmul.f32 %v2776, %v3046
        %v3049 = vmul.f32 %v2777, %v3046
        %v3050 = vmul.f32 %v2778, %v3046
        %v3051 = vmul.f32 %v2779, %v3046
        %v3052 = vmul.f32 %v2780, %v3046
        %v3053 = vmul.f32 %v2781, %v3046
        %v3054 = vmul.f32 %v2782, %v3046
        %v3055 = vmul.f32 %v2783, %v3046
        %v3056 = vmul.f32 %v2784, %v3046
        %v3057 = vmul.f32 %v2785, %v3046
        %v3058 = vmul.f32 %v2786, %v3046
        %v3059 = vmul.f32 %v2787, %v3046
        %v3060 = vmul.f32 %v2788, %v3046
        %v3061 = vmul.f32 %v2789, %v3046
        %v3062 = vmul.f32 %v2790, %v3046
        %v3063 = vmul.f32 %v2791, %v3046
        %v3064 = vmul.f32 %v2792, %v3046
        %v3065 = vmul.f32 %v2793, %v3046
        %v3066 = vmul.f32 %v2794, %v3046
        %v3067 = vmul.f32 %v2795, %v3046
        %v3068 = vmul.f32 %v2796, %v3046
        %v3069 = vmul.f32 %v2797, %v3046
        %v3070 = vmul.f32 %v2798, %v3046
        %v3071 = vmul.f32 %v2799, %v3046
        %v3072 = vmul.f32 %v2800, %v3046
        %v3073 = vmul.f32 %v2801, %v3046
        %v3074 = vmul.f32 %v2802, %v3046
        %v3075 = vmul.f32 %v2803, %v3046
        %v3076 = vmul.f32 %v2804, %v3046
        %v3077 = vmul.f32 %v2805, %v3046
        %v3078 = vmul.f32 %v2806, %v3046
        %v3079 = vmul.f32 %v2807, %v3046
        %v3080 = vadd.f32 %v3048, 0.0
        %v3081 = vadd.f32 %v3049, 0.0
        %v3082 = vadd.f32 %v3050, 0.0
        %v3083 = vadd.f32 %v3051, 0.0
        %v3084 = vadd.f32 %v3052, 0.0
        %v3085 = vadd.f32 %v3053, 0.0
        %v3086 = vadd.f32 %v3054, 0.0
        %v3087 = vadd.f32 %v3055, 0.0
        %v3088 = vadd.f32 %v3056, 0.0
        %v3089 = vadd.f32 %v3057, 0.0
        %v3090 = vadd.f32 %v3058, 0.0
        %v3091 = vadd.f32 %v3059, 0.0
        %v3092 = vadd.f32 %v3060, 0.0
        %v3093 = vadd.f32 %v3061, 0.0
        %v3094 = vadd.f32 %v3062, 0.0
        %v3095 = vadd.f32 %v3063, 0.0
        %v3096 = vadd.f32 %v3064, 0.0
        %v3097 = vadd.f32 %v3065, 0.0
        %v3098 = vadd.f32 %v3066, 0.0
        %v3099 = vadd.f32 %v3067, 0.0
        %v3100 = vadd.f32 %v3068, 0.0
        %v3101 = vadd.f32 %v3069, 0.0
        %v3102 = vadd.f32 %v3070, 0.0
        %v3103 = vadd.f32 %v3071, 0.0
        %v3104 = vadd.f32 %v3072, 0.0
        %v3105 = vadd.f32 %v3073, 0.0
        %v3106 = vadd.f32 %v3074, 0.0
        %v3107 = vadd.f32 %v3075, 0.0
        %v3108 = vadd.f32 %v3076, 0.0
        %v3109 = vadd.f32 %v3077, 0.0
        %v3110 = vadd.f32 %v3078, 0.0
        %v3111 = vadd.f32 %v3079, 0.0
        %s3112 = scalar_lea.vmem %s6, 1
        %v3113 = vld [vmem:[%s3112] sm:$0x1]
        %v3115 = vperm.slane %v3113, 0
        %v3117 = vmul.f32 %v2808, %v3115
        %v3118 = vmul.f32 %v2809, %v3115
        %v3119 = vmul.f32 %v2810, %v3115
        %v3120 = vmul.f32 %v2811, %v3115
        %v3121 = vmul.f32 %v2812, %v3115
        %v3122 = vmul.f32 %v2813, %v3115
        %v3123 = vmul.f32 %v2814, %v3115
        %v3124 = vmul.f32 %v2815, %v3115
        %v3125 = vmul.f32 %v2816, %v3115
        %v3126 = vmul.f32 %v2817, %v3115
        %v3127 = vmul.f32 %v2818, %v3115
        %v3128 = vmul.f32 %v2819, %v3115
        %v3129 = vmul.f32 %v2820, %v3115
        %v3130 = vmul.f32 %v2821, %v3115
        %v3131 = vmul.f32 %v2822, %v3115
        %v3132 = vmul.f32 %v2823, %v3115
        %v3133 = vmul.f32 %v2824, %v3115
        %v3134 = vmul.f32 %v2825, %v3115
        %v3135 = vmul.f32 %v2826, %v3115
        %v3136 = vmul.f32 %v2827, %v3115
        %v3137 = vmul.f32 %v2828, %v3115
        %v3138 = vmul.f32 %v2829, %v3115
        %v3139 = vmul.f32 %v2830, %v3115
        %v3140 = vmul.f32 %v2831, %v3115
        %v3141 = vmul.f32 %v2832, %v3115
        %v3142 = vmul.f32 %v2833, %v3115
        %v3143 = vmul.f32 %v2834, %v3115
        %v3144 = vmul.f32 %v2835, %v3115
        %v3145 = vmul.f32 %v2836, %v3115
        %v3146 = vmul.f32 %v2837, %v3115
        %v3147 = vmul.f32 %v2838, %v3115
        %v3148 = vmul.f32 %v2839, %v3115
        %v3149 = vadd.f32 %v3080, %v3117
        %v3150 = vadd.f32 %v3081, %v3118
        %v3151 = vadd.f32 %v3082, %v3119
        %v3152 = vadd.f32 %v3083, %v3120
        %v3153 = vadd.f32 %v3084, %v3121
        %v3154 = vadd.f32 %v3085, %v3122
        %v3155 = vadd.f32 %v3086, %v3123
        %v3156 = vadd.f32 %v3087, %v3124
        %v3157 = vadd.f32 %v3088, %v3125
        %v3158 = vadd.f32 %v3089, %v3126
        %v3159 = vadd.f32 %v3090, %v3127
        %v3160 = vadd.f32 %v3091, %v3128
        %v3161 = vadd.f32 %v3092, %v3129
        %v3162 = vadd.f32 %v3093, %v3130
        %v3163 = vadd.f32 %v3094, %v3131
        %v3164 = vadd.f32 %v3095, %v3132
        %v3165 = vadd.f32 %v3096, %v3133
        %v3166 = vadd.f32 %v3097, %v3134
        %v3167 = vadd.f32 %v3098, %v3135
        %v3168 = vadd.f32 %v3099, %v3136
        %v3169 = vadd.f32 %v3100, %v3137
        %v3170 = vadd.f32 %v3101, %v3138
        %v3171 = vadd.f32 %v3102, %v3139
        %v3172 = vadd.f32 %v3103, %v3140
        %v3173 = vadd.f32 %v3104, %v3141
        %v3174 = vadd.f32 %v3105, %v3142
        %v3175 = vadd.f32 %v3106, %v3143
        %v3176 = vadd.f32 %v3107, %v3144
        %v3177 = vadd.f32 %v3108, %v3145
        %v3178 = vadd.f32 %v3109, %v3146
        %v3179 = vadd.f32 %v3110, %v3147
        %v3180 = vadd.f32 %v3111, %v3148
        %s3181 = scalar_lea.vmem %s6, 2
        %v3182 = vld [vmem:[%s3181] sm:$0x1]
        %v3184 = vperm.slane %v3182, 0
        %v3186 = vmul.f32 %v2872, %v3184
        %v3187 = vmul.f32 %v2873, %v3184
        %v3188 = vmul.f32 %v2874, %v3184
        %v3189 = vmul.f32 %v2875, %v3184
        %v3190 = vmul.f32 %v2876, %v3184
        %v3191 = vmul.f32 %v2877, %v3184
        %v3192 = vmul.f32 %v2878, %v3184
        %v3193 = vmul.f32 %v2879, %v3184
        %v3194 = vmul.f32 %v2880, %v3184
        %v3195 = vmul.f32 %v2881, %v3184
        %v3196 = vmul.f32 %v2882, %v3184
        %v3197 = vmul.f32 %v2883, %v3184
        %v3198 = vmul.f32 %v2884, %v3184
        %v3199 = vmul.f32 %v2885, %v3184
        %v3200 = vmul.f32 %v2886, %v3184
        %v3201 = vmul.f32 %v2887, %v3184
        %v3202 = vmul.f32 %v2888, %v3184
        %v3203 = vmul.f32 %v2889, %v3184
        %v3204 = vmul.f32 %v2890, %v3184
        %v3205 = vmul.f32 %v2891, %v3184
        %v3206 = vmul.f32 %v2892, %v3184
        %v3207 = vmul.f32 %v2893, %v3184
        %v3208 = vmul.f32 %v2894, %v3184
        %v3209 = vmul.f32 %v2895, %v3184
        %v3210 = vmul.f32 %v2896, %v3184
        %v3211 = vmul.f32 %v2897, %v3184
        %v3212 = vmul.f32 %v2898, %v3184
        %v3213 = vmul.f32 %v2899, %v3184
        %v3214 = vmul.f32 %v2900, %v3184
        %v3215 = vmul.f32 %v2901, %v3184
        %v3216 = vmul.f32 %v2902, %v3184
        %v3217 = vmul.f32 %v2903, %v3184
        %v3218 = vadd.f32 %v3149, %v3186
        %v3219 = vadd.f32 %v3150, %v3187
        %v3220 = vadd.f32 %v3151, %v3188
        %v3221 = vadd.f32 %v3152, %v3189
        %v3222 = vadd.f32 %v3153, %v3190
        %v3223 = vadd.f32 %v3154, %v3191
        %v3224 = vadd.f32 %v3155, %v3192
        %v3225 = vadd.f32 %v3156, %v3193
        %v3226 = vadd.f32 %v3157, %v3194
        %v3227 = vadd.f32 %v3158, %v3195
        %v3228 = vadd.f32 %v3159, %v3196
        %v3229 = vadd.f32 %v3160, %v3197
        %v3230 = vadd.f32 %v3161, %v3198
        %v3231 = vadd.f32 %v3162, %v3199
        %v3232 = vadd.f32 %v3163, %v3200
        %v3233 = vadd.f32 %v3164, %v3201
        %v3234 = vadd.f32 %v3165, %v3202
        %v3235 = vadd.f32 %v3166, %v3203
        %v3236 = vadd.f32 %v3167, %v3204
        %v3237 = vadd.f32 %v3168, %v3205
        %v3238 = vadd.f32 %v3169, %v3206
        %v3239 = vadd.f32 %v3170, %v3207
        %v3240 = vadd.f32 %v3171, %v3208
        %v3241 = vadd.f32 %v3172, %v3209
        %v3242 = vadd.f32 %v3173, %v3210
        %v3243 = vadd.f32 %v3174, %v3211
        %v3244 = vadd.f32 %v3175, %v3212
        %v3245 = vadd.f32 %v3176, %v3213
        %v3246 = vadd.f32 %v3177, %v3214
        %v3247 = vadd.f32 %v3178, %v3215
        %v3248 = vadd.f32 %v3179, %v3216
        %v3249 = vadd.f32 %v3180, %v3217
        %s3250 = scalar_lea.vmem %s6, 3
        %v3251 = vld [vmem:[%s3250] sm:$0x1]
        %v3253 = vperm.slane %v3251, 0
        %v3255 = vmul.f32 %v2906, %v3253
        %v3256 = vmul.f32 %v2907, %v3253
        %v3257 = vmul.f32 %v2908, %v3253
        %v3258 = vmul.f32 %v2909, %v3253
        %v3259 = vmul.f32 %v2910, %v3253
        %v3260 = vmul.f32 %v2911, %v3253
        %v3261 = vmul.f32 %v2912, %v3253
        %v3262 = vmul.f32 %v2913, %v3253
        %v3263 = vmul.f32 %v2914, %v3253
        %v3264 = vmul.f32 %v2915, %v3253
        %v3265 = vmul.f32 %v2916, %v3253
        %v3266 = vmul.f32 %v2917, %v3253
        %v3267 = vmul.f32 %v2918, %v3253
        %v3268 = vmul.f32 %v2919, %v3253
        %v3269 = vmul.f32 %v2920, %v3253
        %v3270 = vmul.f32 %v2921, %v3253
        %v3271 = vmul.f32 %v2922, %v3253
        %v3272 = vmul.f32 %v2923, %v3253
        %v3273 = vmul.f32 %v2924, %v3253
        %v3274 = vmul.f32 %v2925, %v3253
        %v3275 = vmul.f32 %v2926, %v3253
        %v3276 = vmul.f32 %v2927, %v3253
        %v3277 = vmul.f32 %v2928, %v3253
        %v3278 = vmul.f32 %v2929, %v3253
        %v3279 = vmul.f32 %v2930, %v3253
        %v3280 = vmul.f32 %v2931, %v3253
        %v3281 = vmul.f32 %v2932, %v3253
        %v3282 = vmul.f32 %v2933, %v3253
        %v3283 = vmul.f32 %v2934, %v3253
        %v3284 = vmul.f32 %v2935, %v3253
        %v3285 = vmul.f32 %v2936, %v3253
        %v3286 = vmul.f32 %v2937, %v3253
        %v3287 = vadd.f32 %v3218, %v3255
        %v3288 = vadd.f32 %v3219, %v3256
        %v3289 = vadd.f32 %v3220, %v3257
        %v3290 = vadd.f32 %v3221, %v3258
        %v3291 = vadd.f32 %v3222, %v3259
        %v3292 = vadd.f32 %v3223, %v3260
        %v3293 = vadd.f32 %v3224, %v3261
        %v3294 = vadd.f32 %v3225, %v3262
        %v3295 = vadd.f32 %v3226, %v3263
        %v3296 = vadd.f32 %v3227, %v3264
        %v3297 = vadd.f32 %v3228, %v3265
        %v3298 = vadd.f32 %v3229, %v3266
        %v3299 = vadd.f32 %v3230, %v3267
        %v3300 = vadd.f32 %v3231, %v3268
        %v3301 = vadd.f32 %v3232, %v3269
        %v3302 = vadd.f32 %v3233, %v3270
        %v3303 = vadd.f32 %v3234, %v3271
        %v3304 = vadd.f32 %v3235, %v3272
        %v3305 = vadd.f32 %v3236, %v3273
        %v3306 = vadd.f32 %v3237, %v3274
        %v3307 = vadd.f32 %v3238, %v3275
        %v3308 = vadd.f32 %v3239, %v3276
        %v3309 = vadd.f32 %v3240, %v3277
        %v3310 = vadd.f32 %v3241, %v3278
        %v3311 = vadd.f32 %v3242, %v3279
        %v3312 = vadd.f32 %v3243, %v3280
        %v3313 = vadd.f32 %v3244, %v3281
        %v3314 = vadd.f32 %v3245, %v3282
        %v3315 = vadd.f32 %v3246, %v3283
        %v3316 = vadd.f32 %v3247, %v3284
        %v3317 = vadd.f32 %v3248, %v3285
        %v3318 = vadd.f32 %v3249, %v3286
        %s3319 = scalar_lea.vmem %s6, 4
        %v3320 = vld [vmem:[%s3319] sm:$0x1]
        %v3322 = vperm.slane %v3320, 0
        %v3324 = vmul.f32 %v2810, %v3322
        %v3325 = vmul.f32 %v2811, %v3322
        %v3326 = vmul.f32 %v2812, %v3322
        %v3327 = vmul.f32 %v2813, %v3322
        %v3328 = vmul.f32 %v2814, %v3322
        %v3329 = vmul.f32 %v2815, %v3322
        %v3330 = vmul.f32 %v2816, %v3322
        %v3331 = vmul.f32 %v2817, %v3322
        %v3332 = vmul.f32 %v2818, %v3322
        %v3333 = vmul.f32 %v2819, %v3322
        %v3334 = vmul.f32 %v2820, %v3322
        %v3335 = vmul.f32 %v2821, %v3322
        %v3336 = vmul.f32 %v2822, %v3322
        %v3337 = vmul.f32 %v2823, %v3322
        %v3338 = vmul.f32 %v2824, %v3322
        %v3339 = vmul.f32 %v2825, %v3322
        %v3340 = vmul.f32 %v2826, %v3322
        %v3341 = vmul.f32 %v2827, %v3322
        %v3342 = vmul.f32 %v2828, %v3322
        %v3343 = vmul.f32 %v2829, %v3322
        %v3344 = vmul.f32 %v2830, %v3322
        %v3345 = vmul.f32 %v2831, %v3322
        %v3346 = vmul.f32 %v2832, %v3322
        %v3347 = vmul.f32 %v2833, %v3322
        %v3348 = vmul.f32 %v2834, %v3322
        %v3349 = vmul.f32 %v2835, %v3322
        %v3350 = vmul.f32 %v2836, %v3322
        %v3351 = vmul.f32 %v2837, %v3322
        %v3352 = vmul.f32 %v2838, %v3322
        %v3353 = vmul.f32 %v2839, %v3322
        %v3354 = vmul.f32 %v2938, %v3322
        %v3355 = vmul.f32 %v2939, %v3322
        %v3356 = vadd.f32 %v3287, %v3324
        %v3357 = vadd.f32 %v3288, %v3325
        %v3358 = vadd.f32 %v3289, %v3326
        %v3359 = vadd.f32 %v3290, %v3327
        %v3360 = vadd.f32 %v3291, %v3328
        %v3361 = vadd.f32 %v3292, %v3329
        %v3362 = vadd.f32 %v3293, %v3330
        %v3363 = vadd.f32 %v3294, %v3331
        %v3364 = vadd.f32 %v3295, %v3332
        %v3365 = vadd.f32 %v3296, %v3333
        %v3366 = vadd.f32 %v3297, %v3334
        %v3367 = vadd.f32 %v3298, %v3335
        %v3368 = vadd.f32 %v3299, %v3336
        %v3369 = vadd.f32 %v3300, %v3337
        %v3370 = vadd.f32 %v3301, %v3338
        %v3371 = vadd.f32 %v3302, %v3339
        %v3372 = vadd.f32 %v3303, %v3340
        %v3373 = vadd.f32 %v3304, %v3341
        %v3374 = vadd.f32 %v3305, %v3342
        %v3375 = vadd.f32 %v3306, %v3343
        %v3376 = vadd.f32 %v3307, %v3344
        %v3377 = vadd.f32 %v3308, %v3345
        %v3378 = vadd.f32 %v3309, %v3346
        %v3379 = vadd.f32 %v3310, %v3347
        %v3380 = vadd.f32 %v3311, %v3348
        %v3381 = vadd.f32 %v3312, %v3349
        %v3382 = vadd.f32 %v3313, %v3350
        %v3383 = vadd.f32 %v3314, %v3351
        %v3384 = vadd.f32 %v3315, %v3352
        %v3385 = vadd.f32 %v3316, %v3353
        %v3386 = vadd.f32 %v3317, %v3354
        %v3387 = vadd.f32 %v3318, %v3355
        %s3388 = scalar_lea.vmem %s6, 5
        %v3389 = vld [vmem:[%s3388] sm:$0x1]
        %v3391 = vperm.slane %v3389, 0
        %v3393 = vmul.f32 %v2942, %v3391
        %v3394 = vmul.f32 %v2943, %v3391
        %v3395 = vmul.f32 %v2944, %v3391
        %v3396 = vmul.f32 %v2945, %v3391
        %v3397 = vmul.f32 %v2946, %v3391
        %v3398 = vmul.f32 %v2947, %v3391
        %v3399 = vmul.f32 %v2948, %v3391
        %v3400 = vmul.f32 %v2949, %v3391
        %v3401 = vmul.f32 %v2950, %v3391
        %v3402 = vmul.f32 %v2951, %v3391
        %v3403 = vmul.f32 %v2952, %v3391
        %v3404 = vmul.f32 %v2953, %v3391
        %v3405 = vmul.f32 %v2954, %v3391
        %v3406 = vmul.f32 %v2955, %v3391
        %v3407 = vmul.f32 %v2956, %v3391
        %v3408 = vmul.f32 %v2957, %v3391
        %v3409 = vmul.f32 %v2958, %v3391
        %v3410 = vmul.f32 %v2959, %v3391
        %v3411 = vmul.f32 %v2960, %v3391
        %v3412 = vmul.f32 %v2961, %v3391
        %v3413 = vmul.f32 %v2962, %v3391
        %v3414 = vmul.f32 %v2963, %v3391
        %v3415 = vmul.f32 %v2964, %v3391
        %v3416 = vmul.f32 %v2965, %v3391
        %v3417 = vmul.f32 %v2966, %v3391
        %v3418 = vmul.f32 %v2967, %v3391
        %v3419 = vmul.f32 %v2968, %v3391
        %v3420 = vmul.f32 %v2969, %v3391
        %v3421 = vmul.f32 %v2970, %v3391
        %v3422 = vmul.f32 %v2971, %v3391
        %v3423 = vmul.f32 %v2972, %v3391
        %v3424 = vmul.f32 %v2973, %v3391
        %v3425 = vadd.f32 %v3356, %v3393
        %v3426 = vadd.f32 %v3357, %v3394
        %v3427 = vadd.f32 %v3358, %v3395
        %v3428 = vadd.f32 %v3359, %v3396
        %v3429 = vadd.f32 %v3360, %v3397
        %v3430 = vadd.f32 %v3361, %v3398
        %v3431 = vadd.f32 %v3362, %v3399
        %v3432 = vadd.f32 %v3363, %v3400
        %v3433 = vadd.f32 %v3364, %v3401
        %v3434 = vadd.f32 %v3365, %v3402
        %v3435 = vadd.f32 %v3366, %v3403
        %v3436 = vadd.f32 %v3367, %v3404
        %v3437 = vadd.f32 %v3368, %v3405
        %v3438 = vadd.f32 %v3369, %v3406
        %v3439 = vadd.f32 %v3370, %v3407
        %v3440 = vadd.f32 %v3371, %v3408
        %v3441 = vadd.f32 %v3372, %v3409
        %v3442 = vadd.f32 %v3373, %v3410
        %v3443 = vadd.f32 %v3374, %v3411
        %v3444 = vadd.f32 %v3375, %v3412
        %v3445 = vadd.f32 %v3376, %v3413
        %v3446 = vadd.f32 %v3377, %v3414
        %v3447 = vadd.f32 %v3378, %v3415
        %v3448 = vadd.f32 %v3379, %v3416
        %v3449 = vadd.f32 %v3380, %v3417
        %v3450 = vadd.f32 %v3381, %v3418
        %v3451 = vadd.f32 %v3382, %v3419
        %v3452 = vadd.f32 %v3383, %v3420
        %v3453 = vadd.f32 %v3384, %v3421
        %v3454 = vadd.f32 %v3385, %v3422
        %v3455 = vadd.f32 %v3386, %v3423
        %v3456 = vadd.f32 %v3387, %v3424
        %s3457 = scalar_lea.vmem %s6, 6
        %v3458 = vld [vmem:[%s3457] sm:$0x1]
        %v3460 = vperm.slane %v3458, 0
        %v3462 = vmul.f32 %v2976, %v3460
        %v3463 = vmul.f32 %v2977, %v3460
        %v3464 = vmul.f32 %v2978, %v3460
        %v3465 = vmul.f32 %v2979, %v3460
        %v3466 = vmul.f32 %v2980, %v3460
        %v3467 = vmul.f32 %v2981, %v3460
        %v3468 = vmul.f32 %v2982, %v3460
        %v3469 = vmul.f32 %v2983, %v3460
        %v3470 = vmul.f32 %v2984, %v3460
        %v3471 = vmul.f32 %v2985, %v3460
        %v3472 = vmul.f32 %v2986, %v3460
        %v3473 = vmul.f32 %v2987, %v3460
        %v3474 = vmul.f32 %v2988, %v3460
        %v3475 = vmul.f32 %v2989, %v3460
        %v3476 = vmul.f32 %v2990, %v3460
        %v3477 = vmul.f32 %v2991, %v3460
        %v3478 = vmul.f32 %v2992, %v3460
        %v3479 = vmul.f32 %v2993, %v3460
        %v3480 = vmul.f32 %v2994, %v3460
        %v3481 = vmul.f32 %v2995, %v3460
        %v3482 = vmul.f32 %v2996, %v3460
        %v3483 = vmul.f32 %v2997, %v3460
        %v3484 = vmul.f32 %v2998, %v3460
        %v3485 = vmul.f32 %v2999, %v3460
        %v3486 = vmul.f32 %v3000, %v3460
        %v3487 = vmul.f32 %v3001, %v3460
        %v3488 = vmul.f32 %v3002, %v3460
        %v3489 = vmul.f32 %v3003, %v3460
        %v3490 = vmul.f32 %v3004, %v3460
        %v3491 = vmul.f32 %v3005, %v3460
        %v3492 = vmul.f32 %v3006, %v3460
        %v3493 = vmul.f32 %v3007, %v3460
        %v3494 = vadd.f32 %v3425, %v3462
        %v3495 = vadd.f32 %v3426, %v3463
        %v3496 = vadd.f32 %v3427, %v3464
        %v3497 = vadd.f32 %v3428, %v3465
        %v3498 = vadd.f32 %v3429, %v3466
        %v3499 = vadd.f32 %v3430, %v3467
        %v3500 = vadd.f32 %v3431, %v3468
        %v3501 = vadd.f32 %v3432, %v3469
        %v3502 = vadd.f32 %v3433, %v3470
        %v3503 = vadd.f32 %v3434, %v3471
        %v3504 = vadd.f32 %v3435, %v3472
        %v3505 = vadd.f32 %v3436, %v3473
        %v3506 = vadd.f32 %v3437, %v3474
        %v3507 = vadd.f32 %v3438, %v3475
        %v3508 = vadd.f32 %v3439, %v3476
        %v3509 = vadd.f32 %v3440, %v3477
        %v3510 = vadd.f32 %v3441, %v3478
        %v3511 = vadd.f32 %v3442, %v3479
        %v3512 = vadd.f32 %v3443, %v3480
        %v3513 = vadd.f32 %v3444, %v3481
        %v3514 = vadd.f32 %v3445, %v3482
        %v3515 = vadd.f32 %v3446, %v3483
        %v3516 = vadd.f32 %v3447, %v3484
        %v3517 = vadd.f32 %v3448, %v3485
        %v3518 = vadd.f32 %v3449, %v3486
        %v3519 = vadd.f32 %v3450, %v3487
        %v3520 = vadd.f32 %v3451, %v3488
        %v3521 = vadd.f32 %v3452, %v3489
        %v3522 = vadd.f32 %v3453, %v3490
        %v3523 = vadd.f32 %v3454, %v3491
        %v3524 = vadd.f32 %v3455, %v3492
        %v3525 = vadd.f32 %v3456, %v3493
        %s3526 = scalar_lea.vmem %s6, 7
        %v3527 = vld [vmem:[%s3526] sm:$0x1]
        %v3529 = vperm.slane %v3527, 0
        %v3531 = vmul.f32 %v2812, %v3529
        %v3532 = vmul.f32 %v2813, %v3529
        %v3533 = vmul.f32 %v2814, %v3529
        %v3534 = vmul.f32 %v2815, %v3529
        %v3535 = vmul.f32 %v2816, %v3529
        %v3536 = vmul.f32 %v2817, %v3529
        %v3537 = vmul.f32 %v2818, %v3529
        %v3538 = vmul.f32 %v2819, %v3529
        %v3539 = vmul.f32 %v2820, %v3529
        %v3540 = vmul.f32 %v2821, %v3529
        %v3541 = vmul.f32 %v2822, %v3529
        %v3542 = vmul.f32 %v2823, %v3529
        %v3543 = vmul.f32 %v2824, %v3529
        %v3544 = vmul.f32 %v2825, %v3529
        %v3545 = vmul.f32 %v2826, %v3529
        %v3546 = vmul.f32 %v2827, %v3529
        %v3547 = vmul.f32 %v2828, %v3529
        %v3548 = vmul.f32 %v2829, %v3529
        %v3549 = vmul.f32 %v2830, %v3529
        %v3550 = vmul.f32 %v2831, %v3529
        %v3551 = vmul.f32 %v2832, %v3529
        %v3552 = vmul.f32 %v2833, %v3529
        %v3553 = vmul.f32 %v2834, %v3529
        %v3554 = vmul.f32 %v2835, %v3529
        %v3555 = vmul.f32 %v2836, %v3529
        %v3556 = vmul.f32 %v2837, %v3529
        %v3557 = vmul.f32 %v2838, %v3529
        %v3558 = vmul.f32 %v2839, %v3529
        %v3559 = vmul.f32 %v2938, %v3529
        %v3560 = vmul.f32 %v2939, %v3529
        %v3561 = vmul.f32 %v3008, %v3529
        %v3562 = vmul.f32 %v3009, %v3529
        %v3563 = vadd.f32 %v3494, %v3531
        %v3564 = vadd.f32 %v3495, %v3532
        %v3565 = vadd.f32 %v3496, %v3533
        %v3566 = vadd.f32 %v3497, %v3534
        %v3567 = vadd.f32 %v3498, %v3535
        %v3568 = vadd.f32 %v3499, %v3536
        %v3569 = vadd.f32 %v3500, %v3537
        %v3570 = vadd.f32 %v3501, %v3538
        %v3571 = vadd.f32 %v3502, %v3539
        %v3572 = vadd.f32 %v3503, %v3540
        %v3573 = vadd.f32 %v3504, %v3541
        %v3574 = vadd.f32 %v3505, %v3542
        %v3575 = vadd.f32 %v3506, %v3543
        %v3576 = vadd.f32 %v3507, %v3544
        %v3577 = vadd.f32 %v3508, %v3545
        %v3578 = vadd.f32 %v3509, %v3546
        %v3579 = vadd.f32 %v3510, %v3547
        %v3580 = vadd.f32 %v3511, %v3548
        %v3581 = vadd.f32 %v3512, %v3549
        %v3582 = vadd.f32 %v3513, %v3550
        %v3583 = vadd.f32 %v3514, %v3551
        %v3584 = vadd.f32 %v3515, %v3552
        %v3585 = vadd.f32 %v3516, %v3553
        %v3586 = vadd.f32 %v3517, %v3554
        %v3587 = vadd.f32 %v3518, %v3555
        %v3588 = vadd.f32 %v3519, %v3556
        %v3589 = vadd.f32 %v3520, %v3557
        %v3590 = vadd.f32 %v3521, %v3558
        %v3591 = vadd.f32 %v3522, %v3559
        %v3592 = vadd.f32 %v3523, %v3560
        %v3593 = vadd.f32 %v3524, %v3561
        %v3594 = vadd.f32 %v3525, %v3562
        %s3595 = scalar_lea.vmem %s6, 8
        %v3596 = vld [vmem:[%s3595] sm:$0x1]
        %v3598 = vperm.slane %v3596, 0
        %v3600 = vmul.f32 %v3012, %v3598
        %v3601 = vmul.f32 %v3013, %v3598
        %v3602 = vmul.f32 %v3014, %v3598
        %v3603 = vmul.f32 %v3015, %v3598
        %v3604 = vmul.f32 %v3016, %v3598
        %v3605 = vmul.f32 %v3017, %v3598
        %v3606 = vmul.f32 %v3018, %v3598
        %v3607 = vmul.f32 %v3019, %v3598
        %v3608 = vmul.f32 %v3020, %v3598
        %v3609 = vmul.f32 %v3021, %v3598
        %v3610 = vmul.f32 %v3022, %v3598
        %v3611 = vmul.f32 %v3023, %v3598
        %v3612 = vmul.f32 %v3024, %v3598
        %v3613 = vmul.f32 %v3025, %v3598
        %v3614 = vmul.f32 %v3026, %v3598
        %v3615 = vmul.f32 %v3027, %v3598
        %v3616 = vmul.f32 %v3028, %v3598
        %v3617 = vmul.f32 %v3029, %v3598
        %v3618 = vmul.f32 %v3030, %v3598
        %v3619 = vmul.f32 %v3031, %v3598
        %v3620 = vmul.f32 %v3032, %v3598
        %v3621 = vmul.f32 %v3033, %v3598
        %v3622 = vmul.f32 %v3034, %v3598
        %v3623 = vmul.f32 %v3035, %v3598
        %v3624 = vmul.f32 %v3036, %v3598
        %v3625 = vmul.f32 %v3037, %v3598
        %v3626 = vmul.f32 %v3038, %v3598
        %v3627 = vmul.f32 %v3039, %v3598
        %v3628 = vmul.f32 %v3040, %v3598
        %v3629 = vmul.f32 %v3041, %v3598
        %v3630 = vmul.f32 %v3042, %v3598
        %v3631 = vmul.f32 %v3043, %v3598
        %v3632 = vadd.f32 %v3563, %v3600
        %v3633 = vadd.f32 %v3564, %v3601
        %v3634 = vadd.f32 %v3565, %v3602
        %v3635 = vadd.f32 %v3566, %v3603
        %v3636 = vadd.f32 %v3567, %v3604
        %v3637 = vadd.f32 %v3568, %v3605
        %v3638 = vadd.f32 %v3569, %v3606
        %v3639 = vadd.f32 %v3570, %v3607
        %v3640 = vadd.f32 %v3571, %v3608
        %v3641 = vadd.f32 %v3572, %v3609
        %v3642 = vadd.f32 %v3573, %v3610
        %v3643 = vadd.f32 %v3574, %v3611
        %v3644 = vadd.f32 %v3575, %v3612
        %v3645 = vadd.f32 %v3576, %v3613
        %v3646 = vadd.f32 %v3577, %v3614
        %v3647 = vadd.f32 %v3578, %v3615
        %v3648 = vadd.f32 %v3579, %v3616
        %v3649 = vadd.f32 %v3580, %v3617
        %v3650 = vadd.f32 %v3581, %v3618
        %v3651 = vadd.f32 %v3582, %v3619
        %v3652 = vadd.f32 %v3583, %v3620
        %v3653 = vadd.f32 %v3584, %v3621
        %v3654 = vadd.f32 %v3585, %v3622
        %v3655 = vadd.f32 %v3586, %v3623
        %v3656 = vadd.f32 %v3587, %v3624
        %v3657 = vadd.f32 %v3588, %v3625
        %v3658 = vadd.f32 %v3589, %v3626
        %v3659 = vadd.f32 %v3590, %v3627
        %v3660 = vadd.f32 %v3591, %v3628
        %v3661 = vadd.f32 %v3592, %v3629
        %v3662 = vadd.f32 %v3593, %v3630
        %v3663 = vadd.f32 %v3594, %v3631
        %v3664 = vpack.c.bf16 %v3633, %v3632
        %v3665 = vpack.c.bf16 %v3635, %v3634
        %v3666 = vpack.c.bf16 %v3637, %v3636
        %v3667 = vpack.c.bf16 %v3639, %v3638
        %v3668 = vpack.c.bf16 %v3641, %v3640
        %v3669 = vpack.c.bf16 %v3643, %v3642
        %v3670 = vpack.c.bf16 %v3645, %v3644
        %v3671 = vpack.c.bf16 %v3647, %v3646
        %v3672 = vpack.c.bf16 %v3649, %v3648
        %v3673 = vpack.c.bf16 %v3651, %v3650
        %v3674 = vpack.c.bf16 %v3653, %v3652
        %v3675 = vpack.c.bf16 %v3655, %v3654
        %v3676 = vpack.c.bf16 %v3657, %v3656
        %v3677 = vpack.c.bf16 %v3659, %v3658
        %v3678 = vpack.c.bf16 %v3661, %v3660
        %v3679 = vpack.c.bf16 %v3663, %v3662
        %v3680 = vld [vmem:[%s7] sm:$0xf]
        %v3681 = vld [vmem:[%s7 + $0x4] sm:$0xf]
        %v3682 = vld [vmem:[%s7 + $0x8] sm:$0xf]
        %v3683 = vld [vmem:[%s7 + $0xc] sm:$0xf]
        %v3684 = vld [vmem:[%s7 + $0x10] sm:$0xf]
        %v3685 = vld [vmem:[%s7 + $0x14] sm:$0xf]
        %v3686 = vld [vmem:[%s7 + $0x18] sm:$0xf]
        %v3687 = vld [vmem:[%s7 + $0x1c] sm:$0xf]
        %v3688 = vld [vmem:[%s8] sm:$0x1]
        %v3690 = vperm.slane %v3688, 0
        %v3700 = vunpack.c.l.b16 %v3680
        %v3701 = vunpack.c.l.b16 %v3681
        %v3702 = vunpack.c.l.b16 %v3682
        %v3703 = vunpack.c.l.b16 %v3683
        %v3704 = vunpack.c.l.b16 %v3684
        %v3705 = vunpack.c.l.b16 %v3685
        %v3706 = vunpack.c.l.b16 %v3686
        %v3707 = vunpack.c.l.b16 %v3687
        %v3708 = vpack.c.b16 %v3701, %v3700
        %v3709 = vpack.c.b16 %v3703, %v3702
        %v3710 = vpack.c.b16 %v3705, %v3704
        %v3711 = vpack.c.b16 %v3707, %v3706
        %v3717 = vsel %vm386, %v3664, 0
        %v3720 = vsel %vm386, %v3665, 0
        %v3723 = vsel %vm386, %v3666, 0
        %v3726 = vsel %vm386, %v3667, 0
        %v3729 = vsel %vm386, %v3668, 0
        %v3732 = vsel %vm386, %v3669, 0
        %v3735 = vsel %vm386, %v3670, 0
        %v3738 = vsel %vm386, %v3671, 0
        %v3741 = vsel %vm386, %v3672, 0
        %v3744 = vsel %vm386, %v3673, 0
        %v3747 = vsel %vm386, %v3674, 0
        %v3750 = vsel %vm386, %v3675, 0
        %v3753 = vsel %vm386, %v3676, 0
        %v3756 = vsel %vm386, %v3677, 0
        %v3759 = vsel %vm386, %v3678, 0
        %v3762 = vsel %vm386, %v3679, 0
        %3764 = vmatpush.bf16.msra.mxu0 0
        %3765 = vmatpush.bf16.msra.mxu0 0
        %3766 = vmatpush.bf16.msra.mxu0 0
        %3767 = vmatpush.bf16.msra.mxu0 0
        %3768 = vmatpush.bf16.msra.mxu0 %v3711
        %3769 = vmatpush.bf16.msra.mxu0 %v3710
        %3770 = vmatpush.bf16.msra.mxu0 %v3709
        %3771 = vmatpush.bf16.msra.mxu0 %v3708
        %3772 = vmatmul.bf16.gmra.mxu0 %v3717
        %v3773 = vpop.f32.mrf.mxu0
        %v3774 = vadd.f32 %v3690, %v3773
        %v3775 = vpop.f32.mrf.mxu0
        %v3776 = vadd.f32 %v3690, %v3775
        %3777 = vmatmul.bf16.gmra.mxu0 %v3720
        %v3778 = vpop.f32.mrf.mxu0
        %v3779 = vadd.f32 %v3690, %v3778
        %v3780 = vpop.f32.mrf.mxu0
        %v3781 = vadd.f32 %v3690, %v3780
        %3782 = vmatmul.bf16.gmra.mxu0 %v3723
        %v3783 = vpop.f32.mrf.mxu0
        %v3784 = vadd.f32 %v3690, %v3783
        %v3785 = vpop.f32.mrf.mxu0
        %v3786 = vadd.f32 %v3690, %v3785
        %3787 = vmatmul.bf16.gmra.mxu0 %v3726
        %v3788 = vpop.f32.mrf.mxu0
        %v3789 = vadd.f32 %v3690, %v3788
        %v3790 = vpop.f32.mrf.mxu0
        %v3791 = vadd.f32 %v3690, %v3790
        %3792 = vmatmul.bf16.gmra.mxu0 %v3729
        %v3793 = vpop.f32.mrf.mxu0
        %v3794 = vadd.f32 %v3690, %v3793
        %v3795 = vpop.f32.mrf.mxu0
        %v3796 = vadd.f32 %v3690, %v3795
        %3797 = vmatmul.bf16.gmra.mxu0 %v3732
        %v3798 = vpop.f32.mrf.mxu0
        %v3799 = vadd.f32 %v3690, %v3798
        %v3800 = vpop.f32.mrf.mxu0
        %v3801 = vadd.f32 %v3690, %v3800
        %3802 = vmatmul.bf16.gmra.mxu0 %v3735
        %v3803 = vpop.f32.mrf.mxu0
        %v3804 = vadd.f32 %v3690, %v3803
        %v3805 = vpop.f32.mrf.mxu0
        %v3806 = vadd.f32 %v3690, %v3805
        %3807 = vmatmul.bf16.gmra.mxu0 %v3738
        %v3808 = vpop.f32.mrf.mxu0
        %v3809 = vadd.f32 %v3690, %v3808
        %v3810 = vpop.f32.mrf.mxu0
        %v3811 = vadd.f32 %v3690, %v3810
        %3812 = vmatmul.bf16.gmra.mxu0 %v3741
        %v3813 = vpop.f32.mrf.mxu0
        %v3814 = vadd.f32 %v3690, %v3813
        %v3815 = vpop.f32.mrf.mxu0
        %v3816 = vadd.f32 %v3690, %v3815
        %3817 = vmatmul.bf16.gmra.mxu0 %v3744
        %v3818 = vpop.f32.mrf.mxu0
        %v3819 = vadd.f32 %v3690, %v3818
        %v3820 = vpop.f32.mrf.mxu0
        %v3821 = vadd.f32 %v3690, %v3820
        %3822 = vmatmul.bf16.gmra.mxu0 %v3747
        %v3823 = vpop.f32.mrf.mxu0
        %v3824 = vadd.f32 %v3690, %v3823
        %v3825 = vpop.f32.mrf.mxu0
        %v3826 = vadd.f32 %v3690, %v3825
        %3827 = vmatmul.bf16.gmra.mxu0 %v3750
        %v3828 = vpop.f32.mrf.mxu0
        %v3829 = vadd.f32 %v3690, %v3828
        %v3830 = vpop.f32.mrf.mxu0
        %v3831 = vadd.f32 %v3690, %v3830
        %3832 = vmatmul.bf16.gmra.mxu0 %v3753
        %v3833 = vpop.f32.mrf.mxu0
        %v3834 = vadd.f32 %v3690, %v3833
        %v3835 = vpop.f32.mrf.mxu0
        %v3836 = vadd.f32 %v3690, %v3835
        %3837 = vmatmul.bf16.gmra.mxu0 %v3756
        %v3838 = vpop.f32.mrf.mxu0
        %v3839 = vadd.f32 %v3690, %v3838
        %v3840 = vpop.f32.mrf.mxu0
        %v3841 = vadd.f32 %v3690, %v3840
        %3842 = vmatmul.bf16.gmra.mxu0 %v3759
        %v3843 = vpop.f32.mrf.mxu0
        %v3844 = vadd.f32 %v3690, %v3843
        %v3845 = vpop.f32.mrf.mxu0
        %v3846 = vadd.f32 %v3690, %v3845
        %3847 = vmatmul.bf16.gmra.mxu0 %v3762
        %v3848 = vpop.f32.mrf.mxu0
        %v3849 = vadd.f32 %v3690, %v3848
        %v3850 = vpop.f32.mrf.mxu0
        %v3851 = vadd.f32 %v3690, %v3850
        %3852 = vdwg.mxu0
        %v3853 = vsub.f32 0.0, %v3774
        %v3854 = vsub.f32 0.0, %v3776
        %v3855 = vsub.f32 0.0, %v3779
        %v3856 = vsub.f32 0.0, %v3781
        %v3857 = vsub.f32 0.0, %v3784
        %v3858 = vsub.f32 0.0, %v3786
        %v3859 = vsub.f32 0.0, %v3789
        %v3860 = vsub.f32 0.0, %v3791
        %v3861 = vsub.f32 0.0, %v3794
        %v3862 = vsub.f32 0.0, %v3796
        %v3863 = vsub.f32 0.0, %v3799
        %v3864 = vsub.f32 0.0, %v3801
        %v3865 = vsub.f32 0.0, %v3804
        %v3866 = vsub.f32 0.0, %v3806
        %v3867 = vsub.f32 0.0, %v3809
        %v3868 = vsub.f32 0.0, %v3811
        %v3869 = vsub.f32 0.0, %v3814
        %v3870 = vsub.f32 0.0, %v3816
        %v3871 = vsub.f32 0.0, %v3819
        %v3872 = vsub.f32 0.0, %v3821
        %v3873 = vsub.f32 0.0, %v3824
        %v3874 = vsub.f32 0.0, %v3826
        %v3875 = vsub.f32 0.0, %v3829
        %v3876 = vsub.f32 0.0, %v3831
        %v3877 = vsub.f32 0.0, %v3834
        %v3878 = vsub.f32 0.0, %v3836
        %v3879 = vsub.f32 0.0, %v3839
        %v3880 = vsub.f32 0.0, %v3841
        %v3881 = vsub.f32 0.0, %v3844
        %v3882 = vsub.f32 0.0, %v3846
        %v3883 = vsub.f32 0.0, %v3849
        %v3884 = vsub.f32 0.0, %v3851
        %v3885 = vmul.f32 %v3853, 1.442695
        %v3886 = vpow.pop %v3885
        %v3887 = vmul.f32 %v3854, 1.442695
        %v3888 = vpow.pop %v3887
        %v3889 = vmul.f32 %v3855, 1.442695
        %v3890 = vpow.pop %v3889
        %v3891 = vmul.f32 %v3856, 1.442695
        %v3892 = vpow.pop %v3891
        %v3893 = vmul.f32 %v3857, 1.442695
        %v3894 = vpow.pop %v3893
        %v3895 = vmul.f32 %v3858, 1.442695
        %v3896 = vpow.pop %v3895
        %v3897 = vmul.f32 %v3859, 1.442695
        %v3898 = vpow.pop %v3897
        %v3899 = vmul.f32 %v3860, 1.442695
        %v3900 = vpow.pop %v3899
        %v3901 = vmul.f32 %v3861, 1.442695
        %v3902 = vpow.pop %v3901
        %v3903 = vmul.f32 %v3862, 1.442695
        %v3904 = vpow.pop %v3903
        %v3905 = vmul.f32 %v3863, 1.442695
        %v3906 = vpow.pop %v3905
        %v3907 = vmul.f32 %v3864, 1.442695
        %v3908 = vpow.pop %v3907
        %v3909 = vmul.f32 %v3865, 1.442695
        %v3910 = vpow.pop %v3909
        %v3911 = vmul.f32 %v3866, 1.442695
        %v3912 = vpow.pop %v3911
        %v3913 = vmul.f32 %v3867, 1.442695
        %v3914 = vpow.pop %v3913
        %v3915 = vmul.f32 %v3868, 1.442695
        %v3916 = vpow.pop %v3915
        %v3917 = vmul.f32 %v3869, 1.442695
        %v3918 = vpow.pop %v3917
        %v3919 = vmul.f32 %v3870, 1.442695
        %v3920 = vpow.pop %v3919
        %v3921 = vmul.f32 %v3871, 1.442695
        %v3922 = vpow.pop %v3921
        %v3923 = vmul.f32 %v3872, 1.442695
        %v3924 = vpow.pop %v3923
        %v3925 = vmul.f32 %v3873, 1.442695
        %v3926 = vpow.pop %v3925
        %v3927 = vmul.f32 %v3874, 1.442695
        %v3928 = vpow.pop %v3927
        %v3929 = vmul.f32 %v3875, 1.442695
        %v3930 = vpow.pop %v3929
        %v3931 = vmul.f32 %v3876, 1.442695
        %v3932 = vpow.pop %v3931
        %v3933 = vmul.f32 %v3877, 1.442695
        %v3934 = vpow.pop %v3933
        %v3935 = vmul.f32 %v3878, 1.442695
        %v3936 = vpow.pop %v3935
        %v3937 = vmul.f32 %v3879, 1.442695
        %v3938 = vpow.pop %v3937
        %v3939 = vmul.f32 %v3880, 1.442695
        %v3940 = vpow.pop %v3939
        %v3941 = vmul.f32 %v3881, 1.442695
        %v3942 = vpow.pop %v3941
        %v3943 = vmul.f32 %v3882, 1.442695
        %v3944 = vpow.pop %v3943
        %v3945 = vmul.f32 %v3883, 1.442695
        %v3946 = vpow.pop %v3945
        %v3947 = vmul.f32 %v3884, 1.442695
        %v3948 = vpow.pop %v3947
        %v3949 = vadd.f32 %v3886, 1.0
        %v3950 = vadd.f32 %v3888, 1.0
        %v3951 = vadd.f32 %v3890, 1.0
        %v3952 = vadd.f32 %v3892, 1.0
        %v3953 = vadd.f32 %v3894, 1.0
        %v3954 = vadd.f32 %v3896, 1.0
        %v3955 = vadd.f32 %v3898, 1.0
        %v3956 = vadd.f32 %v3900, 1.0
        %v3957 = vadd.f32 %v3902, 1.0
        %v3958 = vadd.f32 %v3904, 1.0
        %v3959 = vadd.f32 %v3906, 1.0
        %v3960 = vadd.f32 %v3908, 1.0
        %v3961 = vadd.f32 %v3910, 1.0
        %v3962 = vadd.f32 %v3912, 1.0
        %v3963 = vadd.f32 %v3914, 1.0
        %v3964 = vadd.f32 %v3916, 1.0
        %v3965 = vadd.f32 %v3918, 1.0
        %v3966 = vadd.f32 %v3920, 1.0
        %v3967 = vadd.f32 %v3922, 1.0
        %v3968 = vadd.f32 %v3924, 1.0
        %v3969 = vadd.f32 %v3926, 1.0
        %v3970 = vadd.f32 %v3928, 1.0
        %v3971 = vadd.f32 %v3930, 1.0
        %v3972 = vadd.f32 %v3932, 1.0
        %v3973 = vadd.f32 %v3934, 1.0
        %v3974 = vadd.f32 %v3936, 1.0
        %v3975 = vadd.f32 %v3938, 1.0
        %v3976 = vadd.f32 %v3940, 1.0
        %v3977 = vadd.f32 %v3942, 1.0
        %v3978 = vadd.f32 %v3944, 1.0
        %v3979 = vadd.f32 %v3946, 1.0
        %v3980 = vadd.f32 %v3948, 1.0
        %v3981 = vrcp.pop %v3949
        %v3982 = vmul.f32 %v3949, %v3981
        %v3983 = vsub.f32 1.0, %v3982
        %v3984 = vmul.f32 %v3981, %v3983
        %v3985 = vadd.f32 %v3981, %v3984
        %vm3986 = vweird.f32 %v3949
        %vm3987 = vweird.f32 %v3981
        %vm3988 = vmor %vm3986, %vm3987
        %v3989 = vsel %vm3988, %v3981, %v3985
        %v3990 = vand.u32 2147483647, %v3949
        %vm3991 = vcmp.eq.f32.partialorder %v3990, 8.507059e+37
        %v3992 = vand.u32 %v3949, 2147483648
        %v3993 = vor.u32 1.1754944e-38, %v3992
        %v3994 = vsel %vm3991, %v3993, %v3989
        %v3995 = vmul.f32 1.0, %v3994
        %v3996 = vrcp.pop %v3950
        %v3997 = vmul.f32 %v3950, %v3996
        %v3998 = vsub.f32 1.0, %v3997
        %v3999 = vmul.f32 %v3996, %v3998
        %v4000 = vadd.f32 %v3996, %v3999
        %vm4001 = vweird.f32 %v3950
        %vm4002 = vweird.f32 %v3996
        %vm4003 = vmor %vm4001, %vm4002
        %v4004 = vsel %vm4003, %v3996, %v4000
        %v4005 = vand.u32 2147483647, %v3950
        %vm4006 = vcmp.eq.f32.partialorder %v4005, 8.507059e+37
        %v4007 = vand.u32 %v3950, 2147483648
        %v4008 = vor.u32 1.1754944e-38, %v4007
        %v4009 = vsel %vm4006, %v4008, %v4004
        %v4010 = vmul.f32 1.0, %v4009
        %v4011 = vrcp.pop %v3951
        %v4012 = vmul.f32 %v3951, %v4011
        %v4013 = vsub.f32 1.0, %v4012
        %v4014 = vmul.f32 %v4011, %v4013
        %v4015 = vadd.f32 %v4011, %v4014
        %vm4016 = vweird.f32 %v3951
        %vm4017 = vweird.f32 %v4011
        %vm4018 = vmor %vm4016, %vm4017
        %v4019 = vsel %vm4018, %v4011, %v4015
        %v4020 = vand.u32 2147483647, %v3951
        %vm4021 = vcmp.eq.f32.partialorder %v4020, 8.507059e+37
        %v4022 = vand.u32 %v3951, 2147483648
        %v4023 = vor.u32 1.1754944e-38, %v4022
        %v4024 = vsel %vm4021, %v4023, %v4019
        %v4025 = vmul.f32 1.0, %v4024
        %v4026 = vrcp.pop %v3952
        %v4027 = vmul.f32 %v3952, %v4026
        %v4028 = vsub.f32 1.0, %v4027
        %v4029 = vmul.f32 %v4026, %v4028
        %v4030 = vadd.f32 %v4026, %v4029
        %vm4031 = vweird.f32 %v3952
        %vm4032 = vweird.f32 %v4026
        %vm4033 = vmor %vm4031, %vm4032
        %v4034 = vsel %vm4033, %v4026, %v4030
        %v4035 = vand.u32 2147483647, %v3952
        %vm4036 = vcmp.eq.f32.partialorder %v4035, 8.507059e+37
        %v4037 = vand.u32 %v3952, 2147483648
        %v4038 = vor.u32 1.1754944e-38, %v4037
        %v4039 = vsel %vm4036, %v4038, %v4034
        %v4040 = vmul.f32 1.0, %v4039
        %v4041 = vrcp.pop %v3953
        %v4042 = vmul.f32 %v3953, %v4041
        %v4043 = vsub.f32 1.0, %v4042
        %v4044 = vmul.f32 %v4041, %v4043
        %v4045 = vadd.f32 %v4041, %v4044
        %vm4046 = vweird.f32 %v3953
        %vm4047 = vweird.f32 %v4041
        %vm4048 = vmor %vm4046, %vm4047
        %v4049 = vsel %vm4048, %v4041, %v4045
        %v4050 = vand.u32 2147483647, %v3953
        %vm4051 = vcmp.eq.f32.partialorder %v4050, 8.507059e+37
        %v4052 = vand.u32 %v3953, 2147483648
        %v4053 = vor.u32 1.1754944e-38, %v4052
        %v4054 = vsel %vm4051, %v4053, %v4049
        %v4055 = vmul.f32 1.0, %v4054
        %v4056 = vrcp.pop %v3954
        %v4057 = vmul.f32 %v3954, %v4056
        %v4058 = vsub.f32 1.0, %v4057
        %v4059 = vmul.f32 %v4056, %v4058
        %v4060 = vadd.f32 %v4056, %v4059
        %vm4061 = vweird.f32 %v3954
        %vm4062 = vweird.f32 %v4056
        %vm4063 = vmor %vm4061, %vm4062
        %v4064 = vsel %vm4063, %v4056, %v4060
        %v4065 = vand.u32 2147483647, %v3954
        %vm4066 = vcmp.eq.f32.partialorder %v4065, 8.507059e+37
        %v4067 = vand.u32 %v3954, 2147483648
        %v4068 = vor.u32 1.1754944e-38, %v4067
        %v4069 = vsel %vm4066, %v4068, %v4064
        %v4070 = vmul.f32 1.0, %v4069
        %v4071 = vrcp.pop %v3955
        %v4072 = vmul.f32 %v3955, %v4071
        %v4073 = vsub.f32 1.0, %v4072
        %v4074 = vmul.f32 %v4071, %v4073
        %v4075 = vadd.f32 %v4071, %v4074
        %vm4076 = vweird.f32 %v3955
        %vm4077 = vweird.f32 %v4071
        %vm4078 = vmor %vm4076, %vm4077
        %v4079 = vsel %vm4078, %v4071, %v4075
        %v4080 = vand.u32 2147483647, %v3955
        %vm4081 = vcmp.eq.f32.partialorder %v4080, 8.507059e+37
        %v4082 = vand.u32 %v3955, 2147483648
        %v4083 = vor.u32 1.1754944e-38, %v4082
        %v4084 = vsel %vm4081, %v4083, %v4079
        %v4085 = vmul.f32 1.0, %v4084
        %v4086 = vrcp.pop %v3956
        %v4087 = vmul.f32 %v3956, %v4086
        %v4088 = vsub.f32 1.0, %v4087
        %v4089 = vmul.f32 %v4086, %v4088
        %v4090 = vadd.f32 %v4086, %v4089
        %vm4091 = vweird.f32 %v3956
        %vm4092 = vweird.f32 %v4086
        %vm4093 = vmor %vm4091, %vm4092
        %v4094 = vsel %vm4093, %v4086, %v4090
        %v4095 = vand.u32 2147483647, %v3956
        %vm4096 = vcmp.eq.f32.partialorder %v4095, 8.507059e+37
        %v4097 = vand.u32 %v3956, 2147483648
        %v4098 = vor.u32 1.1754944e-38, %v4097
        %v4099 = vsel %vm4096, %v4098, %v4094
        %v4100 = vmul.f32 1.0, %v4099
        %v4101 = vrcp.pop %v3957
        %v4102 = vmul.f32 %v3957, %v4101
        %v4103 = vsub.f32 1.0, %v4102
        %v4104 = vmul.f32 %v4101, %v4103
        %v4105 = vadd.f32 %v4101, %v4104
        %vm4106 = vweird.f32 %v3957
        %vm4107 = vweird.f32 %v4101
        %vm4108 = vmor %vm4106, %vm4107
        %v4109 = vsel %vm4108, %v4101, %v4105
        %v4110 = vand.u32 2147483647, %v3957
        %vm4111 = vcmp.eq.f32.partialorder %v4110, 8.507059e+37
        %v4112 = vand.u32 %v3957, 2147483648
        %v4113 = vor.u32 1.1754944e-38, %v4112
        %v4114 = vsel %vm4111, %v4113, %v4109
        %v4115 = vmul.f32 1.0, %v4114
        %v4116 = vrcp.pop %v3958
        %v4117 = vmul.f32 %v3958, %v4116
        %v4118 = vsub.f32 1.0, %v4117
        %v4119 = vmul.f32 %v4116, %v4118
        %v4120 = vadd.f32 %v4116, %v4119
        %vm4121 = vweird.f32 %v3958
        %vm4122 = vweird.f32 %v4116
        %vm4123 = vmor %vm4121, %vm4122
        %v4124 = vsel %vm4123, %v4116, %v4120
        %v4125 = vand.u32 2147483647, %v3958
        %vm4126 = vcmp.eq.f32.partialorder %v4125, 8.507059e+37
        %v4127 = vand.u32 %v3958, 2147483648
        %v4128 = vor.u32 1.1754944e-38, %v4127
        %v4129 = vsel %vm4126, %v4128, %v4124
        %v4130 = vmul.f32 1.0, %v4129
        %v4131 = vrcp.pop %v3959
        %v4132 = vmul.f32 %v3959, %v4131
        %v4133 = vsub.f32 1.0, %v4132
        %v4134 = vmul.f32 %v4131, %v4133
        %v4135 = vadd.f32 %v4131, %v4134
        %vm4136 = vweird.f32 %v3959
        %vm4137 = vweird.f32 %v4131
        %vm4138 = vmor %vm4136, %vm4137
        %v4139 = vsel %vm4138, %v4131, %v4135
        %v4140 = vand.u32 2147483647, %v3959
        %vm4141 = vcmp.eq.f32.partialorder %v4140, 8.507059e+37
        %v4142 = vand.u32 %v3959, 2147483648
        %v4143 = vor.u32 1.1754944e-38, %v4142
        %v4144 = vsel %vm4141, %v4143, %v4139
        %v4145 = vmul.f32 1.0, %v4144
        %v4146 = vrcp.pop %v3960
        %v4147 = vmul.f32 %v3960, %v4146
        %v4148 = vsub.f32 1.0, %v4147
        %v4149 = vmul.f32 %v4146, %v4148
        %v4150 = vadd.f32 %v4146, %v4149
        %vm4151 = vweird.f32 %v3960
        %vm4152 = vweird.f32 %v4146
        %vm4153 = vmor %vm4151, %vm4152
        %v4154 = vsel %vm4153, %v4146, %v4150
        %v4155 = vand.u32 2147483647, %v3960
        %vm4156 = vcmp.eq.f32.partialorder %v4155, 8.507059e+37
        %v4157 = vand.u32 %v3960, 2147483648
        %v4158 = vor.u32 1.1754944e-38, %v4157
        %v4159 = vsel %vm4156, %v4158, %v4154
        %v4160 = vmul.f32 1.0, %v4159
        %v4161 = vrcp.pop %v3961
        %v4162 = vmul.f32 %v3961, %v4161
        %v4163 = vsub.f32 1.0, %v4162
        %v4164 = vmul.f32 %v4161, %v4163
        %v4165 = vadd.f32 %v4161, %v4164
        %vm4166 = vweird.f32 %v3961
        %vm4167 = vweird.f32 %v4161
        %vm4168 = vmor %vm4166, %vm4167
        %v4169 = vsel %vm4168, %v4161, %v4165
        %v4170 = vand.u32 2147483647, %v3961
        %vm4171 = vcmp.eq.f32.partialorder %v4170, 8.507059e+37
        %v4172 = vand.u32 %v3961, 2147483648
        %v4173 = vor.u32 1.1754944e-38, %v4172
        %v4174 = vsel %vm4171, %v4173, %v4169
        %v4175 = vmul.f32 1.0, %v4174
        %v4176 = vrcp.pop %v3962
        %v4177 = vmul.f32 %v3962, %v4176
        %v4178 = vsub.f32 1.0, %v4177
        %v4179 = vmul.f32 %v4176, %v4178
        %v4180 = vadd.f32 %v4176, %v4179
        %vm4181 = vweird.f32 %v3962
        %vm4182 = vweird.f32 %v4176
        %vm4183 = vmor %vm4181, %vm4182
        %v4184 = vsel %vm4183, %v4176, %v4180
        %v4185 = vand.u32 2147483647, %v3962
        %vm4186 = vcmp.eq.f32.partialorder %v4185, 8.507059e+37
        %v4187 = vand.u32 %v3962, 2147483648
        %v4188 = vor.u32 1.1754944e-38, %v4187
        %v4189 = vsel %vm4186, %v4188, %v4184
        %v4190 = vmul.f32 1.0, %v4189
        %v4191 = vrcp.pop %v3963
        %v4192 = vmul.f32 %v3963, %v4191
        %v4193 = vsub.f32 1.0, %v4192
        %v4194 = vmul.f32 %v4191, %v4193
        %v4195 = vadd.f32 %v4191, %v4194
        %vm4196 = vweird.f32 %v3963
        %vm4197 = vweird.f32 %v4191
        %vm4198 = vmor %vm4196, %vm4197
        %v4199 = vsel %vm4198, %v4191, %v4195
        %v4200 = vand.u32 2147483647, %v3963
        %vm4201 = vcmp.eq.f32.partialorder %v4200, 8.507059e+37
        %v4202 = vand.u32 %v3963, 2147483648
        %v4203 = vor.u32 1.1754944e-38, %v4202
        %v4204 = vsel %vm4201, %v4203, %v4199
        %v4205 = vmul.f32 1.0, %v4204
        %v4206 = vrcp.pop %v3964
        %v4207 = vmul.f32 %v3964, %v4206
        %v4208 = vsub.f32 1.0, %v4207
        %v4209 = vmul.f32 %v4206, %v4208
        %v4210 = vadd.f32 %v4206, %v4209
        %vm4211 = vweird.f32 %v3964
        %vm4212 = vweird.f32 %v4206
        %vm4213 = vmor %vm4211, %vm4212
        %v4214 = vsel %vm4213, %v4206, %v4210
        %v4215 = vand.u32 2147483647, %v3964
        %vm4216 = vcmp.eq.f32.partialorder %v4215, 8.507059e+37
        %v4217 = vand.u32 %v3964, 2147483648
        %v4218 = vor.u32 1.1754944e-38, %v4217
        %v4219 = vsel %vm4216, %v4218, %v4214
        %v4220 = vmul.f32 1.0, %v4219
        %v4221 = vrcp.pop %v3965
        %v4222 = vmul.f32 %v3965, %v4221
        %v4223 = vsub.f32 1.0, %v4222
        %v4224 = vmul.f32 %v4221, %v4223
        %v4225 = vadd.f32 %v4221, %v4224
        %vm4226 = vweird.f32 %v3965
        %vm4227 = vweird.f32 %v4221
        %vm4228 = vmor %vm4226, %vm4227
        %v4229 = vsel %vm4228, %v4221, %v4225
        %v4230 = vand.u32 2147483647, %v3965
        %vm4231 = vcmp.eq.f32.partialorder %v4230, 8.507059e+37
        %v4232 = vand.u32 %v3965, 2147483648
        %v4233 = vor.u32 1.1754944e-38, %v4232
        %v4234 = vsel %vm4231, %v4233, %v4229
        %v4235 = vmul.f32 1.0, %v4234
        %v4236 = vrcp.pop %v3966
        %v4237 = vmul.f32 %v3966, %v4236
        %v4238 = vsub.f32 1.0, %v4237
        %v4239 = vmul.f32 %v4236, %v4238
        %v4240 = vadd.f32 %v4236, %v4239
        %vm4241 = vweird.f32 %v3966
        %vm4242 = vweird.f32 %v4236
        %vm4243 = vmor %vm4241, %vm4242
        %v4244 = vsel %vm4243, %v4236, %v4240
        %v4245 = vand.u32 2147483647, %v3966
        %vm4246 = vcmp.eq.f32.partialorder %v4245, 8.507059e+37
        %v4247 = vand.u32 %v3966, 2147483648
        %v4248 = vor.u32 1.1754944e-38, %v4247
        %v4249 = vsel %vm4246, %v4248, %v4244
        %v4250 = vmul.f32 1.0, %v4249
        %v4251 = vrcp.pop %v3967
        %v4252 = vmul.f32 %v3967, %v4251
        %v4253 = vsub.f32 1.0, %v4252
        %v4254 = vmul.f32 %v4251, %v4253
        %v4255 = vadd.f32 %v4251, %v4254
        %vm4256 = vweird.f32 %v3967
        %vm4257 = vweird.f32 %v4251
        %vm4258 = vmor %vm4256, %vm4257
        %v4259 = vsel %vm4258, %v4251, %v4255
        %v4260 = vand.u32 2147483647, %v3967
        %vm4261 = vcmp.eq.f32.partialorder %v4260, 8.507059e+37
        %v4262 = vand.u32 %v3967, 2147483648
        %v4263 = vor.u32 1.1754944e-38, %v4262
        %v4264 = vsel %vm4261, %v4263, %v4259
        %v4265 = vmul.f32 1.0, %v4264
        %v4266 = vrcp.pop %v3968
        %v4267 = vmul.f32 %v3968, %v4266
        %v4268 = vsub.f32 1.0, %v4267
        %v4269 = vmul.f32 %v4266, %v4268
        %v4270 = vadd.f32 %v4266, %v4269
        %vm4271 = vweird.f32 %v3968
        %vm4272 = vweird.f32 %v4266
        %vm4273 = vmor %vm4271, %vm4272
        %v4274 = vsel %vm4273, %v4266, %v4270
        %v4275 = vand.u32 2147483647, %v3968
        %vm4276 = vcmp.eq.f32.partialorder %v4275, 8.507059e+37
        %v4277 = vand.u32 %v3968, 2147483648
        %v4278 = vor.u32 1.1754944e-38, %v4277
        %v4279 = vsel %vm4276, %v4278, %v4274
        %v4280 = vmul.f32 1.0, %v4279
        %v4281 = vrcp.pop %v3969
        %v4282 = vmul.f32 %v3969, %v4281
        %v4283 = vsub.f32 1.0, %v4282
        %v4284 = vmul.f32 %v4281, %v4283
        %v4285 = vadd.f32 %v4281, %v4284
        %vm4286 = vweird.f32 %v3969
        %vm4287 = vweird.f32 %v4281
        %vm4288 = vmor %vm4286, %vm4287
        %v4289 = vsel %vm4288, %v4281, %v4285
        %v4290 = vand.u32 2147483647, %v3969
        %vm4291 = vcmp.eq.f32.partialorder %v4290, 8.507059e+37
        %v4292 = vand.u32 %v3969, 2147483648
        %v4293 = vor.u32 1.1754944e-38, %v4292
        %v4294 = vsel %vm4291, %v4293, %v4289
        %v4295 = vmul.f32 1.0, %v4294
        %v4296 = vrcp.pop %v3970
        %v4297 = vmul.f32 %v3970, %v4296
        %v4298 = vsub.f32 1.0, %v4297
        %v4299 = vmul.f32 %v4296, %v4298
        %v4300 = vadd.f32 %v4296, %v4299
        %vm4301 = vweird.f32 %v3970
        %vm4302 = vweird.f32 %v4296
        %vm4303 = vmor %vm4301, %vm4302
        %v4304 = vsel %vm4303, %v4296, %v4300
        %v4305 = vand.u32 2147483647, %v3970
        %vm4306 = vcmp.eq.f32.partialorder %v4305, 8.507059e+37
        %v4307 = vand.u32 %v3970, 2147483648
        %v4308 = vor.u32 1.1754944e-38, %v4307
        %v4309 = vsel %vm4306, %v4308, %v4304
        %v4310 = vmul.f32 1.0, %v4309
        %v4311 = vrcp.pop %v3971
        %v4312 = vmul.f32 %v3971, %v4311
        %v4313 = vsub.f32 1.0, %v4312
        %v4314 = vmul.f32 %v4311, %v4313
        %v4315 = vadd.f32 %v4311, %v4314
        %vm4316 = vweird.f32 %v3971
        %vm4317 = vweird.f32 %v4311
        %vm4318 = vmor %vm4316, %vm4317
        %v4319 = vsel %vm4318, %v4311, %v4315
        %v4320 = vand.u32 2147483647, %v3971
        %vm4321 = vcmp.eq.f32.partialorder %v4320, 8.507059e+37
        %v4322 = vand.u32 %v3971, 2147483648
        %v4323 = vor.u32 1.1754944e-38, %v4322
        %v4324 = vsel %vm4321, %v4323, %v4319
        %v4325 = vmul.f32 1.0, %v4324
        %v4326 = vrcp.pop %v3972
        %v4327 = vmul.f32 %v3972, %v4326
        %v4328 = vsub.f32 1.0, %v4327
        %v4329 = vmul.f32 %v4326, %v4328
        %v4330 = vadd.f32 %v4326, %v4329
        %vm4331 = vweird.f32 %v3972
        %vm4332 = vweird.f32 %v4326
        %vm4333 = vmor %vm4331, %vm4332
        %v4334 = vsel %vm4333, %v4326, %v4330
        %v4335 = vand.u32 2147483647, %v3972
        %vm4336 = vcmp.eq.f32.partialorder %v4335, 8.507059e+37
        %v4337 = vand.u32 %v3972, 2147483648
        %v4338 = vor.u32 1.1754944e-38, %v4337
        %v4339 = vsel %vm4336, %v4338, %v4334
        %v4340 = vmul.f32 1.0, %v4339
        %v4341 = vrcp.pop %v3973
        %v4342 = vmul.f32 %v3973, %v4341
        %v4343 = vsub.f32 1.0, %v4342
        %v4344 = vmul.f32 %v4341, %v4343
        %v4345 = vadd.f32 %v4341, %v4344
        %vm4346 = vweird.f32 %v3973
        %vm4347 = vweird.f32 %v4341
        %vm4348 = vmor %vm4346, %vm4347
        %v4349 = vsel %vm4348, %v4341, %v4345
        %v4350 = vand.u32 2147483647, %v3973
        %vm4351 = vcmp.eq.f32.partialorder %v4350, 8.507059e+37
        %v4352 = vand.u32 %v3973, 2147483648
        %v4353 = vor.u32 1.1754944e-38, %v4352
        %v4354 = vsel %vm4351, %v4353, %v4349
        %v4355 = vmul.f32 1.0, %v4354
        %v4356 = vrcp.pop %v3974
        %v4357 = vmul.f32 %v3974, %v4356
        %v4358 = vsub.f32 1.0, %v4357
        %v4359 = vmul.f32 %v4356, %v4358
        %v4360 = vadd.f32 %v4356, %v4359
        %vm4361 = vweird.f32 %v3974
        %vm4362 = vweird.f32 %v4356
        %vm4363 = vmor %vm4361, %vm4362
        %v4364 = vsel %vm4363, %v4356, %v4360
        %v4365 = vand.u32 2147483647, %v3974
        %vm4366 = vcmp.eq.f32.partialorder %v4365, 8.507059e+37
        %v4367 = vand.u32 %v3974, 2147483648
        %v4368 = vor.u32 1.1754944e-38, %v4367
        %v4369 = vsel %vm4366, %v4368, %v4364
        %v4370 = vmul.f32 1.0, %v4369
        %v4371 = vrcp.pop %v3975
        %v4372 = vmul.f32 %v3975, %v4371
        %v4373 = vsub.f32 1.0, %v4372
        %v4374 = vmul.f32 %v4371, %v4373
        %v4375 = vadd.f32 %v4371, %v4374
        %vm4376 = vweird.f32 %v3975
        %vm4377 = vweird.f32 %v4371
        %vm4378 = vmor %vm4376, %vm4377
        %v4379 = vsel %vm4378, %v4371, %v4375
        %v4380 = vand.u32 2147483647, %v3975
        %vm4381 = vcmp.eq.f32.partialorder %v4380, 8.507059e+37
        %v4382 = vand.u32 %v3975, 2147483648
        %v4383 = vor.u32 1.1754944e-38, %v4382
        %v4384 = vsel %vm4381, %v4383, %v4379
        %v4385 = vmul.f32 1.0, %v4384
        %v4386 = vrcp.pop %v3976
        %v4387 = vmul.f32 %v3976, %v4386
        %v4388 = vsub.f32 1.0, %v4387
        %v4389 = vmul.f32 %v4386, %v4388
        %v4390 = vadd.f32 %v4386, %v4389
        %vm4391 = vweird.f32 %v3976
        %vm4392 = vweird.f32 %v4386
        %vm4393 = vmor %vm4391, %vm4392
        %v4394 = vsel %vm4393, %v4386, %v4390
        %v4395 = vand.u32 2147483647, %v3976
        %vm4396 = vcmp.eq.f32.partialorder %v4395, 8.507059e+37
        %v4397 = vand.u32 %v3976, 2147483648
        %v4398 = vor.u32 1.1754944e-38, %v4397
        %v4399 = vsel %vm4396, %v4398, %v4394
        %v4400 = vmul.f32 1.0, %v4399
        %v4401 = vrcp.pop %v3977
        %v4402 = vmul.f32 %v3977, %v4401
        %v4403 = vsub.f32 1.0, %v4402
        %v4404 = vmul.f32 %v4401, %v4403
        %v4405 = vadd.f32 %v4401, %v4404
        %vm4406 = vweird.f32 %v3977
        %vm4407 = vweird.f32 %v4401
        %vm4408 = vmor %vm4406, %vm4407
        %v4409 = vsel %vm4408, %v4401, %v4405
        %v4410 = vand.u32 2147483647, %v3977
        %vm4411 = vcmp.eq.f32.partialorder %v4410, 8.507059e+37
        %v4412 = vand.u32 %v3977, 2147483648
        %v4413 = vor.u32 1.1754944e-38, %v4412
        %v4414 = vsel %vm4411, %v4413, %v4409
        %v4415 = vmul.f32 1.0, %v4414
        %v4416 = vrcp.pop %v3978
        %v4417 = vmul.f32 %v3978, %v4416
        %v4418 = vsub.f32 1.0, %v4417
        %v4419 = vmul.f32 %v4416, %v4418
        %v4420 = vadd.f32 %v4416, %v4419
        %vm4421 = vweird.f32 %v3978
        %vm4422 = vweird.f32 %v4416
        %vm4423 = vmor %vm4421, %vm4422
        %v4424 = vsel %vm4423, %v4416, %v4420
        %v4425 = vand.u32 2147483647, %v3978
        %vm4426 = vcmp.eq.f32.partialorder %v4425, 8.507059e+37
        %v4427 = vand.u32 %v3978, 2147483648
        %v4428 = vor.u32 1.1754944e-38, %v4427
        %v4429 = vsel %vm4426, %v4428, %v4424
        %v4430 = vmul.f32 1.0, %v4429
        %v4431 = vrcp.pop %v3979
        %v4432 = vmul.f32 %v3979, %v4431
        %v4433 = vsub.f32 1.0, %v4432
        %v4434 = vmul.f32 %v4431, %v4433
        %v4435 = vadd.f32 %v4431, %v4434
        %vm4436 = vweird.f32 %v3979
        %vm4437 = vweird.f32 %v4431
        %vm4438 = vmor %vm4436, %vm4437
        %v4439 = vsel %vm4438, %v4431, %v4435
        %v4440 = vand.u32 2147483647, %v3979
        %vm4441 = vcmp.eq.f32.partialorder %v4440, 8.507059e+37
        %v4442 = vand.u32 %v3979, 2147483648
        %v4443 = vor.u32 1.1754944e-38, %v4442
        %v4444 = vsel %vm4441, %v4443, %v4439
        %v4445 = vmul.f32 1.0, %v4444
        %v4446 = vrcp.pop %v3980
        %v4447 = vmul.f32 %v3980, %v4446
        %v4448 = vsub.f32 1.0, %v4447
        %v4449 = vmul.f32 %v4446, %v4448
        %v4450 = vadd.f32 %v4446, %v4449
        %vm4451 = vweird.f32 %v3980
        %vm4452 = vweird.f32 %v4446
        %vm4453 = vmor %vm4451, %vm4452
        %v4454 = vsel %vm4453, %v4446, %v4450
        %v4455 = vand.u32 2147483647, %v3980
        %vm4456 = vcmp.eq.f32.partialorder %v4455, 8.507059e+37
        %v4457 = vand.u32 %v3980, 2147483648
        %v4458 = vor.u32 1.1754944e-38, %v4457
        %v4459 = vsel %vm4456, %v4458, %v4454
        %v4460 = vmul.f32 1.0, %v4459
        %v4461 = vmul.f32 %v3774, %v3995
        %v4462 = vmul.f32 %v3776, %v4010
        %v4463 = vmul.f32 %v3779, %v4025
        %v4464 = vmul.f32 %v3781, %v4040
        %v4465 = vmul.f32 %v3784, %v4055
        %v4466 = vmul.f32 %v3786, %v4070
        %v4467 = vmul.f32 %v3789, %v4085
        %v4468 = vmul.f32 %v3791, %v4100
        %v4469 = vmul.f32 %v3794, %v4115
        %v4470 = vmul.f32 %v3796, %v4130
        %v4471 = vmul.f32 %v3799, %v4145
        %v4472 = vmul.f32 %v3801, %v4160
        %v4473 = vmul.f32 %v3804, %v4175
        %v4474 = vmul.f32 %v3806, %v4190
        %v4475 = vmul.f32 %v3809, %v4205
        %v4476 = vmul.f32 %v3811, %v4220
        %v4477 = vmul.f32 %v3814, %v4235
        %v4478 = vmul.f32 %v3816, %v4250
        %v4479 = vmul.f32 %v3819, %v4265
        %v4480 = vmul.f32 %v3821, %v4280
        %v4481 = vmul.f32 %v3824, %v4295
        %v4482 = vmul.f32 %v3826, %v4310
        %v4483 = vmul.f32 %v3829, %v4325
        %v4484 = vmul.f32 %v3831, %v4340
        %v4485 = vmul.f32 %v3834, %v4355
        %v4486 = vmul.f32 %v3836, %v4370
        %v4487 = vmul.f32 %v3839, %v4385
        %v4488 = vmul.f32 %v3841, %v4400
        %v4489 = vmul.f32 %v3844, %v4415
        %v4490 = vmul.f32 %v3846, %v4430
        %v4491 = vmul.f32 %v3849, %v4445
        %v4492 = vmul.f32 %v3851, %v4460
        %4493 = vst.msk [vmem:[#allocation2 + $0x11] sm:$0xff] %vm386, %v4461
        %4494 = vst.msk [vmem:[#allocation2 + $0x19] sm:$0xff] %vm386, %v4462
        %4495 = vst.msk [vmem:[#allocation2 + $0x21] sm:$0xff] %vm386, %v4463
        %4496 = vst.msk [vmem:[#allocation2 + $0x29] sm:$0xff] %vm386, %v4464
        %4497 = vst.msk [vmem:[#allocation2 + $0x31] sm:$0xff] %vm386, %v4465
        %4498 = vst.msk [vmem:[#allocation2 + $0x39] sm:$0xff] %vm386, %v4466
        %4499 = vst.msk [vmem:[#allocation2 + $0x41] sm:$0xff] %vm386, %v4467
        %4500 = vst.msk [vmem:[#allocation2 + $0x49] sm:$0xff] %vm386, %v4468
        %4501 = vst.msk [vmem:[#allocation2 + $0x51] sm:$0xff] %vm386, %v4469
        %4502 = vst.msk [vmem:[#allocation2 + $0x59] sm:$0xff] %vm386, %v4470
        %4503 = vst.msk [vmem:[#allocation2 + $0x61] sm:$0xff] %vm386, %v4471
        %4504 = vst.msk [vmem:[#allocation2 + $0x69] sm:$0xff] %vm386, %v4472
        %4505 = vst.msk [vmem:[#allocation2 + $0x71] sm:$0xff] %vm386, %v4473
        %4506 = vst.msk [vmem:[#allocation2 + $0x79] sm:$0xff] %vm386, %v4474
        %4507 = vst.msk [vmem:[#allocation2 + $0x81] sm:$0xff] %vm386, %v4475
        %4508 = vst.msk [vmem:[#allocation2 + $0x89] sm:$0xff] %vm386, %v4476
        %4509 = vst.msk [vmem:[#allocation2 + $0x91] sm:$0xff] %vm386, %v4477
        %4510 = vst.msk [vmem:[#allocation2 + $0x99] sm:$0xff] %vm386, %v4478
        %4511 = vst.msk [vmem:[#allocation2 + $0xa1] sm:$0xff] %vm386, %v4479
        %4512 = vst.msk [vmem:[#allocation2 + $0xa9] sm:$0xff] %vm386, %v4480
        %4513 = vst.msk [vmem:[#allocation2 + $0xb1] sm:$0xff] %vm386, %v4481
        %4514 = vst.msk [vmem:[#allocation2 + $0xb9] sm:$0xff] %vm386, %v4482
        %4515 = vst.msk [vmem:[#allocation2 + $0xc1] sm:$0xff] %vm386, %v4483
        %4516 = vst.msk [vmem:[#allocation2 + $0xc9] sm:$0xff] %vm386, %v4484
        %4517 = vst.msk [vmem:[#allocation2 + $0xd1] sm:$0xff] %vm386, %v4485
        %4518 = vst.msk [vmem:[#allocation2 + $0xd9] sm:$0xff] %vm386, %v4486
        %4519 = vst.msk [vmem:[#allocation2 + $0xe1] sm:$0xff] %vm386, %v4487
        %4520 = vst.msk [vmem:[#allocation2 + $0xe9] sm:$0xff] %vm386, %v4488
        %4521 = vst.msk [vmem:[#allocation2 + $0xf1] sm:$0xff] %vm386, %v4489
        %4522 = vst.msk [vmem:[#allocation2 + $0xf9] sm:$0xff] %vm386, %v4490
        %4523 = vst.msk [vmem:[#allocation2 + $0x101] sm:$0xff] %vm386, %v4491
        %4524 = vst.msk [vmem:[#allocation2 + $0x109] sm:$0xff] %vm386, %v4492
        %v4525 = vld [vmem:[#allocation2] sm:$0xff]
        %v4526 = vld [vmem:[#allocation2 + $0x8] sm:$0xff]
        %v4527 = vld [vmem:[#allocation2 + $0x10] sm:$0xff]
        %v4528 = vld [vmem:[#allocation2 + $0x18] sm:$0xff]
        %v4529 = vld [vmem:[#allocation2 + $0x20] sm:$0xff]
        %v4530 = vld [vmem:[#allocation2 + $0x28] sm:$0xff]
        %v4531 = vld [vmem:[#allocation2 + $0x30] sm:$0xff]
        %v4532 = vld [vmem:[#allocation2 + $0x38] sm:$0xff]
        %v4533 = vld [vmem:[#allocation2 + $0x40] sm:$0xff]
        %v4534 = vld [vmem:[#allocation2 + $0x48] sm:$0xff]
        %v4535 = vld [vmem:[#allocation2 + $0x50] sm:$0xff]
        %v4536 = vld [vmem:[#allocation2 + $0x58] sm:$0xff]
        %v4537 = vld [vmem:[#allocation2 + $0x60] sm:$0xff]
        %v4538 = vld [vmem:[#allocation2 + $0x68] sm:$0xff]
        %v4539 = vld [vmem:[#allocation2 + $0x70] sm:$0xff]
        %v4540 = vld [vmem:[#allocation2 + $0x78] sm:$0xff]
        %v4541 = vld [vmem:[#allocation2 + $0x80] sm:$0xff]
        %v4542 = vld [vmem:[#allocation2 + $0x88] sm:$0xff]
        %v4543 = vld [vmem:[#allocation2 + $0x90] sm:$0xff]
        %v4544 = vld [vmem:[#allocation2 + $0x98] sm:$0xff]
        %v4545 = vld [vmem:[#allocation2 + $0xa0] sm:$0xff]
        %v4546 = vld [vmem:[#allocation2 + $0xa8] sm:$0xff]
        %v4547 = vld [vmem:[#allocation2 + $0xb0] sm:$0xff]
        %v4548 = vld [vmem:[#allocation2 + $0xb8] sm:$0xff]
        %v4549 = vld [vmem:[#allocation2 + $0xc0] sm:$0xff]
        %v4550 = vld [vmem:[#allocation2 + $0xc8] sm:$0xff]
        %v4551 = vld [vmem:[#allocation2 + $0xd0] sm:$0xff]
        %v4552 = vld [vmem:[#allocation2 + $0xd8] sm:$0xff]
        %v4553 = vld [vmem:[#allocation2 + $0xe0] sm:$0xff]
        %v4554 = vld [vmem:[#allocation2 + $0xe8] sm:$0xff]
        %v4555 = vld [vmem:[#allocation2 + $0xf0] sm:$0xff]
        %v4556 = vld [vmem:[#allocation2 + $0xf8] sm:$0xff]
        %v4557 = vmul.f32 %v4525, %v588
        %v4558 = vmul.f32 %v4526, %v593
        %v4559 = vmul.f32 %v4527, %v598
        %v4560 = vmul.f32 %v4528, %v603
        %v4561 = vmul.f32 %v4529, %v608
        %v4562 = vmul.f32 %v4530, %v613
        %v4563 = vmul.f32 %v4531, %v618
        %v4564 = vmul.f32 %v4532, %v623
        %v4565 = vmul.f32 %v4533, %v628
        %v4566 = vmul.f32 %v4534, %v633
        %v4567 = vmul.f32 %v4535, %v638
        %v4568 = vmul.f32 %v4536, %v643
        %v4569 = vmul.f32 %v4537, %v648
        %v4570 = vmul.f32 %v4538, %v653
        %v4571 = vmul.f32 %v4539, %v658
        %v4572 = vmul.f32 %v4540, %v663
        %v4573 = vmul.f32 %v4541, %v668
        %v4574 = vmul.f32 %v4542, %v673
        %v4575 = vmul.f32 %v4543, %v678
        %v4576 = vmul.f32 %v4544, %v683
        %v4577 = vmul.f32 %v4545, %v688
        %v4578 = vmul.f32 %v4546, %v693
        %v4579 = vmul.f32 %v4547, %v698
        %v4580 = vmul.f32 %v4548, %v703
        %v4581 = vmul.f32 %v4549, %v708
        %v4582 = vmul.f32 %v4550, %v713
        %v4583 = vmul.f32 %v4551, %v718
        %v4584 = vmul.f32 %v4552, %v723
        %v4585 = vmul.f32 %v4553, %v728
        %v4586 = vmul.f32 %v4554, %v733
        %v4587 = vmul.f32 %v4555, %v738
        %v4588 = vmul.f32 %v4556, %v743
        %v4589 = vld [vmem:[#allocation2 + $0x1] sm:$0xff]
        %v4590 = vld [vmem:[#allocation2 + $0x9] sm:$0xff]
        %v4591 = vld [vmem:[#allocation2 + $0x11] sm:$0xff]
        %v4592 = vld [vmem:[#allocation2 + $0x19] sm:$0xff]
        %v4593 = vld [vmem:[#allocation2 + $0x21] sm:$0xff]
        %v4594 = vld [vmem:[#allocation2 + $0x29] sm:$0xff]
        %v4595 = vld [vmem:[#allocation2 + $0x31] sm:$0xff]
        %v4596 = vld [vmem:[#allocation2 + $0x39] sm:$0xff]
        %v4597 = vld [vmem:[#allocation2 + $0x41] sm:$0xff]
        %v4598 = vld [vmem:[#allocation2 + $0x49] sm:$0xff]
        %v4599 = vld [vmem:[#allocation2 + $0x51] sm:$0xff]
        %v4600 = vld [vmem:[#allocation2 + $0x59] sm:$0xff]
        %v4601 = vld [vmem:[#allocation2 + $0x61] sm:$0xff]
        %v4602 = vld [vmem:[#allocation2 + $0x69] sm:$0xff]
        %v4603 = vld [vmem:[#allocation2 + $0x71] sm:$0xff]
        %v4604 = vld [vmem:[#allocation2 + $0x79] sm:$0xff]
        %v4605 = vld [vmem:[#allocation2 + $0x81] sm:$0xff]
        %v4606 = vld [vmem:[#allocation2 + $0x89] sm:$0xff]
        %v4607 = vld [vmem:[#allocation2 + $0x91] sm:$0xff]
        %v4608 = vld [vmem:[#allocation2 + $0x99] sm:$0xff]
        %v4609 = vld [vmem:[#allocation2 + $0xa1] sm:$0xff]
        %v4610 = vld [vmem:[#allocation2 + $0xa9] sm:$0xff]
        %v4611 = vld [vmem:[#allocation2 + $0xb1] sm:$0xff]
        %v4612 = vld [vmem:[#allocation2 + $0xb9] sm:$0xff]
        %v4613 = vld [vmem:[#allocation2 + $0xc1] sm:$0xff]
        %v4614 = vld [vmem:[#allocation2 + $0xc9] sm:$0xff]
        %v4615 = vld [vmem:[#allocation2 + $0xd1] sm:$0xff]
        %v4616 = vld [vmem:[#allocation2 + $0xd9] sm:$0xff]
        %v4617 = vld [vmem:[#allocation2 + $0xe1] sm:$0xff]
        %v4618 = vld [vmem:[#allocation2 + $0xe9] sm:$0xff]
        %v4619 = vld [vmem:[#allocation2 + $0xf1] sm:$0xff]
        %v4620 = vld [vmem:[#allocation2 + $0xf9] sm:$0xff]
        %v4621 = vld [vmem:[#allocation2 + $0x2] sm:$0xff]
        %v4622 = vld [vmem:[#allocation2 + $0xa] sm:$0xff]
        %v4623 = vld [vmem:[#allocation2 + $0x12] sm:$0xff]
        %v4624 = vld [vmem:[#allocation2 + $0x1a] sm:$0xff]
        %v4625 = vld [vmem:[#allocation2 + $0x22] sm:$0xff]
        %v4626 = vld [vmem:[#allocation2 + $0x2a] sm:$0xff]
        %v4627 = vld [vmem:[#allocation2 + $0x32] sm:$0xff]
        %v4628 = vld [vmem:[#allocation2 + $0x3a] sm:$0xff]
        %v4629 = vld [vmem:[#allocation2 + $0x42] sm:$0xff]
        %v4630 = vld [vmem:[#allocation2 + $0x4a] sm:$0xff]
        %v4631 = vld [vmem:[#allocation2 + $0x52] sm:$0xff]
        %v4632 = vld [vmem:[#allocation2 + $0x5a] sm:$0xff]
        %v4633 = vld [vmem:[#allocation2 + $0x62] sm:$0xff]
        %v4634 = vld [vmem:[#allocation2 + $0x6a] sm:$0xff]
        %v4635 = vld [vmem:[#allocation2 + $0x72] sm:$0xff]
        %v4636 = vld [vmem:[#allocation2 + $0x7a] sm:$0xff]
        %v4637 = vld [vmem:[#allocation2 + $0x82] sm:$0xff]
        %v4638 = vld [vmem:[#allocation2 + $0x8a] sm:$0xff]
        %v4639 = vld [vmem:[#allocation2 + $0x92] sm:$0xff]
        %v4640 = vld [vmem:[#allocation2 + $0x9a] sm:$0xff]
        %v4641 = vld [vmem:[#allocation2 + $0xa2] sm:$0xff]
        %v4642 = vld [vmem:[#allocation2 + $0xaa] sm:$0xff]
        %v4643 = vld [vmem:[#allocation2 + $0xb2] sm:$0xff]
        %v4644 = vld [vmem:[#allocation2 + $0xba] sm:$0xff]
        %v4645 = vld [vmem:[#allocation2 + $0xc2] sm:$0xff]
        %v4646 = vld [vmem:[#allocation2 + $0xca] sm:$0xff]
        %v4647 = vld [vmem:[#allocation2 + $0xd2] sm:$0xff]
        %v4648 = vld [vmem:[#allocation2 + $0xda] sm:$0xff]
        %v4649 = vld [vmem:[#allocation2 + $0xe2] sm:$0xff]
        %v4650 = vld [vmem:[#allocation2 + $0xea] sm:$0xff]
        %v4651 = vld [vmem:[#allocation2 + $0xf2] sm:$0xff]
        %v4652 = vld [vmem:[#allocation2 + $0xfa] sm:$0xff]
        %v4653 = vmul.f32 %v4621, %v844
        %v4654 = vmul.f32 %v4622, %v849
        %v4655 = vmul.f32 %v4623, %v854
        %v4656 = vmul.f32 %v4624, %v859
        %v4657 = vmul.f32 %v4625, %v864
        %v4658 = vmul.f32 %v4626, %v869
        %v4659 = vmul.f32 %v4627, %v874
        %v4660 = vmul.f32 %v4628, %v879
        %v4661 = vmul.f32 %v4629, %v884
        %v4662 = vmul.f32 %v4630, %v889
        %v4663 = vmul.f32 %v4631, %v894
        %v4664 = vmul.f32 %v4632, %v899
        %v4665 = vmul.f32 %v4633, %v904
        %v4666 = vmul.f32 %v4634, %v909
        %v4667 = vmul.f32 %v4635, %v914
        %v4668 = vmul.f32 %v4636, %v919
        %v4669 = vmul.f32 %v4637, %v924
        %v4670 = vmul.f32 %v4638, %v929
        %v4671 = vmul.f32 %v4639, %v934
        %v4672 = vmul.f32 %v4640, %v939
        %v4673 = vmul.f32 %v4641, %v944
        %v4674 = vmul.f32 %v4642, %v949
        %v4675 = vmul.f32 %v4643, %v954
        %v4676 = vmul.f32 %v4644, %v959
        %v4677 = vmul.f32 %v4645, %v964
        %v4678 = vmul.f32 %v4646, %v969
        %v4679 = vmul.f32 %v4647, %v974
        %v4680 = vmul.f32 %v4648, %v979
        %v4681 = vmul.f32 %v4649, %v984
        %v4682 = vmul.f32 %v4650, %v989
        %v4683 = vmul.f32 %v4651, %v994
        %v4684 = vmul.f32 %v4652, %v999
        %v4685 = vld [vmem:[#allocation2 + $0x100] sm:$0xff]
        %v4686 = vld [vmem:[#allocation2 + $0x108] sm:$0xff]
        %v4687 = vmul.f32 %v4527, %v588
        %v4688 = vmul.f32 %v4528, %v593
        %v4689 = vmul.f32 %v4529, %v598
        %v4690 = vmul.f32 %v4530, %v603
        %v4691 = vmul.f32 %v4531, %v608
        %v4692 = vmul.f32 %v4532, %v613
        %v4693 = vmul.f32 %v4533, %v618
        %v4694 = vmul.f32 %v4534, %v623
        %v4695 = vmul.f32 %v4535, %v628
        %v4696 = vmul.f32 %v4536, %v633
        %v4697 = vmul.f32 %v4537, %v638
        %v4698 = vmul.f32 %v4538, %v643
        %v4699 = vmul.f32 %v4539, %v648
        %v4700 = vmul.f32 %v4540, %v653
        %v4701 = vmul.f32 %v4541, %v658
        %v4702 = vmul.f32 %v4542, %v663
        %v4703 = vmul.f32 %v4543, %v668
        %v4704 = vmul.f32 %v4544, %v673
        %v4705 = vmul.f32 %v4545, %v678
        %v4706 = vmul.f32 %v4546, %v683
        %v4707 = vmul.f32 %v4547, %v688
        %v4708 = vmul.f32 %v4548, %v693
        %v4709 = vmul.f32 %v4549, %v698
        %v4710 = vmul.f32 %v4550, %v703
        %v4711 = vmul.f32 %v4551, %v708
        %v4712 = vmul.f32 %v4552, %v713
        %v4713 = vmul.f32 %v4553, %v718
        %v4714 = vmul.f32 %v4554, %v723
        %v4715 = vmul.f32 %v4555, %v728
        %v4716 = vmul.f32 %v4556, %v733
        %v4717 = vmul.f32 %v4685, %v738
        %v4718 = vmul.f32 %v4686, %v743
        %v4719 = vld [vmem:[#allocation2 + $0x101] sm:$0xff]
        %v4720 = vld [vmem:[#allocation2 + $0x109] sm:$0xff]
        %v4721 = vld [vmem:[#allocation2 + $0x102] sm:$0xff]
        %v4722 = vld [vmem:[#allocation2 + $0x10a] sm:$0xff]
        %v4723 = vmul.f32 %v4623, %v844
        %v4724 = vmul.f32 %v4624, %v849
        %v4725 = vmul.f32 %v4625, %v854
        %v4726 = vmul.f32 %v4626, %v859
        %v4727 = vmul.f32 %v4627, %v864
        %v4728 = vmul.f32 %v4628, %v869
        %v4729 = vmul.f32 %v4629, %v874
        %v4730 = vmul.f32 %v4630, %v879
        %v4731 = vmul.f32 %v4631, %v884
        %v4732 = vmul.f32 %v4632, %v889
        %v4733 = vmul.f32 %v4633, %v894
        %v4734 = vmul.f32 %v4634, %v899
        %v4735 = vmul.f32 %v4635, %v904
        %v4736 = vmul.f32 %v4636, %v909
        %v4737 = vmul.f32 %v4637, %v914
        %v4738 = vmul.f32 %v4638, %v919
        %v4739 = vmul.f32 %v4639, %v924
        %v4740 = vmul.f32 %v4640, %v929
        %v4741 = vmul.f32 %v4641, %v934
        %v4742 = vmul.f32 %v4642, %v939
        %v4743 = vmul.f32 %v4643, %v944
        %v4744 = vmul.f32 %v4644, %v949
        %v4745 = vmul.f32 %v4645, %v954
        %v4746 = vmul.f32 %v4646, %v959
        %v4747 = vmul.f32 %v4647, %v964
        %v4748 = vmul.f32 %v4648, %v969
        %v4749 = vmul.f32 %v4649, %v974
        %v4750 = vmul.f32 %v4650, %v979
        %v4751 = vmul.f32 %v4651, %v984
        %v4752 = vmul.f32 %v4652, %v989
        %v4753 = vmul.f32 %v4721, %v994
        %v4754 = vmul.f32 %v4722, %v999
        %v4755 = vld [vmem:[#allocation2 + $0x110] sm:$0xff]
        %v4756 = vld [vmem:[#allocation2 + $0x118] sm:$0xff]
        %v4757 = vmul.f32 %v4529, %v588
        %v4758 = vmul.f32 %v4530, %v593
        %v4759 = vmul.f32 %v4531, %v598
        %v4760 = vmul.f32 %v4532, %v603
        %v4761 = vmul.f32 %v4533, %v608
        %v4762 = vmul.f32 %v4534, %v613
        %v4763 = vmul.f32 %v4535, %v618
        %v4764 = vmul.f32 %v4536, %v623
        %v4765 = vmul.f32 %v4537, %v628
        %v4766 = vmul.f32 %v4538, %v633
        %v4767 = vmul.f32 %v4539, %v638
        %v4768 = vmul.f32 %v4540, %v643
        %v4769 = vmul.f32 %v4541, %v648
        %v4770 = vmul.f32 %v4542, %v653
        %v4771 = vmul.f32 %v4543, %v658
        %v4772 = vmul.f32 %v4544, %v663
        %v4773 = vmul.f32 %v4545, %v668
        %v4774 = vmul.f32 %v4546, %v673
        %v4775 = vmul.f32 %v4547, %v678
        %v4776 = vmul.f32 %v4548, %v683
        %v4777 = vmul.f32 %v4549, %v688
        %v4778 = vmul.f32 %v4550, %v693
        %v4779 = vmul.f32 %v4551, %v698
        %v4780 = vmul.f32 %v4552, %v703
        %v4781 = vmul.f32 %v4553, %v708
        %v4782 = vmul.f32 %v4554, %v713
        %v4783 = vmul.f32 %v4555, %v718
        %v4784 = vmul.f32 %v4556, %v723
        %v4785 = vmul.f32 %v4685, %v728
        %v4786 = vmul.f32 %v4686, %v733
        %v4787 = vmul.f32 %v4755, %v738
        %v4788 = vmul.f32 %v4756, %v743
        %v4789 = vld [vmem:[#allocation2 + $0x111] sm:$0xff]
        %v4790 = vld [vmem:[#allocation2 + $0x119] sm:$0xff]
        %v4791 = vld [vmem:[#allocation2 + $0x112] sm:$0xff]
        %v4792 = vld [vmem:[#allocation2 + $0x11a] sm:$0xff]
        %v4793 = vmul.f32 %v4625, %v844
        %v4794 = vmul.f32 %v4626, %v849
        %v4795 = vmul.f32 %v4627, %v854
        %v4796 = vmul.f32 %v4628, %v859
        %v4797 = vmul.f32 %v4629, %v864
        %v4798 = vmul.f32 %v4630, %v869
        %v4799 = vmul.f32 %v4631, %v874
        %v4800 = vmul.f32 %v4632, %v879
        %v4801 = vmul.f32 %v4633, %v884
        %v4802 = vmul.f32 %v4634, %v889
        %v4803 = vmul.f32 %v4635, %v894
        %v4804 = vmul.f32 %v4636, %v899
        %v4805 = vmul.f32 %v4637, %v904
        %v4806 = vmul.f32 %v4638, %v909
        %v4807 = vmul.f32 %v4639, %v914
        %v4808 = vmul.f32 %v4640, %v919
        %v4809 = vmul.f32 %v4641, %v924
        %v4810 = vmul.f32 %v4642, %v929
        %v4811 = vmul.f32 %v4643, %v934
        %v4812 = vmul.f32 %v4644, %v939
        %v4813 = vmul.f32 %v4645, %v944
        %v4814 = vmul.f32 %v4646, %v949
        %v4815 = vmul.f32 %v4647, %v954
        %v4816 = vmul.f32 %v4648, %v959
        %v4817 = vmul.f32 %v4649, %v964
        %v4818 = vmul.f32 %v4650, %v969
        %v4819 = vmul.f32 %v4651, %v974
        %v4820 = vmul.f32 %v4652, %v979
        %v4821 = vmul.f32 %v4721, %v984
        %v4822 = vmul.f32 %v4722, %v989
        %v4823 = vmul.f32 %v4791, %v994
        %v4824 = vmul.f32 %v4792, %v999
        %v4825 = vpack.c.bf16 %v4558, %v4557
        %v4826 = vpack.c.bf16 %v4560, %v4559
        %v4827 = vpack.c.bf16 %v4562, %v4561
        %v4828 = vpack.c.bf16 %v4564, %v4563
        %v4829 = vpack.c.bf16 %v4566, %v4565
        %v4830 = vpack.c.bf16 %v4568, %v4567
        %v4831 = vpack.c.bf16 %v4570, %v4569
        %v4832 = vpack.c.bf16 %v4572, %v4571
        %v4833 = vpack.c.bf16 %v4574, %v4573
        %v4834 = vpack.c.bf16 %v4576, %v4575
        %v4835 = vpack.c.bf16 %v4578, %v4577
        %v4836 = vpack.c.bf16 %v4580, %v4579
        %v4837 = vpack.c.bf16 %v4582, %v4581
        %v4838 = vpack.c.bf16 %v4584, %v4583
        %v4839 = vpack.c.bf16 %v4586, %v4585
        %v4840 = vpack.c.bf16 %v4588, %v4587
        %v4841 = vld [vmem:[%s9] sm:$0xf]
        %v4842 = vld [vmem:[%s9 + $0x4] sm:$0xf]
        %v4843 = vld [vmem:[%s9 + $0x8] sm:$0xf]
        %v4844 = vld [vmem:[%s9 + $0xc] sm:$0xf]
        %v4845 = vld [vmem:[%s9 + $0x10] sm:$0xf]
        %v4846 = vld [vmem:[%s9 + $0x14] sm:$0xf]
        %v4847 = vld [vmem:[%s9 + $0x18] sm:$0xf]
        %v4848 = vld [vmem:[%s9 + $0x1c] sm:$0xf]
        %v4849 = vpack.c.bf16 %v4590, %v4589
        %v4850 = vpack.c.bf16 %v4592, %v4591
        %v4851 = vpack.c.bf16 %v4594, %v4593
        %v4852 = vpack.c.bf16 %v4596, %v4595
        %v4853 = vpack.c.bf16 %v4598, %v4597
        %v4854 = vpack.c.bf16 %v4600, %v4599
        %v4855 = vpack.c.bf16 %v4602, %v4601
        %v4856 = vpack.c.bf16 %v4604, %v4603
        %v4857 = vpack.c.bf16 %v4606, %v4605
        %v4858 = vpack.c.bf16 %v4608, %v4607
        %v4859 = vpack.c.bf16 %v4610, %v4609
        %v4860 = vpack.c.bf16 %v4612, %v4611
        %v4861 = vpack.c.bf16 %v4614, %v4613
        %v4862 = vpack.c.bf16 %v4616, %v4615
        %v4863 = vpack.c.bf16 %v4618, %v4617
        %v4864 = vpack.c.bf16 %v4620, %v4619
        %s4865 = scalar_lea.vmem %s9, 32
        %v4866 = vld [vmem:[%s4865] sm:$0xf]
        %v4867 = vld [vmem:[%s4865 + $0x4] sm:$0xf]
        %v4868 = vld [vmem:[%s4865 + $0x8] sm:$0xf]
        %v4869 = vld [vmem:[%s4865 + $0xc] sm:$0xf]
        %v4870 = vld [vmem:[%s4865 + $0x10] sm:$0xf]
        %v4871 = vld [vmem:[%s4865 + $0x14] sm:$0xf]
        %v4872 = vld [vmem:[%s4865 + $0x18] sm:$0xf]
        %v4873 = vld [vmem:[%s4865 + $0x1c] sm:$0xf]
        %v4882 = vunpack.c.l.b16 %v4866
        %v4883 = vunpack.c.l.b16 %v4867
        %v4884 = vunpack.c.l.b16 %v4868
        %v4885 = vunpack.c.l.b16 %v4869
        %v4886 = vunpack.c.l.b16 %v4870
        %v4887 = vunpack.c.l.b16 %v4871
        %v4888 = vunpack.c.l.b16 %v4872
        %v4889 = vunpack.c.l.b16 %v4873
        %v4890 = vpack.c.b16 %v4883, %v4882
        %v4891 = vpack.c.b16 %v4885, %v4884
        %v4892 = vpack.c.b16 %v4887, %v4886
        %v4893 = vpack.c.b16 %v4889, %v4888
        %v4899 = vsel %vm386, %v4849, 0
        %v4902 = vsel %vm386, %v4850, 0
        %v4905 = vsel %vm386, %v4851, 0
        %v4908 = vsel %vm386, %v4852, 0
        %v4911 = vsel %vm386, %v4853, 0
        %v4914 = vsel %vm386, %v4854, 0
        %v4917 = vsel %vm386, %v4855, 0
        %v4920 = vsel %vm386, %v4856, 0
        %v4923 = vsel %vm386, %v4857, 0
        %v4926 = vsel %vm386, %v4858, 0
        %v4929 = vsel %vm386, %v4859, 0
        %v4932 = vsel %vm386, %v4860, 0
        %v4935 = vsel %vm386, %v4861, 0
        %v4938 = vsel %vm386, %v4862, 0
        %v4941 = vsel %vm386, %v4863, 0
        %v4944 = vsel %vm386, %v4864, 0
        %4946 = vmatpush.bf16.msra.mxu0 0
        %4947 = vmatpush.bf16.msra.mxu0 0
        %4948 = vmatpush.bf16.msra.mxu0 0
        %4949 = vmatpush.bf16.msra.mxu0 0
        %4950 = vmatpush.bf16.msra.mxu0 %v4893
        %4951 = vmatpush.bf16.msra.mxu0 %v4892
        %4952 = vmatpush.bf16.msra.mxu0 %v4891
        %4953 = vmatpush.bf16.msra.mxu0 %v4890
        %4954 = vmatmul.bf16.gmra.mxu0 %v4899
        %v4955 = vpop.f32.mrf.mxu0
        %v4956 = vadd.f32 0.0, %v4955
        %v4957 = vpop.f32.mrf.mxu0
        %v4958 = vadd.f32 0.0, %v4957
        %4959 = vmatmul.bf16.gmra.mxu0 %v4902
        %v4960 = vpop.f32.mrf.mxu0
        %v4961 = vadd.f32 0.0, %v4960
        %v4962 = vpop.f32.mrf.mxu0
        %v4963 = vadd.f32 0.0, %v4962
        %4964 = vmatmul.bf16.gmra.mxu0 %v4905
        %v4965 = vpop.f32.mrf.mxu0
        %v4966 = vadd.f32 0.0, %v4965
        %v4967 = vpop.f32.mrf.mxu0
        %v4968 = vadd.f32 0.0, %v4967
        %4969 = vmatmul.bf16.gmra.mxu0 %v4908
        %v4970 = vpop.f32.mrf.mxu0
        %v4971 = vadd.f32 0.0, %v4970
        %v4972 = vpop.f32.mrf.mxu0
        %v4973 = vadd.f32 0.0, %v4972
        %4974 = vmatmul.bf16.gmra.mxu0 %v4911
        %v4975 = vpop.f32.mrf.mxu0
        %v4976 = vadd.f32 0.0, %v4975
        %v4977 = vpop.f32.mrf.mxu0
        %v4978 = vadd.f32 0.0, %v4977
        %4979 = vmatmul.bf16.gmra.mxu0 %v4914
        %v4980 = vpop.f32.mrf.mxu0
        %v4981 = vadd.f32 0.0, %v4980
        %v4982 = vpop.f32.mrf.mxu0
        %v4983 = vadd.f32 0.0, %v4982
        %4984 = vmatmul.bf16.gmra.mxu0 %v4917
        %v4985 = vpop.f32.mrf.mxu0
        %v4986 = vadd.f32 0.0, %v4985
        %v4987 = vpop.f32.mrf.mxu0
        %v4988 = vadd.f32 0.0, %v4987
        %4989 = vmatmul.bf16.gmra.mxu0 %v4920
        %v4990 = vpop.f32.mrf.mxu0
        %v4991 = vadd.f32 0.0, %v4990
        %v4992 = vpop.f32.mrf.mxu0
        %v4993 = vadd.f32 0.0, %v4992
        %4994 = vmatmul.bf16.gmra.mxu0 %v4923
        %v4995 = vpop.f32.mrf.mxu0
        %v4996 = vadd.f32 0.0, %v4995
        %v4997 = vpop.f32.mrf.mxu0
        %v4998 = vadd.f32 0.0, %v4997
        %4999 = vmatmul.bf16.gmra.mxu0 %v4926
        %v5000 = vpop.f32.mrf.mxu0
        %v5001 = vadd.f32 0.0, %v5000
        %v5002 = vpop.f32.mrf.mxu0
        %v5003 = vadd.f32 0.0, %v5002
        %5004 = vmatmul.bf16.gmra.mxu0 %v4929
        %v5005 = vpop.f32.mrf.mxu0
        %v5006 = vadd.f32 0.0, %v5005
        %v5007 = vpop.f32.mrf.mxu0
        %v5008 = vadd.f32 0.0, %v5007
        %5009 = vmatmul.bf16.gmra.mxu0 %v4932
        %v5010 = vpop.f32.mrf.mxu0
        %v5011 = vadd.f32 0.0, %v5010
        %v5012 = vpop.f32.mrf.mxu0
        %v5013 = vadd.f32 0.0, %v5012
        %5014 = vmatmul.bf16.gmra.mxu0 %v4935
        %v5015 = vpop.f32.mrf.mxu0
        %v5016 = vadd.f32 0.0, %v5015
        %v5017 = vpop.f32.mrf.mxu0
        %v5018 = vadd.f32 0.0, %v5017
        %5019 = vmatmul.bf16.gmra.mxu0 %v4938
        %v5020 = vpop.f32.mrf.mxu0
        %v5021 = vadd.f32 0.0, %v5020
        %v5022 = vpop.f32.mrf.mxu0
        %v5023 = vadd.f32 0.0, %v5022
        %5024 = vmatmul.bf16.gmra.mxu0 %v4941
        %v5025 = vpop.f32.mrf.mxu0
        %v5026 = vadd.f32 0.0, %v5025
        %v5027 = vpop.f32.mrf.mxu0
        %v5028 = vadd.f32 0.0, %v5027
        %5029 = vmatmul.bf16.gmra.mxu0 %v4944
        %v5030 = vpop.f32.mrf.mxu0
        %v5031 = vadd.f32 0.0, %v5030
        %v5032 = vpop.f32.mrf.mxu0
        %v5033 = vadd.f32 0.0, %v5032
        %5034 = vdwg.mxu0
        %v5043 = vunpack.c.l.b16 %v4841
        %v5044 = vunpack.c.l.b16 %v4842
        %v5045 = vunpack.c.l.b16 %v4843
        %v5046 = vunpack.c.l.b16 %v4844
        %v5047 = vunpack.c.l.b16 %v4845
        %v5048 = vunpack.c.l.b16 %v4846
        %v5049 = vunpack.c.l.b16 %v4847
        %v5050 = vunpack.c.l.b16 %v4848
        %v5051 = vpack.c.b16 %v5044, %v5043
        %v5052 = vpack.c.b16 %v5046, %v5045
        %v5053 = vpack.c.b16 %v5048, %v5047
        %v5054 = vpack.c.b16 %v5050, %v5049
        %v5060 = vsel %vm386, %v4825, 0
        %v5063 = vsel %vm386, %v4826, 0
        %v5066 = vsel %vm386, %v4827, 0
        %v5069 = vsel %vm386, %v4828, 0
        %v5072 = vsel %vm386, %v4829, 0
        %v5075 = vsel %vm386, %v4830, 0
        %v5078 = vsel %vm386, %v4831, 0
        %v5081 = vsel %vm386, %v4832, 0
        %v5084 = vsel %vm386, %v4833, 0
        %v5087 = vsel %vm386, %v4834, 0
        %v5090 = vsel %vm386, %v4835, 0
        %v5093 = vsel %vm386, %v4836, 0
        %v5096 = vsel %vm386, %v4837, 0
        %v5099 = vsel %vm386, %v4838, 0
        %v5102 = vsel %vm386, %v4839, 0
        %v5105 = vsel %vm386, %v4840, 0
        %5107 = vmatpush.bf16.msra.mxu0 0
        %5108 = vmatpush.bf16.msra.mxu0 0
        %5109 = vmatpush.bf16.msra.mxu0 0
        %5110 = vmatpush.bf16.msra.mxu0 0
        %5111 = vmatpush.bf16.msra.mxu0 %v5054
        %5112 = vmatpush.bf16.msra.mxu0 %v5053
        %5113 = vmatpush.bf16.msra.mxu0 %v5052
        %5114 = vmatpush.bf16.msra.mxu0 %v5051
        %5115 = vmatmul.bf16.gmra.mxu0 %v5060
        %v5116 = vpop.f32.mrf.mxu0
        %v5117 = vadd.f32 %v4956, %v5116
        %v5118 = vpop.f32.mrf.mxu0
        %v5119 = vadd.f32 %v4958, %v5118
        %5120 = vmatmul.bf16.gmra.mxu0 %v5063
        %v5121 = vpop.f32.mrf.mxu0
        %v5122 = vadd.f32 %v4961, %v5121
        %v5123 = vpop.f32.mrf.mxu0
        %v5124 = vadd.f32 %v4963, %v5123
        %5125 = vmatmul.bf16.gmra.mxu0 %v5066
        %v5126 = vpop.f32.mrf.mxu0
        %v5127 = vadd.f32 %v4966, %v5126
        %v5128 = vpop.f32.mrf.mxu0
        %v5129 = vadd.f32 %v4968, %v5128
        %5130 = vmatmul.bf16.gmra.mxu0 %v5069
        %v5131 = vpop.f32.mrf.mxu0
        %v5132 = vadd.f32 %v4971, %v5131
        %v5133 = vpop.f32.mrf.mxu0
        %v5134 = vadd.f32 %v4973, %v5133
        %5135 = vmatmul.bf16.gmra.mxu0 %v5072
        %v5136 = vpop.f32.mrf.mxu0
        %v5137 = vadd.f32 %v4976, %v5136
        %v5138 = vpop.f32.mrf.mxu0
        %v5139 = vadd.f32 %v4978, %v5138
        %5140 = vmatmul.bf16.gmra.mxu0 %v5075
        %v5141 = vpop.f32.mrf.mxu0
        %v5142 = vadd.f32 %v4981, %v5141
        %v5143 = vpop.f32.mrf.mxu0
        %v5144 = vadd.f32 %v4983, %v5143
        %5145 = vmatmul.bf16.gmra.mxu0 %v5078
        %v5146 = vpop.f32.mrf.mxu0
        %v5147 = vadd.f32 %v4986, %v5146
        %v5148 = vpop.f32.mrf.mxu0
        %v5149 = vadd.f32 %v4988, %v5148
        %5150 = vmatmul.bf16.gmra.mxu0 %v5081
        %v5151 = vpop.f32.mrf.mxu0
        %v5152 = vadd.f32 %v4991, %v5151
        %v5153 = vpop.f32.mrf.mxu0
        %v5154 = vadd.f32 %v4993, %v5153
        %5155 = vmatmul.bf16.gmra.mxu0 %v5084
        %v5156 = vpop.f32.mrf.mxu0
        %v5157 = vadd.f32 %v4996, %v5156
        %v5158 = vpop.f32.mrf.mxu0
        %v5159 = vadd.f32 %v4998, %v5158
        %5160 = vmatmul.bf16.gmra.mxu0 %v5087
        %v5161 = vpop.f32.mrf.mxu0
        %v5162 = vadd.f32 %v5001, %v5161
        %v5163 = vpop.f32.mrf.mxu0
        %v5164 = vadd.f32 %v5003, %v5163
        %5165 = vmatmul.bf16.gmra.mxu0 %v5090
        %v5166 = vpop.f32.mrf.mxu0
        %v5167 = vadd.f32 %v5006, %v5166
        %v5168 = vpop.f32.mrf.mxu0
        %v5169 = vadd.f32 %v5008, %v5168
        %5170 = vmatmul.bf16.gmra.mxu0 %v5093
        %v5171 = vpop.f32.mrf.mxu0
        %v5172 = vadd.f32 %v5011, %v5171
        %v5173 = vpop.f32.mrf.mxu0
        %v5174 = vadd.f32 %v5013, %v5173
        %5175 = vmatmul.bf16.gmra.mxu0 %v5096
        %v5176 = vpop.f32.mrf.mxu0
        %v5177 = vadd.f32 %v5016, %v5176
        %v5178 = vpop.f32.mrf.mxu0
        %v5179 = vadd.f32 %v5018, %v5178
        %5180 = vmatmul.bf16.gmra.mxu0 %v5099
        %v5181 = vpop.f32.mrf.mxu0
        %v5182 = vadd.f32 %v5021, %v5181
        %v5183 = vpop.f32.mrf.mxu0
        %v5184 = vadd.f32 %v5023, %v5183
        %5185 = vmatmul.bf16.gmra.mxu0 %v5102
        %v5186 = vpop.f32.mrf.mxu0
        %v5187 = vadd.f32 %v5026, %v5186
        %v5188 = vpop.f32.mrf.mxu0
        %v5189 = vadd.f32 %v5028, %v5188
        %5190 = vmatmul.bf16.gmra.mxu0 %v5105
        %v5191 = vpop.f32.mrf.mxu0
        %v5192 = vadd.f32 %v5031, %v5191
        %v5193 = vpop.f32.mrf.mxu0
        %v5194 = vadd.f32 %v5033, %v5193
        %5195 = vdwg.mxu0
        %v5196 = vpack.c.bf16 %v4654, %v4653
        %v5197 = vpack.c.bf16 %v4656, %v4655
        %v5198 = vpack.c.bf16 %v4658, %v4657
        %v5199 = vpack.c.bf16 %v4660, %v4659
        %v5200 = vpack.c.bf16 %v4662, %v4661
        %v5201 = vpack.c.bf16 %v4664, %v4663
        %v5202 = vpack.c.bf16 %v4666, %v4665
        %v5203 = vpack.c.bf16 %v4668, %v4667
        %v5204 = vpack.c.bf16 %v4670, %v4669
        %v5205 = vpack.c.bf16 %v4672, %v4671
        %v5206 = vpack.c.bf16 %v4674, %v4673
        %v5207 = vpack.c.bf16 %v4676, %v4675
        %v5208 = vpack.c.bf16 %v4678, %v4677
        %v5209 = vpack.c.bf16 %v4680, %v4679
        %v5210 = vpack.c.bf16 %v4682, %v4681
        %v5211 = vpack.c.bf16 %v4684, %v4683
        %s5212 = scalar_lea.vmem %s9, 64
        %v5213 = vld [vmem:[%s5212] sm:$0xf]
        %v5214 = vld [vmem:[%s5212 + $0x4] sm:$0xf]
        %v5215 = vld [vmem:[%s5212 + $0x8] sm:$0xf]
        %v5216 = vld [vmem:[%s5212 + $0xc] sm:$0xf]
        %v5217 = vld [vmem:[%s5212 + $0x10] sm:$0xf]
        %v5218 = vld [vmem:[%s5212 + $0x14] sm:$0xf]
        %v5219 = vld [vmem:[%s5212 + $0x18] sm:$0xf]
        %v5220 = vld [vmem:[%s5212 + $0x1c] sm:$0xf]
        %v5229 = vunpack.c.l.b16 %v5213
        %v5230 = vunpack.c.l.b16 %v5214
        %v5231 = vunpack.c.l.b16 %v5215
        %v5232 = vunpack.c.l.b16 %v5216
        %v5233 = vunpack.c.l.b16 %v5217
        %v5234 = vunpack.c.l.b16 %v5218
        %v5235 = vunpack.c.l.b16 %v5219
        %v5236 = vunpack.c.l.b16 %v5220
        %v5237 = vpack.c.b16 %v5230, %v5229
        %v5238 = vpack.c.b16 %v5232, %v5231
        %v5239 = vpack.c.b16 %v5234, %v5233
        %v5240 = vpack.c.b16 %v5236, %v5235
        %v5246 = vsel %vm386, %v5196, 0
        %v5249 = vsel %vm386, %v5197, 0
        %v5252 = vsel %vm386, %v5198, 0
        %v5255 = vsel %vm386, %v5199, 0
        %v5258 = vsel %vm386, %v5200, 0
        %v5261 = vsel %vm386, %v5201, 0
        %v5264 = vsel %vm386, %v5202, 0
        %v5267 = vsel %vm386, %v5203, 0
        %v5270 = vsel %vm386, %v5204, 0
        %v5273 = vsel %vm386, %v5205, 0
        %v5276 = vsel %vm386, %v5206, 0
        %v5279 = vsel %vm386, %v5207, 0
        %v5282 = vsel %vm386, %v5208, 0
        %v5285 = vsel %vm386, %v5209, 0
        %v5288 = vsel %vm386, %v5210, 0
        %v5291 = vsel %vm386, %v5211, 0
        %5293 = vmatpush.bf16.msra.mxu0 0
        %5294 = vmatpush.bf16.msra.mxu0 0
        %5295 = vmatpush.bf16.msra.mxu0 0
        %5296 = vmatpush.bf16.msra.mxu0 0
        %5297 = vmatpush.bf16.msra.mxu0 %v5240
        %5298 = vmatpush.bf16.msra.mxu0 %v5239
        %5299 = vmatpush.bf16.msra.mxu0 %v5238
        %5300 = vmatpush.bf16.msra.mxu0 %v5237
        %5301 = vmatmul.bf16.gmra.mxu0 %v5246
        %v5302 = vpop.f32.mrf.mxu0
        %v5303 = vadd.f32 0.0, %v5302
        %v5304 = vpop.f32.mrf.mxu0
        %v5305 = vadd.f32 0.0, %v5304
        %5306 = vmatmul.bf16.gmra.mxu0 %v5249
        %v5307 = vpop.f32.mrf.mxu0
        %v5308 = vadd.f32 0.0, %v5307
        %v5309 = vpop.f32.mrf.mxu0
        %v5310 = vadd.f32 0.0, %v5309
        %5311 = vmatmul.bf16.gmra.mxu0 %v5252
        %v5312 = vpop.f32.mrf.mxu0
        %v5313 = vadd.f32 0.0, %v5312
        %v5314 = vpop.f32.mrf.mxu0
        %v5315 = vadd.f32 0.0, %v5314
        %5316 = vmatmul.bf16.gmra.mxu0 %v5255
        %v5317 = vpop.f32.mrf.mxu0
        %v5318 = vadd.f32 0.0, %v5317
        %v5319 = vpop.f32.mrf.mxu0
        %v5320 = vadd.f32 0.0, %v5319
        %5321 = vmatmul.bf16.gmra.mxu0 %v5258
        %v5322 = vpop.f32.mrf.mxu0
        %v5323 = vadd.f32 0.0, %v5322
        %v5324 = vpop.f32.mrf.mxu0
        %v5325 = vadd.f32 0.0, %v5324
        %5326 = vmatmul.bf16.gmra.mxu0 %v5261
        %v5327 = vpop.f32.mrf.mxu0
        %v5328 = vadd.f32 0.0, %v5327
        %v5329 = vpop.f32.mrf.mxu0
        %v5330 = vadd.f32 0.0, %v5329
        %5331 = vmatmul.bf16.gmra.mxu0 %v5264
        %v5332 = vpop.f32.mrf.mxu0
        %v5333 = vadd.f32 0.0, %v5332
        %v5334 = vpop.f32.mrf.mxu0
        %v5335 = vadd.f32 0.0, %v5334
        %5336 = vmatmul.bf16.gmra.mxu0 %v5267
        %v5337 = vpop.f32.mrf.mxu0
        %v5338 = vadd.f32 0.0, %v5337
        %v5339 = vpop.f32.mrf.mxu0
        %v5340 = vadd.f32 0.0, %v5339
        %5341 = vmatmul.bf16.gmra.mxu0 %v5270
        %v5342 = vpop.f32.mrf.mxu0
        %v5343 = vadd.f32 0.0, %v5342
        %v5344 = vpop.f32.mrf.mxu0
        %v5345 = vadd.f32 0.0, %v5344
        %5346 = vmatmul.bf16.gmra.mxu0 %v5273
        %v5347 = vpop.f32.mrf.mxu0
        %v5348 = vadd.f32 0.0, %v5347
        %v5349 = vpop.f32.mrf.mxu0
        %v5350 = vadd.f32 0.0, %v5349
        %5351 = vmatmul.bf16.gmra.mxu0 %v5276
        %v5352 = vpop.f32.mrf.mxu0
        %v5353 = vadd.f32 0.0, %v5352
        %v5354 = vpop.f32.mrf.mxu0
        %v5355 = vadd.f32 0.0, %v5354
        %5356 = vmatmul.bf16.gmra.mxu0 %v5279
        %v5357 = vpop.f32.mrf.mxu0
        %v5358 = vadd.f32 0.0, %v5357
        %v5359 = vpop.f32.mrf.mxu0
        %v5360 = vadd.f32 0.0, %v5359
        %5361 = vmatmul.bf16.gmra.mxu0 %v5282
        %v5362 = vpop.f32.mrf.mxu0
        %v5363 = vadd.f32 0.0, %v5362
        %v5364 = vpop.f32.mrf.mxu0
        %v5365 = vadd.f32 0.0, %v5364
        %5366 = vmatmul.bf16.gmra.mxu0 %v5285
        %v5367 = vpop.f32.mrf.mxu0
        %v5368 = vadd.f32 0.0, %v5367
        %v5369 = vpop.f32.mrf.mxu0
        %v5370 = vadd.f32 0.0, %v5369
        %5371 = vmatmul.bf16.gmra.mxu0 %v5288
        %v5372 = vpop.f32.mrf.mxu0
        %v5373 = vadd.f32 0.0, %v5372
        %v5374 = vpop.f32.mrf.mxu0
        %v5375 = vadd.f32 0.0, %v5374
        %5376 = vmatmul.bf16.gmra.mxu0 %v5291
        %v5377 = vpop.f32.mrf.mxu0
        %v5378 = vadd.f32 0.0, %v5377
        %v5379 = vpop.f32.mrf.mxu0
        %v5380 = vadd.f32 0.0, %v5379
        %5381 = vdwg.mxu0
        %v5382 = vadd.f32 %v5117, %v5303
        %v5383 = vadd.f32 %v5119, %v5305
        %v5384 = vadd.f32 %v5122, %v5308
        %v5385 = vadd.f32 %v5124, %v5310
        %v5386 = vadd.f32 %v5127, %v5313
        %v5387 = vadd.f32 %v5129, %v5315
        %v5388 = vadd.f32 %v5132, %v5318
        %v5389 = vadd.f32 %v5134, %v5320
        %v5390 = vadd.f32 %v5137, %v5323
        %v5391 = vadd.f32 %v5139, %v5325
        %v5392 = vadd.f32 %v5142, %v5328
        %v5393 = vadd.f32 %v5144, %v5330
        %v5394 = vadd.f32 %v5147, %v5333
        %v5395 = vadd.f32 %v5149, %v5335
        %v5396 = vadd.f32 %v5152, %v5338
        %v5397 = vadd.f32 %v5154, %v5340
        %v5398 = vadd.f32 %v5157, %v5343
        %v5399 = vadd.f32 %v5159, %v5345
        %v5400 = vadd.f32 %v5162, %v5348
        %v5401 = vadd.f32 %v5164, %v5350
        %v5402 = vadd.f32 %v5167, %v5353
        %v5403 = vadd.f32 %v5169, %v5355
        %v5404 = vadd.f32 %v5172, %v5358
        %v5405 = vadd.f32 %v5174, %v5360
        %v5406 = vadd.f32 %v5177, %v5363
        %v5407 = vadd.f32 %v5179, %v5365
        %v5408 = vadd.f32 %v5182, %v5368
        %v5409 = vadd.f32 %v5184, %v5370
        %v5410 = vadd.f32 %v5187, %v5373
        %v5411 = vadd.f32 %v5189, %v5375
        %v5412 = vadd.f32 %v5192, %v5378
        %v5413 = vadd.f32 %v5194, %v5380
        %v5414 = vpack.c.bf16 %v4688, %v4687
        %v5415 = vpack.c.bf16 %v4690, %v4689
        %v5416 = vpack.c.bf16 %v4692, %v4691
        %v5417 = vpack.c.bf16 %v4694, %v4693
        %v5418 = vpack.c.bf16 %v4696, %v4695
        %v5419 = vpack.c.bf16 %v4698, %v4697
        %v5420 = vpack.c.bf16 %v4700, %v4699
        %v5421 = vpack.c.bf16 %v4702, %v4701
        %v5422 = vpack.c.bf16 %v4704, %v4703
        %v5423 = vpack.c.bf16 %v4706, %v4705
        %v5424 = vpack.c.bf16 %v4708, %v4707
        %v5425 = vpack.c.bf16 %v4710, %v4709
        %v5426 = vpack.c.bf16 %v4712, %v4711
        %v5427 = vpack.c.bf16 %v4714, %v4713
        %v5428 = vpack.c.bf16 %v4716, %v4715
        %v5429 = vpack.c.bf16 %v4718, %v4717
        %s5430 = scalar_lea.vmem %s9, 96
        %v5431 = vld [vmem:[%s5430] sm:$0xf]
        %v5432 = vld [vmem:[%s5430 + $0x4] sm:$0xf]
        %v5433 = vld [vmem:[%s5430 + $0x8] sm:$0xf]
        %v5434 = vld [vmem:[%s5430 + $0xc] sm:$0xf]
        %v5435 = vld [vmem:[%s5430 + $0x10] sm:$0xf]
        %v5436 = vld [vmem:[%s5430 + $0x14] sm:$0xf]
        %v5437 = vld [vmem:[%s5430 + $0x18] sm:$0xf]
        %v5438 = vld [vmem:[%s5430 + $0x1c] sm:$0xf]
        %v5447 = vunpack.c.l.b16 %v5431
        %v5448 = vunpack.c.l.b16 %v5432
        %v5449 = vunpack.c.l.b16 %v5433
        %v5450 = vunpack.c.l.b16 %v5434
        %v5451 = vunpack.c.l.b16 %v5435
        %v5452 = vunpack.c.l.b16 %v5436
        %v5453 = vunpack.c.l.b16 %v5437
        %v5454 = vunpack.c.l.b16 %v5438
        %v5455 = vpack.c.b16 %v5448, %v5447
        %v5456 = vpack.c.b16 %v5450, %v5449
        %v5457 = vpack.c.b16 %v5452, %v5451
        %v5458 = vpack.c.b16 %v5454, %v5453
        %v5464 = vsel %vm386, %v5414, 0
        %v5467 = vsel %vm386, %v5415, 0
        %v5470 = vsel %vm386, %v5416, 0
        %v5473 = vsel %vm386, %v5417, 0
        %v5476 = vsel %vm386, %v5418, 0
        %v5479 = vsel %vm386, %v5419, 0
        %v5482 = vsel %vm386, %v5420, 0
        %v5485 = vsel %vm386, %v5421, 0
        %v5488 = vsel %vm386, %v5422, 0
        %v5491 = vsel %vm386, %v5423, 0
        %v5494 = vsel %vm386, %v5424, 0
        %v5497 = vsel %vm386, %v5425, 0
        %v5500 = vsel %vm386, %v5426, 0
        %v5503 = vsel %vm386, %v5427, 0
        %v5506 = vsel %vm386, %v5428, 0
        %v5509 = vsel %vm386, %v5429, 0
        %5511 = vmatpush.bf16.msra.mxu0 0
        %5512 = vmatpush.bf16.msra.mxu0 0
        %5513 = vmatpush.bf16.msra.mxu0 0
        %5514 = vmatpush.bf16.msra.mxu0 0
        %5515 = vmatpush.bf16.msra.mxu0 %v5458
        %5516 = vmatpush.bf16.msra.mxu0 %v5457
        %5517 = vmatpush.bf16.msra.mxu0 %v5456
        %5518 = vmatpush.bf16.msra.mxu0 %v5455
        %5519 = vmatmul.bf16.gmra.mxu0 %v5464
        %v5520 = vpop.f32.mrf.mxu0
        %v5521 = vadd.f32 0.0, %v5520
        %v5522 = vpop.f32.mrf.mxu0
        %v5523 = vadd.f32 0.0, %v5522
        %5524 = vmatmul.bf16.gmra.mxu0 %v5467
        %v5525 = vpop.f32.mrf.mxu0
        %v5526 = vadd.f32 0.0, %v5525
        %v5527 = vpop.f32.mrf.mxu0
        %v5528 = vadd.f32 0.0, %v5527
        %5529 = vmatmul.bf16.gmra.mxu0 %v5470
        %v5530 = vpop.f32.mrf.mxu0
        %v5531 = vadd.f32 0.0, %v5530
        %v5532 = vpop.f32.mrf.mxu0
        %v5533 = vadd.f32 0.0, %v5532
        %5534 = vmatmul.bf16.gmra.mxu0 %v5473
        %v5535 = vpop.f32.mrf.mxu0
        %v5536 = vadd.f32 0.0, %v5535
        %v5537 = vpop.f32.mrf.mxu0
        %v5538 = vadd.f32 0.0, %v5537
        %5539 = vmatmul.bf16.gmra.mxu0 %v5476
        %v5540 = vpop.f32.mrf.mxu0
        %v5541 = vadd.f32 0.0, %v5540
        %v5542 = vpop.f32.mrf.mxu0
        %v5543 = vadd.f32 0.0, %v5542
        %5544 = vmatmul.bf16.gmra.mxu0 %v5479
        %v5545 = vpop.f32.mrf.mxu0
        %v5546 = vadd.f32 0.0, %v5545
        %v5547 = vpop.f32.mrf.mxu0
        %v5548 = vadd.f32 0.0, %v5547
        %5549 = vmatmul.bf16.gmra.mxu0 %v5482
        %v5550 = vpop.f32.mrf.mxu0
        %v5551 = vadd.f32 0.0, %v5550
        %v5552 = vpop.f32.mrf.mxu0
        %v5553 = vadd.f32 0.0, %v5552
        %5554 = vmatmul.bf16.gmra.mxu0 %v5485
        %v5555 = vpop.f32.mrf.mxu0
        %v5556 = vadd.f32 0.0, %v5555
        %v5557 = vpop.f32.mrf.mxu0
        %v5558 = vadd.f32 0.0, %v5557
        %5559 = vmatmul.bf16.gmra.mxu0 %v5488
        %v5560 = vpop.f32.mrf.mxu0
        %v5561 = vadd.f32 0.0, %v5560
        %v5562 = vpop.f32.mrf.mxu0
        %v5563 = vadd.f32 0.0, %v5562
        %5564 = vmatmul.bf16.gmra.mxu0 %v5491
        %v5565 = vpop.f32.mrf.mxu0
        %v5566 = vadd.f32 0.0, %v5565
        %v5567 = vpop.f32.mrf.mxu0
        %v5568 = vadd.f32 0.0, %v5567
        %5569 = vmatmul.bf16.gmra.mxu0 %v5494
        %v5570 = vpop.f32.mrf.mxu0
        %v5571 = vadd.f32 0.0, %v5570
        %v5572 = vpop.f32.mrf.mxu0
        %v5573 = vadd.f32 0.0, %v5572
        %5574 = vmatmul.bf16.gmra.mxu0 %v5497
        %v5575 = vpop.f32.mrf.mxu0
        %v5576 = vadd.f32 0.0, %v5575
        %v5577 = vpop.f32.mrf.mxu0
        %v5578 = vadd.f32 0.0, %v5577
        %5579 = vmatmul.bf16.gmra.mxu0 %v5500
        %v5580 = vpop.f32.mrf.mxu0
        %v5581 = vadd.f32 0.0, %v5580
        %v5582 = vpop.f32.mrf.mxu0
        %v5583 = vadd.f32 0.0, %v5582
        %5584 = vmatmul.bf16.gmra.mxu0 %v5503
        %v5585 = vpop.f32.mrf.mxu0
        %v5586 = vadd.f32 0.0, %v5585
        %v5587 = vpop.f32.mrf.mxu0
        %v5588 = vadd.f32 0.0, %v5587
        %5589 = vmatmul.bf16.gmra.mxu0 %v5506
        %v5590 = vpop.f32.mrf.mxu0
        %v5591 = vadd.f32 0.0, %v5590
        %v5592 = vpop.f32.mrf.mxu0
        %v5593 = vadd.f32 0.0, %v5592
        %5594 = vmatmul.bf16.gmra.mxu0 %v5509
        %v5595 = vpop.f32.mrf.mxu0
        %v5596 = vadd.f32 0.0, %v5595
        %v5597 = vpop.f32.mrf.mxu0
        %v5598 = vadd.f32 0.0, %v5597
        %5599 = vdwg.mxu0
        %v5600 = vadd.f32 %v5382, %v5521
        %v5601 = vadd.f32 %v5383, %v5523
        %v5602 = vadd.f32 %v5384, %v5526
        %v5603 = vadd.f32 %v5385, %v5528
        %v5604 = vadd.f32 %v5386, %v5531
        %v5605 = vadd.f32 %v5387, %v5533
        %v5606 = vadd.f32 %v5388, %v5536
        %v5607 = vadd.f32 %v5389, %v5538
        %v5608 = vadd.f32 %v5390, %v5541
        %v5609 = vadd.f32 %v5391, %v5543
        %v5610 = vadd.f32 %v5392, %v5546
        %v5611 = vadd.f32 %v5393, %v5548
        %v5612 = vadd.f32 %v5394, %v5551
        %v5613 = vadd.f32 %v5395, %v5553
        %v5614 = vadd.f32 %v5396, %v5556
        %v5615 = vadd.f32 %v5397, %v5558
        %v5616 = vadd.f32 %v5398, %v5561
        %v5617 = vadd.f32 %v5399, %v5563
        %v5618 = vadd.f32 %v5400, %v5566
        %v5619 = vadd.f32 %v5401, %v5568
        %v5620 = vadd.f32 %v5402, %v5571
        %v5621 = vadd.f32 %v5403, %v5573
        %v5622 = vadd.f32 %v5404, %v5576
        %v5623 = vadd.f32 %v5405, %v5578
        %v5624 = vadd.f32 %v5406, %v5581
        %v5625 = vadd.f32 %v5407, %v5583
        %v5626 = vadd.f32 %v5408, %v5586
        %v5627 = vadd.f32 %v5409, %v5588
        %v5628 = vadd.f32 %v5410, %v5591
        %v5629 = vadd.f32 %v5411, %v5593
        %v5630 = vadd.f32 %v5412, %v5596
        %v5631 = vadd.f32 %v5413, %v5598
        %v5632 = vpack.c.bf16 %v4720, %v4719
        %s5633 = scalar_lea.vmem %s9, 128
        %v5634 = vld [vmem:[%s5633] sm:$0xf]
        %v5635 = vld [vmem:[%s5633 + $0x4] sm:$0xf]
        %v5636 = vld [vmem:[%s5633 + $0x8] sm:$0xf]
        %v5637 = vld [vmem:[%s5633 + $0xc] sm:$0xf]
        %v5638 = vld [vmem:[%s5633 + $0x10] sm:$0xf]
        %v5639 = vld [vmem:[%s5633 + $0x14] sm:$0xf]
        %v5640 = vld [vmem:[%s5633 + $0x18] sm:$0xf]
        %v5641 = vld [vmem:[%s5633 + $0x1c] sm:$0xf]
        %v5650 = vunpack.c.l.b16 %v5634
        %v5651 = vunpack.c.l.b16 %v5635
        %v5652 = vunpack.c.l.b16 %v5636
        %v5653 = vunpack.c.l.b16 %v5637
        %v5654 = vunpack.c.l.b16 %v5638
        %v5655 = vunpack.c.l.b16 %v5639
        %v5656 = vunpack.c.l.b16 %v5640
        %v5657 = vunpack.c.l.b16 %v5641
        %v5658 = vpack.c.b16 %v5651, %v5650
        %v5659 = vpack.c.b16 %v5653, %v5652
        %v5660 = vpack.c.b16 %v5655, %v5654
        %v5661 = vpack.c.b16 %v5657, %v5656
        %v5667 = vsel %vm386, %v5632, 0
        %5669 = vmatpush.bf16.msra.mxu0 0
        %5670 = vmatpush.bf16.msra.mxu0 0
        %5671 = vmatpush.bf16.msra.mxu0 0
        %5672 = vmatpush.bf16.msra.mxu0 0
        %5673 = vmatpush.bf16.msra.mxu0 %v5661
        %5674 = vmatpush.bf16.msra.mxu0 %v5660
        %5675 = vmatpush.bf16.msra.mxu0 %v5659
        %5676 = vmatpush.bf16.msra.mxu0 %v5658
        %5677 = vmatmul.bf16.gmra.mxu0 %v4902
        %v5678 = vpop.f32.mrf.mxu0
        %v5679 = vadd.f32 0.0, %v5678
        %v5680 = vpop.f32.mrf.mxu0
        %v5681 = vadd.f32 0.0, %v5680
        %5682 = vmatmul.bf16.gmra.mxu0 %v4905
        %v5683 = vpop.f32.mrf.mxu0
        %v5684 = vadd.f32 0.0, %v5683
        %v5685 = vpop.f32.mrf.mxu0
        %v5686 = vadd.f32 0.0, %v5685
        %5687 = vmatmul.bf16.gmra.mxu0 %v4908
        %v5688 = vpop.f32.mrf.mxu0
        %v5689 = vadd.f32 0.0, %v5688
        %v5690 = vpop.f32.mrf.mxu0
        %v5691 = vadd.f32 0.0, %v5690
        %5692 = vmatmul.bf16.gmra.mxu0 %v4911
        %v5693 = vpop.f32.mrf.mxu0
        %v5694 = vadd.f32 0.0, %v5693
        %v5695 = vpop.f32.mrf.mxu0
        %v5696 = vadd.f32 0.0, %v5695
        %5697 = vmatmul.bf16.gmra.mxu0 %v4914
        %v5698 = vpop.f32.mrf.mxu0
        %v5699 = vadd.f32 0.0, %v5698
        %v5700 = vpop.f32.mrf.mxu0
        %v5701 = vadd.f32 0.0, %v5700
        %5702 = vmatmul.bf16.gmra.mxu0 %v4917
        %v5703 = vpop.f32.mrf.mxu0
        %v5704 = vadd.f32 0.0, %v5703
        %v5705 = vpop.f32.mrf.mxu0
        %v5706 = vadd.f32 0.0, %v5705
        %5707 = vmatmul.bf16.gmra.mxu0 %v4920
        %v5708 = vpop.f32.mrf.mxu0
        %v5709 = vadd.f32 0.0, %v5708
        %v5710 = vpop.f32.mrf.mxu0
        %v5711 = vadd.f32 0.0, %v5710
        %5712 = vmatmul.bf16.gmra.mxu0 %v4923
        %v5713 = vpop.f32.mrf.mxu0
        %v5714 = vadd.f32 0.0, %v5713
        %v5715 = vpop.f32.mrf.mxu0
        %v5716 = vadd.f32 0.0, %v5715
        %5717 = vmatmul.bf16.gmra.mxu0 %v4926
        %v5718 = vpop.f32.mrf.mxu0
        %v5719 = vadd.f32 0.0, %v5718
        %v5720 = vpop.f32.mrf.mxu0
        %v5721 = vadd.f32 0.0, %v5720
        %5722 = vmatmul.bf16.gmra.mxu0 %v4929
        %v5723 = vpop.f32.mrf.mxu0
        %v5724 = vadd.f32 0.0, %v5723
        %v5725 = vpop.f32.mrf.mxu0
        %v5726 = vadd.f32 0.0, %v5725
        %5727 = vmatmul.bf16.gmra.mxu0 %v4932
        %v5728 = vpop.f32.mrf.mxu0
        %v5729 = vadd.f32 0.0, %v5728
        %v5730 = vpop.f32.mrf.mxu0
        %v5731 = vadd.f32 0.0, %v5730
        %5732 = vmatmul.bf16.gmra.mxu0 %v4935
        %v5733 = vpop.f32.mrf.mxu0
        %v5734 = vadd.f32 0.0, %v5733
        %v5735 = vpop.f32.mrf.mxu0
        %v5736 = vadd.f32 0.0, %v5735
        %5737 = vmatmul.bf16.gmra.mxu0 %v4938
        %v5738 = vpop.f32.mrf.mxu0
        %v5739 = vadd.f32 0.0, %v5738
        %v5740 = vpop.f32.mrf.mxu0
        %v5741 = vadd.f32 0.0, %v5740
        %5742 = vmatmul.bf16.gmra.mxu0 %v4941
        %v5743 = vpop.f32.mrf.mxu0
        %v5744 = vadd.f32 0.0, %v5743
        %v5745 = vpop.f32.mrf.mxu0
        %v5746 = vadd.f32 0.0, %v5745
        %5747 = vmatmul.bf16.gmra.mxu0 %v4944
        %v5748 = vpop.f32.mrf.mxu0
        %v5749 = vadd.f32 0.0, %v5748
        %v5750 = vpop.f32.mrf.mxu0
        %v5751 = vadd.f32 0.0, %v5750
        %5752 = vmatmul.bf16.gmra.mxu0 %v5667
        %v5753 = vpop.f32.mrf.mxu0
        %v5754 = vadd.f32 0.0, %v5753
        %v5755 = vpop.f32.mrf.mxu0
        %v5756 = vadd.f32 0.0, %v5755
        %5757 = vdwg.mxu0
        %v5758 = vadd.f32 %v5600, %v5679
        %v5759 = vadd.f32 %v5601, %v5681
        %v5760 = vadd.f32 %v5602, %v5684
        %v5761 = vadd.f32 %v5603, %v5686
        %v5762 = vadd.f32 %v5604, %v5689
        %v5763 = vadd.f32 %v5605, %v5691
        %v5764 = vadd.f32 %v5606, %v5694
        %v5765 = vadd.f32 %v5607, %v5696
        %v5766 = vadd.f32 %v5608, %v5699
        %v5767 = vadd.f32 %v5609, %v5701
        %v5768 = vadd.f32 %v5610, %v5704
        %v5769 = vadd.f32 %v5611, %v5706
        %v5770 = vadd.f32 %v5612, %v5709
        %v5771 = vadd.f32 %v5613, %v5711
        %v5772 = vadd.f32 %v5614, %v5714
        %v5773 = vadd.f32 %v5615, %v5716
        %v5774 = vadd.f32 %v5616, %v5719
        %v5775 = vadd.f32 %v5617, %v5721
        %v5776 = vadd.f32 %v5618, %v5724
        %v5777 = vadd.f32 %v5619, %v5726
        %v5778 = vadd.f32 %v5620, %v5729
        %v5779 = vadd.f32 %v5621, %v5731
        %v5780 = vadd.f32 %v5622, %v5734
        %v5781 = vadd.f32 %v5623, %v5736
        %v5782 = vadd.f32 %v5624, %v5739
        %v5783 = vadd.f32 %v5625, %v5741
        %v5784 = vadd.f32 %v5626, %v5744
        %v5785 = vadd.f32 %v5627, %v5746
        %v5786 = vadd.f32 %v5628, %v5749
        %v5787 = vadd.f32 %v5629, %v5751
        %v5788 = vadd.f32 %v5630, %v5754
        %v5789 = vadd.f32 %v5631, %v5756
        %v5790 = vpack.c.bf16 %v4724, %v4723
        %v5791 = vpack.c.bf16 %v4726, %v4725
        %v5792 = vpack.c.bf16 %v4728, %v4727
        %v5793 = vpack.c.bf16 %v4730, %v4729
        %v5794 = vpack.c.bf16 %v4732, %v4731
        %v5795 = vpack.c.bf16 %v4734, %v4733
        %v5796 = vpack.c.bf16 %v4736, %v4735
        %v5797 = vpack.c.bf16 %v4738, %v4737
        %v5798 = vpack.c.bf16 %v4740, %v4739
        %v5799 = vpack.c.bf16 %v4742, %v4741
        %v5800 = vpack.c.bf16 %v4744, %v4743
        %v5801 = vpack.c.bf16 %v4746, %v4745
        %v5802 = vpack.c.bf16 %v4748, %v4747
        %v5803 = vpack.c.bf16 %v4750, %v4749
        %v5804 = vpack.c.bf16 %v4752, %v4751
        %v5805 = vpack.c.bf16 %v4754, %v4753
        %s5806 = scalar_lea.vmem %s9, 160
        %v5807 = vld [vmem:[%s5806] sm:$0xf]
        %v5808 = vld [vmem:[%s5806 + $0x4] sm:$0xf]
        %v5809 = vld [vmem:[%s5806 + $0x8] sm:$0xf]
        %v5810 = vld [vmem:[%s5806 + $0xc] sm:$0xf]
        %v5811 = vld [vmem:[%s5806 + $0x10] sm:$0xf]
        %v5812 = vld [vmem:[%s5806 + $0x14] sm:$0xf]
        %v5813 = vld [vmem:[%s5806 + $0x18] sm:$0xf]
        %v5814 = vld [vmem:[%s5806 + $0x1c] sm:$0xf]
        %v5823 = vunpack.c.l.b16 %v5807
        %v5824 = vunpack.c.l.b16 %v5808
        %v5825 = vunpack.c.l.b16 %v5809
        %v5826 = vunpack.c.l.b16 %v5810
        %v5827 = vunpack.c.l.b16 %v5811
        %v5828 = vunpack.c.l.b16 %v5812
        %v5829 = vunpack.c.l.b16 %v5813
        %v5830 = vunpack.c.l.b16 %v5814
        %v5831 = vpack.c.b16 %v5824, %v5823
        %v5832 = vpack.c.b16 %v5826, %v5825
        %v5833 = vpack.c.b16 %v5828, %v5827
        %v5834 = vpack.c.b16 %v5830, %v5829
        %v5840 = vsel %vm386, %v5790, 0
        %v5843 = vsel %vm386, %v5791, 0
        %v5846 = vsel %vm386, %v5792, 0
        %v5849 = vsel %vm386, %v5793, 0
        %v5852 = vsel %vm386, %v5794, 0
        %v5855 = vsel %vm386, %v5795, 0
        %v5858 = vsel %vm386, %v5796, 0
        %v5861 = vsel %vm386, %v5797, 0
        %v5864 = vsel %vm386, %v5798, 0
        %v5867 = vsel %vm386, %v5799, 0
        %v5870 = vsel %vm386, %v5800, 0
        %v5873 = vsel %vm386, %v5801, 0
        %v5876 = vsel %vm386, %v5802, 0
        %v5879 = vsel %vm386, %v5803, 0
        %v5882 = vsel %vm386, %v5804, 0
        %v5885 = vsel %vm386, %v5805, 0
        %5887 = vmatpush.bf16.msra.mxu0 0
        %5888 = vmatpush.bf16.msra.mxu0 0
        %5889 = vmatpush.bf16.msra.mxu0 0
        %5890 = vmatpush.bf16.msra.mxu0 0
        %5891 = vmatpush.bf16.msra.mxu0 %v5834
        %5892 = vmatpush.bf16.msra.mxu0 %v5833
        %5893 = vmatpush.bf16.msra.mxu0 %v5832
        %5894 = vmatpush.bf16.msra.mxu0 %v5831
        %5895 = vmatmul.bf16.gmra.mxu0 %v5840
        %v5896 = vpop.f32.mrf.mxu0
        %v5897 = vadd.f32 0.0, %v5896
        %v5898 = vpop.f32.mrf.mxu0
        %v5899 = vadd.f32 0.0, %v5898
        %5900 = vmatmul.bf16.gmra.mxu0 %v5843
        %v5901 = vpop.f32.mrf.mxu0
        %v5902 = vadd.f32 0.0, %v5901
        %v5903 = vpop.f32.mrf.mxu0
        %v5904 = vadd.f32 0.0, %v5903
        %5905 = vmatmul.bf16.gmra.mxu0 %v5846
        %v5906 = vpop.f32.mrf.mxu0
        %v5907 = vadd.f32 0.0, %v5906
        %v5908 = vpop.f32.mrf.mxu0
        %v5909 = vadd.f32 0.0, %v5908
        %5910 = vmatmul.bf16.gmra.mxu0 %v5849
        %v5911 = vpop.f32.mrf.mxu0
        %v5912 = vadd.f32 0.0, %v5911
        %v5913 = vpop.f32.mrf.mxu0
        %v5914 = vadd.f32 0.0, %v5913
        %5915 = vmatmul.bf16.gmra.mxu0 %v5852
        %v5916 = vpop.f32.mrf.mxu0
        %v5917 = vadd.f32 0.0, %v5916
        %v5918 = vpop.f32.mrf.mxu0
        %v5919 = vadd.f32 0.0, %v5918
        %5920 = vmatmul.bf16.gmra.mxu0 %v5855
        %v5921 = vpop.f32.mrf.mxu0
        %v5922 = vadd.f32 0.0, %v5921
        %v5923 = vpop.f32.mrf.mxu0
        %v5924 = vadd.f32 0.0, %v5923
        %5925 = vmatmul.bf16.gmra.mxu0 %v5858
        %v5926 = vpop.f32.mrf.mxu0
        %v5927 = vadd.f32 0.0, %v5926
        %v5928 = vpop.f32.mrf.mxu0
        %v5929 = vadd.f32 0.0, %v5928
        %5930 = vmatmul.bf16.gmra.mxu0 %v5861
        %v5931 = vpop.f32.mrf.mxu0
        %v5932 = vadd.f32 0.0, %v5931
        %v5933 = vpop.f32.mrf.mxu0
        %v5934 = vadd.f32 0.0, %v5933
        %5935 = vmatmul.bf16.gmra.mxu0 %v5864
        %v5936 = vpop.f32.mrf.mxu0
        %v5937 = vadd.f32 0.0, %v5936
        %v5938 = vpop.f32.mrf.mxu0
        %v5939 = vadd.f32 0.0, %v5938
        %5940 = vmatmul.bf16.gmra.mxu0 %v5867
        %v5941 = vpop.f32.mrf.mxu0
        %v5942 = vadd.f32 0.0, %v5941
        %v5943 = vpop.f32.mrf.mxu0
        %v5944 = vadd.f32 0.0, %v5943
        %5945 = vmatmul.bf16.gmra.mxu0 %v5870
        %v5946 = vpop.f32.mrf.mxu0
        %v5947 = vadd.f32 0.0, %v5946
        %v5948 = vpop.f32.mrf.mxu0
        %v5949 = vadd.f32 0.0, %v5948
        %5950 = vmatmul.bf16.gmra.mxu0 %v5873
        %v5951 = vpop.f32.mrf.mxu0
        %v5952 = vadd.f32 0.0, %v5951
        %v5953 = vpop.f32.mrf.mxu0
        %v5954 = vadd.f32 0.0, %v5953
        %5955 = vmatmul.bf16.gmra.mxu0 %v5876
        %v5956 = vpop.f32.mrf.mxu0
        %v5957 = vadd.f32 0.0, %v5956
        %v5958 = vpop.f32.mrf.mxu0
        %v5959 = vadd.f32 0.0, %v5958
        %5960 = vmatmul.bf16.gmra.mxu0 %v5879
        %v5961 = vpop.f32.mrf.mxu0
        %v5962 = vadd.f32 0.0, %v5961
        %v5963 = vpop.f32.mrf.mxu0
        %v5964 = vadd.f32 0.0, %v5963
        %5965 = vmatmul.bf16.gmra.mxu0 %v5882
        %v5966 = vpop.f32.mrf.mxu0
        %v5967 = vadd.f32 0.0, %v5966
        %v5968 = vpop.f32.mrf.mxu0
        %v5969 = vadd.f32 0.0, %v5968
        %5970 = vmatmul.bf16.gmra.mxu0 %v5885
        %v5971 = vpop.f32.mrf.mxu0
        %v5972 = vadd.f32 0.0, %v5971
        %v5973 = vpop.f32.mrf.mxu0
        %v5974 = vadd.f32 0.0, %v5973
        %5975 = vdwg.mxu0
        %v5976 = vadd.f32 %v5758, %v5897
        %v5977 = vadd.f32 %v5759, %v5899
        %v5978 = vadd.f32 %v5760, %v5902
        %v5979 = vadd.f32 %v5761, %v5904
        %v5980 = vadd.f32 %v5762, %v5907
        %v5981 = vadd.f32 %v5763, %v5909
        %v5982 = vadd.f32 %v5764, %v5912
        %v5983 = vadd.f32 %v5765, %v5914
        %v5984 = vadd.f32 %v5766, %v5917
        %v5985 = vadd.f32 %v5767, %v5919
        %v5986 = vadd.f32 %v5768, %v5922
        %v5987 = vadd.f32 %v5769, %v5924
        %v5988 = vadd.f32 %v5770, %v5927
        %v5989 = vadd.f32 %v5771, %v5929
        %v5990 = vadd.f32 %v5772, %v5932
        %v5991 = vadd.f32 %v5773, %v5934
        %v5992 = vadd.f32 %v5774, %v5937
        %v5993 = vadd.f32 %v5775, %v5939
        %v5994 = vadd.f32 %v5776, %v5942
        %v5995 = vadd.f32 %v5777, %v5944
        %v5996 = vadd.f32 %v5778, %v5947
        %v5997 = vadd.f32 %v5779, %v5949
        %v5998 = vadd.f32 %v5780, %v5952
        %v5999 = vadd.f32 %v5781, %v5954
        %v6000 = vadd.f32 %v5782, %v5957
        %v6001 = vadd.f32 %v5783, %v5959
        %v6002 = vadd.f32 %v5784, %v5962
        %v6003 = vadd.f32 %v5785, %v5964
        %v6004 = vadd.f32 %v5786, %v5967
        %v6005 = vadd.f32 %v5787, %v5969
        %v6006 = vadd.f32 %v5788, %v5972
        %v6007 = vadd.f32 %v5789, %v5974
        %v6008 = vpack.c.bf16 %v4758, %v4757
        %v6009 = vpack.c.bf16 %v4760, %v4759
        %v6010 = vpack.c.bf16 %v4762, %v4761
        %v6011 = vpack.c.bf16 %v4764, %v4763
        %v6012 = vpack.c.bf16 %v4766, %v4765
        %v6013 = vpack.c.bf16 %v4768, %v4767
        %v6014 = vpack.c.bf16 %v4770, %v4769
        %v6015 = vpack.c.bf16 %v4772, %v4771
        %v6016 = vpack.c.bf16 %v4774, %v4773
        %v6017 = vpack.c.bf16 %v4776, %v4775
        %v6018 = vpack.c.bf16 %v4778, %v4777
        %v6019 = vpack.c.bf16 %v4780, %v4779
        %v6020 = vpack.c.bf16 %v4782, %v4781
        %v6021 = vpack.c.bf16 %v4784, %v4783
        %v6022 = vpack.c.bf16 %v4786, %v4785
        %v6023 = vpack.c.bf16 %v4788, %v4787
        %s6024 = scalar_lea.vmem %s9, 192
        %v6025 = vld [vmem:[%s6024] sm:$0xf]
        %v6026 = vld [vmem:[%s6024 + $0x4] sm:$0xf]
        %v6027 = vld [vmem:[%s6024 + $0x8] sm:$0xf]
        %v6028 = vld [vmem:[%s6024 + $0xc] sm:$0xf]
        %v6029 = vld [vmem:[%s6024 + $0x10] sm:$0xf]
        %v6030 = vld [vmem:[%s6024 + $0x14] sm:$0xf]
        %v6031 = vld [vmem:[%s6024 + $0x18] sm:$0xf]
        %v6032 = vld [vmem:[%s6024 + $0x1c] sm:$0xf]
        %v6041 = vunpack.c.l.b16 %v6025
        %v6042 = vunpack.c.l.b16 %v6026
        %v6043 = vunpack.c.l.b16 %v6027
        %v6044 = vunpack.c.l.b16 %v6028
        %v6045 = vunpack.c.l.b16 %v6029
        %v6046 = vunpack.c.l.b16 %v6030
        %v6047 = vunpack.c.l.b16 %v6031
        %v6048 = vunpack.c.l.b16 %v6032
        %v6049 = vpack.c.b16 %v6042, %v6041
        %v6050 = vpack.c.b16 %v6044, %v6043
        %v6051 = vpack.c.b16 %v6046, %v6045
        %v6052 = vpack.c.b16 %v6048, %v6047
        %v6058 = vsel %vm386, %v6008, 0
        %v6061 = vsel %vm386, %v6009, 0
        %v6064 = vsel %vm386, %v6010, 0
        %v6067 = vsel %vm386, %v6011, 0
        %v6070 = vsel %vm386, %v6012, 0
        %v6073 = vsel %vm386, %v6013, 0
        %v6076 = vsel %vm386, %v6014, 0
        %v6079 = vsel %vm386, %v6015, 0
        %v6082 = vsel %vm386, %v6016, 0
        %v6085 = vsel %vm386, %v6017, 0
        %v6088 = vsel %vm386, %v6018, 0
        %v6091 = vsel %vm386, %v6019, 0
        %v6094 = vsel %vm386, %v6020, 0
        %v6097 = vsel %vm386, %v6021, 0
        %v6100 = vsel %vm386, %v6022, 0
        %v6103 = vsel %vm386, %v6023, 0
        %6105 = vmatpush.bf16.msra.mxu0 0
        %6106 = vmatpush.bf16.msra.mxu0 0
        %6107 = vmatpush.bf16.msra.mxu0 0
        %6108 = vmatpush.bf16.msra.mxu0 0
        %6109 = vmatpush.bf16.msra.mxu0 %v6052
        %6110 = vmatpush.bf16.msra.mxu0 %v6051
        %6111 = vmatpush.bf16.msra.mxu0 %v6050
        %6112 = vmatpush.bf16.msra.mxu0 %v6049
        %6113 = vmatmul.bf16.gmra.mxu0 %v6058
        %v6114 = vpop.f32.mrf.mxu0
        %v6115 = vadd.f32 0.0, %v6114
        %v6116 = vpop.f32.mrf.mxu0
        %v6117 = vadd.f32 0.0, %v6116
        %6118 = vmatmul.bf16.gmra.mxu0 %v6061
        %v6119 = vpop.f32.mrf.mxu0
        %v6120 = vadd.f32 0.0, %v6119
        %v6121 = vpop.f32.mrf.mxu0
        %v6122 = vadd.f32 0.0, %v6121
        %6123 = vmatmul.bf16.gmra.mxu0 %v6064
        %v6124 = vpop.f32.mrf.mxu0
        %v6125 = vadd.f32 0.0, %v6124
        %v6126 = vpop.f32.mrf.mxu0
        %v6127 = vadd.f32 0.0, %v6126
        %6128 = vmatmul.bf16.gmra.mxu0 %v6067
        %v6129 = vpop.f32.mrf.mxu0
        %v6130 = vadd.f32 0.0, %v6129
        %v6131 = vpop.f32.mrf.mxu0
        %v6132 = vadd.f32 0.0, %v6131
        %6133 = vmatmul.bf16.gmra.mxu0 %v6070
        %v6134 = vpop.f32.mrf.mxu0
        %v6135 = vadd.f32 0.0, %v6134
        %v6136 = vpop.f32.mrf.mxu0
        %v6137 = vadd.f32 0.0, %v6136
        %6138 = vmatmul.bf16.gmra.mxu0 %v6073
        %v6139 = vpop.f32.mrf.mxu0
        %v6140 = vadd.f32 0.0, %v6139
        %v6141 = vpop.f32.mrf.mxu0
        %v6142 = vadd.f32 0.0, %v6141
        %6143 = vmatmul.bf16.gmra.mxu0 %v6076
        %v6144 = vpop.f32.mrf.mxu0
        %v6145 = vadd.f32 0.0, %v6144
        %v6146 = vpop.f32.mrf.mxu0
        %v6147 = vadd.f32 0.0, %v6146
        %6148 = vmatmul.bf16.gmra.mxu0 %v6079
        %v6149 = vpop.f32.mrf.mxu0
        %v6150 = vadd.f32 0.0, %v6149
        %v6151 = vpop.f32.mrf.mxu0
        %v6152 = vadd.f32 0.0, %v6151
        %6153 = vmatmul.bf16.gmra.mxu0 %v6082
        %v6154 = vpop.f32.mrf.mxu0
        %v6155 = vadd.f32 0.0, %v6154
        %v6156 = vpop.f32.mrf.mxu0
        %v6157 = vadd.f32 0.0, %v6156
        %6158 = vmatmul.bf16.gmra.mxu0 %v6085
        %v6159 = vpop.f32.mrf.mxu0
        %v6160 = vadd.f32 0.0, %v6159
        %v6161 = vpop.f32.mrf.mxu0
        %v6162 = vadd.f32 0.0, %v6161
        %6163 = vmatmul.bf16.gmra.mxu0 %v6088
        %v6164 = vpop.f32.mrf.mxu0
        %v6165 = vadd.f32 0.0, %v6164
        %v6166 = vpop.f32.mrf.mxu0
        %v6167 = vadd.f32 0.0, %v6166
        %6168 = vmatmul.bf16.gmra.mxu0 %v6091
        %v6169 = vpop.f32.mrf.mxu0
        %v6170 = vadd.f32 0.0, %v6169
        %v6171 = vpop.f32.mrf.mxu0
        %v6172 = vadd.f32 0.0, %v6171
        %6173 = vmatmul.bf16.gmra.mxu0 %v6094
        %v6174 = vpop.f32.mrf.mxu0
        %v6175 = vadd.f32 0.0, %v6174
        %v6176 = vpop.f32.mrf.mxu0
        %v6177 = vadd.f32 0.0, %v6176
        %6178 = vmatmul.bf16.gmra.mxu0 %v6097
        %v6179 = vpop.f32.mrf.mxu0
        %v6180 = vadd.f32 0.0, %v6179
        %v6181 = vpop.f32.mrf.mxu0
        %v6182 = vadd.f32 0.0, %v6181
        %6183 = vmatmul.bf16.gmra.mxu0 %v6100
        %v6184 = vpop.f32.mrf.mxu0
        %v6185 = vadd.f32 0.0, %v6184
        %v6186 = vpop.f32.mrf.mxu0
        %v6187 = vadd.f32 0.0, %v6186
        %6188 = vmatmul.bf16.gmra.mxu0 %v6103
        %v6189 = vpop.f32.mrf.mxu0
        %v6190 = vadd.f32 0.0, %v6189
        %v6191 = vpop.f32.mrf.mxu0
        %v6192 = vadd.f32 0.0, %v6191
        %6193 = vdwg.mxu0
        %v6194 = vadd.f32 %v5976, %v6115
        %v6195 = vadd.f32 %v5977, %v6117
        %v6196 = vadd.f32 %v5978, %v6120
        %v6197 = vadd.f32 %v5979, %v6122
        %v6198 = vadd.f32 %v5980, %v6125
        %v6199 = vadd.f32 %v5981, %v6127
        %v6200 = vadd.f32 %v5982, %v6130
        %v6201 = vadd.f32 %v5983, %v6132
        %v6202 = vadd.f32 %v5984, %v6135
        %v6203 = vadd.f32 %v5985, %v6137
        %v6204 = vadd.f32 %v5986, %v6140
        %v6205 = vadd.f32 %v5987, %v6142
        %v6206 = vadd.f32 %v5988, %v6145
        %v6207 = vadd.f32 %v5989, %v6147
        %v6208 = vadd.f32 %v5990, %v6150
        %v6209 = vadd.f32 %v5991, %v6152
        %v6210 = vadd.f32 %v5992, %v6155
        %v6211 = vadd.f32 %v5993, %v6157
        %v6212 = vadd.f32 %v5994, %v6160
        %v6213 = vadd.f32 %v5995, %v6162
        %v6214 = vadd.f32 %v5996, %v6165
        %v6215 = vadd.f32 %v5997, %v6167
        %v6216 = vadd.f32 %v5998, %v6170
        %v6217 = vadd.f32 %v5999, %v6172
        %v6218 = vadd.f32 %v6000, %v6175
        %v6219 = vadd.f32 %v6001, %v6177
        %v6220 = vadd.f32 %v6002, %v6180
        %v6221 = vadd.f32 %v6003, %v6182
        %v6222 = vadd.f32 %v6004, %v6185
        %v6223 = vadd.f32 %v6005, %v6187
        %v6224 = vadd.f32 %v6006, %v6190
        %v6225 = vadd.f32 %v6007, %v6192
        %v6226 = vpack.c.bf16 %v4790, %v4789
        %s6227 = scalar_lea.vmem %s9, 224
        %v6228 = vld [vmem:[%s6227] sm:$0xf]
        %v6229 = vld [vmem:[%s6227 + $0x4] sm:$0xf]
        %v6230 = vld [vmem:[%s6227 + $0x8] sm:$0xf]
        %v6231 = vld [vmem:[%s6227 + $0xc] sm:$0xf]
        %v6232 = vld [vmem:[%s6227 + $0x10] sm:$0xf]
        %v6233 = vld [vmem:[%s6227 + $0x14] sm:$0xf]
        %v6234 = vld [vmem:[%s6227 + $0x18] sm:$0xf]
        %v6235 = vld [vmem:[%s6227 + $0x1c] sm:$0xf]
        %v6244 = vunpack.c.l.b16 %v6228
        %v6245 = vunpack.c.l.b16 %v6229
        %v6246 = vunpack.c.l.b16 %v6230
        %v6247 = vunpack.c.l.b16 %v6231
        %v6248 = vunpack.c.l.b16 %v6232
        %v6249 = vunpack.c.l.b16 %v6233
        %v6250 = vunpack.c.l.b16 %v6234
        %v6251 = vunpack.c.l.b16 %v6235
        %v6252 = vpack.c.b16 %v6245, %v6244
        %v6253 = vpack.c.b16 %v6247, %v6246
        %v6254 = vpack.c.b16 %v6249, %v6248
        %v6255 = vpack.c.b16 %v6251, %v6250
        %v6261 = vsel %vm386, %v6226, 0
        %6263 = vmatpush.bf16.msra.mxu0 0
        %6264 = vmatpush.bf16.msra.mxu0 0
        %6265 = vmatpush.bf16.msra.mxu0 0
        %6266 = vmatpush.bf16.msra.mxu0 0
        %6267 = vmatpush.bf16.msra.mxu0 %v6255
        %6268 = vmatpush.bf16.msra.mxu0 %v6254
        %6269 = vmatpush.bf16.msra.mxu0 %v6253
        %6270 = vmatpush.bf16.msra.mxu0 %v6252
        %6271 = vmatmul.bf16.gmra.mxu0 %v4905
        %v6272 = vpop.f32.mrf.mxu0
        %v6273 = vadd.f32 0.0, %v6272
        %v6274 = vpop.f32.mrf.mxu0
        %v6275 = vadd.f32 0.0, %v6274
        %6276 = vmatmul.bf16.gmra.mxu0 %v4908
        %v6277 = vpop.f32.mrf.mxu0
        %v6278 = vadd.f32 0.0, %v6277
        %v6279 = vpop.f32.mrf.mxu0
        %v6280 = vadd.f32 0.0, %v6279
        %6281 = vmatmul.bf16.gmra.mxu0 %v4911
        %v6282 = vpop.f32.mrf.mxu0
        %v6283 = vadd.f32 0.0, %v6282
        %v6284 = vpop.f32.mrf.mxu0
        %v6285 = vadd.f32 0.0, %v6284
        %6286 = vmatmul.bf16.gmra.mxu0 %v4914
        %v6287 = vpop.f32.mrf.mxu0
        %v6288 = vadd.f32 0.0, %v6287
        %v6289 = vpop.f32.mrf.mxu0
        %v6290 = vadd.f32 0.0, %v6289
        %6291 = vmatmul.bf16.gmra.mxu0 %v4917
        %v6292 = vpop.f32.mrf.mxu0
        %v6293 = vadd.f32 0.0, %v6292
        %v6294 = vpop.f32.mrf.mxu0
        %v6295 = vadd.f32 0.0, %v6294
        %6296 = vmatmul.bf16.gmra.mxu0 %v4920
        %v6297 = vpop.f32.mrf.mxu0
        %v6298 = vadd.f32 0.0, %v6297
        %v6299 = vpop.f32.mrf.mxu0
        %v6300 = vadd.f32 0.0, %v6299
        %6301 = vmatmul.bf16.gmra.mxu0 %v4923
        %v6302 = vpop.f32.mrf.mxu0
        %v6303 = vadd.f32 0.0, %v6302
        %v6304 = vpop.f32.mrf.mxu0
        %v6305 = vadd.f32 0.0, %v6304
        %6306 = vmatmul.bf16.gmra.mxu0 %v4926
        %v6307 = vpop.f32.mrf.mxu0
        %v6308 = vadd.f32 0.0, %v6307
        %v6309 = vpop.f32.mrf.mxu0
        %v6310 = vadd.f32 0.0, %v6309
        %6311 = vmatmul.bf16.gmra.mxu0 %v4929
        %v6312 = vpop.f32.mrf.mxu0
        %v6313 = vadd.f32 0.0, %v6312
        %v6314 = vpop.f32.mrf.mxu0
        %v6315 = vadd.f32 0.0, %v6314
        %6316 = vmatmul.bf16.gmra.mxu0 %v4932
        %v6317 = vpop.f32.mrf.mxu0
        %v6318 = vadd.f32 0.0, %v6317
        %v6319 = vpop.f32.mrf.mxu0
        %v6320 = vadd.f32 0.0, %v6319
        %6321 = vmatmul.bf16.gmra.mxu0 %v4935
        %v6322 = vpop.f32.mrf.mxu0
        %v6323 = vadd.f32 0.0, %v6322
        %v6324 = vpop.f32.mrf.mxu0
        %v6325 = vadd.f32 0.0, %v6324
        %6326 = vmatmul.bf16.gmra.mxu0 %v4938
        %v6327 = vpop.f32.mrf.mxu0
        %v6328 = vadd.f32 0.0, %v6327
        %v6329 = vpop.f32.mrf.mxu0
        %v6330 = vadd.f32 0.0, %v6329
        %6331 = vmatmul.bf16.gmra.mxu0 %v4941
        %v6332 = vpop.f32.mrf.mxu0
        %v6333 = vadd.f32 0.0, %v6332
        %v6334 = vpop.f32.mrf.mxu0
        %v6335 = vadd.f32 0.0, %v6334
        %6336 = vmatmul.bf16.gmra.mxu0 %v4944
        %v6337 = vpop.f32.mrf.mxu0
        %v6338 = vadd.f32 0.0, %v6337
        %v6339 = vpop.f32.mrf.mxu0
        %v6340 = vadd.f32 0.0, %v6339
        %6341 = vmatmul.bf16.gmra.mxu0 %v5667
        %v6342 = vpop.f32.mrf.mxu0
        %v6343 = vadd.f32 0.0, %v6342
        %v6344 = vpop.f32.mrf.mxu0
        %v6345 = vadd.f32 0.0, %v6344
        %6346 = vmatmul.bf16.gmra.mxu0 %v6261
        %v6347 = vpop.f32.mrf.mxu0
        %v6348 = vadd.f32 0.0, %v6347
        %v6349 = vpop.f32.mrf.mxu0
        %v6350 = vadd.f32 0.0, %v6349
        %6351 = vdwg.mxu0
        %v6352 = vadd.f32 %v6194, %v6273
        %v6353 = vadd.f32 %v6195, %v6275
        %v6354 = vadd.f32 %v6196, %v6278
        %v6355 = vadd.f32 %v6197, %v6280
        %v6356 = vadd.f32 %v6198, %v6283
        %v6357 = vadd.f32 %v6199, %v6285
        %v6358 = vadd.f32 %v6200, %v6288
        %v6359 = vadd.f32 %v6201, %v6290
        %v6360 = vadd.f32 %v6202, %v6293
        %v6361 = vadd.f32 %v6203, %v6295
        %v6362 = vadd.f32 %v6204, %v6298
        %v6363 = vadd.f32 %v6205, %v6300
        %v6364 = vadd.f32 %v6206, %v6303
        %v6365 = vadd.f32 %v6207, %v6305
        %v6366 = vadd.f32 %v6208, %v6308
        %v6367 = vadd.f32 %v6209, %v6310
        %v6368 = vadd.f32 %v6210, %v6313
        %v6369 = vadd.f32 %v6211, %v6315
        %v6370 = vadd.f32 %v6212, %v6318
        %v6371 = vadd.f32 %v6213, %v6320
        %v6372 = vadd.f32 %v6214, %v6323
        %v6373 = vadd.f32 %v6215, %v6325
        %v6374 = vadd.f32 %v6216, %v6328
        %v6375 = vadd.f32 %v6217, %v6330
        %v6376 = vadd.f32 %v6218, %v6333
        %v6377 = vadd.f32 %v6219, %v6335
        %v6378 = vadd.f32 %v6220, %v6338
        %v6379 = vadd.f32 %v6221, %v6340
        %v6380 = vadd.f32 %v6222, %v6343
        %v6381 = vadd.f32 %v6223, %v6345
        %v6382 = vadd.f32 %v6224, %v6348
        %v6383 = vadd.f32 %v6225, %v6350
        %v6384 = vpack.c.bf16 %v4794, %v4793
        %v6385 = vpack.c.bf16 %v4796, %v4795
        %v6386 = vpack.c.bf16 %v4798, %v4797
        %v6387 = vpack.c.bf16 %v4800, %v4799
        %v6388 = vpack.c.bf16 %v4802, %v4801
        %v6389 = vpack.c.bf16 %v4804, %v4803
        %v6390 = vpack.c.bf16 %v4806, %v4805
        %v6391 = vpack.c.bf16 %v4808, %v4807
        %v6392 = vpack.c.bf16 %v4810, %v4809
        %v6393 = vpack.c.bf16 %v4812, %v4811
        %v6394 = vpack.c.bf16 %v4814, %v4813
        %v6395 = vpack.c.bf16 %v4816, %v4815
        %v6396 = vpack.c.bf16 %v4818, %v4817
        %v6397 = vpack.c.bf16 %v4820, %v4819
        %v6398 = vpack.c.bf16 %v4822, %v4821
        %v6399 = vpack.c.bf16 %v4824, %v4823
        %s6400 = scalar_lea.vmem %s9, 256
        %v6401 = vld [vmem:[%s6400] sm:$0xf]
        %v6402 = vld [vmem:[%s6400 + $0x4] sm:$0xf]
        %v6403 = vld [vmem:[%s6400 + $0x8] sm:$0xf]
        %v6404 = vld [vmem:[%s6400 + $0xc] sm:$0xf]
        %v6405 = vld [vmem:[%s6400 + $0x10] sm:$0xf]
        %v6406 = vld [vmem:[%s6400 + $0x14] sm:$0xf]
        %v6407 = vld [vmem:[%s6400 + $0x18] sm:$0xf]
        %v6408 = vld [vmem:[%s6400 + $0x1c] sm:$0xf]
        %v6417 = vunpack.c.l.b16 %v6401
        %v6418 = vunpack.c.l.b16 %v6402
        %v6419 = vunpack.c.l.b16 %v6403
        %v6420 = vunpack.c.l.b16 %v6404
        %v6421 = vunpack.c.l.b16 %v6405
        %v6422 = vunpack.c.l.b16 %v6406
        %v6423 = vunpack.c.l.b16 %v6407
        %v6424 = vunpack.c.l.b16 %v6408
        %v6425 = vpack.c.b16 %v6418, %v6417
        %v6426 = vpack.c.b16 %v6420, %v6419
        %v6427 = vpack.c.b16 %v6422, %v6421
        %v6428 = vpack.c.b16 %v6424, %v6423
        %v6434 = vsel %vm386, %v6384, 0
        %v6437 = vsel %vm386, %v6385, 0
        %v6440 = vsel %vm386, %v6386, 0
        %v6443 = vsel %vm386, %v6387, 0
        %v6446 = vsel %vm386, %v6388, 0
        %v6449 = vsel %vm386, %v6389, 0
        %v6452 = vsel %vm386, %v6390, 0
        %v6455 = vsel %vm386, %v6391, 0
        %v6458 = vsel %vm386, %v6392, 0
        %v6461 = vsel %vm386, %v6393, 0
        %v6464 = vsel %vm386, %v6394, 0
        %v6467 = vsel %vm386, %v6395, 0
        %v6470 = vsel %vm386, %v6396, 0
        %v6473 = vsel %vm386, %v6397, 0
        %v6476 = vsel %vm386, %v6398, 0
        %v6479 = vsel %vm386, %v6399, 0
        %6481 = vmatpush.bf16.msra.mxu0 0
        %6482 = vmatpush.bf16.msra.mxu0 0
        %6483 = vmatpush.bf16.msra.mxu0 0
        %6484 = vmatpush.bf16.msra.mxu0 0
        %6485 = vmatpush.bf16.msra.mxu0 %v6428
        %6486 = vmatpush.bf16.msra.mxu0 %v6427
        %6487 = vmatpush.bf16.msra.mxu0 %v6426
        %6488 = vmatpush.bf16.msra.mxu0 %v6425
        %6489 = vmatmul.bf16.gmra.mxu0 %v6434
        %v6490 = vpop.f32.mrf.mxu0
        %v6491 = vadd.f32 0.0, %v6490
        %v6492 = vpop.f32.mrf.mxu0
        %v6493 = vadd.f32 0.0, %v6492
        %6494 = vmatmul.bf16.gmra.mxu0 %v6437
        %v6495 = vpop.f32.mrf.mxu0
        %v6496 = vadd.f32 0.0, %v6495
        %v6497 = vpop.f32.mrf.mxu0
        %v6498 = vadd.f32 0.0, %v6497
        %6499 = vmatmul.bf16.gmra.mxu0 %v6440
        %v6500 = vpop.f32.mrf.mxu0
        %v6501 = vadd.f32 0.0, %v6500
        %v6502 = vpop.f32.mrf.mxu0
        %v6503 = vadd.f32 0.0, %v6502
        %6504 = vmatmul.bf16.gmra.mxu0 %v6443
        %v6505 = vpop.f32.mrf.mxu0
        %v6506 = vadd.f32 0.0, %v6505
        %v6507 = vpop.f32.mrf.mxu0
        %v6508 = vadd.f32 0.0, %v6507
        %6509 = vmatmul.bf16.gmra.mxu0 %v6446
        %v6510 = vpop.f32.mrf.mxu0
        %v6511 = vadd.f32 0.0, %v6510
        %v6512 = vpop.f32.mrf.mxu0
        %v6513 = vadd.f32 0.0, %v6512
        %6514 = vmatmul.bf16.gmra.mxu0 %v6449
        %v6515 = vpop.f32.mrf.mxu0
        %v6516 = vadd.f32 0.0, %v6515
        %v6517 = vpop.f32.mrf.mxu0
        %v6518 = vadd.f32 0.0, %v6517
        %6519 = vmatmul.bf16.gmra.mxu0 %v6452
        %v6520 = vpop.f32.mrf.mxu0
        %v6521 = vadd.f32 0.0, %v6520
        %v6522 = vpop.f32.mrf.mxu0
        %v6523 = vadd.f32 0.0, %v6522
        %6524 = vmatmul.bf16.gmra.mxu0 %v6455
        %v6525 = vpop.f32.mrf.mxu0
        %v6526 = vadd.f32 0.0, %v6525
        %v6527 = vpop.f32.mrf.mxu0
        %v6528 = vadd.f32 0.0, %v6527
        %6529 = vmatmul.bf16.gmra.mxu0 %v6458
        %v6530 = vpop.f32.mrf.mxu0
        %v6531 = vadd.f32 0.0, %v6530
        %v6532 = vpop.f32.mrf.mxu0
        %v6533 = vadd.f32 0.0, %v6532
        %6534 = vmatmul.bf16.gmra.mxu0 %v6461
        %v6535 = vpop.f32.mrf.mxu0
        %v6536 = vadd.f32 0.0, %v6535
        %v6537 = vpop.f32.mrf.mxu0
        %v6538 = vadd.f32 0.0, %v6537
        %6539 = vmatmul.bf16.gmra.mxu0 %v6464
        %v6540 = vpop.f32.mrf.mxu0
        %v6541 = vadd.f32 0.0, %v6540
        %v6542 = vpop.f32.mrf.mxu0
        %v6543 = vadd.f32 0.0, %v6542
        %6544 = vmatmul.bf16.gmra.mxu0 %v6467
        %v6545 = vpop.f32.mrf.mxu0
        %v6546 = vadd.f32 0.0, %v6545
        %v6547 = vpop.f32.mrf.mxu0
        %v6548 = vadd.f32 0.0, %v6547
        %6549 = vmatmul.bf16.gmra.mxu0 %v6470
        %v6550 = vpop.f32.mrf.mxu0
        %v6551 = vadd.f32 0.0, %v6550
        %v6552 = vpop.f32.mrf.mxu0
        %v6553 = vadd.f32 0.0, %v6552
        %6554 = vmatmul.bf16.gmra.mxu0 %v6473
        %v6555 = vpop.f32.mrf.mxu0
        %v6556 = vadd.f32 0.0, %v6555
        %v6557 = vpop.f32.mrf.mxu0
        %v6558 = vadd.f32 0.0, %v6557
        %6559 = vmatmul.bf16.gmra.mxu0 %v6476
        %v6560 = vpop.f32.mrf.mxu0
        %v6561 = vadd.f32 0.0, %v6560
        %v6562 = vpop.f32.mrf.mxu0
        %v6563 = vadd.f32 0.0, %v6562
        %6564 = vmatmul.bf16.gmra.mxu0 %v6479
        %v6565 = vpop.f32.mrf.mxu0
        %v6566 = vadd.f32 0.0, %v6565
        %v6567 = vpop.f32.mrf.mxu0
        %v6568 = vadd.f32 0.0, %v6567
        %6569 = vdwg.mxu0
        %v6570 = vadd.f32 %v6352, %v6491
        %v6571 = vadd.f32 %v6353, %v6493
        %v6572 = vadd.f32 %v6354, %v6496
        %v6573 = vadd.f32 %v6355, %v6498
        %v6574 = vadd.f32 %v6356, %v6501
        %v6575 = vadd.f32 %v6357, %v6503
        %v6576 = vadd.f32 %v6358, %v6506
        %v6577 = vadd.f32 %v6359, %v6508
        %v6578 = vadd.f32 %v6360, %v6511
        %v6579 = vadd.f32 %v6361, %v6513
        %v6580 = vadd.f32 %v6362, %v6516
        %v6581 = vadd.f32 %v6363, %v6518
        %v6582 = vadd.f32 %v6364, %v6521
        %v6583 = vadd.f32 %v6365, %v6523
        %v6584 = vadd.f32 %v6366, %v6526
        %v6585 = vadd.f32 %v6367, %v6528
        %v6586 = vadd.f32 %v6368, %v6531
        %v6587 = vadd.f32 %v6369, %v6533
        %v6588 = vadd.f32 %v6370, %v6536
        %v6589 = vadd.f32 %v6371, %v6538
        %v6590 = vadd.f32 %v6372, %v6541
        %v6591 = vadd.f32 %v6373, %v6543
        %v6592 = vadd.f32 %v6374, %v6546
        %v6593 = vadd.f32 %v6375, %v6548
        %v6594 = vadd.f32 %v6376, %v6551
        %v6595 = vadd.f32 %v6377, %v6553
        %v6596 = vadd.f32 %v6378, %v6556
        %v6597 = vadd.f32 %v6379, %v6558
        %v6598 = vadd.f32 %v6380, %v6561
        %v6599 = vadd.f32 %v6381, %v6563
        %v6600 = vadd.f32 %v6382, %v6566
        %v6601 = vadd.f32 %v6383, %v6568
        %v6602 = vld [vmem:[%s10] sm:$0x1]
        %v6604 = vperm.slane %v6602, 0
        %v6606 = vadd.f32 %v6570, %v6604
        %v6607 = vadd.f32 %v6571, %v6604
        %v6608 = vadd.f32 %v6572, %v6604
        %v6609 = vadd.f32 %v6573, %v6604
        %v6610 = vadd.f32 %v6574, %v6604
        %v6611 = vadd.f32 %v6575, %v6604
        %v6612 = vadd.f32 %v6576, %v6604
        %v6613 = vadd.f32 %v6577, %v6604
        %v6614 = vadd.f32 %v6578, %v6604
        %v6615 = vadd.f32 %v6579, %v6604
        %v6616 = vadd.f32 %v6580, %v6604
        %v6617 = vadd.f32 %v6581, %v6604
        %v6618 = vadd.f32 %v6582, %v6604
        %v6619 = vadd.f32 %v6583, %v6604
        %v6620 = vadd.f32 %v6584, %v6604
        %v6621 = vadd.f32 %v6585, %v6604
        %v6622 = vadd.f32 %v6586, %v6604
        %v6623 = vadd.f32 %v6587, %v6604
        %v6624 = vadd.f32 %v6588, %v6604
        %v6625 = vadd.f32 %v6589, %v6604
        %v6626 = vadd.f32 %v6590, %v6604
        %v6627 = vadd.f32 %v6591, %v6604
        %v6628 = vadd.f32 %v6592, %v6604
        %v6629 = vadd.f32 %v6593, %v6604
        %v6630 = vadd.f32 %v6594, %v6604
        %v6631 = vadd.f32 %v6595, %v6604
        %v6632 = vadd.f32 %v6596, %v6604
        %v6633 = vadd.f32 %v6597, %v6604
        %v6634 = vadd.f32 %v6598, %v6604
        %v6635 = vadd.f32 %v6599, %v6604
        %v6636 = vadd.f32 %v6600, %v6604
        %v6637 = vadd.f32 %v6601, %v6604
        %v6638 = vsub.f32 0.0, %v6606
        %v6639 = vsub.f32 0.0, %v6607
        %v6640 = vsub.f32 0.0, %v6608
        %v6641 = vsub.f32 0.0, %v6609
        %v6642 = vsub.f32 0.0, %v6610
        %v6643 = vsub.f32 0.0, %v6611
        %v6644 = vsub.f32 0.0, %v6612
        %v6645 = vsub.f32 0.0, %v6613
        %v6646 = vsub.f32 0.0, %v6614
        %v6647 = vsub.f32 0.0, %v6615
        %v6648 = vsub.f32 0.0, %v6616
        %v6649 = vsub.f32 0.0, %v6617
        %v6650 = vsub.f32 0.0, %v6618
        %v6651 = vsub.f32 0.0, %v6619
        %v6652 = vsub.f32 0.0, %v6620
        %v6653 = vsub.f32 0.0, %v6621
        %v6654 = vsub.f32 0.0, %v6622
        %v6655 = vsub.f32 0.0, %v6623
        %v6656 = vsub.f32 0.0, %v6624
        %v6657 = vsub.f32 0.0, %v6625
        %v6658 = vsub.f32 0.0, %v6626
        %v6659 = vsub.f32 0.0, %v6627
        %v6660 = vsub.f32 0.0, %v6628
        %v6661 = vsub.f32 0.0, %v6629
        %v6662 = vsub.f32 0.0, %v6630
        %v6663 = vsub.f32 0.0, %v6631
        %v6664 = vsub.f32 0.0, %v6632
        %v6665 = vsub.f32 0.0, %v6633
        %v6666 = vsub.f32 0.0, %v6634
        %v6667 = vsub.f32 0.0, %v6635
        %v6668 = vsub.f32 0.0, %v6636
        %v6669 = vsub.f32 0.0, %v6637
        %v6670 = vmul.f32 %v6638, 1.442695
        %v6671 = vpow.pop %v6670
        %v6672 = vmul.f32 %v6639, 1.442695
        %v6673 = vpow.pop %v6672
        %v6674 = vmul.f32 %v6640, 1.442695
        %v6675 = vpow.pop %v6674
        %v6676 = vmul.f32 %v6641, 1.442695
        %v6677 = vpow.pop %v6676
        %v6678 = vmul.f32 %v6642, 1.442695
        %v6679 = vpow.pop %v6678
        %v6680 = vmul.f32 %v6643, 1.442695
        %v6681 = vpow.pop %v6680
        %v6682 = vmul.f32 %v6644, 1.442695
        %v6683 = vpow.pop %v6682
        %v6684 = vmul.f32 %v6645, 1.442695
        %v6685 = vpow.pop %v6684
        %v6686 = vmul.f32 %v6646, 1.442695
        %v6687 = vpow.pop %v6686
        %v6688 = vmul.f32 %v6647, 1.442695
        %v6689 = vpow.pop %v6688
        %v6690 = vmul.f32 %v6648, 1.442695
        %v6691 = vpow.pop %v6690
        %v6692 = vmul.f32 %v6649, 1.442695
        %v6693 = vpow.pop %v6692
        %v6694 = vmul.f32 %v6650, 1.442695
        %v6695 = vpow.pop %v6694
        %v6696 = vmul.f32 %v6651, 1.442695
        %v6697 = vpow.pop %v6696
        %v6698 = vmul.f32 %v6652, 1.442695
        %v6699 = vpow.pop %v6698
        %v6700 = vmul.f32 %v6653, 1.442695
        %v6701 = vpow.pop %v6700
        %v6702 = vmul.f32 %v6654, 1.442695
        %v6703 = vpow.pop %v6702
        %v6704 = vmul.f32 %v6655, 1.442695
        %v6705 = vpow.pop %v6704
        %v6706 = vmul.f32 %v6656, 1.442695
        %v6707 = vpow.pop %v6706
        %v6708 = vmul.f32 %v6657, 1.442695
        %v6709 = vpow.pop %v6708
        %v6710 = vmul.f32 %v6658, 1.442695
        %v6711 = vpow.pop %v6710
        %v6712 = vmul.f32 %v6659, 1.442695
        %v6713 = vpow.pop %v6712
        %v6714 = vmul.f32 %v6660, 1.442695
        %v6715 = vpow.pop %v6714
        %v6716 = vmul.f32 %v6661, 1.442695
        %v6717 = vpow.pop %v6716
        %v6718 = vmul.f32 %v6662, 1.442695
        %v6719 = vpow.pop %v6718
        %v6720 = vmul.f32 %v6663, 1.442695
        %v6721 = vpow.pop %v6720
        %v6722 = vmul.f32 %v6664, 1.442695
        %v6723 = vpow.pop %v6722
        %v6724 = vmul.f32 %v6665, 1.442695
        %v6725 = vpow.pop %v6724
        %v6726 = vmul.f32 %v6666, 1.442695
        %v6727 = vpow.pop %v6726
        %v6728 = vmul.f32 %v6667, 1.442695
        %v6729 = vpow.pop %v6728
        %v6730 = vmul.f32 %v6668, 1.442695
        %v6731 = vpow.pop %v6730
        %v6732 = vmul.f32 %v6669, 1.442695
        %v6733 = vpow.pop %v6732
        %v6734 = vadd.f32 %v6671, 1.0
        %v6735 = vadd.f32 %v6673, 1.0
        %v6736 = vadd.f32 %v6675, 1.0
        %v6737 = vadd.f32 %v6677, 1.0
        %v6738 = vadd.f32 %v6679, 1.0
        %v6739 = vadd.f32 %v6681, 1.0
        %v6740 = vadd.f32 %v6683, 1.0
        %v6741 = vadd.f32 %v6685, 1.0
        %v6742 = vadd.f32 %v6687, 1.0
        %v6743 = vadd.f32 %v6689, 1.0
        %v6744 = vadd.f32 %v6691, 1.0
        %v6745 = vadd.f32 %v6693, 1.0
        %v6746 = vadd.f32 %v6695, 1.0
        %v6747 = vadd.f32 %v6697, 1.0
        %v6748 = vadd.f32 %v6699, 1.0
        %v6749 = vadd.f32 %v6701, 1.0
        %v6750 = vadd.f32 %v6703, 1.0
        %v6751 = vadd.f32 %v6705, 1.0
        %v6752 = vadd.f32 %v6707, 1.0
        %v6753 = vadd.f32 %v6709, 1.0
        %v6754 = vadd.f32 %v6711, 1.0
        %v6755 = vadd.f32 %v6713, 1.0
        %v6756 = vadd.f32 %v6715, 1.0
        %v6757 = vadd.f32 %v6717, 1.0
        %v6758 = vadd.f32 %v6719, 1.0
        %v6759 = vadd.f32 %v6721, 1.0
        %v6760 = vadd.f32 %v6723, 1.0
        %v6761 = vadd.f32 %v6725, 1.0
        %v6762 = vadd.f32 %v6727, 1.0
        %v6763 = vadd.f32 %v6729, 1.0
        %v6764 = vadd.f32 %v6731, 1.0
        %v6765 = vadd.f32 %v6733, 1.0
        %v6766 = vrcp.pop %v6734
        %v6767 = vmul.f32 %v6734, %v6766
        %v6768 = vsub.f32 1.0, %v6767
        %v6769 = vmul.f32 %v6766, %v6768
        %v6770 = vadd.f32 %v6766, %v6769
        %vm6771 = vweird.f32 %v6734
        %vm6772 = vweird.f32 %v6766
        %vm6773 = vmor %vm6771, %vm6772
        %v6774 = vsel %vm6773, %v6766, %v6770
        %v6775 = vand.u32 2147483647, %v6734
        %vm6776 = vcmp.eq.f32.partialorder %v6775, 8.507059e+37
        %v6777 = vand.u32 %v6734, 2147483648
        %v6778 = vor.u32 1.1754944e-38, %v6777
        %v6779 = vsel %vm6776, %v6778, %v6774
        %v6780 = vmul.f32 1.0, %v6779
        %v6781 = vrcp.pop %v6735
        %v6782 = vmul.f32 %v6735, %v6781
        %v6783 = vsub.f32 1.0, %v6782
        %v6784 = vmul.f32 %v6781, %v6783
        %v6785 = vadd.f32 %v6781, %v6784
        %vm6786 = vweird.f32 %v6735
        %vm6787 = vweird.f32 %v6781
        %vm6788 = vmor %vm6786, %vm6787
        %v6789 = vsel %vm6788, %v6781, %v6785
        %v6790 = vand.u32 2147483647, %v6735
        %vm6791 = vcmp.eq.f32.partialorder %v6790, 8.507059e+37
        %v6792 = vand.u32 %v6735, 2147483648
        %v6793 = vor.u32 1.1754944e-38, %v6792
        %v6794 = vsel %vm6791, %v6793, %v6789
        %v6795 = vmul.f32 1.0, %v6794
        %v6796 = vrcp.pop %v6736
        %v6797 = vmul.f32 %v6736, %v6796
        %v6798 = vsub.f32 1.0, %v6797
        %v6799 = vmul.f32 %v6796, %v6798
        %v6800 = vadd.f32 %v6796, %v6799
        %vm6801 = vweird.f32 %v6736
        %vm6802 = vweird.f32 %v6796
        %vm6803 = vmor %vm6801, %vm6802
        %v6804 = vsel %vm6803, %v6796, %v6800
        %v6805 = vand.u32 2147483647, %v6736
        %vm6806 = vcmp.eq.f32.partialorder %v6805, 8.507059e+37
        %v6807 = vand.u32 %v6736, 2147483648
        %v6808 = vor.u32 1.1754944e-38, %v6807
        %v6809 = vsel %vm6806, %v6808, %v6804
        %v6810 = vmul.f32 1.0, %v6809
        %v6811 = vrcp.pop %v6737
        %v6812 = vmul.f32 %v6737, %v6811
        %v6813 = vsub.f32 1.0, %v6812
        %v6814 = vmul.f32 %v6811, %v6813
        %v6815 = vadd.f32 %v6811, %v6814
        %vm6816 = vweird.f32 %v6737
        %vm6817 = vweird.f32 %v6811
        %vm6818 = vmor %vm6816, %vm6817
        %v6819 = vsel %vm6818, %v6811, %v6815
        %v6820 = vand.u32 2147483647, %v6737
        %vm6821 = vcmp.eq.f32.partialorder %v6820, 8.507059e+37
        %v6822 = vand.u32 %v6737, 2147483648
        %v6823 = vor.u32 1.1754944e-38, %v6822
        %v6824 = vsel %vm6821, %v6823, %v6819
        %v6825 = vmul.f32 1.0, %v6824
        %v6826 = vrcp.pop %v6738
        %v6827 = vmul.f32 %v6738, %v6826
        %v6828 = vsub.f32 1.0, %v6827
        %v6829 = vmul.f32 %v6826, %v6828
        %v6830 = vadd.f32 %v6826, %v6829
        %vm6831 = vweird.f32 %v6738
        %vm6832 = vweird.f32 %v6826
        %vm6833 = vmor %vm6831, %vm6832
        %v6834 = vsel %vm6833, %v6826, %v6830
        %v6835 = vand.u32 2147483647, %v6738
        %vm6836 = vcmp.eq.f32.partialorder %v6835, 8.507059e+37
        %v6837 = vand.u32 %v6738, 2147483648
        %v6838 = vor.u32 1.1754944e-38, %v6837
        %v6839 = vsel %vm6836, %v6838, %v6834
        %v6840 = vmul.f32 1.0, %v6839
        %v6841 = vrcp.pop %v6739
        %v6842 = vmul.f32 %v6739, %v6841
        %v6843 = vsub.f32 1.0, %v6842
        %v6844 = vmul.f32 %v6841, %v6843
        %v6845 = vadd.f32 %v6841, %v6844
        %vm6846 = vweird.f32 %v6739
        %vm6847 = vweird.f32 %v6841
        %vm6848 = vmor %vm6846, %vm6847
        %v6849 = vsel %vm6848, %v6841, %v6845
        %v6850 = vand.u32 2147483647, %v6739
        %vm6851 = vcmp.eq.f32.partialorder %v6850, 8.507059e+37
        %v6852 = vand.u32 %v6739, 2147483648
        %v6853 = vor.u32 1.1754944e-38, %v6852
        %v6854 = vsel %vm6851, %v6853, %v6849
        %v6855 = vmul.f32 1.0, %v6854
        %v6856 = vrcp.pop %v6740
        %v6857 = vmul.f32 %v6740, %v6856
        %v6858 = vsub.f32 1.0, %v6857
        %v6859 = vmul.f32 %v6856, %v6858
        %v6860 = vadd.f32 %v6856, %v6859
        %vm6861 = vweird.f32 %v6740
        %vm6862 = vweird.f32 %v6856
        %vm6863 = vmor %vm6861, %vm6862
        %v6864 = vsel %vm6863, %v6856, %v6860
        %v6865 = vand.u32 2147483647, %v6740
        %vm6866 = vcmp.eq.f32.partialorder %v6865, 8.507059e+37
        %v6867 = vand.u32 %v6740, 2147483648
        %v6868 = vor.u32 1.1754944e-38, %v6867
        %v6869 = vsel %vm6866, %v6868, %v6864
        %v6870 = vmul.f32 1.0, %v6869
        %v6871 = vrcp.pop %v6741
        %v6872 = vmul.f32 %v6741, %v6871
        %v6873 = vsub.f32 1.0, %v6872
        %v6874 = vmul.f32 %v6871, %v6873
        %v6875 = vadd.f32 %v6871, %v6874
        %vm6876 = vweird.f32 %v6741
        %vm6877 = vweird.f32 %v6871
        %vm6878 = vmor %vm6876, %vm6877
        %v6879 = vsel %vm6878, %v6871, %v6875
        %v6880 = vand.u32 2147483647, %v6741
        %vm6881 = vcmp.eq.f32.partialorder %v6880, 8.507059e+37
        %v6882 = vand.u32 %v6741, 2147483648
        %v6883 = vor.u32 1.1754944e-38, %v6882
        %v6884 = vsel %vm6881, %v6883, %v6879
        %v6885 = vmul.f32 1.0, %v6884
        %v6886 = vrcp.pop %v6742
        %v6887 = vmul.f32 %v6742, %v6886
        %v6888 = vsub.f32 1.0, %v6887
        %v6889 = vmul.f32 %v6886, %v6888
        %v6890 = vadd.f32 %v6886, %v6889
        %vm6891 = vweird.f32 %v6742
        %vm6892 = vweird.f32 %v6886
        %vm6893 = vmor %vm6891, %vm6892
        %v6894 = vsel %vm6893, %v6886, %v6890
        %v6895 = vand.u32 2147483647, %v6742
        %vm6896 = vcmp.eq.f32.partialorder %v6895, 8.507059e+37
        %v6897 = vand.u32 %v6742, 2147483648
        %v6898 = vor.u32 1.1754944e-38, %v6897
        %v6899 = vsel %vm6896, %v6898, %v6894
        %v6900 = vmul.f32 1.0, %v6899
        %v6901 = vrcp.pop %v6743
        %v6902 = vmul.f32 %v6743, %v6901
        %v6903 = vsub.f32 1.0, %v6902
        %v6904 = vmul.f32 %v6901, %v6903
        %v6905 = vadd.f32 %v6901, %v6904
        %vm6906 = vweird.f32 %v6743
        %vm6907 = vweird.f32 %v6901
        %vm6908 = vmor %vm6906, %vm6907
        %v6909 = vsel %vm6908, %v6901, %v6905
        %v6910 = vand.u32 2147483647, %v6743
        %vm6911 = vcmp.eq.f32.partialorder %v6910, 8.507059e+37
        %v6912 = vand.u32 %v6743, 2147483648
        %v6913 = vor.u32 1.1754944e-38, %v6912
        %v6914 = vsel %vm6911, %v6913, %v6909
        %v6915 = vmul.f32 1.0, %v6914
        %v6916 = vrcp.pop %v6744
        %v6917 = vmul.f32 %v6744, %v6916
        %v6918 = vsub.f32 1.0, %v6917
        %v6919 = vmul.f32 %v6916, %v6918
        %v6920 = vadd.f32 %v6916, %v6919
        %vm6921 = vweird.f32 %v6744
        %vm6922 = vweird.f32 %v6916
        %vm6923 = vmor %vm6921, %vm6922
        %v6924 = vsel %vm6923, %v6916, %v6920
        %v6925 = vand.u32 2147483647, %v6744
        %vm6926 = vcmp.eq.f32.partialorder %v6925, 8.507059e+37
        %v6927 = vand.u32 %v6744, 2147483648
        %v6928 = vor.u32 1.1754944e-38, %v6927
        %v6929 = vsel %vm6926, %v6928, %v6924
        %v6930 = vmul.f32 1.0, %v6929
        %v6931 = vrcp.pop %v6745
        %v6932 = vmul.f32 %v6745, %v6931
        %v6933 = vsub.f32 1.0, %v6932
        %v6934 = vmul.f32 %v6931, %v6933
        %v6935 = vadd.f32 %v6931, %v6934
        %vm6936 = vweird.f32 %v6745
        %vm6937 = vweird.f32 %v6931
        %vm6938 = vmor %vm6936, %vm6937
        %v6939 = vsel %vm6938, %v6931, %v6935
        %v6940 = vand.u32 2147483647, %v6745
        %vm6941 = vcmp.eq.f32.partialorder %v6940, 8.507059e+37
        %v6942 = vand.u32 %v6745, 2147483648
        %v6943 = vor.u32 1.1754944e-38, %v6942
        %v6944 = vsel %vm6941, %v6943, %v6939
        %v6945 = vmul.f32 1.0, %v6944
        %v6946 = vrcp.pop %v6746
        %v6947 = vmul.f32 %v6746, %v6946
        %v6948 = vsub.f32 1.0, %v6947
        %v6949 = vmul.f32 %v6946, %v6948
        %v6950 = vadd.f32 %v6946, %v6949
        %vm6951 = vweird.f32 %v6746
        %vm6952 = vweird.f32 %v6946
        %vm6953 = vmor %vm6951, %vm6952
        %v6954 = vsel %vm6953, %v6946, %v6950
        %v6955 = vand.u32 2147483647, %v6746
        %vm6956 = vcmp.eq.f32.partialorder %v6955, 8.507059e+37
        %v6957 = vand.u32 %v6746, 2147483648
        %v6958 = vor.u32 1.1754944e-38, %v6957
        %v6959 = vsel %vm6956, %v6958, %v6954
        %v6960 = vmul.f32 1.0, %v6959
        %v6961 = vrcp.pop %v6747
        %v6962 = vmul.f32 %v6747, %v6961
        %v6963 = vsub.f32 1.0, %v6962
        %v6964 = vmul.f32 %v6961, %v6963
        %v6965 = vadd.f32 %v6961, %v6964
        %vm6966 = vweird.f32 %v6747
        %vm6967 = vweird.f32 %v6961
        %vm6968 = vmor %vm6966, %vm6967
        %v6969 = vsel %vm6968, %v6961, %v6965
        %v6970 = vand.u32 2147483647, %v6747
        %vm6971 = vcmp.eq.f32.partialorder %v6970, 8.507059e+37
        %v6972 = vand.u32 %v6747, 2147483648
        %v6973 = vor.u32 1.1754944e-38, %v6972
        %v6974 = vsel %vm6971, %v6973, %v6969
        %v6975 = vmul.f32 1.0, %v6974
        %v6976 = vrcp.pop %v6748
        %v6977 = vmul.f32 %v6748, %v6976
        %v6978 = vsub.f32 1.0, %v6977
        %v6979 = vmul.f32 %v6976, %v6978
        %v6980 = vadd.f32 %v6976, %v6979
        %vm6981 = vweird.f32 %v6748
        %vm6982 = vweird.f32 %v6976
        %vm6983 = vmor %vm6981, %vm6982
        %v6984 = vsel %vm6983, %v6976, %v6980
        %v6985 = vand.u32 2147483647, %v6748
        %vm6986 = vcmp.eq.f32.partialorder %v6985, 8.507059e+37
        %v6987 = vand.u32 %v6748, 2147483648
        %v6988 = vor.u32 1.1754944e-38, %v6987
        %v6989 = vsel %vm6986, %v6988, %v6984
        %v6990 = vmul.f32 1.0, %v6989
        %v6991 = vrcp.pop %v6749
        %v6992 = vmul.f32 %v6749, %v6991
        %v6993 = vsub.f32 1.0, %v6992
        %v6994 = vmul.f32 %v6991, %v6993
        %v6995 = vadd.f32 %v6991, %v6994
        %vm6996 = vweird.f32 %v6749
        %vm6997 = vweird.f32 %v6991
        %vm6998 = vmor %vm6996, %vm6997
        %v6999 = vsel %vm6998, %v6991, %v6995
        %v7000 = vand.u32 2147483647, %v6749
        %vm7001 = vcmp.eq.f32.partialorder %v7000, 8.507059e+37
        %v7002 = vand.u32 %v6749, 2147483648
        %v7003 = vor.u32 1.1754944e-38, %v7002
        %v7004 = vsel %vm7001, %v7003, %v6999
        %v7005 = vmul.f32 1.0, %v7004
        %v7006 = vrcp.pop %v6750
        %v7007 = vmul.f32 %v6750, %v7006
        %v7008 = vsub.f32 1.0, %v7007
        %v7009 = vmul.f32 %v7006, %v7008
        %v7010 = vadd.f32 %v7006, %v7009
        %vm7011 = vweird.f32 %v6750
        %vm7012 = vweird.f32 %v7006
        %vm7013 = vmor %vm7011, %vm7012
        %v7014 = vsel %vm7013, %v7006, %v7010
        %v7015 = vand.u32 2147483647, %v6750
        %vm7016 = vcmp.eq.f32.partialorder %v7015, 8.507059e+37
        %v7017 = vand.u32 %v6750, 2147483648
        %v7018 = vor.u32 1.1754944e-38, %v7017
        %v7019 = vsel %vm7016, %v7018, %v7014
        %v7020 = vmul.f32 1.0, %v7019
        %v7021 = vrcp.pop %v6751
        %v7022 = vmul.f32 %v6751, %v7021
        %v7023 = vsub.f32 1.0, %v7022
        %v7024 = vmul.f32 %v7021, %v7023
        %v7025 = vadd.f32 %v7021, %v7024
        %vm7026 = vweird.f32 %v6751
        %vm7027 = vweird.f32 %v7021
        %vm7028 = vmor %vm7026, %vm7027
        %v7029 = vsel %vm7028, %v7021, %v7025
        %v7030 = vand.u32 2147483647, %v6751
        %vm7031 = vcmp.eq.f32.partialorder %v7030, 8.507059e+37
        %v7032 = vand.u32 %v6751, 2147483648
        %v7033 = vor.u32 1.1754944e-38, %v7032
        %v7034 = vsel %vm7031, %v7033, %v7029
        %v7035 = vmul.f32 1.0, %v7034
        %v7036 = vrcp.pop %v6752
        %v7037 = vmul.f32 %v6752, %v7036
        %v7038 = vsub.f32 1.0, %v7037
        %v7039 = vmul.f32 %v7036, %v7038
        %v7040 = vadd.f32 %v7036, %v7039
        %vm7041 = vweird.f32 %v6752
        %vm7042 = vweird.f32 %v7036
        %vm7043 = vmor %vm7041, %vm7042
        %v7044 = vsel %vm7043, %v7036, %v7040
        %v7045 = vand.u32 2147483647, %v6752
        %vm7046 = vcmp.eq.f32.partialorder %v7045, 8.507059e+37
        %v7047 = vand.u32 %v6752, 2147483648
        %v7048 = vor.u32 1.1754944e-38, %v7047
        %v7049 = vsel %vm7046, %v7048, %v7044
        %v7050 = vmul.f32 1.0, %v7049
        %v7051 = vrcp.pop %v6753
        %v7052 = vmul.f32 %v6753, %v7051
        %v7053 = vsub.f32 1.0, %v7052
        %v7054 = vmul.f32 %v7051, %v7053
        %v7055 = vadd.f32 %v7051, %v7054
        %vm7056 = vweird.f32 %v6753
        %vm7057 = vweird.f32 %v7051
        %vm7058 = vmor %vm7056, %vm7057
        %v7059 = vsel %vm7058, %v7051, %v7055
        %v7060 = vand.u32 2147483647, %v6753
        %vm7061 = vcmp.eq.f32.partialorder %v7060, 8.507059e+37
        %v7062 = vand.u32 %v6753, 2147483648
        %v7063 = vor.u32 1.1754944e-38, %v7062
        %v7064 = vsel %vm7061, %v7063, %v7059
        %v7065 = vmul.f32 1.0, %v7064
        %v7066 = vrcp.pop %v6754
        %v7067 = vmul.f32 %v6754, %v7066
        %v7068 = vsub.f32 1.0, %v7067
        %v7069 = vmul.f32 %v7066, %v7068
        %v7070 = vadd.f32 %v7066, %v7069
        %vm7071 = vweird.f32 %v6754
        %vm7072 = vweird.f32 %v7066
        %vm7073 = vmor %vm7071, %vm7072
        %v7074 = vsel %vm7073, %v7066, %v7070
        %v7075 = vand.u32 2147483647, %v6754
        %vm7076 = vcmp.eq.f32.partialorder %v7075, 8.507059e+37
        %v7077 = vand.u32 %v6754, 2147483648
        %v7078 = vor.u32 1.1754944e-38, %v7077
        %v7079 = vsel %vm7076, %v7078, %v7074
        %v7080 = vmul.f32 1.0, %v7079
        %v7081 = vrcp.pop %v6755
        %v7082 = vmul.f32 %v6755, %v7081
        %v7083 = vsub.f32 1.0, %v7082
        %v7084 = vmul.f32 %v7081, %v7083
        %v7085 = vadd.f32 %v7081, %v7084
        %vm7086 = vweird.f32 %v6755
        %vm7087 = vweird.f32 %v7081
        %vm7088 = vmor %vm7086, %vm7087
        %v7089 = vsel %vm7088, %v7081, %v7085
        %v7090 = vand.u32 2147483647, %v6755
        %vm7091 = vcmp.eq.f32.partialorder %v7090, 8.507059e+37
        %v7092 = vand.u32 %v6755, 2147483648
        %v7093 = vor.u32 1.1754944e-38, %v7092
        %v7094 = vsel %vm7091, %v7093, %v7089
        %v7095 = vmul.f32 1.0, %v7094
        %v7096 = vrcp.pop %v6756
        %v7097 = vmul.f32 %v6756, %v7096
        %v7098 = vsub.f32 1.0, %v7097
        %v7099 = vmul.f32 %v7096, %v7098
        %v7100 = vadd.f32 %v7096, %v7099
        %vm7101 = vweird.f32 %v6756
        %vm7102 = vweird.f32 %v7096
        %vm7103 = vmor %vm7101, %vm7102
        %v7104 = vsel %vm7103, %v7096, %v7100
        %v7105 = vand.u32 2147483647, %v6756
        %vm7106 = vcmp.eq.f32.partialorder %v7105, 8.507059e+37
        %v7107 = vand.u32 %v6756, 2147483648
        %v7108 = vor.u32 1.1754944e-38, %v7107
        %v7109 = vsel %vm7106, %v7108, %v7104
        %v7110 = vmul.f32 1.0, %v7109
        %v7111 = vrcp.pop %v6757
        %v7112 = vmul.f32 %v6757, %v7111
        %v7113 = vsub.f32 1.0, %v7112
        %v7114 = vmul.f32 %v7111, %v7113
        %v7115 = vadd.f32 %v7111, %v7114
        %vm7116 = vweird.f32 %v6757
        %vm7117 = vweird.f32 %v7111
        %vm7118 = vmor %vm7116, %vm7117
        %v7119 = vsel %vm7118, %v7111, %v7115
        %v7120 = vand.u32 2147483647, %v6757
        %vm7121 = vcmp.eq.f32.partialorder %v7120, 8.507059e+37
        %v7122 = vand.u32 %v6757, 2147483648
        %v7123 = vor.u32 1.1754944e-38, %v7122
        %v7124 = vsel %vm7121, %v7123, %v7119
        %v7125 = vmul.f32 1.0, %v7124
        %v7126 = vrcp.pop %v6758
        %v7127 = vmul.f32 %v6758, %v7126
        %v7128 = vsub.f32 1.0, %v7127
        %v7129 = vmul.f32 %v7126, %v7128
        %v7130 = vadd.f32 %v7126, %v7129
        %vm7131 = vweird.f32 %v6758
        %vm7132 = vweird.f32 %v7126
        %vm7133 = vmor %vm7131, %vm7132
        %v7134 = vsel %vm7133, %v7126, %v7130
        %v7135 = vand.u32 2147483647, %v6758
        %vm7136 = vcmp.eq.f32.partialorder %v7135, 8.507059e+37
        %v7137 = vand.u32 %v6758, 2147483648
        %v7138 = vor.u32 1.1754944e-38, %v7137
        %v7139 = vsel %vm7136, %v7138, %v7134
        %v7140 = vmul.f32 1.0, %v7139
        %v7141 = vrcp.pop %v6759
        %v7142 = vmul.f32 %v6759, %v7141
        %v7143 = vsub.f32 1.0, %v7142
        %v7144 = vmul.f32 %v7141, %v7143
        %v7145 = vadd.f32 %v7141, %v7144
        %vm7146 = vweird.f32 %v6759
        %vm7147 = vweird.f32 %v7141
        %vm7148 = vmor %vm7146, %vm7147
        %v7149 = vsel %vm7148, %v7141, %v7145
        %v7150 = vand.u32 2147483647, %v6759
        %vm7151 = vcmp.eq.f32.partialorder %v7150, 8.507059e+37
        %v7152 = vand.u32 %v6759, 2147483648
        %v7153 = vor.u32 1.1754944e-38, %v7152
        %v7154 = vsel %vm7151, %v7153, %v7149
        %v7155 = vmul.f32 1.0, %v7154
        %v7156 = vrcp.pop %v6760
        %v7157 = vmul.f32 %v6760, %v7156
        %v7158 = vsub.f32 1.0, %v7157
        %v7159 = vmul.f32 %v7156, %v7158
        %v7160 = vadd.f32 %v7156, %v7159
        %vm7161 = vweird.f32 %v6760
        %vm7162 = vweird.f32 %v7156
        %vm7163 = vmor %vm7161, %vm7162
        %v7164 = vsel %vm7163, %v7156, %v7160
        %v7165 = vand.u32 2147483647, %v6760
        %vm7166 = vcmp.eq.f32.partialorder %v7165, 8.507059e+37
        %v7167 = vand.u32 %v6760, 2147483648
        %v7168 = vor.u32 1.1754944e-38, %v7167
        %v7169 = vsel %vm7166, %v7168, %v7164
        %v7170 = vmul.f32 1.0, %v7169
        %v7171 = vrcp.pop %v6761
        %v7172 = vmul.f32 %v6761, %v7171
        %v7173 = vsub.f32 1.0, %v7172
        %v7174 = vmul.f32 %v7171, %v7173
        %v7175 = vadd.f32 %v7171, %v7174
        %vm7176 = vweird.f32 %v6761
        %vm7177 = vweird.f32 %v7171
        %vm7178 = vmor %vm7176, %vm7177
        %v7179 = vsel %vm7178, %v7171, %v7175
        %v7180 = vand.u32 2147483647, %v6761
        %vm7181 = vcmp.eq.f32.partialorder %v7180, 8.507059e+37
        %v7182 = vand.u32 %v6761, 2147483648
        %v7183 = vor.u32 1.1754944e-38, %v7182
        %v7184 = vsel %vm7181, %v7183, %v7179
        %v7185 = vmul.f32 1.0, %v7184
        %v7186 = vrcp.pop %v6762
        %v7187 = vmul.f32 %v6762, %v7186
        %v7188 = vsub.f32 1.0, %v7187
        %v7189 = vmul.f32 %v7186, %v7188
        %v7190 = vadd.f32 %v7186, %v7189
        %vm7191 = vweird.f32 %v6762
        %vm7192 = vweird.f32 %v7186
        %vm7193 = vmor %vm7191, %vm7192
        %v7194 = vsel %vm7193, %v7186, %v7190
        %v7195 = vand.u32 2147483647, %v6762
        %vm7196 = vcmp.eq.f32.partialorder %v7195, 8.507059e+37
        %v7197 = vand.u32 %v6762, 2147483648
        %v7198 = vor.u32 1.1754944e-38, %v7197
        %v7199 = vsel %vm7196, %v7198, %v7194
        %v7200 = vmul.f32 1.0, %v7199
        %v7201 = vrcp.pop %v6763
        %v7202 = vmul.f32 %v6763, %v7201
        %v7203 = vsub.f32 1.0, %v7202
        %v7204 = vmul.f32 %v7201, %v7203
        %v7205 = vadd.f32 %v7201, %v7204
        %vm7206 = vweird.f32 %v6763
        %vm7207 = vweird.f32 %v7201
        %vm7208 = vmor %vm7206, %vm7207
        %v7209 = vsel %vm7208, %v7201, %v7205
        %v7210 = vand.u32 2147483647, %v6763
        %vm7211 = vcmp.eq.f32.partialorder %v7210, 8.507059e+37
        %v7212 = vand.u32 %v6763, 2147483648
        %v7213 = vor.u32 1.1754944e-38, %v7212
        %v7214 = vsel %vm7211, %v7213, %v7209
        %v7215 = vmul.f32 1.0, %v7214
        %v7216 = vrcp.pop %v6764
        %v7217 = vmul.f32 %v6764, %v7216
        %v7218 = vsub.f32 1.0, %v7217
        %v7219 = vmul.f32 %v7216, %v7218
        %v7220 = vadd.f32 %v7216, %v7219
        %vm7221 = vweird.f32 %v6764
        %vm7222 = vweird.f32 %v7216
        %vm7223 = vmor %vm7221, %vm7222
        %v7224 = vsel %vm7223, %v7216, %v7220
        %v7225 = vand.u32 2147483647, %v6764
        %vm7226 = vcmp.eq.f32.partialorder %v7225, 8.507059e+37
        %v7227 = vand.u32 %v6764, 2147483648
        %v7228 = vor.u32 1.1754944e-38, %v7227
        %v7229 = vsel %vm7226, %v7228, %v7224
        %v7230 = vmul.f32 1.0, %v7229
        %v7231 = vrcp.pop %v6765
        %v7232 = vmul.f32 %v6765, %v7231
        %v7233 = vsub.f32 1.0, %v7232
        %v7234 = vmul.f32 %v7231, %v7233
        %v7235 = vadd.f32 %v7231, %v7234
        %vm7236 = vweird.f32 %v6765
        %vm7237 = vweird.f32 %v7231
        %vm7238 = vmor %vm7236, %vm7237
        %v7239 = vsel %vm7238, %v7231, %v7235
        %v7240 = vand.u32 2147483647, %v6765
        %vm7241 = vcmp.eq.f32.partialorder %v7240, 8.507059e+37
        %v7242 = vand.u32 %v6765, 2147483648
        %v7243 = vor.u32 1.1754944e-38, %v7242
        %v7244 = vsel %vm7241, %v7243, %v7239
        %v7245 = vmul.f32 1.0, %v7244
        %7246 = vst [vmem:[%s379] sm:$0xff] %v6780
        %7247 = vst [vmem:[%s379 + $0x8] sm:$0xff] %v6795
        %7248 = vst [vmem:[%s379 + $0x10] sm:$0xff] %v6810
        %7249 = vst [vmem:[%s379 + $0x18] sm:$0xff] %v6825
        %7250 = vst [vmem:[%s379 + $0x20] sm:$0xff] %v6840
        %7251 = vst [vmem:[%s379 + $0x28] sm:$0xff] %v6855
        %7252 = vst [vmem:[%s379 + $0x30] sm:$0xff] %v6870
        %7253 = vst [vmem:[%s379 + $0x38] sm:$0xff] %v6885
        %7254 = vst [vmem:[%s379 + $0x40] sm:$0xff] %v6900
        %7255 = vst [vmem:[%s379 + $0x48] sm:$0xff] %v6915
        %7256 = vst [vmem:[%s379 + $0x50] sm:$0xff] %v6930
        %7257 = vst [vmem:[%s379 + $0x58] sm:$0xff] %v6945
        %7258 = vst [vmem:[%s379 + $0x60] sm:$0xff] %v6960
        %7259 = vst [vmem:[%s379 + $0x68] sm:$0xff] %v6975
        %7260 = vst [vmem:[%s379 + $0x70] sm:$0xff] %v6990
        %7261 = vst [vmem:[%s379 + $0x78] sm:$0xff] %v7005
        %7262 = vst [vmem:[%s379 + $0x80] sm:$0xff] %v7020
        %7263 = vst [vmem:[%s379 + $0x88] sm:$0xff] %v7035
        %7264 = vst [vmem:[%s379 + $0x90] sm:$0xff] %v7050
        %7265 = vst [vmem:[%s379 + $0x98] sm:$0xff] %v7065
        %7266 = vst [vmem:[%s379 + $0xa0] sm:$0xff] %v7080
        %7267 = vst [vmem:[%s379 + $0xa8] sm:$0xff] %v7095
        %7268 = vst [vmem:[%s379 + $0xb0] sm:$0xff] %v7110
        %7269 = vst [vmem:[%s379 + $0xb8] sm:$0xff] %v7125
        %7270 = vst [vmem:[%s379 + $0xc0] sm:$0xff] %v7140
        %7271 = vst [vmem:[%s379 + $0xc8] sm:$0xff] %v7155
        %7272 = vst [vmem:[%s379 + $0xd0] sm:$0xff] %v7170
        %7273 = vst [vmem:[%s379 + $0xd8] sm:$0xff] %v7185
        %7274 = vst [vmem:[%s379 + $0xe0] sm:$0xff] %v7200
        %7275 = vst [vmem:[%s379 + $0xe8] sm:$0xff] %v7215
        %7276 = vst [vmem:[%s379 + $0xf0] sm:$0xff] %v7230
        %7277 = vst [vmem:[%s379 + $0xf8] sm:$0xff] %v7245
        %s7278 = sand.u32 %s269, 1
        %s7279 = scalar_lea.sflag [#allocation4], %s7278
        %s7280 = sand.u32 %s269, 1
        %s7281 = smul.addr %s7280, 256
        %s7282 = scalar_lea.vmem [#allocation3], %s7281
        // Predicated region
        $region65: #{tpu_custom_call.1} parent=63 // pred_check
          %p7283 = pneg %p279
        $region66: #{tpu_custom_call.1} parent=63 // pred_check_branch
          %7285 = sbr.rel (%p7283) target = $region68
        $region67: #{tpu_custom_call.1} parent=63 // pred_region
          %7287 = vsyncadd %s7279, 0
          %s7288 = smul.addr %s25, 32
          %s7289 = smul.addr %s7288, 8
          %s7290 = scalar_lea.hbm %s11, %s7289
          %s7291 = sshll.u32 %s7282, 4
          %s7292 = int_to_ptr.vmem [resolvable:$true] %s7291
          %s7293 = sshll.u32 %s7290, 4
          %s7294 = int_to_ptr.hbm [resolvable:$true] %s7293
          %7299 = dma.vmem_to_hbm [thread:$0]  %s7292, 4096, %s7294, %s7279, 128, 128, 8
        $region68: #{tpu_custom_call.1} parent=63 // pred_fallthru
          _
      $region64: #{tpu_custom_call.1} parent=5 // pred_fallthru
        _
      %p7300 = scmp.le.s32.totalorder 2, %s20
      // Predicated region
      $region69: #{tpu_custom_call.1} parent=5 // pred_check
        %p7301 = pneg %p7300
      $region70: #{tpu_custom_call.1} parent=5 // pred_check_branch
        %7303 = sbr.rel (%p7301) target = $region72
      $region71: #{tpu_custom_call.1} parent=5 // pred_region
        %s7304 = ssub.s32 %s20, 2
        // Predicated region
        $region73: #{tpu_custom_call.1} parent=71 // pred_check
          %p7305 = pneg %p285
        $region74: #{tpu_custom_call.1} parent=71 // pred_check_branch
          %7307 = sbr.rel (%p7305) target = $region76
        $region75: #{tpu_custom_call.1} parent=71 // pred_region
          %s7308 = sand.u32 %s270, 1
          %s7309 = scalar_lea.sflag [#allocation4], %s7308
          %s7310 = sand.u32 %s270, 1
          %s7311 = smul.addr %s7310, 256
          %s7312 = scalar_lea.vmem [#allocation3], %s7311
          %7314 = dma.done %s7309, 4096
        $region76: #{tpu_custom_call.1} parent=71 // pred_fallthru
          _
      $region72: #{tpu_custom_call.1} parent=5 // pred_fallthru
        _
    $region6: #{tpu_custom_call.1} parent=1 // loop_footer
      %s24 = sadd.s32 1, %s20
    $region7: #{tpu_custom_call.1} parent=1 // loop_footer_branch
      %19 = sbr.rel target = $region3
    $region8: #{tpu_custom_call.1} parent=1 // loop_exit
      _
    %7315 = vsyncpa [#allocation4], 1
    %s7316 = scalar_lea.sflag [#allocation4], 1
    %7317 = vsyncpa %s7316, 1

</llo_original>
